<compile_context>
chip_gen: v5e
topology: v5e:2x2
jax: 0.10.0
libtpu: 0.0.40
codegen_flags: <defaults>
</compile_context>

<pallas_src>
import functools

import jax
import jax.numpy as jnp
from jax.experimental import pallas as pl
from jax.experimental.pallas import tpu as pltpu

BN_EPS = 1e-5


# ----------------------------------------------------------------------------
# Pallas kernel: fused 3x3 dilated conv + folded-BN shift + activation (+res)
# ----------------------------------------------------------------------------
def _conv_kernel(x_ref, w_ref, b_ref, *rest, dil, wp, th, single_tile,
                 activation, has_res):
    """One (batch, row-tile) step of the conv in channels-major layout.

    x_ref : (1, Cin, Lp)    bf16  flattened reflect-padded image (resident)
    w_ref : (9, Cout, Cin)  bf16  BN-scale-folded weights, tap-major
    b_ref : (Cout, 1)       f32   folded BN/bias shift
    rest  : [r_ref (1, Cout, L) f32,]  o_ref (1, Cout, L) f32
    """
    if has_res:
        r_ref, o_ref = rest
    else:
        (o_ref,) = rest

    cout = o_ref.shape[1]
    tile = th * wp
    base = 0 if single_tile else pl.program_id(1) * tile

    acc = jnp.zeros((cout, tile), jnp.float32)
    for ky in range(3):
        for kx in range(3):
            off = (ky * dil) * wp + kx * dil
            # In-kernel im2col: each dilated tap is a flat slice of the
            # resident padded image (bf16) -> (Cin, tile).
            tap = x_ref[0, :, pl.ds(base + off, tile)]
            acc = acc + jnp.dot(w_ref[ky * 3 + kx], tap,
                                preferred_element_type=jnp.float32)

    y = acc + b_ref[...]                      # per-channel shift (f32 epilogue)
    if activation == "relu":
        y = jnp.maximum(y, 0.0)
    elif activation == "tanh":
        y = jnp.tanh(y)
    if has_res:
        y = y + r_ref[0]
    o_ref[0] = y.astype(o_ref.dtype)


# ----------------------------------------------------------------------------
# Wrapper: reflect pad + flatten in glue, lane-dense pallas_call, crop output.
# ----------------------------------------------------------------------------
def _round_up(v, m):
    return (v + m - 1) // m * m


def _pick_row_tile(h, wp, max_lanes=2048):
    """Rows per grid step: whole image unless the lane tile would be huge."""
    if h * wp <= max_lanes:
        return h
    for th in range(h - 1, 0, -1):
        if h % th == 0 and th * wp <= max_lanes and (th * wp) % 128 == 0:
            return th
    return h  # fall back to whole image (correct, just a big tile)


def conv3x3(x, p, *, dilation, activation, residual=None):
    """3x3 dilated conv (reflect pad = dilation) + folded BN + act (+ residual).

    x: (N, Cin, H, W) float32. Returns (N, Cout, H, W) float32.
    """
    n, cin, h, w = x.shape
    d = dilation
    hp, wp = h + 2 * d, w + 2 * d
    cout = p["w"].shape[1]

    # Reflect pad then flatten; 9 taps become contiguous flat slices in-kernel.
    xp = jnp.pad(x, ((0, 0), (0, 0), (d, d), (d, d)), mode="reflect")
    lp = _round_up(hp * wp + 2 * d, 128)
    xf = jnp.pad(xp.reshape(n, cin, hp * wp),
                 ((0, 0), (0, 0), (0, lp - hp * wp)))
    xf = xf.astype(jnp.bfloat16)              # halve matmul-input DMA bytes

    th = _pick_row_tile(h, wp)
    nrt = h // th
    tile = th * wp
    single = nrt == 1

    if single:
        grid = (n,)
        xmap = lambda i: (i, 0, 0)
        wmap = lambda i: (0, 0, 0)
        bmap = lambda i: (0, 0)
        omap = lambda i: (i, 0, 0)
        dims = ("parallel",)
    else:
        grid = (n, nrt)
        xmap = lambda i, t: (i, 0, 0)        # padded image resident across t
        wmap = lambda i, t: (0, 0, 0)
        bmap = lambda i, t: (0, 0)
        omap = lambda i, t: (i, 0, t)
        dims = ("parallel", "parallel")

    in_specs = [
        pl.BlockSpec((1, cin, lp), xmap),
        pl.BlockSpec((9, cout, cin), wmap),
        pl.BlockSpec((cout, 1), bmap),
    ]
    args = [xf, p["w"], p["shift"]]

    has_res = residual is not None
    if has_res:
        # Widen the residual to the (H, Wp)-flattened grid so the add fuses.
        rw = jnp.pad(residual, ((0, 0), (0, 0), (0, 0), (0, wp - w)))
        args.append(rw.reshape(n, cout, h * wp))
        in_specs.append(pl.BlockSpec((1, cout, tile), omap))

    flops = 2 * n * h * wp * 9 * cin * cout
    transcendentals = n * h * wp * cout if activation == "tanh" else 0
    bytes_accessed = (n * cin * lp * 2 + 9 * cout * cin * 2
                      + n * cout * h * wp * 4 * (2 if has_res else 1))

    kernel = functools.partial(_conv_kernel, dil=d, wp=wp, th=th,
                               single_tile=single, activation=activation,
                               has_res=has_res)
    y_wide = pl.pallas_call(
        kernel,
        out_shape=jax.ShapeDtypeStruct((n, cout, h * wp), jnp.float32),
        grid=grid,
        in_specs=in_specs,
        out_specs=pl.BlockSpec((1, cout, tile), omap),
        compiler_params=pltpu.CompilerParams(
            dimension_semantics=dims,
            vmem_limit_bytes=32 * 1024 * 1024),
        cost_estimate=pl.CostEstimate(flops=flops,
                                      transcendentals=transcendentals,
                                      bytes_accessed=bytes_accessed),
    )(*args)
    # Drop the "wrap" columns introduced by the flat-shift im2col.
    return y_wide.reshape(n, cout, h, wp)[:, :, :, :w]


# ----------------------------------------------------------------------------
# Parameter construction (deterministic, synthetic; BN scale folded into W).
# ----------------------------------------------------------------------------
def make_conv_params(key, cin, cout, *, conv_bias, use_bn):
    k = jax.random.split(key, 6)
    w = jax.random.normal(k[0], (cout, cin, 3, 3), jnp.float32) * 0.05
    bias = (jax.random.normal(k[1], (cout,), jnp.float32) * 0.05
            if conv_bias else jnp.zeros((cout,), jnp.float32))
    if use_bn:
        gamma = 1.0 + 0.1 * jax.random.normal(k[2], (cout,), jnp.float32)
        beta = 0.1 * jax.random.normal(k[3], (cout,), jnp.float32)
        mean = 0.1 * jax.random.normal(k[4], (cout,), jnp.float32)
        var = 1.0 + 0.1 * jnp.abs(jax.random.normal(k[5], (cout,), jnp.float32))
        scale = gamma / jnp.sqrt(var + BN_EPS)
        shift = beta + (bias - mean) * scale
    else:
        scale = jnp.ones((cout,), jnp.float32)
        shift = bias
    # Fold the BN scale into the weights, reorder to tap-major (9, Cout, Cin).
    wf = w * scale[:, None, None, None]                       # (Cout,Cin,3,3)
    wf = jnp.transpose(wf, (2, 3, 0, 1)).reshape(9, cout, cin)
    return {"w": wf.astype(jnp.bfloat16),
            "shift": shift.reshape(cout, 1).astype(jnp.float32)}


def init_params(key, ngf, output_nc):
    keys = jax.random.split(key, 5)
    params = {}
    # 3 ResnetBlocks (dilations 1, 2, 4): Conv2d(bias=False) + BatchNorm2d.
    for bi in range(3):
        k1, k2 = jax.random.split(keys[bi])
        params[f"block{bi}_conv1"] = make_conv_params(
            k1, ngf, ngf, conv_bias=False, use_bn=True)
        params[f"block{bi}_conv2"] = make_conv_params(
            k2, ngf, ngf, conv_bias=False, use_bn=True)
    # ReflectionPad2d(2) + Conv2d(ngf, ngf//2, k=3, dilation=2, bias=True) + BN + ReLU
    params["head1"] = make_conv_params(
        keys[3], ngf, ngf // 2, conv_bias=True, use_bn=True)
    # ReflectionPad2d(1) + Conv2d(ngf//2, output_nc, k=3, bias=True) + Tanh
    params["head2"] = make_conv_params(
        keys[4], ngf // 2, output_nc, conv_bias=True, use_bn=False)
    return params


# ----------------------------------------------------------------------------
# Full forward pass (mirrors DilatedResnetGenerator.forward in eval mode).
# ----------------------------------------------------------------------------
def forward(params, x):
    # x: (N, ngf, H, W)  NCHW float32
    for bi, d in enumerate((1, 2, 4)):
        h = conv3x3(x, params[f"block{bi}_conv1"], dilation=d,
                    activation="relu")
        # Dropout(0.5) -> identity in eval mode.
        x = conv3x3(h, params[f"block{bi}_conv2"], dilation=d,
                    activation="none", residual=x)    # out = x + conv_block(x)
    x = conv3x3(x, params["head1"], dilation=2, activation="relu")
    x = conv3x3(x, params["head2"], dilation=1, activation="tanh")
    return x


if __name__ == "__main__":
    # The module's first layer is ResnetBlock(ngf), so the input must already
    # have ngf channels (input_nc == ngf for the forward to be valid).
    ngf = 8
    output_nc = 3
    batch, height, width = 2, 16, 16

    key = jax.random.PRNGKey(0)
    kx, kp = jax.random.split(key)

    x = jax.random.normal(kx, (batch, ngf, height, width), jnp.float32)
    params = init_params(kp, ngf, output_nc)

    y = jax.jit(forward)(params, x)
    jax.block_until_ready(y)

    assert y.shape == (batch, output_nc, height, width)
    assert bool(jnp.all(jnp.isfinite(y)))
    assert bool(jnp.all(jnp.abs(y) <= 1.0))            # tanh output range
    print("KERNEL_OK")
</pallas_src>

<mosaic_0001>
module attributes {stable_mosaic.version = 11 : i64} {
  func.func @_conv_kernel(%arg0: i32, %arg1: memref<1x8x384xbf16, #tpu.memory_space<vmem>>, %arg2: memref<9x8x8xbf16, #tpu.memory_space<vmem>>, %arg3: memref<8x1xf32, #tpu.memory_space<vmem>>, %arg4: memref<1x8x288xf32, #tpu.memory_space<vmem>>) attributes {dimension_semantics = [#tpu.dimension_semantics<parallel>], iteration_bounds = array<i64: 2>, scalar_prefetch = 0 : i64, scratch_operands = 0 : i64, tpu.core_type = #tpu.core_type<tc>, window_params = [{transform_indices = @transform_0, window_bounds = array<i64: 1, 8, 384>}, {pipeline_mode = #tpu.pipeline_mode<synchronous>, transform_indices = @transform_1, window_bounds = array<i64: 9, 8, 8>}, {pipeline_mode = #tpu.pipeline_mode<synchronous>, transform_indices = @transform_2, window_bounds = array<i64: 8, 1>}, {transform_indices = @transform_3, window_bounds = array<i64: 1, 8, 288>}]} {
    %cst = arith.constant 0.000000e+00 : f32
    %0 = vector.broadcast %cst : f32 to vector<8x288xf32>
    %c0 = arith.constant 0 : index
    %c0_0 = arith.constant 0 : index
    %c0_1 = arith.constant 0 : index
    %1 = vector.load %arg1[%c0, %c0_0, %c0_1] : memref<1x8x384xbf16, #tpu.memory_space<vmem>>, vector<1x8x288xbf16>
    %2 = vector.shape_cast %1 : vector<1x8x288xbf16> to vector<8x288xbf16>
    %c0_2 = arith.constant 0 : index
    %c0_3 = arith.constant 0 : index
    %c0_4 = arith.constant 0 : index
    %3 = vector.load %arg2[%c0_2, %c0_3, %c0_4] : memref<9x8x8xbf16, #tpu.memory_space<vmem>>, vector<1x8x8xbf16>
    %4 = vector.shape_cast %3 : vector<1x8x8xbf16> to vector<8x8xbf16>
    %cst_5 = arith.constant dense<0.000000e+00> : vector<8x288xf32>
    %5 = tpu.matmul %4, %2, %cst_5 {dimension_numbers = #tpu.dot_dimension_numbers<[1], [0], [0], [1], [0, 0, 1, 1], [], []>} : vector<8x8xbf16>, vector<8x288xbf16>, vector<8x288xf32> -> vector<8x288xf32>
    %6 = arith.addf %0, %5 : vector<8x288xf32>
    %c0_6 = arith.constant 0 : index
    %c0_7 = arith.constant 0 : index
    %c1 = arith.constant 1 : index
    %7 = vector.load %arg1[%c0_6, %c0_7, %c1] : memref<1x8x384xbf16, #tpu.memory_space<vmem>>, vector<1x8x288xbf16>
    %8 = vector.shape_cast %7 : vector<1x8x288xbf16> to vector<8x288xbf16>
    %c1_8 = arith.constant 1 : index
    %c0_9 = arith.constant 0 : index
    %c0_10 = arith.constant 0 : index
    %9 = vector.load %arg2[%c1_8, %c0_9, %c0_10] : memref<9x8x8xbf16, #tpu.memory_space<vmem>>, vector<1x8x8xbf16>
    %10 = vector.shape_cast %9 : vector<1x8x8xbf16> to vector<8x8xbf16>
    %cst_11 = arith.constant dense<0.000000e+00> : vector<8x288xf32>
    %11 = tpu.matmul %10, %8, %cst_11 {dimension_numbers = #tpu.dot_dimension_numbers<[1], [0], [0], [1], [0, 0, 1, 1], [], []>} : vector<8x8xbf16>, vector<8x288xbf16>, vector<8x288xf32> -> vector<8x288xf32>
    %12 = arith.addf %6, %11 : vector<8x288xf32>
    %c0_12 = arith.constant 0 : index
    %c0_13 = arith.constant 0 : index
    %c2 = arith.constant 2 : index
    %13 = vector.load %arg1[%c0_12, %c0_13, %c2] : memref<1x8x384xbf16, #tpu.memory_space<vmem>>, vector<1x8x288xbf16>
    %14 = vector.shape_cast %13 : vector<1x8x288xbf16> to vector<8x288xbf16>
    %c2_14 = arith.constant 2 : index
    %c0_15 = arith.constant 0 : index
    %c0_16 = arith.constant 0 : index
    %15 = vector.load %arg2[%c2_14, %c0_15, %c0_16] : memref<9x8x8xbf16, #tpu.memory_space<vmem>>, vector<1x8x8xbf16>
    %16 = vector.shape_cast %15 : vector<1x8x8xbf16> to vector<8x8xbf16>
    %cst_17 = arith.constant dense<0.000000e+00> : vector<8x288xf32>
    %17 = tpu.matmul %16, %14, %cst_17 {dimension_numbers = #tpu.dot_dimension_numbers<[1], [0], [0], [1], [0, 0, 1, 1], [], []>} : vector<8x8xbf16>, vector<8x288xbf16>, vector<8x288xf32> -> vector<8x288xf32>
    %18 = arith.addf %12, %17 : vector<8x288xf32>
    %c0_18 = arith.constant 0 : index
    %c0_19 = arith.constant 0 : index
    %c18 = arith.constant 18 : index
    %19 = vector.load %arg1[%c0_18, %c0_19, %c18] : memref<1x8x384xbf16, #tpu.memory_space<vmem>>, vector<1x8x288xbf16>
    %20 = vector.shape_cast %19 : vector<1x8x288xbf16> to vector<8x288xbf16>
    %c3 = arith.constant 3 : index
    %c0_20 = arith.constant 0 : index
    %c0_21 = arith.constant 0 : index
    %21 = vector.load %arg2[%c3, %c0_20, %c0_21] : memref<9x8x8xbf16, #tpu.memory_space<vmem>>, vector<1x8x8xbf16>
    %22 = vector.shape_cast %21 : vector<1x8x8xbf16> to vector<8x8xbf16>
    %cst_22 = arith.constant dense<0.000000e+00> : vector<8x288xf32>
    %23 = tpu.matmul %22, %20, %cst_22 {dimension_numbers = #tpu.dot_dimension_numbers<[1], [0], [0], [1], [0, 0, 1, 1], [], []>} : vector<8x8xbf16>, vector<8x288xbf16>, vector<8x288xf32> -> vector<8x288xf32>
    %24 = arith.addf %18, %23 : vector<8x288xf32>
    %c0_23 = arith.constant 0 : index
    %c0_24 = arith.constant 0 : index
    %c19 = arith.constant 19 : index
    %25 = vector.load %arg1[%c0_23, %c0_24, %c19] : memref<1x8x384xbf16, #tpu.memory_space<vmem>>, vector<1x8x288xbf16>
    %26 = vector.shape_cast %25 : vector<1x8x288xbf16> to vector<8x288xbf16>
    %c4 = arith.constant 4 : index
    %c0_25 = arith.constant 0 : index
    %c0_26 = arith.constant 0 : index
    %27 = vector.load %arg2[%c4, %c0_25, %c0_26] : memref<9x8x8xbf16, #tpu.memory_space<vmem>>, vector<1x8x8xbf16>
    %28 = vector.shape_cast %27 : vector<1x8x8xbf16> to vector<8x8xbf16>
    %cst_27 = arith.constant dense<0.000000e+00> : vector<8x288xf32>
    %29 = tpu.matmul %28, %26, %cst_27 {dimension_numbers = #tpu.dot_dimension_numbers<[1], [0], [0], [1], [0, 0, 1, 1], [], []>} : vector<8x8xbf16>, vector<8x288xbf16>, vector<8x288xf32> -> vector<8x288xf32>
    %30 = arith.addf %24, %29 : vector<8x288xf32>
    %c0_28 = arith.constant 0 : index
    %c0_29 = arith.constant 0 : index
    %c20 = arith.constant 20 : index
    %31 = vector.load %arg1[%c0_28, %c0_29, %c20] : memref<1x8x384xbf16, #tpu.memory_space<vmem>>, vector<1x8x288xbf16>
    %32 = vector.shape_cast %31 : vector<1x8x288xbf16> to vector<8x288xbf16>
    %c5 = arith.constant 5 : index
    %c0_30 = arith.constant 0 : index
    %c0_31 = arith.constant 0 : index
    %33 = vector.load %arg2[%c5, %c0_30, %c0_31] : memref<9x8x8xbf16, #tpu.memory_space<vmem>>, vector<1x8x8xbf16>
    %34 = vector.shape_cast %33 : vector<1x8x8xbf16> to vector<8x8xbf16>
    %cst_32 = arith.constant dense<0.000000e+00> : vector<8x288xf32>
    %35 = tpu.matmul %34, %32, %cst_32 {dimension_numbers = #tpu.dot_dimension_numbers<[1], [0], [0], [1], [0, 0, 1, 1], [], []>} : vector<8x8xbf16>, vector<8x288xbf16>, vector<8x288xf32> -> vector<8x288xf32>
    %36 = arith.addf %30, %35 : vector<8x288xf32>
    %c0_33 = arith.constant 0 : index
    %c0_34 = arith.constant 0 : index
    %c36 = arith.constant 36 : index
    %37 = vector.load %arg1[%c0_33, %c0_34, %c36] : memref<1x8x384xbf16, #tpu.memory_space<vmem>>, vector<1x8x288xbf16>
    %38 = vector.shape_cast %37 : vector<1x8x288xbf16> to vector<8x288xbf16>
    %c6 = arith.constant 6 : index
    %c0_35 = arith.constant 0 : index
    %c0_36 = arith.constant 0 : index
    %39 = vector.load %arg2[%c6, %c0_35, %c0_36] : memref<9x8x8xbf16, #tpu.memory_space<vmem>>, vector<1x8x8xbf16>
    %40 = vector.shape_cast %39 : vector<1x8x8xbf16> to vector<8x8xbf16>
    %cst_37 = arith.constant dense<0.000000e+00> : vector<8x288xf32>
    %41 = tpu.matmul %40, %38, %cst_37 {dimension_numbers = #tpu.dot_dimension_numbers<[1], [0], [0], [1], [0, 0, 1, 1], [], []>} : vector<8x8xbf16>, vector<8x288xbf16>, vector<8x288xf32> -> vector<8x288xf32>
    %42 = arith.addf %36, %41 : vector<8x288xf32>
    %c0_38 = arith.constant 0 : index
    %c0_39 = arith.constant 0 : index
    %c37 = arith.constant 37 : index
    %43 = vector.load %arg1[%c0_38, %c0_39, %c37] : memref<1x8x384xbf16, #tpu.memory_space<vmem>>, vector<1x8x288xbf16>
    %44 = vector.shape_cast %43 : vector<1x8x288xbf16> to vector<8x288xbf16>
    %c7 = arith.constant 7 : index
    %c0_40 = arith.constant 0 : index
    %c0_41 = arith.constant 0 : index
    %45 = vector.load %arg2[%c7, %c0_40, %c0_41] : memref<9x8x8xbf16, #tpu.memory_space<vmem>>, vector<1x8x8xbf16>
    %46 = vector.shape_cast %45 : vector<1x8x8xbf16> to vector<8x8xbf16>
    %cst_42 = arith.constant dense<0.000000e+00> : vector<8x288xf32>
    %47 = tpu.matmul %46, %44, %cst_42 {dimension_numbers = #tpu.dot_dimension_numbers<[1], [0], [0], [1], [0, 0, 1, 1], [], []>} : vector<8x8xbf16>, vector<8x288xbf16>, vector<8x288xf32> -> vector<8x288xf32>
    %48 = arith.addf %42, %47 : vector<8x288xf32>
    %c0_43 = arith.constant 0 : index
    %c0_44 = arith.constant 0 : index
    %c38 = arith.constant 38 : index
    %49 = vector.load %arg1[%c0_43, %c0_44, %c38] : memref<1x8x384xbf16, #tpu.memory_space<vmem>>, vector<1x8x288xbf16>
    %50 = vector.shape_cast %49 : vector<1x8x288xbf16> to vector<8x288xbf16>
    %c8 = arith.constant 8 : index
    %c0_45 = arith.constant 0 : index
    %c0_46 = arith.constant 0 : index
    %51 = vector.load %arg2[%c8, %c0_45, %c0_46] : memref<9x8x8xbf16, #tpu.memory_space<vmem>>, vector<1x8x8xbf16>
    %52 = vector.shape_cast %51 : vector<1x8x8xbf16> to vector<8x8xbf16>
    %cst_47 = arith.constant dense<0.000000e+00> : vector<8x288xf32>
    %53 = tpu.matmul %52, %50, %cst_47 {dimension_numbers = #tpu.dot_dimension_numbers<[1], [0], [0], [1], [0, 0, 1, 1], [], []>} : vector<8x8xbf16>, vector<8x288xbf16>, vector<8x288xf32> -> vector<8x288xf32>
    %54 = arith.addf %48, %53 : vector<8x288xf32>
    %c0_48 = arith.constant 0 : index
    %c0_49 = arith.constant 0 : index
    %55 = vector.load %arg3[%c0_48, %c0_49] : memref<8x1xf32, #tpu.memory_space<vmem>>, vector<8x1xf32>
    %56 = vector.broadcast %55 : vector<8x1xf32> to vector<8x288xf32>
    %57 = arith.addf %54, %56 : vector<8x288xf32>
    %cst_50 = arith.constant 0.000000e+00 : f32
    %58 = vector.broadcast %cst_50 : f32 to vector<8x288xf32>
    %59 = arith.maximumf %57, %58 : vector<8x288xf32>
    %c0_51 = arith.constant 0 : index
    %c0_52 = arith.constant 0 : index
    %c0_53 = arith.constant 0 : index
    %60 = vector.load %arg4[%c0_51, %c0_52, %c0_53] : memref<1x8x288xf32, #tpu.memory_space<vmem>>, vector<1x8x288xf32>
    %61 = vector.shape_cast %60 : vector<1x8x288xf32> to vector<8x288xf32>
    %62 = vector.shape_cast %59 : vector<8x288xf32> to vector<1x8x288xf32>
    tpu.vector_store %arg4[%c0_51, %c0_52, %c0_53], %62 {strides = array<i32>} : memref<1x8x288xf32, #tpu.memory_space<vmem>>, vector<1x8x288xf32>,
    return
  }
  func.func @transform_0(%arg0: i32) -> (i32, i32, i32) {
    %c0_i32 = arith.constant 0 : i32
    %c0_i32_0 = arith.constant 0 : i32
    %c0_i32_1 = arith.constant 0 : i32
    return %arg0, %c0_i32, %c0_i32_0 : i32, i32, i32
  }
  func.func @transform_1(%arg0: i32) -> (i32, i32, i32) {
    %c0_i32 = arith.constant 0 : i32
    %c0_i32_0 = arith.constant 0 : i32
    %c0_i32_1 = arith.constant 0 : i32
    %c0_i32_2 = arith.constant 0 : i32
    return %c0_i32, %c0_i32_0, %c0_i32_1 : i32, i32, i32
  }
  func.func @transform_2(%arg0: i32) -> (i32, i32) {
    %c0_i32 = arith.constant 0 : i32
    %c0_i32_0 = arith.constant 0 : i32
    %c0_i32_1 = arith.constant 0 : i32
    return %c0_i32, %c0_i32_0 : i32, i32
  }
  func.func @transform_3(%arg0: i32) -> (i32, i32, i32) {
    %c0_i32 = arith.constant 0 : i32
    %c0_i32_0 = arith.constant 0 : i32
    %c0_i32_1 = arith.constant 0 : i32
    return %arg0, %c0_i32, %c0_i32_0 : i32, i32, i32
  }
}

module attributes {stable_mosaic.version = 11 : i64} {
  func.func @_conv_kernel(%arg0: i32, %arg1: memref<1x8x384xbf16, #tpu.memory_space<vmem>>, %arg2: memref<9x8x8xbf16, #tpu.memory_space<vmem>>, %arg3: memref<8x1xf32, #tpu.memory_space<vmem>>, %arg4: memref<1x8x288xf32, #tpu.memory_space<vmem>>, %arg5: memref<1x8x288xf32, #tpu.memory_space<vmem>>) attributes {dimension_semantics = [#tpu.dimension_semantics<parallel>], iteration_bounds = array<i64: 2>, scalar_prefetch = 0 : i64, scratch_operands = 0 : i64, tpu.core_type = #tpu.core_type<tc>, window_params = [{transform_indices = @transform_0, window_bounds = array<i64: 1, 8, 384>}, {pipeline_mode = #tpu.pipeline_mode<synchronous>, transform_indices = @transform_1, window_bounds = array<i64: 9, 8, 8>}, {pipeline_mode = #tpu.pipeline_mode<synchronous>, transform_indices = @transform_2, window_bounds = array<i64: 8, 1>}, {transform_indices = @transform_3, window_bounds = array<i64: 1, 8, 288>}, {transform_indices = @transform_4, window_bounds = array<i64: 1, 8, 288>}]} {
    %cst = arith.constant 0.000000e+00 : f32
    %0 = vector.broadcast %cst : f32 to vector<8x288xf32>
    %c0 = arith.constant 0 : index
    %c0_0 = arith.constant 0 : index
    %c0_1 = arith.constant 0 : index
    %1 = vector.load %arg1[%c0, %c0_0, %c0_1] : memref<1x8x384xbf16, #tpu.memory_space<vmem>>, vector<1x8x288xbf16>
    %2 = vector.shape_cast %1 : vector<1x8x288xbf16> to vector<8x288xbf16>
    %c0_2 = arith.constant 0 : index
    %c0_3 = arith.constant 0 : index
    %c0_4 = arith.constant 0 : index
    %3 = vector.load %arg2[%c0_2, %c0_3, %c0_4] : memref<9x8x8xbf16, #tpu.memory_space<vmem>>, vector<1x8x8xbf16>
    %4 = vector.shape_cast %3 : vector<1x8x8xbf16> to vector<8x8xbf16>
    %cst_5 = arith.constant dense<0.000000e+00> : vector<8x288xf32>
    %5 = tpu.matmul %4, %2, %cst_5 {dimension_numbers = #tpu.dot_dimension_numbers<[1], [0], [0], [1], [0, 0, 1, 1], [], []>} : vector<8x8xbf16>, vector<8x288xbf16>, vector<8x288xf32> -> vector<8x288xf32>
    %6 = arith.addf %0, %5 : vector<8x288xf32>
    %c0_6 = arith.constant 0 : index
    %c0_7 = arith.constant 0 : index
    %c1 = arith.constant 1 : index
    %7 = vector.load %arg1[%c0_6, %c0_7, %c1] : memref<1x8x384xbf16, #tpu.memory_space<vmem>>, vector<1x8x288xbf16>
    %8 = vector.shape_cast %7 : vector<1x8x288xbf16> to vector<8x288xbf16>
    %c1_8 = arith.constant 1 : index
    %c0_9 = arith.constant 0 : index
    %c0_10 = arith.constant 0 : index
    %9 = vector.load %arg2[%c1_8, %c0_9, %c0_10] : memref<9x8x8xbf16, #tpu.memory_space<vmem>>, vector<1x8x8xbf16>
    %10 = vector.shape_cast %9 : vector<1x8x8xbf16> to vector<8x8xbf16>
    %cst_11 = arith.constant dense<0.000000e+00> : vector<8x288xf32>
    %11 = tpu.matmul %10, %8, %cst_11 {dimension_numbers = #tpu.dot_dimension_numbers<[1], [0], [0], [1], [0, 0, 1, 1], [], []>} : vector<8x8xbf16>, vector<8x288xbf16>, vector<8x288xf32> -> vector<8x288xf32>
    %12 = arith.addf %6, %11 : vector<8x288xf32>
    %c0_12 = arith.constant 0 : index
    %c0_13 = arith.constant 0 : index
    %c2 = arith.constant 2 : index
    %13 = vector.load %arg1[%c0_12, %c0_13, %c2] : memref<1x8x384xbf16, #tpu.memory_space<vmem>>, vector<1x8x288xbf16>
    %14 = vector.shape_cast %13 : vector<1x8x288xbf16> to vector<8x288xbf16>
    %c2_14 = arith.constant 2 : index
    %c0_15 = arith.constant 0 : index
    %c0_16 = arith.constant 0 : index
    %15 = vector.load %arg2[%c2_14, %c0_15, %c0_16] : memref<9x8x8xbf16, #tpu.memory_space<vmem>>, vector<1x8x8xbf16>
    %16 = vector.shape_cast %15 : vector<1x8x8xbf16> to vector<8x8xbf16>
    %cst_17 = arith.constant dense<0.000000e+00> : vector<8x288xf32>
    %17 = tpu.matmul %16, %14, %cst_17 {dimension_numbers = #tpu.dot_dimension_numbers<[1], [0], [0], [1], [0, 0, 1, 1], [], []>} : vector<8x8xbf16>, vector<8x288xbf16>, vector<8x288xf32> -> vector<8x288xf32>
    %18 = arith.addf %12, %17 : vector<8x288xf32>
    %c0_18 = arith.constant 0 : index
    %c0_19 = arith.constant 0 : index
    %c18 = arith.constant 18 : index
    %19 = vector.load %arg1[%c0_18, %c0_19, %c18] : memref<1x8x384xbf16, #tpu.memory_space<vmem>>, vector<1x8x288xbf16>
    %20 = vector.shape_cast %19 : vector<1x8x288xbf16> to vector<8x288xbf16>
    %c3 = arith.constant 3 : index
    %c0_20 = arith.constant 0 : index
    %c0_21 = arith.constant 0 : index
    %21 = vector.load %arg2[%c3, %c0_20, %c0_21] : memref<9x8x8xbf16, #tpu.memory_space<vmem>>, vector<1x8x8xbf16>
    %22 = vector.shape_cast %21 : vector<1x8x8xbf16> to vector<8x8xbf16>
    %cst_22 = arith.constant dense<0.000000e+00> : vector<8x288xf32>
    %23 = tpu.matmul %22, %20, %cst_22 {dimension_numbers = #tpu.dot_dimension_numbers<[1], [0], [0], [1], [0, 0, 1, 1], [], []>} : vector<8x8xbf16>, vector<8x288xbf16>, vector<8x288xf32> -> vector<8x288xf32>
    %24 = arith.addf %18, %23 : vector<8x288xf32>
    %c0_23 = arith.constant 0 : index
    %c0_24 = arith.constant 0 : index
    %c19 = arith.constant 19 : index
    %25 = vector.load %arg1[%c0_23, %c0_24, %c19] : memref<1x8x384xbf16, #tpu.memory_space<vmem>>, vector<1x8x288xbf16>
    %26 = vector.shape_cast %25 : vector<1x8x288xbf16> to vector<8x288xbf16>
    %c4 = arith.constant 4 : index
    %c0_25 = arith.constant 0 : index
    %c0_26 = arith.constant 0 : index
    %27 = vector.load %arg2[%c4, %c0_25, %c0_26] : memref<9x8x8xbf16, #tpu.memory_space<vmem>>, vector<1x8x8xbf16>
    %28 = vector.shape_cast %27 : vector<1x8x8xbf16> to vector<8x8xbf16>
    %cst_27 = arith.constant dense<0.000000e+00> : vector<8x288xf32>
    %29 = tpu.matmul %28, %26, %cst_27 {dimension_numbers = #tpu.dot_dimension_numbers<[1], [0], [0], [1], [0, 0, 1, 1], [], []>} : vector<8x8xbf16>, vector<8x288xbf16>, vector<8x288xf32> -> vector<8x288xf32>
    %30 = arith.addf %24, %29 : vector<8x288xf32>
    %c0_28 = arith.constant 0 : index
    %c0_29 = arith.constant 0 : index
    %c20 = arith.constant 20 : index
    %31 = vector.load %arg1[%c0_28, %c0_29, %c20] : memref<1x8x384xbf16, #tpu.memory_space<vmem>>, vector<1x8x288xbf16>
    %32 = vector.shape_cast %31 : vector<1x8x288xbf16> to vector<8x288xbf16>
    %c5 = arith.constant 5 : index
    %c0_30 = arith.constant 0 : index
    %c0_31 = arith.constant 0 : index
    %33 = vector.load %arg2[%c5, %c0_30, %c0_31] : memref<9x8x8xbf16, #tpu.memory_space<vmem>>, vector<1x8x8xbf16>
    %34 = vector.shape_cast %33 : vector<1x8x8xbf16> to vector<8x8xbf16>
    %cst_32 = arith.constant dense<0.000000e+00> : vector<8x288xf32>
    %35 = tpu.matmul %34, %32, %cst_32 {dimension_numbers = #tpu.dot_dimension_numbers<[1], [0], [0], [1], [0, 0, 1, 1], [], []>} : vector<8x8xbf16>, vector<8x288xbf16>, vector<8x288xf32> -> vector<8x288xf32>
    %36 = arith.addf %30, %35 : vector<8x288xf32>
    %c0_33 = arith.constant 0 : index
    %c0_34 = arith.constant 0 : index
    %c36 = arith.constant 36 : index
    %37 = vector.load %arg1[%c0_33, %c0_34, %c36] : memref<1x8x384xbf16, #tpu.memory_space<vmem>>, vector<1x8x288xbf16>
    %38 = vector.shape_cast %37 : vector<1x8x288xbf16> to vector<8x288xbf16>
    %c6 = arith.constant 6 : index
    %c0_35 = arith.constant 0 : index
    %c0_36 = arith.constant 0 : index
    %39 = vector.load %arg2[%c6, %c0_35, %c0_36] : memref<9x8x8xbf16, #tpu.memory_space<vmem>>, vector<1x8x8xbf16>
    %40 = vector.shape_cast %39 : vector<1x8x8xbf16> to vector<8x8xbf16>
    %cst_37 = arith.constant dense<0.000000e+00> : vector<8x288xf32>
    %41 = tpu.matmul %40, %38, %cst_37 {dimension_numbers = #tpu.dot_dimension_numbers<[1], [0], [0], [1], [0, 0, 1, 1], [], []>} : vector<8x8xbf16>, vector<8x288xbf16>, vector<8x288xf32> -> vector<8x288xf32>
    %42 = arith.addf %36, %41 : vector<8x288xf32>
    %c0_38 = arith.constant 0 : index
    %c0_39 = arith.constant 0 : index
    %c37 = arith.constant 37 : index
    %43 = vector.load %arg1[%c0_38, %c0_39, %c37] : memref<1x8x384xbf16, #tpu.memory_space<vmem>>, vector<1x8x288xbf16>
    %44 = vector.shape_cast %43 : vector<1x8x288xbf16> to vector<8x288xbf16>
    %c7 = arith.constant 7 : index
    %c0_40 = arith.constant 0 : index
    %c0_41 = arith.constant 0 : index
    %45 = vector.load %arg2[%c7, %c0_40, %c0_41] : memref<9x8x8xbf16, #tpu.memory_space<vmem>>, vector<1x8x8xbf16>
    %46 = vector.shape_cast %45 : vector<1x8x8xbf16> to vector<8x8xbf16>
    %cst_42 = arith.constant dense<0.000000e+00> : vector<8x288xf32>
    %47 = tpu.matmul %46, %44, %cst_42 {dimension_numbers = #tpu.dot_dimension_numbers<[1], [0], [0], [1], [0, 0, 1, 1], [], []>} : vector<8x8xbf16>, vector<8x288xbf16>, vector<8x288xf32> -> vector<8x288xf32>
    %48 = arith.addf %42, %47 : vector<8x288xf32>
    %c0_43 = arith.constant 0 : index
    %c0_44 = arith.constant 0 : index
    %c38 = arith.constant 38 : index
    %49 = vector.load %arg1[%c0_43, %c0_44, %c38] : memref<1x8x384xbf16, #tpu.memory_space<vmem>>, vector<1x8x288xbf16>
    %50 = vector.shape_cast %49 : vector<1x8x288xbf16> to vector<8x288xbf16>
    %c8 = arith.constant 8 : index
    %c0_45 = arith.constant 0 : index
    %c0_46 = arith.constant 0 : index
    %51 = vector.load %arg2[%c8, %c0_45, %c0_46] : memref<9x8x8xbf16, #tpu.memory_space<vmem>>, vector<1x8x8xbf16>
    %52 = vector.shape_cast %51 : vector<1x8x8xbf16> to vector<8x8xbf16>
    %cst_47 = arith.constant dense<0.000000e+00> : vector<8x288xf32>
    %53 = tpu.matmul %52, %50, %cst_47 {dimension_numbers = #tpu.dot_dimension_numbers<[1], [0], [0], [1], [0, 0, 1, 1], [], []>} : vector<8x8xbf16>, vector<8x288xbf16>, vector<8x288xf32> -> vector<8x288xf32>
    %54 = arith.addf %48, %53 : vector<8x288xf32>
    %c0_48 = arith.constant 0 : index
    %c0_49 = arith.constant 0 : index
    %55 = vector.load %arg3[%c0_48, %c0_49] : memref<8x1xf32, #tpu.memory_space<vmem>>, vector<8x1xf32>
    %56 = vector.broadcast %55 : vector<8x1xf32> to vector<8x288xf32>
    %57 = arith.addf %54, %56 : vector<8x288xf32>
    %c0_50 = arith.constant 0 : index
    %c0_51 = arith.constant 0 : index
    %c0_52 = arith.constant 0 : index
    %58 = vector.load %arg4[%c0_50, %c0_51, %c0_52] : memref<1x8x288xf32, #tpu.memory_space<vmem>>, vector<1x8x288xf32>
    %59 = vector.shape_cast %58 : vector<1x8x288xf32> to vector<8x288xf32>
    %60 = arith.addf %57, %59 : vector<8x288xf32>
    %c0_53 = arith.constant 0 : index
    %c0_54 = arith.constant 0 : index
    %c0_55 = arith.constant 0 : index
    %61 = vector.load %arg5[%c0_53, %c0_54, %c0_55] : memref<1x8x288xf32, #tpu.memory_space<vmem>>, vector<1x8x288xf32>
    %62 = vector.shape_cast %61 : vector<1x8x288xf32> to vector<8x288xf32>
    %63 = vector.shape_cast %60 : vector<8x288xf32> to vector<1x8x288xf32>
    tpu.vector_store %arg5[%c0_53, %c0_54, %c0_55], %63 {strides = array<i32>} : memref<1x8x288xf32, #tpu.memory_space<vmem>>, vector<1x8x288xf32>,
    return
  }
  func.func @transform_0(%arg0: i32) -> (i32, i32, i32) {
    %c0_i32 = arith.constant 0 : i32
    %c0_i32_0 = arith.constant 0 : i32
    %c0_i32_1 = arith.constant 0 : i32
    return %arg0, %c0_i32, %c0_i32_0 : i32, i32, i32
  }
  func.func @transform_1(%arg0: i32) -> (i32, i32, i32) {
    %c0_i32 = arith.constant 0 : i32
    %c0_i32_0 = arith.constant 0 : i32
    %c0_i32_1 = arith.constant 0 : i32
    %c0_i32_2 = arith.constant 0 : i32
    return %c0_i32, %c0_i32_0, %c0_i32_1 : i32, i32, i32
  }
  func.func @transform_2(%arg0: i32) -> (i32, i32) {
    %c0_i32 = arith.constant 0 : i32
    %c0_i32_0 = arith.constant 0 : i32
    %c0_i32_1 = arith.constant 0 : i32
    return %c0_i32, %c0_i32_0 : i32, i32
  }
  func.func @transform_3(%arg0: i32) -> (i32, i32, i32) {
    %c0_i32 = arith.constant 0 : i32
    %c0_i32_0 = arith.constant 0 : i32
    %c0_i32_1 = arith.constant 0 : i32
    return %arg0, %c0_i32, %c0_i32_0 : i32, i32, i32
  }
  func.func @transform_4(%arg0: i32) -> (i32, i32, i32) {
    %c0_i32 = arith.constant 0 : i32
    %c0_i32_0 = arith.constant 0 : i32
    %c0_i32_1 = arith.constant 0 : i32
    return %arg0, %c0_i32, %c0_i32_0 : i32, i32, i32
  }
}

module attributes {stable_mosaic.version = 11 : i64} {
  func.func @_conv_kernel(%arg0: i32, %arg1: memref<1x8x512xbf16, #tpu.memory_space<vmem>>, %arg2: memref<9x8x8xbf16, #tpu.memory_space<vmem>>, %arg3: memref<8x1xf32, #tpu.memory_space<vmem>>, %arg4: memref<1x8x320xf32, #tpu.memory_space<vmem>>) attributes {dimension_semantics = [#tpu.dimension_semantics<parallel>], iteration_bounds = array<i64: 2>, scalar_prefetch = 0 : i64, scratch_operands = 0 : i64, tpu.core_type = #tpu.core_type<tc>, window_params = [{transform_indices = @transform_0, window_bounds = array<i64: 1, 8, 512>}, {pipeline_mode = #tpu.pipeline_mode<synchronous>, transform_indices = @transform_1, window_bounds = array<i64: 9, 8, 8>}, {pipeline_mode = #tpu.pipeline_mode<synchronous>, transform_indices = @transform_2, window_bounds = array<i64: 8, 1>}, {transform_indices = @transform_3, window_bounds = array<i64: 1, 8, 320>}]} {
    %cst = arith.constant 0.000000e+00 : f32
    %0 = vector.broadcast %cst : f32 to vector<8x320xf32>
    %c0 = arith.constant 0 : index
    %c0_0 = arith.constant 0 : index
    %c0_1 = arith.constant 0 : index
    %1 = vector.load %arg1[%c0, %c0_0, %c0_1] : memref<1x8x512xbf16, #tpu.memory_space<vmem>>, vector<1x8x320xbf16>
    %2 = vector.shape_cast %1 : vector<1x8x320xbf16> to vector<8x320xbf16>
    %c0_2 = arith.constant 0 : index
    %c0_3 = arith.constant 0 : index
    %c0_4 = arith.constant 0 : index
    %3 = vector.load %arg2[%c0_2, %c0_3, %c0_4] : memref<9x8x8xbf16, #tpu.memory_space<vmem>>, vector<1x8x8xbf16>
    %4 = vector.shape_cast %3 : vector<1x8x8xbf16> to vector<8x8xbf16>
    %cst_5 = arith.constant dense<0.000000e+00> : vector<8x320xf32>
    %5 = tpu.matmul %4, %2, %cst_5 {dimension_numbers = #tpu.dot_dimension_numbers<[1], [0], [0], [1], [0, 0, 1, 1], [], []>} : vector<8x8xbf16>, vector<8x320xbf16>, vector<8x320xf32> -> vector<8x320xf32>
    %6 = arith.addf %0, %5 : vector<8x320xf32>
    %c0_6 = arith.constant 0 : index
    %c0_7 = arith.constant 0 : index
    %c2 = arith.constant 2 : index
    %7 = vector.load %arg1[%c0_6, %c0_7, %c2] : memref<1x8x512xbf16, #tpu.memory_space<vmem>>, vector<1x8x320xbf16>
    %8 = vector.shape_cast %7 : vector<1x8x320xbf16> to vector<8x320xbf16>
    %c1 = arith.constant 1 : index
    %c0_8 = arith.constant 0 : index
    %c0_9 = arith.constant 0 : index
    %9 = vector.load %arg2[%c1, %c0_8, %c0_9] : memref<9x8x8xbf16, #tpu.memory_space<vmem>>, vector<1x8x8xbf16>
    %10 = vector.shape_cast %9 : vector<1x8x8xbf16> to vector<8x8xbf16>
    %cst_10 = arith.constant dense<0.000000e+00> : vector<8x320xf32>
    %11 = tpu.matmul %10, %8, %cst_10 {dimension_numbers = #tpu.dot_dimension_numbers<[1], [0], [0], [1], [0, 0, 1, 1], [], []>} : vector<8x8xbf16>, vector<8x320xbf16>, vector<8x320xf32> -> vector<8x320xf32>
    %12 = arith.addf %6, %11 : vector<8x320xf32>
    %c0_11 = arith.constant 0 : index
    %c0_12 = arith.constant 0 : index
    %c4 = arith.constant 4 : index
    %13 = vector.load %arg1[%c0_11, %c0_12, %c4] : memref<1x8x512xbf16, #tpu.memory_space<vmem>>, vector<1x8x320xbf16>
    %14 = vector.shape_cast %13 : vector<1x8x320xbf16> to vector<8x320xbf16>
    %c2_13 = arith.constant 2 : index
    %c0_14 = arith.constant 0 : index
    %c0_15 = arith.constant 0 : index
    %15 = vector.load %arg2[%c2_13, %c0_14, %c0_15] : memref<9x8x8xbf16, #tpu.memory_space<vmem>>, vector<1x8x8xbf16>
    %16 = vector.shape_cast %15 : vector<1x8x8xbf16> to vector<8x8xbf16>
    %cst_16 = arith.constant dense<0.000000e+00> : vector<8x320xf32>
    %17 = tpu.matmul %16, %14, %cst_16 {dimension_numbers = #tpu.dot_dimension_numbers<[1], [0], [0], [1], [0, 0, 1, 1], [], []>} : vector<8x8xbf16>, vector<8x320xbf16>, vector<8x320xf32> -> vector<8x320xf32>
    %18 = arith.addf %12, %17 : vector<8x320xf32>
    %c0_17 = arith.constant 0 : index
    %c0_18 = arith.constant 0 : index
    %c40 = arith.constant 40 : index
    %19 = vector.load %arg1[%c0_17, %c0_18, %c40] : memref<1x8x512xbf16, #tpu.memory_space<vmem>>, vector<1x8x320xbf16>
    %20 = vector.shape_cast %19 : vector<1x8x320xbf16> to vector<8x320xbf16>
    %c3 = arith.constant 3 : index
    %c0_19 = arith.constant 0 : index
    %c0_20 = arith.constant 0 : index
    %21 = vector.load %arg2[%c3, %c0_19, %c0_20] : memref<9x8x8xbf16, #tpu.memory_space<vmem>>, vector<1x8x8xbf16>
    %22 = vector.shape_cast %21 : vector<1x8x8xbf16> to vector<8x8xbf16>
    %cst_21 = arith.constant dense<0.000000e+00> : vector<8x320xf32>
    %23 = tpu.matmul %22, %20, %cst_21 {dimension_numbers = #tpu.dot_dimension_numbers<[1], [0], [0], [1], [0, 0, 1, 1], [], []>} : vector<8x8xbf16>, vector<8x320xbf16>, vector<8x320xf32> -> vector<8x320xf32>
    %24 = arith.addf %18, %23 : vector<8x320xf32>
    %c0_22 = arith.constant 0 : index
    %c0_23 = arith.constant 0 : index
    %c42 = arith.constant 42 : index
    %25 = vector.load %arg1[%c0_22, %c0_23, %c42] : memref<1x8x512xbf16, #tpu.memory_space<vmem>>, vector<1x8x320xbf16>
    %26 = vector.shape_cast %25 : vector<1x8x320xbf16> to vector<8x320xbf16>
    %c4_24 = arith.constant 4 : index
    %c0_25 = arith.constant 0 : index
    %c0_26 = arith.constant 0 : index
    %27 = vector.load %arg2[%c4_24, %c0_25, %c0_26] : memref<9x8x8xbf16, #tpu.memory_space<vmem>>, vector<1x8x8xbf16>
    %28 = vector.shape_cast %27 : vector<1x8x8xbf16> to vector<8x8xbf16>
    %cst_27 = arith.constant dense<0.000000e+00> : vector<8x320xf32>
    %29 = tpu.matmul %28, %26, %cst_27 {dimension_numbers = #tpu.dot_dimension_numbers<[1], [0], [0], [1], [0, 0, 1, 1], [], []>} : vector<8x8xbf16>, vector<8x320xbf16>, vector<8x320xf32> -> vector<8x320xf32>
    %30 = arith.addf %24, %29 : vector<8x320xf32>
    %c0_28 = arith.constant 0 : index
    %c0_29 = arith.constant 0 : index
    %c44 = arith.constant 44 : index
    %31 = vector.load %arg1[%c0_28, %c0_29, %c44] : memref<1x8x512xbf16, #tpu.memory_space<vmem>>, vector<1x8x320xbf16>
    %32 = vector.shape_cast %31 : vector<1x8x320xbf16> to vector<8x320xbf16>
    %c5 = arith.constant 5 : index
    %c0_30 = arith.constant 0 : index
    %c0_31 = arith.constant 0 : index
    %33 = vector.load %arg2[%c5, %c0_30, %c0_31] : memref<9x8x8xbf16, #tpu.memory_space<vmem>>, vector<1x8x8xbf16>
    %34 = vector.shape_cast %33 : vector<1x8x8xbf16> to vector<8x8xbf16>
    %cst_32 = arith.constant dense<0.000000e+00> : vector<8x320xf32>
    %35 = tpu.matmul %34, %32, %cst_32 {dimension_numbers = #tpu.dot_dimension_numbers<[1], [0], [0], [1], [0, 0, 1, 1], [], []>} : vector<8x8xbf16>, vector<8x320xbf16>, vector<8x320xf32> -> vector<8x320xf32>
    %36 = arith.addf %30, %35 : vector<8x320xf32>
    %c0_33 = arith.constant 0 : index
    %c0_34 = arith.constant 0 : index
    %c80 = arith.constant 80 : index
    %37 = vector.load %arg1[%c0_33, %c0_34, %c80] : memref<1x8x512xbf16, #tpu.memory_space<vmem>>, vector<1x8x320xbf16>
    %38 = vector.shape_cast %37 : vector<1x8x320xbf16> to vector<8x320xbf16>
    %c6 = arith.constant 6 : index
    %c0_35 = arith.constant 0 : index
    %c0_36 = arith.constant 0 : index
    %39 = vector.load %arg2[%c6, %c0_35, %c0_36] : memref<9x8x8xbf16, #tpu.memory_space<vmem>>, vector<1x8x8xbf16>
    %40 = vector.shape_cast %39 : vector<1x8x8xbf16> to vector<8x8xbf16>
    %cst_37 = arith.constant dense<0.000000e+00> : vector<8x320xf32>
    %41 = tpu.matmul %40, %38, %cst_37 {dimension_numbers = #tpu.dot_dimension_numbers<[1], [0], [0], [1], [0, 0, 1, 1], [], []>} : vector<8x8xbf16>, vector<8x320xbf16>, vector<8x320xf32> -> vector<8x320xf32>
    %42 = arith.addf %36, %41 : vector<8x320xf32>
    %c0_38 = arith.constant 0 : index
    %c0_39 = arith.constant 0 : index
    %c82 = arith.constant 82 : index
    %43 = vector.load %arg1[%c0_38, %c0_39, %c82] : memref<1x8x512xbf16, #tpu.memory_space<vmem>>, vector<1x8x320xbf16>
    %44 = vector.shape_cast %43 : vector<1x8x320xbf16> to vector<8x320xbf16>
    %c7 = arith.constant 7 : index
    %c0_40 = arith.constant 0 : index
    %c0_41 = arith.constant 0 : index
    %45 = vector.load %arg2[%c7, %c0_40, %c0_41] : memref<9x8x8xbf16, #tpu.memory_space<vmem>>, vector<1x8x8xbf16>
    %46 = vector.shape_cast %45 : vector<1x8x8xbf16> to vector<8x8xbf16>
    %cst_42 = arith.constant dense<0.000000e+00> : vector<8x320xf32>
    %47 = tpu.matmul %46, %44, %cst_42 {dimension_numbers = #tpu.dot_dimension_numbers<[1], [0], [0], [1], [0, 0, 1, 1], [], []>} : vector<8x8xbf16>, vector<8x320xbf16>, vector<8x320xf32> -> vector<8x320xf32>
    %48 = arith.addf %42, %47 : vector<8x320xf32>
    %c0_43 = arith.constant 0 : index
    %c0_44 = arith.constant 0 : index
    %c84 = arith.constant 84 : index
    %49 = vector.load %arg1[%c0_43, %c0_44, %c84] : memref<1x8x512xbf16, #tpu.memory_space<vmem>>, vector<1x8x320xbf16>
    %50 = vector.shape_cast %49 : vector<1x8x320xbf16> to vector<8x320xbf16>
    %c8 = arith.constant 8 : index
    %c0_45 = arith.constant 0 : index
    %c0_46 = arith.constant 0 : index
    %51 = vector.load %arg2[%c8, %c0_45, %c0_46] : memref<9x8x8xbf16, #tpu.memory_space<vmem>>, vector<1x8x8xbf16>
    %52 = vector.shape_cast %51 : vector<1x8x8xbf16> to vector<8x8xbf16>
    %cst_47 = arith.constant dense<0.000000e+00> : vector<8x320xf32>
    %53 = tpu.matmul %52, %50, %cst_47 {dimension_numbers = #tpu.dot_dimension_numbers<[1], [0], [0], [1], [0, 0, 1, 1], [], []>} : vector<8x8xbf16>, vector<8x320xbf16>, vector<8x320xf32> -> vector<8x320xf32>
    %54 = arith.addf %48, %53 : vector<8x320xf32>
    %c0_48 = arith.constant 0 : index
    %c0_49 = arith.constant 0 : index
    %55 = vector.load %arg3[%c0_48, %c0_49] : memref<8x1xf32, #tpu.memory_space<vmem>>, vector<8x1xf32>
    %56 = vector.broadcast %55 : vector<8x1xf32> to vector<8x320xf32>
    %57 = arith.addf %54, %56 : vector<8x320xf32>
    %cst_50 = arith.constant 0.000000e+00 : f32
    %58 = vector.broadcast %cst_50 : f32 to vector<8x320xf32>
    %59 = arith.maximumf %57, %58 : vector<8x320xf32>
    %c0_51 = arith.constant 0 : index
    %c0_52 = arith.constant 0 : index
    %c0_53 = arith.constant 0 : index
    %60 = vector.load %arg4[%c0_51, %c0_52, %c0_53] : memref<1x8x320xf32, #tpu.memory_space<vmem>>, vector<1x8x320xf32>
    %61 = vector.shape_cast %60 : vector<1x8x320xf32> to vector<8x320xf32>
    %62 = vector.shape_cast %59 : vector<8x320xf32> to vector<1x8x320xf32>
    tpu.vector_store %arg4[%c0_51, %c0_52, %c0_53], %62 {strides = array<i32>} : memref<1x8x320xf32, #tpu.memory_space<vmem>>, vector<1x8x320xf32>,
    return
  }
  func.func @transform_0(%arg0: i32) -> (i32, i32, i32) {
    %c0_i32 = arith.constant 0 : i32
    %c0_i32_0 = arith.constant 0 : i32
    %c0_i32_1 = arith.constant 0 : i32
    return %arg0, %c0_i32, %c0_i32_0 : i32, i32, i32
  }
  func.func @transform_1(%arg0: i32) -> (i32, i32, i32) {
    %c0_i32 = arith.constant 0 : i32
    %c0_i32_0 = arith.constant 0 : i32
    %c0_i32_1 = arith.constant 0 : i32
    %c0_i32_2 = arith.constant 0 : i32
    return %c0_i32, %c0_i32_0, %c0_i32_1 : i32, i32, i32
  }
  func.func @transform_2(%arg0: i32) -> (i32, i32) {
    %c0_i32 = arith.constant 0 : i32
    %c0_i32_0 = arith.constant 0 : i32
    %c0_i32_1 = arith.constant 0 : i32
    return %c0_i32, %c0_i32_0 : i32, i32
  }
  func.func @transform_3(%arg0: i32) -> (i32, i32, i32) {
    %c0_i32 = arith.constant 0 : i32
    %c0_i32_0 = arith.constant 0 : i32
    %c0_i32_1 = arith.constant 0 : i32
    return %arg0, %c0_i32, %c0_i32_0 : i32, i32, i32
  }
}

module attributes {stable_mosaic.version = 11 : i64} {
  func.func @_conv_kernel(%arg0: i32, %arg1: memref<1x8x512xbf16, #tpu.memory_space<vmem>>, %arg2: memref<9x8x8xbf16, #tpu.memory_space<vmem>>, %arg3: memref<8x1xf32, #tpu.memory_space<vmem>>, %arg4: memref<1x8x320xf32, #tpu.memory_space<vmem>>, %arg5: memref<1x8x320xf32, #tpu.memory_space<vmem>>) attributes {dimension_semantics = [#tpu.dimension_semantics<parallel>], iteration_bounds = array<i64: 2>, scalar_prefetch = 0 : i64, scratch_operands = 0 : i64, tpu.core_type = #tpu.core_type<tc>, window_params = [{transform_indices = @transform_0, window_bounds = array<i64: 1, 8, 512>}, {pipeline_mode = #tpu.pipeline_mode<synchronous>, transform_indices = @transform_1, window_bounds = array<i64: 9, 8, 8>}, {pipeline_mode = #tpu.pipeline_mode<synchronous>, transform_indices = @transform_2, window_bounds = array<i64: 8, 1>}, {transform_indices = @transform_3, window_bounds = array<i64: 1, 8, 320>}, {transform_indices = @transform_4, window_bounds = array<i64: 1, 8, 320>}]} {
    %cst = arith.constant 0.000000e+00 : f32
    %0 = vector.broadcast %cst : f32 to vector<8x320xf32>
    %c0 = arith.constant 0 : index
    %c0_0 = arith.constant 0 : index
    %c0_1 = arith.constant 0 : index
    %1 = vector.load %arg1[%c0, %c0_0, %c0_1] : memref<1x8x512xbf16, #tpu.memory_space<vmem>>, vector<1x8x320xbf16>
    %2 = vector.shape_cast %1 : vector<1x8x320xbf16> to vector<8x320xbf16>
    %c0_2 = arith.constant 0 : index
    %c0_3 = arith.constant 0 : index
    %c0_4 = arith.constant 0 : index
    %3 = vector.load %arg2[%c0_2, %c0_3, %c0_4] : memref<9x8x8xbf16, #tpu.memory_space<vmem>>, vector<1x8x8xbf16>
    %4 = vector.shape_cast %3 : vector<1x8x8xbf16> to vector<8x8xbf16>
    %cst_5 = arith.constant dense<0.000000e+00> : vector<8x320xf32>
    %5 = tpu.matmul %4, %2, %cst_5 {dimension_numbers = #tpu.dot_dimension_numbers<[1], [0], [0], [1], [0, 0, 1, 1], [], []>} : vector<8x8xbf16>, vector<8x320xbf16>, vector<8x320xf32> -> vector<8x320xf32>
    %6 = arith.addf %0, %5 : vector<8x320xf32>
    %c0_6 = arith.constant 0 : index
    %c0_7 = arith.constant 0 : index
    %c2 = arith.constant 2 : index
    %7 = vector.load %arg1[%c0_6, %c0_7, %c2] : memref<1x8x512xbf16, #tpu.memory_space<vmem>>, vector<1x8x320xbf16>
    %8 = vector.shape_cast %7 : vector<1x8x320xbf16> to vector<8x320xbf16>
    %c1 = arith.constant 1 : index
    %c0_8 = arith.constant 0 : index
    %c0_9 = arith.constant 0 : index
    %9 = vector.load %arg2[%c1, %c0_8, %c0_9] : memref<9x8x8xbf16, #tpu.memory_space<vmem>>, vector<1x8x8xbf16>
    %10 = vector.shape_cast %9 : vector<1x8x8xbf16> to vector<8x8xbf16>
    %cst_10 = arith.constant dense<0.000000e+00> : vector<8x320xf32>
    %11 = tpu.matmul %10, %8, %cst_10 {dimension_numbers = #tpu.dot_dimension_numbers<[1], [0], [0], [1], [0, 0, 1, 1], [], []>} : vector<8x8xbf16>, vector<8x320xbf16>, vector<8x320xf32> -> vector<8x320xf32>
    %12 = arith.addf %6, %11 : vector<8x320xf32>
    %c0_11 = arith.constant 0 : index
    %c0_12 = arith.constant 0 : index
    %c4 = arith.constant 4 : index
    %13 = vector.load %arg1[%c0_11, %c0_12, %c4] : memref<1x8x512xbf16, #tpu.memory_space<vmem>>, vector<1x8x320xbf16>
    %14 = vector.shape_cast %13 : vector<1x8x320xbf16> to vector<8x320xbf16>
    %c2_13 = arith.constant 2 : index
    %c0_14 = arith.constant 0 : index
    %c0_15 = arith.constant 0 : index
    %15 = vector.load %arg2[%c2_13, %c0_14, %c0_15] : memref<9x8x8xbf16, #tpu.memory_space<vmem>>, vector<1x8x8xbf16>
    %16 = vector.shape_cast %15 : vector<1x8x8xbf16> to vector<8x8xbf16>
    %cst_16 = arith.constant dense<0.000000e+00> : vector<8x320xf32>
    %17 = tpu.matmul %16, %14, %cst_16 {dimension_numbers = #tpu.dot_dimension_numbers<[1], [0], [0], [1], [0, 0, 1, 1], [], []>} : vector<8x8xbf16>, vector<8x320xbf16>, vector<8x320xf32> -> vector<8x320xf32>
    %18 = arith.addf %12, %17 : vector<8x320xf32>
    %c0_17 = arith.constant 0 : index
    %c0_18 = arith.constant 0 : index
    %c40 = arith.constant 40 : index
    %19 = vector.load %arg1[%c0_17, %c0_18, %c40] : memref<1x8x512xbf16, #tpu.memory_space<vmem>>, vector<1x8x320xbf16>
    %20 = vector.shape_cast %19 : vector<1x8x320xbf16> to vector<8x320xbf16>
    %c3 = arith.constant 3 : index
    %c0_19 = arith.constant 0 : index
    %c0_20 = arith.constant 0 : index
    %21 = vector.load %arg2[%c3, %c0_19, %c0_20] : memref<9x8x8xbf16, #tpu.memory_space<vmem>>, vector<1x8x8xbf16>
    %22 = vector.shape_cast %21 : vector<1x8x8xbf16> to vector<8x8xbf16>
    %cst_21 = arith.constant dense<0.000000e+00> : vector<8x320xf32>
    %23 = tpu.matmul %22, %20, %cst_21 {dimension_numbers = #tpu.dot_dimension_numbers<[1], [0], [0], [1], [0, 0, 1, 1], [], []>} : vector<8x8xbf16>, vector<8x320xbf16>, vector<8x320xf32> -> vector<8x320xf32>
    %24 = arith.addf %18, %23 : vector<8x320xf32>
    %c0_22 = arith.constant 0 : index
    %c0_23 = arith.constant 0 : index
    %c42 = arith.constant 42 : index
    %25 = vector.load %arg1[%c0_22, %c0_23, %c42] : memref<1x8x512xbf16, #tpu.memory_space<vmem>>, vector<1x8x320xbf16>
    %26 = vector.shape_cast %25 : vector<1x8x320xbf16> to vector<8x320xbf16>
    %c4_24 = arith.constant 4 : index
    %c0_25 = arith.constant 0 : index
    %c0_26 = arith.constant 0 : index
    %27 = vector.load %arg2[%c4_24, %c0_25, %c0_26] : memref<9x8x8xbf16, #tpu.memory_space<vmem>>, vector<1x8x8xbf16>
    %28 = vector.shape_cast %27 : vector<1x8x8xbf16> to vector<8x8xbf16>
    %cst_27 = arith.constant dense<0.000000e+00> : vector<8x320xf32>
    %29 = tpu.matmul %28, %26, %cst_27 {dimension_numbers = #tpu.dot_dimension_numbers<[1], [0], [0], [1], [0, 0, 1, 1], [], []>} : vector<8x8xbf16>, vector<8x320xbf16>, vector<8x320xf32> -> vector<8x320xf32>
    %30 = arith.addf %24, %29 : vector<8x320xf32>
    %c0_28 = arith.constant 0 : index
    %c0_29 = arith.constant 0 : index
    %c44 = arith.constant 44 : index
    %31 = vector.load %arg1[%c0_28, %c0_29, %c44] : memref<1x8x512xbf16, #tpu.memory_space<vmem>>, vector<1x8x320xbf16>
    %32 = vector.shape_cast %31 : vector<1x8x320xbf16> to vector<8x320xbf16>
    %c5 = arith.constant 5 : index
    %c0_30 = arith.constant 0 : index
    %c0_31 = arith.constant 0 : index
    %33 = vector.load %arg2[%c5, %c0_30, %c0_31] : memref<9x8x8xbf16, #tpu.memory_space<vmem>>, vector<1x8x8xbf16>
    %34 = vector.shape_cast %33 : vector<1x8x8xbf16> to vector<8x8xbf16>
    %cst_32 = arith.constant dense<0.000000e+00> : vector<8x320xf32>
    %35 = tpu.matmul %34, %32, %cst_32 {dimension_numbers = #tpu.dot_dimension_numbers<[1], [0], [0], [1], [0, 0, 1, 1], [], []>} : vector<8x8xbf16>, vector<8x320xbf16>, vector<8x320xf32> -> vector<8x320xf32>
    %36 = arith.addf %30, %35 : vector<8x320xf32>
    %c0_33 = arith.constant 0 : index
    %c0_34 = arith.constant 0 : index
    %c80 = arith.constant 80 : index
    %37 = vector.load %arg1[%c0_33, %c0_34, %c80] : memref<1x8x512xbf16, #tpu.memory_space<vmem>>, vector<1x8x320xbf16>
    %38 = vector.shape_cast %37 : vector<1x8x320xbf16> to vector<8x320xbf16>
    %c6 = arith.constant 6 : index
    %c0_35 = arith.constant 0 : index
    %c0_36 = arith.constant 0 : index
    %39 = vector.load %arg2[%c6, %c0_35, %c0_36] : memref<9x8x8xbf16, #tpu.memory_space<vmem>>, vector<1x8x8xbf16>
    %40 = vector.shape_cast %39 : vector<1x8x8xbf16> to vector<8x8xbf16>
    %cst_37 = arith.constant dense<0.000000e+00> : vector<8x320xf32>
    %41 = tpu.matmul %40, %38, %cst_37 {dimension_numbers = #tpu.dot_dimension_numbers<[1], [0], [0], [1], [0, 0, 1, 1], [], []>} : vector<8x8xbf16>, vector<8x320xbf16>, vector<8x320xf32> -> vector<8x320xf32>
    %42 = arith.addf %36, %41 : vector<8x320xf32>
    %c0_38 = arith.constant 0 : index
    %c0_39 = arith.constant 0 : index
    %c82 = arith.constant 82 : index
    %43 = vector.load %arg1[%c0_38, %c0_39, %c82] : memref<1x8x512xbf16, #tpu.memory_space<vmem>>, vector<1x8x320xbf16>
    %44 = vector.shape_cast %43 : vector<1x8x320xbf16> to vector<8x320xbf16>
    %c7 = arith.constant 7 : index
    %c0_40 = arith.constant 0 : index
    %c0_41 = arith.constant 0 : index
    %45 = vector.load %arg2[%c7, %c0_40, %c0_41] : memref<9x8x8xbf16, #tpu.memory_space<vmem>>, vector<1x8x8xbf16>
    %46 = vector.shape_cast %45 : vector<1x8x8xbf16> to vector<8x8xbf16>
    %cst_42 = arith.constant dense<0.000000e+00> : vector<8x320xf32>
    %47 = tpu.matmul %46, %44, %cst_42 {dimension_numbers = #tpu.dot_dimension_numbers<[1], [0], [0], [1], [0, 0, 1, 1], [], []>} : vector<8x8xbf16>, vector<8x320xbf16>, vector<8x320xf32> -> vector<8x320xf32>
    %48 = arith.addf %42, %47 : vector<8x320xf32>
    %c0_43 = arith.constant 0 : index
    %c0_44 = arith.constant 0 : index
    %c84 = arith.constant 84 : index
    %49 = vector.load %arg1[%c0_43, %c0_44, %c84] : memref<1x8x512xbf16, #tpu.memory_space<vmem>>, vector<1x8x320xbf16>
    %50 = vector.shape_cast %49 : vector<1x8x320xbf16> to vector<8x320xbf16>
    %c8 = arith.constant 8 : index
    %c0_45 = arith.constant 0 : index
    %c0_46 = arith.constant 0 : index
    %51 = vector.load %arg2[%c8, %c0_45, %c0_46] : memref<9x8x8xbf16, #tpu.memory_space<vmem>>, vector<1x8x8xbf16>
    %52 = vector.shape_cast %51 : vector<1x8x8xbf16> to vector<8x8xbf16>
    %cst_47 = arith.constant dense<0.000000e+00> : vector<8x320xf32>
    %53 = tpu.matmul %52, %50, %cst_47 {dimension_numbers = #tpu.dot_dimension_numbers<[1], [0], [0], [1], [0, 0, 1, 1], [], []>} : vector<8x8xbf16>, vector<8x320xbf16>, vector<8x320xf32> -> vector<8x320xf32>
    %54 = arith.addf %48, %53 : vector<8x320xf32>
    %c0_48 = arith.constant 0 : index
    %c0_49 = arith.constant 0 : index
    %55 = vector.load %arg3[%c0_48, %c0_49] : memref<8x1xf32, #tpu.memory_space<vmem>>, vector<8x1xf32>
    %56 = vector.broadcast %55 : vector<8x1xf32> to vector<8x320xf32>
    %57 = arith.addf %54, %56 : vector<8x320xf32>
    %c0_50 = arith.constant 0 : index
    %c0_51 = arith.constant 0 : index
    %c0_52 = arith.constant 0 : index
    %58 = vector.load %arg4[%c0_50, %c0_51, %c0_52] : memref<1x8x320xf32, #tpu.memory_space<vmem>>, vector<1x8x320xf32>
    %59 = vector.shape_cast %58 : vector<1x8x320xf32> to vector<8x320xf32>
    %60 = arith.addf %57, %59 : vector<8x320xf32>
    %c0_53 = arith.constant 0 : index
    %c0_54 = arith.constant 0 : index
    %c0_55 = arith.constant 0 : index
    %61 = vector.load %arg5[%c0_53, %c0_54, %c0_55] : memref<1x8x320xf32, #tpu.memory_space<vmem>>, vector<1x8x320xf32>
    %62 = vector.shape_cast %61 : vector<1x8x320xf32> to vector<8x320xf32>
    %63 = vector.shape_cast %60 : vector<8x320xf32> to vector<1x8x320xf32>
    tpu.vector_store %arg5[%c0_53, %c0_54, %c0_55], %63 {strides = array<i32>} : memref<1x8x320xf32, #tpu.memory_space<vmem>>, vector<1x8x320xf32>,
    return
  }
  func.func @transform_0(%arg0: i32) -> (i32, i32, i32) {
    %c0_i32 = arith.constant 0 : i32
    %c0_i32_0 = arith.constant 0 : i32
    %c0_i32_1 = arith.constant 0 : i32
    return %arg0, %c0_i32, %c0_i32_0 : i32, i32, i32
  }
  func.func @transform_1(%arg0: i32) -> (i32, i32, i32) {
    %c0_i32 = arith.constant 0 : i32
    %c0_i32_0 = arith.constant 0 : i32
    %c0_i32_1 = arith.constant 0 : i32
    %c0_i32_2 = arith.constant 0 : i32
    return %c0_i32, %c0_i32_0, %c0_i32_1 : i32, i32, i32
  }
  func.func @transform_2(%arg0: i32) -> (i32, i32) {
    %c0_i32 = arith.constant 0 : i32
    %c0_i32_0 = arith.constant 0 : i32
    %c0_i32_1 = arith.constant 0 : i32
    return %c0_i32, %c0_i32_0 : i32, i32
  }
  func.func @transform_3(%arg0: i32) -> (i32, i32, i32) {
    %c0_i32 = arith.constant 0 : i32
    %c0_i32_0 = arith.constant 0 : i32
    %c0_i32_1 = arith.constant 0 : i32
    return %arg0, %c0_i32, %c0_i32_0 : i32, i32, i32
  }
  func.func @transform_4(%arg0: i32) -> (i32, i32, i32) {
    %c0_i32 = arith.constant 0 : i32
    %c0_i32_0 = arith.constant 0 : i32
    %c0_i32_1 = arith.constant 0 : i32
    return %arg0, %c0_i32, %c0_i32_0 : i32, i32, i32
  }
}

module attributes {stable_mosaic.version = 11 : i64} {
  func.func @_conv_kernel(%arg0: i32, %arg1: memref<1x8x640xbf16, #tpu.memory_space<vmem>>, %arg2: memref<9x8x8xbf16, #tpu.memory_space<vmem>>, %arg3: memref<8x1xf32, #tpu.memory_space<vmem>>, %arg4: memref<1x8x384xf32, #tpu.memory_space<vmem>>) attributes {dimension_semantics = [#tpu.dimension_semantics<parallel>], iteration_bounds = array<i64: 2>, scalar_prefetch = 0 : i64, scratch_operands = 0 : i64, tpu.core_type = #tpu.core_type<tc>, window_params = [{transform_indices = @transform_0, window_bounds = array<i64: 1, 8, 640>}, {pipeline_mode = #tpu.pipeline_mode<synchronous>, transform_indices = @transform_1, window_bounds = array<i64: 9, 8, 8>}, {pipeline_mode = #tpu.pipeline_mode<synchronous>, transform_indices = @transform_2, window_bounds = array<i64: 8, 1>}, {transform_indices = @transform_3, window_bounds = array<i64: 1, 8, 384>}]} {
    %cst = arith.constant 0.000000e+00 : f32
    %0 = vector.broadcast %cst : f32 to vector<8x384xf32>
    %c0 = arith.constant 0 : index
    %c0_0 = arith.constant 0 : index
    %c0_1 = arith.constant 0 : index
    %1 = vector.load %arg1[%c0, %c0_0, %c0_1] : memref<1x8x640xbf16, #tpu.memory_space<vmem>>, vector<1x8x384xbf16>
    %2 = vector.shape_cast %1 : vector<1x8x384xbf16> to vector<8x384xbf16>
    %c0_2 = arith.constant 0 : index
    %c0_3 = arith.constant 0 : index
    %c0_4 = arith.constant 0 : index
    %3 = vector.load %arg2[%c0_2, %c0_3, %c0_4] : memref<9x8x8xbf16, #tpu.memory_space<vmem>>, vector<1x8x8xbf16>
    %4 = vector.shape_cast %3 : vector<1x8x8xbf16> to vector<8x8xbf16>
    %cst_5 = arith.constant dense<0.000000e+00> : vector<8x384xf32>
    %5 = tpu.matmul %4, %2, %cst_5 {dimension_numbers = #tpu.dot_dimension_numbers<[1], [0], [0], [1], [0, 0, 1, 1], [], []>} : vector<8x8xbf16>, vector<8x384xbf16>, vector<8x384xf32> -> vector<8x384xf32>
    %6 = arith.addf %0, %5 : vector<8x384xf32>
    %c0_6 = arith.constant 0 : index
    %c0_7 = arith.constant 0 : index
    %c4 = arith.constant 4 : index
    %7 = vector.load %arg1[%c0_6, %c0_7, %c4] : memref<1x8x640xbf16, #tpu.memory_space<vmem>>, vector<1x8x384xbf16>
    %8 = vector.shape_cast %7 : vector<1x8x384xbf16> to vector<8x384xbf16>
    %c1 = arith.constant 1 : index
    %c0_8 = arith.constant 0 : index
    %c0_9 = arith.constant 0 : index
    %9 = vector.load %arg2[%c1, %c0_8, %c0_9] : memref<9x8x8xbf16, #tpu.memory_space<vmem>>, vector<1x8x8xbf16>
    %10 = vector.shape_cast %9 : vector<1x8x8xbf16> to vector<8x8xbf16>
    %cst_10 = arith.constant dense<0.000000e+00> : vector<8x384xf32>
    %11 = tpu.matmul %10, %8, %cst_10 {dimension_numbers = #tpu.dot_dimension_numbers<[1], [0], [0], [1], [0, 0, 1, 1], [], []>} : vector<8x8xbf16>, vector<8x384xbf16>, vector<8x384xf32> -> vector<8x384xf32>
    %12 = arith.addf %6, %11 : vector<8x384xf32>
    %c0_11 = arith.constant 0 : index
    %c0_12 = arith.constant 0 : index
    %c8 = arith.constant 8 : index
    %13 = vector.load %arg1[%c0_11, %c0_12, %c8] : memref<1x8x640xbf16, #tpu.memory_space<vmem>>, vector<1x8x384xbf16>
    %14 = vector.shape_cast %13 : vector<1x8x384xbf16> to vector<8x384xbf16>
    %c2 = arith.constant 2 : index
    %c0_13 = arith.constant 0 : index
    %c0_14 = arith.constant 0 : index
    %15 = vector.load %arg2[%c2, %c0_13, %c0_14] : memref<9x8x8xbf16, #tpu.memory_space<vmem>>, vector<1x8x8xbf16>
    %16 = vector.shape_cast %15 : vector<1x8x8xbf16> to vector<8x8xbf16>
    %cst_15 = arith.constant dense<0.000000e+00> : vector<8x384xf32>
    %17 = tpu.matmul %16, %14, %cst_15 {dimension_numbers = #tpu.dot_dimension_numbers<[1], [0], [0], [1], [0, 0, 1, 1], [], []>} : vector<8x8xbf16>, vector<8x384xbf16>, vector<8x384xf32> -> vector<8x384xf32>
    %18 = arith.addf %12, %17 : vector<8x384xf32>
    %c0_16 = arith.constant 0 : index
    %c0_17 = arith.constant 0 : index
    %c96 = arith.constant 96 : index
    %19 = vector.load %arg1[%c0_16, %c0_17, %c96] : memref<1x8x640xbf16, #tpu.memory_space<vmem>>, vector<1x8x384xbf16>
    %20 = vector.shape_cast %19 : vector<1x8x384xbf16> to vector<8x384xbf16>
    %c3 = arith.constant 3 : index
    %c0_18 = arith.constant 0 : index
    %c0_19 = arith.constant 0 : index
    %21 = vector.load %arg2[%c3, %c0_18, %c0_19] : memref<9x8x8xbf16, #tpu.memory_space<vmem>>, vector<1x8x8xbf16>
    %22 = vector.shape_cast %21 : vector<1x8x8xbf16> to vector<8x8xbf16>
    %cst_20 = arith.constant dense<0.000000e+00> : vector<8x384xf32>
    %23 = tpu.matmul %22, %20, %cst_20 {dimension_numbers = #tpu.dot_dimension_numbers<[1], [0], [0], [1], [0, 0, 1, 1], [], []>} : vector<8x8xbf16>, vector<8x384xbf16>, vector<8x384xf32> -> vector<8x384xf32>
    %24 = arith.addf %18, %23 : vector<8x384xf32>
    %c0_21 = arith.constant 0 : index
    %c0_22 = arith.constant 0 : index
    %c100 = arith.constant 100 : index
    %25 = vector.load %arg1[%c0_21, %c0_22, %c100] : memref<1x8x640xbf16, #tpu.memory_space<vmem>>, vector<1x8x384xbf16>
    %26 = vector.shape_cast %25 : vector<1x8x384xbf16> to vector<8x384xbf16>
    %c4_23 = arith.constant 4 : index
    %c0_24 = arith.constant 0 : index
    %c0_25 = arith.constant 0 : index
    %27 = vector.load %arg2[%c4_23, %c0_24, %c0_25] : memref<9x8x8xbf16, #tpu.memory_space<vmem>>, vector<1x8x8xbf16>
    %28 = vector.shape_cast %27 : vector<1x8x8xbf16> to vector<8x8xbf16>
    %cst_26 = arith.constant dense<0.000000e+00> : vector<8x384xf32>
    %29 = tpu.matmul %28, %26, %cst_26 {dimension_numbers = #tpu.dot_dimension_numbers<[1], [0], [0], [1], [0, 0, 1, 1], [], []>} : vector<8x8xbf16>, vector<8x384xbf16>, vector<8x384xf32> -> vector<8x384xf32>
    %30 = arith.addf %24, %29 : vector<8x384xf32>
    %c0_27 = arith.constant 0 : index
    %c0_28 = arith.constant 0 : index
    %c104 = arith.constant 104 : index
    %31 = vector.load %arg1[%c0_27, %c0_28, %c104] : memref<1x8x640xbf16, #tpu.memory_space<vmem>>, vector<1x8x384xbf16>
    %32 = vector.shape_cast %31 : vector<1x8x384xbf16> to vector<8x384xbf16>
    %c5 = arith.constant 5 : index
    %c0_29 = arith.constant 0 : index
    %c0_30 = arith.constant 0 : index
    %33 = vector.load %arg2[%c5, %c0_29, %c0_30] : memref<9x8x8xbf16, #tpu.memory_space<vmem>>, vector<1x8x8xbf16>
    %34 = vector.shape_cast %33 : vector<1x8x8xbf16> to vector<8x8xbf16>
    %cst_31 = arith.constant dense<0.000000e+00> : vector<8x384xf32>
    %35 = tpu.matmul %34, %32, %cst_31 {dimension_numbers = #tpu.dot_dimension_numbers<[1], [0], [0], [1], [0, 0, 1, 1], [], []>} : vector<8x8xbf16>, vector<8x384xbf16>, vector<8x384xf32> -> vector<8x384xf32>
    %36 = arith.addf %30, %35 : vector<8x384xf32>
    %c0_32 = arith.constant 0 : index
    %c0_33 = arith.constant 0 : index
    %c192 = arith.constant 192 : index
    %37 = vector.load %arg1[%c0_32, %c0_33, %c192] : memref<1x8x640xbf16, #tpu.memory_space<vmem>>, vector<1x8x384xbf16>
    %38 = vector.shape_cast %37 : vector<1x8x384xbf16> to vector<8x384xbf16>
    %c6 = arith.constant 6 : index
    %c0_34 = arith.constant 0 : index
    %c0_35 = arith.constant 0 : index
    %39 = vector.load %arg2[%c6, %c0_34, %c0_35] : memref<9x8x8xbf16, #tpu.memory_space<vmem>>, vector<1x8x8xbf16>
    %40 = vector.shape_cast %39 : vector<1x8x8xbf16> to vector<8x8xbf16>
    %cst_36 = arith.constant dense<0.000000e+00> : vector<8x384xf32>
    %41 = tpu.matmul %40, %38, %cst_36 {dimension_numbers = #tpu.dot_dimension_numbers<[1], [0], [0], [1], [0, 0, 1, 1], [], []>} : vector<8x8xbf16>, vector<8x384xbf16>, vector<8x384xf32> -> vector<8x384xf32>
    %42 = arith.addf %36, %41 : vector<8x384xf32>
    %c0_37 = arith.constant 0 : index
    %c0_38 = arith.constant 0 : index
    %c196 = arith.constant 196 : index
    %43 = vector.load %arg1[%c0_37, %c0_38, %c196] : memref<1x8x640xbf16, #tpu.memory_space<vmem>>, vector<1x8x384xbf16>
    %44 = vector.shape_cast %43 : vector<1x8x384xbf16> to vector<8x384xbf16>
    %c7 = arith.constant 7 : index
    %c0_39 = arith.constant 0 : index
    %c0_40 = arith.constant 0 : index
    %45 = vector.load %arg2[%c7, %c0_39, %c0_40] : memref<9x8x8xbf16, #tpu.memory_space<vmem>>, vector<1x8x8xbf16>
    %46 = vector.shape_cast %45 : vector<1x8x8xbf16> to vector<8x8xbf16>
    %cst_41 = arith.constant dense<0.000000e+00> : vector<8x384xf32>
    %47 = tpu.matmul %46, %44, %cst_41 {dimension_numbers = #tpu.dot_dimension_numbers<[1], [0], [0], [1], [0, 0, 1, 1], [], []>} : vector<8x8xbf16>, vector<8x384xbf16>, vector<8x384xf32> -> vector<8x384xf32>
    %48 = arith.addf %42, %47 : vector<8x384xf32>
    %c0_42 = arith.constant 0 : index
    %c0_43 = arith.constant 0 : index
    %c200 = arith.constant 200 : index
    %49 = vector.load %arg1[%c0_42, %c0_43, %c200] : memref<1x8x640xbf16, #tpu.memory_space<vmem>>, vector<1x8x384xbf16>
    %50 = vector.shape_cast %49 : vector<1x8x384xbf16> to vector<8x384xbf16>
    %c8_44 = arith.constant 8 : index
    %c0_45 = arith.constant 0 : index
    %c0_46 = arith.constant 0 : index
    %51 = vector.load %arg2[%c8_44, %c0_45, %c0_46] : memref<9x8x8xbf16, #tpu.memory_space<vmem>>, vector<1x8x8xbf16>
    %52 = vector.shape_cast %51 : vector<1x8x8xbf16> to vector<8x8xbf16>
    %cst_47 = arith.constant dense<0.000000e+00> : vector<8x384xf32>
    %53 = tpu.matmul %52, %50, %cst_47 {dimension_numbers = #tpu.dot_dimension_numbers<[1], [0], [0], [1], [0, 0, 1, 1], [], []>} : vector<8x8xbf16>, vector<8x384xbf16>, vector<8x384xf32> -> vector<8x384xf32>
    %54 = arith.addf %48, %53 : vector<8x384xf32>
    %c0_48 = arith.constant 0 : index
    %c0_49 = arith.constant 0 : index
    %55 = vector.load %arg3[%c0_48, %c0_49] : memref<8x1xf32, #tpu.memory_space<vmem>>, vector<8x1xf32>
    %56 = vector.broadcast %55 : vector<8x1xf32> to vector<8x384xf32>
    %57 = arith.addf %54, %56 : vector<8x384xf32>
    %cst_50 = arith.constant 0.000000e+00 : f32
    %58 = vector.broadcast %cst_50 : f32 to vector<8x384xf32>
    %59 = arith.maximumf %57, %58 : vector<8x384xf32>
    %c0_51 = arith.constant 0 : index
    %c0_52 = arith.constant 0 : index
    %c0_53 = arith.constant 0 : index
    %60 = vector.load %arg4[%c0_51, %c0_52, %c0_53] : memref<1x8x384xf32, #tpu.memory_space<vmem>>, vector<1x8x384xf32>
    %61 = vector.shape_cast %60 : vector<1x8x384xf32> to vector<8x384xf32>
    %62 = vector.shape_cast %59 : vector<8x384xf32> to vector<1x8x384xf32>
    tpu.vector_store %arg4[%c0_51, %c0_52, %c0_53], %62 {strides = array<i32>} : memref<1x8x384xf32, #tpu.memory_space<vmem>>, vector<1x8x384xf32>,
    return
  }
  func.func @transform_0(%arg0: i32) -> (i32, i32, i32) {
    %c0_i32 = arith.constant 0 : i32
    %c0_i32_0 = arith.constant 0 : i32
    %c0_i32_1 = arith.constant 0 : i32
    return %arg0, %c0_i32, %c0_i32_0 : i32, i32, i32
  }
  func.func @transform_1(%arg0: i32) -> (i32, i32, i32) {
    %c0_i32 = arith.constant 0 : i32
    %c0_i32_0 = arith.constant 0 : i32
    %c0_i32_1 = arith.constant 0 : i32
    %c0_i32_2 = arith.constant 0 : i32
    return %c0_i32, %c0_i32_0, %c0_i32_1 : i32, i32, i32
  }
  func.func @transform_2(%arg0: i32) -> (i32, i32) {
    %c0_i32 = arith.constant 0 : i32
    %c0_i32_0 = arith.constant 0 : i32
    %c0_i32_1 = arith.constant 0 : i32
    return %c0_i32, %c0_i32_0 : i32, i32
  }
  func.func @transform_3(%arg0: i32) -> (i32, i32, i32) {
    %c0_i32 = arith.constant 0 : i32
    %c0_i32_0 = arith.constant 0 : i32
    %c0_i32_1 = arith.constant 0 : i32
    return %arg0, %c0_i32, %c0_i32_0 : i32, i32, i32
  }
}

module attributes {stable_mosaic.version = 11 : i64} {
  func.func @_conv_kernel(%arg0: i32, %arg1: memref<1x8x640xbf16, #tpu.memory_space<vmem>>, %arg2: memref<9x8x8xbf16, #tpu.memory_space<vmem>>, %arg3: memref<8x1xf32, #tpu.memory_space<vmem>>, %arg4: memref<1x8x384xf32, #tpu.memory_space<vmem>>, %arg5: memref<1x8x384xf32, #tpu.memory_space<vmem>>) attributes {dimension_semantics = [#tpu.dimension_semantics<parallel>], iteration_bounds = array<i64: 2>, scalar_prefetch = 0 : i64, scratch_operands = 0 : i64, tpu.core_type = #tpu.core_type<tc>, window_params = [{transform_indices = @transform_0, window_bounds = array<i64: 1, 8, 640>}, {pipeline_mode = #tpu.pipeline_mode<synchronous>, transform_indices = @transform_1, window_bounds = array<i64: 9, 8, 8>}, {pipeline_mode = #tpu.pipeline_mode<synchronous>, transform_indices = @transform_2, window_bounds = array<i64: 8, 1>}, {transform_indices = @transform_3, window_bounds = array<i64: 1, 8, 384>}, {transform_indices = @transform_4, window_bounds = array<i64: 1, 8, 384>}]} {
    %cst = arith.constant 0.000000e+00 : f32
    %0 = vector.broadcast %cst : f32 to vector<8x384xf32>
    %c0 = arith.constant 0 : index
    %c0_0 = arith.constant 0 : index
    %c0_1 = arith.constant 0 : index
    %1 = vector.load %arg1[%c0, %c0_0, %c0_1] : memref<1x8x640xbf16, #tpu.memory_space<vmem>>, vector<1x8x384xbf16>
    %2 = vector.shape_cast %1 : vector<1x8x384xbf16> to vector<8x384xbf16>
    %c0_2 = arith.constant 0 : index
    %c0_3 = arith.constant 0 : index
    %c0_4 = arith.constant 0 : index
    %3 = vector.load %arg2[%c0_2, %c0_3, %c0_4] : memref<9x8x8xbf16, #tpu.memory_space<vmem>>, vector<1x8x8xbf16>
    %4 = vector.shape_cast %3 : vector<1x8x8xbf16> to vector<8x8xbf16>
    %cst_5 = arith.constant dense<0.000000e+00> : vector<8x384xf32>
    %5 = tpu.matmul %4, %2, %cst_5 {dimension_numbers = #tpu.dot_dimension_numbers<[1], [0], [0], [1], [0, 0, 1, 1], [], []>} : vector<8x8xbf16>, vector<8x384xbf16>, vector<8x384xf32> -> vector<8x384xf32>
    %6 = arith.addf %0, %5 : vector<8x384xf32>
    %c0_6 = arith.constant 0 : index
    %c0_7 = arith.constant 0 : index
    %c4 = arith.constant 4 : index
    %7 = vector.load %arg1[%c0_6, %c0_7, %c4] : memref<1x8x640xbf16, #tpu.memory_space<vmem>>, vector<1x8x384xbf16>
    %8 = vector.shape_cast %7 : vector<1x8x384xbf16> to vector<8x384xbf16>
    %c1 = arith.constant 1 : index
    %c0_8 = arith.constant 0 : index
    %c0_9 = arith.constant 0 : index
    %9 = vector.load %arg2[%c1, %c0_8, %c0_9] : memref<9x8x8xbf16, #tpu.memory_space<vmem>>, vector<1x8x8xbf16>
    %10 = vector.shape_cast %9 : vector<1x8x8xbf16> to vector<8x8xbf16>
    %cst_10 = arith.constant dense<0.000000e+00> : vector<8x384xf32>
    %11 = tpu.matmul %10, %8, %cst_10 {dimension_numbers = #tpu.dot_dimension_numbers<[1], [0], [0], [1], [0, 0, 1, 1], [], []>} : vector<8x8xbf16>, vector<8x384xbf16>, vector<8x384xf32> -> vector<8x384xf32>
    %12 = arith.addf %6, %11 : vector<8x384xf32>
    %c0_11 = arith.constant 0 : index
    %c0_12 = arith.constant 0 : index
    %c8 = arith.constant 8 : index
    %13 = vector.load %arg1[%c0_11, %c0_12, %c8] : memref<1x8x640xbf16, #tpu.memory_space<vmem>>, vector<1x8x384xbf16>
    %14 = vector.shape_cast %13 : vector<1x8x384xbf16> to vector<8x384xbf16>
    %c2 = arith.constant 2 : index
    %c0_13 = arith.constant 0 : index
    %c0_14 = arith.constant 0 : index
    %15 = vector.load %arg2[%c2, %c0_13, %c0_14] : memref<9x8x8xbf16, #tpu.memory_space<vmem>>, vector<1x8x8xbf16>
    %16 = vector.shape_cast %15 : vector<1x8x8xbf16> to vector<8x8xbf16>
    %cst_15 = arith.constant dense<0.000000e+00> : vector<8x384xf32>
    %17 = tpu.matmul %16, %14, %cst_15 {dimension_numbers = #tpu.dot_dimension_numbers<[1], [0], [0], [1], [0, 0, 1, 1], [], []>} : vector<8x8xbf16>, vector<8x384xbf16>, vector<8x384xf32> -> vector<8x384xf32>
    %18 = arith.addf %12, %17 : vector<8x384xf32>
    %c0_16 = arith.constant 0 : index
    %c0_17 = arith.constant 0 : index
    %c96 = arith.constant 96 : index
    %19 = vector.load %arg1[%c0_16, %c0_17, %c96] : memref<1x8x640xbf16, #tpu.memory_space<vmem>>, vector<1x8x384xbf16>
    %20 = vector.shape_cast %19 : vector<1x8x384xbf16> to vector<8x384xbf16>
    %c3 = arith.constant 3 : index
    %c0_18 = arith.constant 0 : index
    %c0_19 = arith.constant 0 : index
    %21 = vector.load %arg2[%c3, %c0_18, %c0_19] : memref<9x8x8xbf16, #tpu.memory_space<vmem>>, vector<1x8x8xbf16>
    %22 = vector.shape_cast %21 : vector<1x8x8xbf16> to vector<8x8xbf16>
    %cst_20 = arith.constant dense<0.000000e+00> : vector<8x384xf32>
    %23 = tpu.matmul %22, %20, %cst_20 {dimension_numbers = #tpu.dot_dimension_numbers<[1], [0], [0], [1], [0, 0, 1, 1], [], []>} : vector<8x8xbf16>, vector<8x384xbf16>, vector<8x384xf32> -> vector<8x384xf32>
    %24 = arith.addf %18, %23 : vector<8x384xf32>
    %c0_21 = arith.constant 0 : index
    %c0_22 = arith.constant 0 : index
    %c100 = arith.constant 100 : index
    %25 = vector.load %arg1[%c0_21, %c0_22, %c100] : memref<1x8x640xbf16, #tpu.memory_space<vmem>>, vector<1x8x384xbf16>
    %26 = vector.shape_cast %25 : vector<1x8x384xbf16> to vector<8x384xbf16>
    %c4_23 = arith.constant 4 : index
    %c0_24 = arith.constant 0 : index
    %c0_25 = arith.constant 0 : index
    %27 = vector.load %arg2[%c4_23, %c0_24, %c0_25] : memref<9x8x8xbf16, #tpu.memory_space<vmem>>, vector<1x8x8xbf16>
    %28 = vector.shape_cast %27 : vector<1x8x8xbf16> to vector<8x8xbf16>
    %cst_26 = arith.constant dense<0.000000e+00> : vector<8x384xf32>
    %29 = tpu.matmul %28, %26, %cst_26 {dimension_numbers = #tpu.dot_dimension_numbers<[1], [0], [0], [1], [0, 0, 1, 1], [], []>} : vector<8x8xbf16>, vector<8x384xbf16>, vector<8x384xf32> -> vector<8x384xf32>
    %30 = arith.addf %24, %29 : vector<8x384xf32>
    %c0_27 = arith.constant 0 : index
    %c0_28 = arith.constant 0 : index
    %c104 = arith.constant 104 : index
    %31 = vector.load %arg1[%c0_27, %c0_28, %c104] : memref<1x8x640xbf16, #tpu.memory_space<vmem>>, vector<1x8x384xbf16>
    %32 = vector.shape_cast %31 : vector<1x8x384xbf16> to vector<8x384xbf16>
    %c5 = arith.constant 5 : index
    %c0_29 = arith.constant 0 : index
    %c0_30 = arith.constant 0 : index
    %33 = vector.load %arg2[%c5, %c0_29, %c0_30] : memref<9x8x8xbf16, #tpu.memory_space<vmem>>, vector<1x8x8xbf16>
    %34 = vector.shape_cast %33 : vector<1x8x8xbf16> to vector<8x8xbf16>
    %cst_31 = arith.constant dense<0.000000e+00> : vector<8x384xf32>
    %35 = tpu.matmul %34, %32, %cst_31 {dimension_numbers = #tpu.dot_dimension_numbers<[1], [0], [0], [1], [0, 0, 1, 1], [], []>} : vector<8x8xbf16>, vector<8x384xbf16>, vector<8x384xf32> -> vector<8x384xf32>
    %36 = arith.addf %30, %35 : vector<8x384xf32>
    %c0_32 = arith.constant 0 : index
    %c0_33 = arith.constant 0 : index
    %c192 = arith.constant 192 : index
    %37 = vector.load %arg1[%c0_32, %c0_33, %c192] : memref<1x8x640xbf16, #tpu.memory_space<vmem>>, vector<1x8x384xbf16>
    %38 = vector.shape_cast %37 : vector<1x8x384xbf16> to vector<8x384xbf16>
    %c6 = arith.constant 6 : index
    %c0_34 = arith.constant 0 : index
    %c0_35 = arith.constant 0 : index
    %39 = vector.load %arg2[%c6, %c0_34, %c0_35] : memref<9x8x8xbf16, #tpu.memory_space<vmem>>, vector<1x8x8xbf16>
    %40 = vector.shape_cast %39 : vector<1x8x8xbf16> to vector<8x8xbf16>
    %cst_36 = arith.constant dense<0.000000e+00> : vector<8x384xf32>
    %41 = tpu.matmul %40, %38, %cst_36 {dimension_numbers = #tpu.dot_dimension_numbers<[1], [0], [0], [1], [0, 0, 1, 1], [], []>} : vector<8x8xbf16>, vector<8x384xbf16>, vector<8x384xf32> -> vector<8x384xf32>
    %42 = arith.addf %36, %41 : vector<8x384xf32>
    %c0_37 = arith.constant 0 : index
    %c0_38 = arith.constant 0 : index
    %c196 = arith.constant 196 : index
    %43 = vector.load %arg1[%c0_37, %c0_38, %c196] : memref<1x8x640xbf16, #tpu.memory_space<vmem>>, vector<1x8x384xbf16>
    %44 = vector.shape_cast %43 : vector<1x8x384xbf16> to vector<8x384xbf16>
    %c7 = arith.constant 7 : index
    %c0_39 = arith.constant 0 : index
    %c0_40 = arith.constant 0 : index
    %45 = vector.load %arg2[%c7, %c0_39, %c0_40] : memref<9x8x8xbf16, #tpu.memory_space<vmem>>, vector<1x8x8xbf16>
    %46 = vector.shape_cast %45 : vector<1x8x8xbf16> to vector<8x8xbf16>
    %cst_41 = arith.constant dense<0.000000e+00> : vector<8x384xf32>
    %47 = tpu.matmul %46, %44, %cst_41 {dimension_numbers = #tpu.dot_dimension_numbers<[1], [0], [0], [1], [0, 0, 1, 1], [], []>} : vector<8x8xbf16>, vector<8x384xbf16>, vector<8x384xf32> -> vector<8x384xf32>
    %48 = arith.addf %42, %47 : vector<8x384xf32>
    %c0_42 = arith.constant 0 : index
    %c0_43 = arith.constant 0 : index
    %c200 = arith.constant 200 : index
    %49 = vector.load %arg1[%c0_42, %c0_43, %c200] : memref<1x8x640xbf16, #tpu.memory_space<vmem>>, vector<1x8x384xbf16>
    %50 = vector.shape_cast %49 : vector<1x8x384xbf16> to vector<8x384xbf16>
    %c8_44 = arith.constant 8 : index
    %c0_45 = arith.constant 0 : index
    %c0_46 = arith.constant 0 : index
    %51 = vector.load %arg2[%c8_44, %c0_45, %c0_46] : memref<9x8x8xbf16, #tpu.memory_space<vmem>>, vector<1x8x8xbf16>
    %52 = vector.shape_cast %51 : vector<1x8x8xbf16> to vector<8x8xbf16>
    %cst_47 = arith.constant dense<0.000000e+00> : vector<8x384xf32>
    %53 = tpu.matmul %52, %50, %cst_47 {dimension_numbers = #tpu.dot_dimension_numbers<[1], [0], [0], [1], [0, 0, 1, 1], [], []>} : vector<8x8xbf16>, vector<8x384xbf16>, vector<8x384xf32> -> vector<8x384xf32>
    %54 = arith.addf %48, %53 : vector<8x384xf32>
    %c0_48 = arith.constant 0 : index
    %c0_49 = arith.constant 0 : index
    %55 = vector.load %arg3[%c0_48, %c0_49] : memref<8x1xf32, #tpu.memory_space<vmem>>, vector<8x1xf32>
    %56 = vector.broadcast %55 : vector<8x1xf32> to vector<8x384xf32>
    %57 = arith.addf %54, %56 : vector<8x384xf32>
    %c0_50 = arith.constant 0 : index
    %c0_51 = arith.constant 0 : index
    %c0_52 = arith.constant 0 : index
    %58 = vector.load %arg4[%c0_50, %c0_51, %c0_52] : memref<1x8x384xf32, #tpu.memory_space<vmem>>, vector<1x8x384xf32>
    %59 = vector.shape_cast %58 : vector<1x8x384xf32> to vector<8x384xf32>
    %60 = arith.addf %57, %59 : vector<8x384xf32>
    %c0_53 = arith.constant 0 : index
    %c0_54 = arith.constant 0 : index
    %c0_55 = arith.constant 0 : index
    %61 = vector.load %arg5[%c0_53, %c0_54, %c0_55] : memref<1x8x384xf32, #tpu.memory_space<vmem>>, vector<1x8x384xf32>
    %62 = vector.shape_cast %61 : vector<1x8x384xf32> to vector<8x384xf32>
    %63 = vector.shape_cast %60 : vector<8x384xf32> to vector<1x8x384xf32>
    tpu.vector_store %arg5[%c0_53, %c0_54, %c0_55], %63 {strides = array<i32>} : memref<1x8x384xf32, #tpu.memory_space<vmem>>, vector<1x8x384xf32>,
    return
  }
  func.func @transform_0(%arg0: i32) -> (i32, i32, i32) {
    %c0_i32 = arith.constant 0 : i32
    %c0_i32_0 = arith.constant 0 : i32
    %c0_i32_1 = arith.constant 0 : i32
    return %arg0, %c0_i32, %c0_i32_0 : i32, i32, i32
  }
  func.func @transform_1(%arg0: i32) -> (i32, i32, i32) {
    %c0_i32 = arith.constant 0 : i32
    %c0_i32_0 = arith.constant 0 : i32
    %c0_i32_1 = arith.constant 0 : i32
    %c0_i32_2 = arith.constant 0 : i32
    return %c0_i32, %c0_i32_0, %c0_i32_1 : i32, i32, i32
  }
  func.func @transform_2(%arg0: i32) -> (i32, i32) {
    %c0_i32 = arith.constant 0 : i32
    %c0_i32_0 = arith.constant 0 : i32
    %c0_i32_1 = arith.constant 0 : i32
    return %c0_i32, %c0_i32_0 : i32, i32
  }
  func.func @transform_3(%arg0: i32) -> (i32, i32, i32) {
    %c0_i32 = arith.constant 0 : i32
    %c0_i32_0 = arith.constant 0 : i32
    %c0_i32_1 = arith.constant 0 : i32
    return %arg0, %c0_i32, %c0_i32_0 : i32, i32, i32
  }
  func.func @transform_4(%arg0: i32) -> (i32, i32, i32) {
    %c0_i32 = arith.constant 0 : i32
    %c0_i32_0 = arith.constant 0 : i32
    %c0_i32_1 = arith.constant 0 : i32
    return %arg0, %c0_i32, %c0_i32_0 : i32, i32, i32
  }
}

module attributes {stable_mosaic.version = 11 : i64} {
  func.func @_conv_kernel(%arg0: i32, %arg1: memref<1x8x512xbf16, #tpu.memory_space<vmem>>, %arg2: memref<9x4x8xbf16, #tpu.memory_space<vmem>>, %arg3: memref<4x1xf32, #tpu.memory_space<vmem>>, %arg4: memref<1x4x320xf32, #tpu.memory_space<vmem>>) attributes {dimension_semantics = [#tpu.dimension_semantics<parallel>], iteration_bounds = array<i64: 2>, scalar_prefetch = 0 : i64, scratch_operands = 0 : i64, tpu.core_type = #tpu.core_type<tc>, window_params = [{transform_indices = @transform_0, window_bounds = array<i64: 1, 8, 512>}, {pipeline_mode = #tpu.pipeline_mode<synchronous>, transform_indices = @transform_1, window_bounds = array<i64: 9, 4, 8>}, {pipeline_mode = #tpu.pipeline_mode<synchronous>, transform_indices = @transform_2, window_bounds = array<i64: 4, 1>}, {transform_indices = @transform_3, window_bounds = array<i64: 1, 4, 320>}]} {
    %cst = arith.constant 0.000000e+00 : f32
    %0 = vector.broadcast %cst : f32 to vector<4x320xf32>
    %c0 = arith.constant 0 : index
    %c0_0 = arith.constant 0 : index
    %c0_1 = arith.constant 0 : index
    %1 = vector.load %arg1[%c0, %c0_0, %c0_1] : memref<1x8x512xbf16, #tpu.memory_space<vmem>>, vector<1x8x320xbf16>
    %2 = vector.shape_cast %1 : vector<1x8x320xbf16> to vector<8x320xbf16>
    %c0_2 = arith.constant 0 : index
    %c0_3 = arith.constant 0 : index
    %c0_4 = arith.constant 0 : index
    %3 = vector.load %arg2[%c0_2, %c0_3, %c0_4] : memref<9x4x8xbf16, #tpu.memory_space<vmem>>, vector<1x4x8xbf16>
    %4 = vector.shape_cast %3 : vector<1x4x8xbf16> to vector<4x8xbf16>
    %cst_5 = arith.constant dense<0.000000e+00> : vector<4x320xf32>
    %5 = tpu.matmul %4, %2, %cst_5 {dimension_numbers = #tpu.dot_dimension_numbers<[1], [0], [0], [1], [0, 0, 1, 1], [], []>} : vector<4x8xbf16>, vector<8x320xbf16>, vector<4x320xf32> -> vector<4x320xf32>
    %6 = arith.addf %0, %5 : vector<4x320xf32>
    %c0_6 = arith.constant 0 : index
    %c0_7 = arith.constant 0 : index
    %c2 = arith.constant 2 : index
    %7 = vector.load %arg1[%c0_6, %c0_7, %c2] : memref<1x8x512xbf16, #tpu.memory_space<vmem>>, vector<1x8x320xbf16>
    %8 = vector.shape_cast %7 : vector<1x8x320xbf16> to vector<8x320xbf16>
    %c1 = arith.constant 1 : index
    %c0_8 = arith.constant 0 : index
    %c0_9 = arith.constant 0 : index
    %9 = vector.load %arg2[%c1, %c0_8, %c0_9] : memref<9x4x8xbf16, #tpu.memory_space<vmem>>, vector<1x4x8xbf16>
    %10 = vector.shape_cast %9 : vector<1x4x8xbf16> to vector<4x8xbf16>
    %cst_10 = arith.constant dense<0.000000e+00> : vector<4x320xf32>
    %11 = tpu.matmul %10, %8, %cst_10 {dimension_numbers = #tpu.dot_dimension_numbers<[1], [0], [0], [1], [0, 0, 1, 1], [], []>} : vector<4x8xbf16>, vector<8x320xbf16>, vector<4x320xf32> -> vector<4x320xf32>
    %12 = arith.addf %6, %11 : vector<4x320xf32>
    %c0_11 = arith.constant 0 : index
    %c0_12 = arith.constant 0 : index
    %c4 = arith.constant 4 : index
    %13 = vector.load %arg1[%c0_11, %c0_12, %c4] : memref<1x8x512xbf16, #tpu.memory_space<vmem>>, vector<1x8x320xbf16>
    %14 = vector.shape_cast %13 : vector<1x8x320xbf16> to vector<8x320xbf16>
    %c2_13 = arith.constant 2 : index
    %c0_14 = arith.constant 0 : index
    %c0_15 = arith.constant 0 : index
    %15 = vector.load %arg2[%c2_13, %c0_14, %c0_15] : memref<9x4x8xbf16, #tpu.memory_space<vmem>>, vector<1x4x8xbf16>
    %16 = vector.shape_cast %15 : vector<1x4x8xbf16> to vector<4x8xbf16>
    %cst_16 = arith.constant dense<0.000000e+00> : vector<4x320xf32>
    %17 = tpu.matmul %16, %14, %cst_16 {dimension_numbers = #tpu.dot_dimension_numbers<[1], [0], [0], [1], [0, 0, 1, 1], [], []>} : vector<4x8xbf16>, vector<8x320xbf16>, vector<4x320xf32> -> vector<4x320xf32>
    %18 = arith.addf %12, %17 : vector<4x320xf32>
    %c0_17 = arith.constant 0 : index
    %c0_18 = arith.constant 0 : index
    %c40 = arith.constant 40 : index
    %19 = vector.load %arg1[%c0_17, %c0_18, %c40] : memref<1x8x512xbf16, #tpu.memory_space<vmem>>, vector<1x8x320xbf16>
    %20 = vector.shape_cast %19 : vector<1x8x320xbf16> to vector<8x320xbf16>
    %c3 = arith.constant 3 : index
    %c0_19 = arith.constant 0 : index
    %c0_20 = arith.constant 0 : index
    %21 = vector.load %arg2[%c3, %c0_19, %c0_20] : memref<9x4x8xbf16, #tpu.memory_space<vmem>>, vector<1x4x8xbf16>
    %22 = vector.shape_cast %21 : vector<1x4x8xbf16> to vector<4x8xbf16>
    %cst_21 = arith.constant dense<0.000000e+00> : vector<4x320xf32>
    %23 = tpu.matmul %22, %20, %cst_21 {dimension_numbers = #tpu.dot_dimension_numbers<[1], [0], [0], [1], [0, 0, 1, 1], [], []>} : vector<4x8xbf16>, vector<8x320xbf16>, vector<4x320xf32> -> vector<4x320xf32>
    %24 = arith.addf %18, %23 : vector<4x320xf32>
    %c0_22 = arith.constant 0 : index
    %c0_23 = arith.constant 0 : index
    %c42 = arith.constant 42 : index
    %25 = vector.load %arg1[%c0_22, %c0_23, %c42] : memref<1x8x512xbf16, #tpu.memory_space<vmem>>, vector<1x8x320xbf16>
    %26 = vector.shape_cast %25 : vector<1x8x320xbf16> to vector<8x320xbf16>
    %c4_24 = arith.constant 4 : index
    %c0_25 = arith.constant 0 : index
    %c0_26 = arith.constant 0 : index
    %27 = vector.load %arg2[%c4_24, %c0_25, %c0_26] : memref<9x4x8xbf16, #tpu.memory_space<vmem>>, vector<1x4x8xbf16>
    %28 = vector.shape_cast %27 : vector<1x4x8xbf16> to vector<4x8xbf16>
    %cst_27 = arith.constant dense<0.000000e+00> : vector<4x320xf32>
    %29 = tpu.matmul %28, %26, %cst_27 {dimension_numbers = #tpu.dot_dimension_numbers<[1], [0], [0], [1], [0, 0, 1, 1], [], []>} : vector<4x8xbf16>, vector<8x320xbf16>, vector<4x320xf32> -> vector<4x320xf32>
    %30 = arith.addf %24, %29 : vector<4x320xf32>
    %c0_28 = arith.constant 0 : index
    %c0_29 = arith.constant 0 : index
    %c44 = arith.constant 44 : index
    %31 = vector.load %arg1[%c0_28, %c0_29, %c44] : memref<1x8x512xbf16, #tpu.memory_space<vmem>>, vector<1x8x320xbf16>
    %32 = vector.shape_cast %31 : vector<1x8x320xbf16> to vector<8x320xbf16>
    %c5 = arith.constant 5 : index
    %c0_30 = arith.constant 0 : index
    %c0_31 = arith.constant 0 : index
    %33 = vector.load %arg2[%c5, %c0_30, %c0_31] : memref<9x4x8xbf16, #tpu.memory_space<vmem>>, vector<1x4x8xbf16>
    %34 = vector.shape_cast %33 : vector<1x4x8xbf16> to vector<4x8xbf16>
    %cst_32 = arith.constant dense<0.000000e+00> : vector<4x320xf32>
    %35 = tpu.matmul %34, %32, %cst_32 {dimension_numbers = #tpu.dot_dimension_numbers<[1], [0], [0], [1], [0, 0, 1, 1], [], []>} : vector<4x8xbf16>, vector<8x320xbf16>, vector<4x320xf32> -> vector<4x320xf32>
    %36 = arith.addf %30, %35 : vector<4x320xf32>
    %c0_33 = arith.constant 0 : index
    %c0_34 = arith.constant 0 : index
    %c80 = arith.constant 80 : index
    %37 = vector.load %arg1[%c0_33, %c0_34, %c80] : memref<1x8x512xbf16, #tpu.memory_space<vmem>>, vector<1x8x320xbf16>
    %38 = vector.shape_cast %37 : vector<1x8x320xbf16> to vector<8x320xbf16>
    %c6 = arith.constant 6 : index
    %c0_35 = arith.constant 0 : index
    %c0_36 = arith.constant 0 : index
    %39 = vector.load %arg2[%c6, %c0_35, %c0_36] : memref<9x4x8xbf16, #tpu.memory_space<vmem>>, vector<1x4x8xbf16>
    %40 = vector.shape_cast %39 : vector<1x4x8xbf16> to vector<4x8xbf16>
    %cst_37 = arith.constant dense<0.000000e+00> : vector<4x320xf32>
    %41 = tpu.matmul %40, %38, %cst_37 {dimension_numbers = #tpu.dot_dimension_numbers<[1], [0], [0], [1], [0, 0, 1, 1], [], []>} : vector<4x8xbf16>, vector<8x320xbf16>, vector<4x320xf32> -> vector<4x320xf32>
    %42 = arith.addf %36, %41 : vector<4x320xf32>
    %c0_38 = arith.constant 0 : index
    %c0_39 = arith.constant 0 : index
    %c82 = arith.constant 82 : index
    %43 = vector.load %arg1[%c0_38, %c0_39, %c82] : memref<1x8x512xbf16, #tpu.memory_space<vmem>>, vector<1x8x320xbf16>
    %44 = vector.shape_cast %43 : vector<1x8x320xbf16> to vector<8x320xbf16>
    %c7 = arith.constant 7 : index
    %c0_40 = arith.constant 0 : index
    %c0_41 = arith.constant 0 : index
    %45 = vector.load %arg2[%c7, %c0_40, %c0_41] : memref<9x4x8xbf16, #tpu.memory_space<vmem>>, vector<1x4x8xbf16>
    %46 = vector.shape_cast %45 : vector<1x4x8xbf16> to vector<4x8xbf16>
    %cst_42 = arith.constant dense<0.000000e+00> : vector<4x320xf32>
    %47 = tpu.matmul %46, %44, %cst_42 {dimension_numbers = #tpu.dot_dimension_numbers<[1], [0], [0], [1], [0, 0, 1, 1], [], []>} : vector<4x8xbf16>, vector<8x320xbf16>, vector<4x320xf32> -> vector<4x320xf32>
    %48 = arith.addf %42, %47 : vector<4x320xf32>
    %c0_43 = arith.constant 0 : index
    %c0_44 = arith.constant 0 : index
    %c84 = arith.constant 84 : index
    %49 = vector.load %arg1[%c0_43, %c0_44, %c84] : memref<1x8x512xbf16, #tpu.memory_space<vmem>>, vector<1x8x320xbf16>
    %50 = vector.shape_cast %49 : vector<1x8x320xbf16> to vector<8x320xbf16>
    %c8 = arith.constant 8 : index
    %c0_45 = arith.constant 0 : index
    %c0_46 = arith.constant 0 : index
    %51 = vector.load %arg2[%c8, %c0_45, %c0_46] : memref<9x4x8xbf16, #tpu.memory_space<vmem>>, vector<1x4x8xbf16>
    %52 = vector.shape_cast %51 : vector<1x4x8xbf16> to vector<4x8xbf16>
    %cst_47 = arith.constant dense<0.000000e+00> : vector<4x320xf32>
    %53 = tpu.matmul %52, %50, %cst_47 {dimension_numbers = #tpu.dot_dimension_numbers<[1], [0], [0], [1], [0, 0, 1, 1], [], []>} : vector<4x8xbf16>, vector<8x320xbf16>, vector<4x320xf32> -> vector<4x320xf32>
    %54 = arith.addf %48, %53 : vector<4x320xf32>
    %c0_48 = arith.constant 0 : index
    %c0_49 = arith.constant 0 : index
    %55 = vector.load %arg3[%c0_48, %c0_49] : memref<4x1xf32, #tpu.memory_space<vmem>>, vector<4x1xf32>
    %56 = vector.broadcast %55 : vector<4x1xf32> to vector<4x320xf32>
    %57 = arith.addf %54, %56 : vector<4x320xf32>
    %cst_50 = arith.constant 0.000000e+00 : f32
    %58 = vector.broadcast %cst_50 : f32 to vector<4x320xf32>
    %59 = arith.maximumf %57, %58 : vector<4x320xf32>
    %c0_51 = arith.constant 0 : index
    %c0_52 = arith.constant 0 : index
    %c0_53 = arith.constant 0 : index
    %60 = vector.load %arg4[%c0_51, %c0_52, %c0_53] : memref<1x4x320xf32, #tpu.memory_space<vmem>>, vector<1x4x320xf32>
    %61 = vector.shape_cast %60 : vector<1x4x320xf32> to vector<4x320xf32>
    %62 = vector.shape_cast %59 : vector<4x320xf32> to vector<1x4x320xf32>
    tpu.vector_store %arg4[%c0_51, %c0_52, %c0_53], %62 {strides = array<i32>} : memref<1x4x320xf32, #tpu.memory_space<vmem>>, vector<1x4x320xf32>,
    return
  }
  func.func @transform_0(%arg0: i32) -> (i32, i32, i32) {
    %c0_i32 = arith.constant 0 : i32
    %c0_i32_0 = arith.constant 0 : i32
    %c0_i32_1 = arith.constant 0 : i32
    return %arg0, %c0_i32, %c0_i32_0 : i32, i32, i32
  }
  func.func @transform_1(%arg0: i32) -> (i32, i32, i32) {
    %c0_i32 = arith.constant 0 : i32
    %c0_i32_0 = arith.constant 0 : i32
    %c0_i32_1 = arith.constant 0 : i32
    %c0_i32_2 = arith.constant 0 : i32
    return %c0_i32, %c0_i32_0, %c0_i32_1 : i32, i32, i32
  }
  func.func @transform_2(%arg0: i32) -> (i32, i32) {
    %c0_i32 = arith.constant 0 : i32
    %c0_i32_0 = arith.constant 0 : i32
    %c0_i32_1 = arith.constant 0 : i32
    return %c0_i32, %c0_i32_0 : i32, i32
  }
  func.func @transform_3(%arg0: i32) -> (i32, i32, i32) {
    %c0_i32 = arith.constant 0 : i32
    %c0_i32_0 = arith.constant 0 : i32
    %c0_i32_1 = arith.constant 0 : i32
    return %arg0, %c0_i32, %c0_i32_0 : i32, i32, i32
  }
}

module attributes {stable_mosaic.version = 11 : i64} {
  func.func @_conv_kernel(%arg0: i32, %arg1: memref<1x4x384xbf16, #tpu.memory_space<vmem>>, %arg2: memref<9x3x4xbf16, #tpu.memory_space<vmem>>, %arg3: memref<3x1xf32, #tpu.memory_space<vmem>>, %arg4: memref<1x3x288xf32, #tpu.memory_space<vmem>>) attributes {dimension_semantics = [#tpu.dimension_semantics<parallel>], iteration_bounds = array<i64: 2>, scalar_prefetch = 0 : i64, scratch_operands = 0 : i64, tpu.core_type = #tpu.core_type<tc>, window_params = [{transform_indices = @transform_0, window_bounds = array<i64: 1, 4, 384>}, {pipeline_mode = #tpu.pipeline_mode<synchronous>, transform_indices = @transform_1, window_bounds = array<i64: 9, 3, 4>}, {pipeline_mode = #tpu.pipeline_mode<synchronous>, transform_indices = @transform_2, window_bounds = array<i64: 3, 1>}, {transform_indices = @transform_3, window_bounds = array<i64: 1, 3, 288>}]} {
    %cst = arith.constant 0.000000e+00 : f32
    %0 = vector.broadcast %cst : f32 to vector<3x288xf32>
    %c0 = arith.constant 0 : index
    %c0_0 = arith.constant 0 : index
    %c0_1 = arith.constant 0 : index
    %1 = vector.load %arg1[%c0, %c0_0, %c0_1] : memref<1x4x384xbf16, #tpu.memory_space<vmem>>, vector<1x4x288xbf16>
    %2 = vector.shape_cast %1 : vector<1x4x288xbf16> to vector<4x288xbf16>
    %c0_2 = arith.constant 0 : index
    %c0_3 = arith.constant 0 : index
    %c0_4 = arith.constant 0 : index
    %3 = vector.load %arg2[%c0_2, %c0_3, %c0_4] : memref<9x3x4xbf16, #tpu.memory_space<vmem>>, vector<1x3x4xbf16>
    %4 = vector.shape_cast %3 : vector<1x3x4xbf16> to vector<3x4xbf16>
    %cst_5 = arith.constant dense<0.000000e+00> : vector<3x288xf32>
    %5 = tpu.matmul %4, %2, %cst_5 {dimension_numbers = #tpu.dot_dimension_numbers<[1], [0], [0], [1], [0, 0, 1, 1], [], []>} : vector<3x4xbf16>, vector<4x288xbf16>, vector<3x288xf32> -> vector<3x288xf32>
    %6 = arith.addf %0, %5 : vector<3x288xf32>
    %c0_6 = arith.constant 0 : index
    %c0_7 = arith.constant 0 : index
    %c1 = arith.constant 1 : index
    %7 = vector.load %arg1[%c0_6, %c0_7, %c1] : memref<1x4x384xbf16, #tpu.memory_space<vmem>>, vector<1x4x288xbf16>
    %8 = vector.shape_cast %7 : vector<1x4x288xbf16> to vector<4x288xbf16>
    %c1_8 = arith.constant 1 : index
    %c0_9 = arith.constant 0 : index
    %c0_10 = arith.constant 0 : index
    %9 = vector.load %arg2[%c1_8, %c0_9, %c0_10] : memref<9x3x4xbf16, #tpu.memory_space<vmem>>, vector<1x3x4xbf16>
    %10 = vector.shape_cast %9 : vector<1x3x4xbf16> to vector<3x4xbf16>
    %cst_11 = arith.constant dense<0.000000e+00> : vector<3x288xf32>
    %11 = tpu.matmul %10, %8, %cst_11 {dimension_numbers = #tpu.dot_dimension_numbers<[1], [0], [0], [1], [0, 0, 1, 1], [], []>} : vector<3x4xbf16>, vector<4x288xbf16>, vector<3x288xf32> -> vector<3x288xf32>
    %12 = arith.addf %6, %11 : vector<3x288xf32>
    %c0_12 = arith.constant 0 : index
    %c0_13 = arith.constant 0 : index
    %c2 = arith.constant 2 : index
    %13 = vector.load %arg1[%c0_12, %c0_13, %c2] : memref<1x4x384xbf16, #tpu.memory_space<vmem>>, vector<1x4x288xbf16>
    %14 = vector.shape_cast %13 : vector<1x4x288xbf16> to vector<4x288xbf16>
    %c2_14 = arith.constant 2 : index
    %c0_15 = arith.constant 0 : index
    %c0_16 = arith.constant 0 : index
    %15 = vector.load %arg2[%c2_14, %c0_15, %c0_16] : memref<9x3x4xbf16, #tpu.memory_space<vmem>>, vector<1x3x4xbf16>
    %16 = vector.shape_cast %15 : vector<1x3x4xbf16> to vector<3x4xbf16>
    %cst_17 = arith.constant dense<0.000000e+00> : vector<3x288xf32>
    %17 = tpu.matmul %16, %14, %cst_17 {dimension_numbers = #tpu.dot_dimension_numbers<[1], [0], [0], [1], [0, 0, 1, 1], [], []>} : vector<3x4xbf16>, vector<4x288xbf16>, vector<3x288xf32> -> vector<3x288xf32>
    %18 = arith.addf %12, %17 : vector<3x288xf32>
    %c0_18 = arith.constant 0 : index
    %c0_19 = arith.constant 0 : index
    %c18 = arith.constant 18 : index
    %19 = vector.load %arg1[%c0_18, %c0_19, %c18] : memref<1x4x384xbf16, #tpu.memory_space<vmem>>, vector<1x4x288xbf16>
    %20 = vector.shape_cast %19 : vector<1x4x288xbf16> to vector<4x288xbf16>
    %c3 = arith.constant 3 : index
    %c0_20 = arith.constant 0 : index
    %c0_21 = arith.constant 0 : index
    %21 = vector.load %arg2[%c3, %c0_20, %c0_21] : memref<9x3x4xbf16, #tpu.memory_space<vmem>>, vector<1x3x4xbf16>
    %22 = vector.shape_cast %21 : vector<1x3x4xbf16> to vector<3x4xbf16>
    %cst_22 = arith.constant dense<0.000000e+00> : vector<3x288xf32>
    %23 = tpu.matmul %22, %20, %cst_22 {dimension_numbers = #tpu.dot_dimension_numbers<[1], [0], [0], [1], [0, 0, 1, 1], [], []>} : vector<3x4xbf16>, vector<4x288xbf16>, vector<3x288xf32> -> vector<3x288xf32>
    %24 = arith.addf %18, %23 : vector<3x288xf32>
    %c0_23 = arith.constant 0 : index
    %c0_24 = arith.constant 0 : index
    %c19 = arith.constant 19 : index
    %25 = vector.load %arg1[%c0_23, %c0_24, %c19] : memref<1x4x384xbf16, #tpu.memory_space<vmem>>, vector<1x4x288xbf16>
    %26 = vector.shape_cast %25 : vector<1x4x288xbf16> to vector<4x288xbf16>
    %c4 = arith.constant 4 : index
    %c0_25 = arith.constant 0 : index
    %c0_26 = arith.constant 0 : index
    %27 = vector.load %arg2[%c4, %c0_25, %c0_26] : memref<9x3x4xbf16, #tpu.memory_space<vmem>>, vector<1x3x4xbf16>
    %28 = vector.shape_cast %27 : vector<1x3x4xbf16> to vector<3x4xbf16>
    %cst_27 = arith.constant dense<0.000000e+00> : vector<3x288xf32>
    %29 = tpu.matmul %28, %26, %cst_27 {dimension_numbers = #tpu.dot_dimension_numbers<[1], [0], [0], [1], [0, 0, 1, 1], [], []>} : vector<3x4xbf16>, vector<4x288xbf16>, vector<3x288xf32> -> vector<3x288xf32>
    %30 = arith.addf %24, %29 : vector<3x288xf32>
    %c0_28 = arith.constant 0 : index
    %c0_29 = arith.constant 0 : index
    %c20 = arith.constant 20 : index
    %31 = vector.load %arg1[%c0_28, %c0_29, %c20] : memref<1x4x384xbf16, #tpu.memory_space<vmem>>, vector<1x4x288xbf16>
    %32 = vector.shape_cast %31 : vector<1x4x288xbf16> to vector<4x288xbf16>
    %c5 = arith.constant 5 : index
    %c0_30 = arith.constant 0 : index
    %c0_31 = arith.constant 0 : index
    %33 = vector.load %arg2[%c5, %c0_30, %c0_31] : memref<9x3x4xbf16, #tpu.memory_space<vmem>>, vector<1x3x4xbf16>
    %34 = vector.shape_cast %33 : vector<1x3x4xbf16> to vector<3x4xbf16>
    %cst_32 = arith.constant dense<0.000000e+00> : vector<3x288xf32>
    %35 = tpu.matmul %34, %32, %cst_32 {dimension_numbers = #tpu.dot_dimension_numbers<[1], [0], [0], [1], [0, 0, 1, 1], [], []>} : vector<3x4xbf16>, vector<4x288xbf16>, vector<3x288xf32> -> vector<3x288xf32>
    %36 = arith.addf %30, %35 : vector<3x288xf32>
    %c0_33 = arith.constant 0 : index
    %c0_34 = arith.constant 0 : index
    %c36 = arith.constant 36 : index
    %37 = vector.load %arg1[%c0_33, %c0_34, %c36] : memref<1x4x384xbf16, #tpu.memory_space<vmem>>, vector<1x4x288xbf16>
    %38 = vector.shape_cast %37 : vector<1x4x288xbf16> to vector<4x288xbf16>
    %c6 = arith.constant 6 : index
    %c0_35 = arith.constant 0 : index
    %c0_36 = arith.constant 0 : index
    %39 = vector.load %arg2[%c6, %c0_35, %c0_36] : memref<9x3x4xbf16, #tpu.memory_space<vmem>>, vector<1x3x4xbf16>
    %40 = vector.shape_cast %39 : vector<1x3x4xbf16> to vector<3x4xbf16>
    %cst_37 = arith.constant dense<0.000000e+00> : vector<3x288xf32>
    %41 = tpu.matmul %40, %38, %cst_37 {dimension_numbers = #tpu.dot_dimension_numbers<[1], [0], [0], [1], [0, 0, 1, 1], [], []>} : vector<3x4xbf16>, vector<4x288xbf16>, vector<3x288xf32> -> vector<3x288xf32>
    %42 = arith.addf %36, %41 : vector<3x288xf32>
    %c0_38 = arith.constant 0 : index
    %c0_39 = arith.constant 0 : index
    %c37 = arith.constant 37 : index
    %43 = vector.load %arg1[%c0_38, %c0_39, %c37] : memref<1x4x384xbf16, #tpu.memory_space<vmem>>, vector<1x4x288xbf16>
    %44 = vector.shape_cast %43 : vector<1x4x288xbf16> to vector<4x288xbf16>
    %c7 = arith.constant 7 : index
    %c0_40 = arith.constant 0 : index
    %c0_41 = arith.constant 0 : index
    %45 = vector.load %arg2[%c7, %c0_40, %c0_41] : memref<9x3x4xbf16, #tpu.memory_space<vmem>>, vector<1x3x4xbf16>
    %46 = vector.shape_cast %45 : vector<1x3x4xbf16> to vector<3x4xbf16>
    %cst_42 = arith.constant dense<0.000000e+00> : vector<3x288xf32>
    %47 = tpu.matmul %46, %44, %cst_42 {dimension_numbers = #tpu.dot_dimension_numbers<[1], [0], [0], [1], [0, 0, 1, 1], [], []>} : vector<3x4xbf16>, vector<4x288xbf16>, vector<3x288xf32> -> vector<3x288xf32>
    %48 = arith.addf %42, %47 : vector<3x288xf32>
    %c0_43 = arith.constant 0 : index
    %c0_44 = arith.constant 0 : index
    %c38 = arith.constant 38 : index
    %49 = vector.load %arg1[%c0_43, %c0_44, %c38] : memref<1x4x384xbf16, #tpu.memory_space<vmem>>, vector<1x4x288xbf16>
    %50 = vector.shape_cast %49 : vector<1x4x288xbf16> to vector<4x288xbf16>
    %c8 = arith.constant 8 : index
    %c0_45 = arith.constant 0 : index
    %c0_46 = arith.constant 0 : index
    %51 = vector.load %arg2[%c8, %c0_45, %c0_46] : memref<9x3x4xbf16, #tpu.memory_space<vmem>>, vector<1x3x4xbf16>
    %52 = vector.shape_cast %51 : vector<1x3x4xbf16> to vector<3x4xbf16>
    %cst_47 = arith.constant dense<0.000000e+00> : vector<3x288xf32>
    %53 = tpu.matmul %52, %50, %cst_47 {dimension_numbers = #tpu.dot_dimension_numbers<[1], [0], [0], [1], [0, 0, 1, 1], [], []>} : vector<3x4xbf16>, vector<4x288xbf16>, vector<3x288xf32> -> vector<3x288xf32>
    %54 = arith.addf %48, %53 : vector<3x288xf32>
    %c0_48 = arith.constant 0 : index
    %c0_49 = arith.constant 0 : index
    %55 = vector.load %arg3[%c0_48, %c0_49] : memref<3x1xf32, #tpu.memory_space<vmem>>, vector<3x1xf32>
    %56 = vector.broadcast %55 : vector<3x1xf32> to vector<3x288xf32>
    %57 = arith.addf %54, %56 : vector<3x288xf32>
    %58 = math.tanh %57 : vector<3x288xf32>
    %c0_50 = arith.constant 0 : index
    %c0_51 = arith.constant 0 : index
    %c0_52 = arith.constant 0 : index
    %59 = vector.load %arg4[%c0_50, %c0_51, %c0_52] : memref<1x3x288xf32, #tpu.memory_space<vmem>>, vector<1x3x288xf32>
    %60 = vector.shape_cast %59 : vector<1x3x288xf32> to vector<3x288xf32>
    %61 = vector.shape_cast %58 : vector<3x288xf32> to vector<1x3x288xf32>
    tpu.vector_store %arg4[%c0_50, %c0_51, %c0_52], %61 {strides = array<i32>} : memref<1x3x288xf32, #tpu.memory_space<vmem>>, vector<1x3x288xf32>,
    return
  }
  func.func @transform_0(%arg0: i32) -> (i32, i32, i32) {
    %c0_i32 = arith.constant 0 : i32
    %c0_i32_0 = arith.constant 0 : i32
    %c0_i32_1 = arith.constant 0 : i32
    return %arg0, %c0_i32, %c0_i32_0 : i32, i32, i32
  }
  func.func @transform_1(%arg0: i32) -> (i32, i32, i32) {
    %c0_i32 = arith.constant 0 : i32
    %c0_i32_0 = arith.constant 0 : i32
    %c0_i32_1 = arith.constant 0 : i32
    %c0_i32_2 = arith.constant 0 : i32
    return %c0_i32, %c0_i32_0, %c0_i32_1 : i32, i32, i32
  }
  func.func @transform_2(%arg0: i32) -> (i32, i32) {
    %c0_i32 = arith.constant 0 : i32
    %c0_i32_0 = arith.constant 0 : i32
    %c0_i32_1 = arith.constant 0 : i32
    return %c0_i32, %c0_i32_0 : i32, i32
  }
  func.func @transform_3(%arg0: i32) -> (i32, i32, i32) {
    %c0_i32 = arith.constant 0 : i32
    %c0_i32_0 = arith.constant 0 : i32
    %c0_i32_1 = arith.constant 0 : i32
    return %arg0, %c0_i32, %c0_i32_0 : i32, i32, i32
  }
}

</mosaic_0001>

<llo_original>
// kernel: forward.8
$region0: #{forward.8}
  #allocation0 [shape = 'u32[]', space=smem, size = 0x4, offset = 0x4, fixed_abs, tag = 'smem constant byte address 0x4 - core index']
  #allocation1 [shape = 'u32[72,128]{1,0:T(1,128)}', space=vmem, size = 0x9000, scoped, tag = 'internal scratch']
  %s0 = inlined_call_operand.vmem [shape: bf16[2,8,384], index: 0, kind: input, shape index: {}]
  %s1 = inlined_call_operand.vmem [shape: bf16[9,8,8], index: 1, kind: input, shape index: {}]
  %s2 = inlined_call_operand.vmem [shape: f32[8,1], index: 2, kind: input, shape index: {}]
  %s3 = inlined_call_operand.vmem [shape: f32[2,8,288], index: 3, kind: output, shape index: {}]
  %s4 = sld [smem:[#allocation0]]
  $region45: #{forward.8} parent=0
    _
  %s6 = ssub.s32 1, %s4
  %s7 = scalar_select 0, %s6, %s4
  loop: start=0, step=1, limit=4
  $region2: #{forward.8} parent=0 // loop_pre_header
    _
  $region3: #{forward.8} parent=0 // loop_header
    %s9 = sphi 0, %s13
    %p10 = scmp.ge.s32.totalorder %s9, 4
    %s19 = sphi 0, %s21
    %s22 = sphi 0, %s19
    %s23 = sphi 0, %s22
    %s39 = sphi 0, %s23
    %s43 = sphi 0, %s43
    %s45 = sphi 0, %s43
    %s46 = sphi 0, %s45
    %s60 = sphi 0, %s46
    %s64 = sphi 0, %s64
    %s66 = sphi 0, %s64
    %s67 = sphi 0, %s66
    %s81 = sphi 0, %s67
    %s87 = sphi 0, %s89
    %s90 = sphi 0, %s87
    %s91 = sphi 0, %s90
    %s107 = sphi 0, %s91
  $region4: #{forward.8} parent=0 // loop_header_branch
    %12 = sbr.rel (%p10) target = $region8
  $region5: #{forward.8} parent=0 // loop_body
    %s14 = ssub.s32 %s9, 1
    %s15 = ssub.s32 %s9, 2
    %s16 = sadd.s32 %s9, 1
    %s17 = ssub.s32 %s9, %s16
    %p18 = scmp.eq.s32.totalorder %s17, 0
    %s20 = sadd.s32 %s19, 1
    %s21 = scalar_select %p18, %s19, %s20
    %p24 = pneg %p18
    %p25 = scmp.eq.s32.totalorder %s9, 1
    %p26 = por %p24, %p25
    %p27 = scmp.ne.s32.totalorder %s19, %s22
    %p28 = scmp.eq.s32.totalorder %s9, 0
    %p29 = por %p27, %p28
    %p30 = scmp.ne.s32.totalorder %s19, %s22
    %p31 = scmp.eq.s32.totalorder %s14, 1
    %p32 = por %p30, %p31
    %p33 = scmp.ne.s32.totalorder %s22, %s23
    %p34 = scmp.eq.s32.totalorder %s14, 0
    %p35 = por %p33, %p34
    %p36 = scmp.ne.s32.totalorder %s22, %s23
    %p37 = scmp.eq.s32.totalorder %s15, 1
    %p38 = por %p36, %p37
    %p40 = scmp.ne.s32.totalorder %s23, %s39
    %p41 = scmp.eq.s32.totalorder %s15, 0
    %p42 = por %p40, %p41
    %s44 = sadd.s32 %s43, 1
    %p47 = scmp.eq.s32.totalorder %s9, 1
    %p48 = scmp.ne.s32.totalorder %s43, %s45
    %p49 = scmp.eq.s32.totalorder %s9, 0
    %p50 = por %p48, %p49
    %p51 = scmp.ne.s32.totalorder %s43, %s45
    %p52 = scmp.eq.s32.totalorder %s14, 1
    %p53 = por %p51, %p52
    %p54 = scmp.ne.s32.totalorder %s45, %s46
    %p55 = scmp.eq.s32.totalorder %s14, 0
    %p56 = por %p54, %p55
    %p57 = scmp.ne.s32.totalorder %s45, %s46
    %p58 = scmp.eq.s32.totalorder %s15, 1
    %p59 = por %p57, %p58
    %p61 = scmp.ne.s32.totalorder %s46, %s60
    %p62 = scmp.eq.s32.totalorder %s15, 0
    %p63 = por %p61, %p62
    %s65 = sadd.s32 %s64, 1
    %p68 = scmp.eq.s32.totalorder %s9, 1
    %p69 = scmp.ne.s32.totalorder %s64, %s66
    %p70 = scmp.eq.s32.totalorder %s9, 0
    %p71 = por %p69, %p70
    %p72 = scmp.ne.s32.totalorder %s64, %s66
    %p73 = scmp.eq.s32.totalorder %s14, 1
    %p74 = por %p72, %p73
    %p75 = scmp.ne.s32.totalorder %s66, %s67
    %p76 = scmp.eq.s32.totalorder %s14, 0
    %p77 = por %p75, %p76
    %p78 = scmp.ne.s32.totalorder %s66, %s67
    %p79 = scmp.eq.s32.totalorder %s15, 1
    %p80 = por %p78, %p79
    %p82 = scmp.ne.s32.totalorder %s67, %s81
    %p83 = scmp.eq.s32.totalorder %s15, 0
    %p84 = por %p82, %p83
    %s85 = ssub.s32 %s9, %s16
    %p86 = scmp.eq.s32.totalorder %s85, 0
    %s88 = sadd.s32 %s87, 1
    %s89 = scalar_select %p86, %s87, %s88
    %p92 = pneg %p86
    %p93 = scmp.eq.s32.totalorder %s9, 1
    %p94 = por %p92, %p93
    %p95 = scmp.ne.s32.totalorder %s87, %s90
    %p96 = scmp.eq.s32.totalorder %s9, 0
    %p97 = por %p95, %p96
    %p98 = scmp.ne.s32.totalorder %s87, %s90
    %p99 = scmp.eq.s32.totalorder %s14, 1
    %p100 = por %p98, %p99
    %p101 = scmp.ne.s32.totalorder %s90, %s91
    %p102 = scmp.eq.s32.totalorder %s14, 0
    %p103 = por %p101, %p102
    %p104 = scmp.ne.s32.totalorder %s90, %s91
    %p105 = scmp.eq.s32.totalorder %s15, 1
    %p106 = por %p104, %p105
    %p108 = scmp.ne.s32.totalorder %s91, %s107
    %p109 = scmp.eq.s32.totalorder %s15, 0
    %p110 = por %p108, %p109
    %p111 = scmp.le.s32.totalorder 1, %s9
    %p112 = scmp.lt.s32.totalorder %s9, 3
    %p113 = pnand %p111, %p112
    %p114 = pneg %p113
    // Predicated region
    $region9: #{forward.8} parent=5 // pred_check
      _
    $region10: #{forward.8} parent=5 // pred_check_branch
      %116 = sbr.rel (%p113) target = $region12
    $region11: #{forward.8} parent=5 // pred_region
      %s117 = ssub.s32 %s9, 1
      // Predicated region
      $region13: #{forward.8} parent=11 // pred_check
        %p118 = pneg %p56
      $region14: #{forward.8} parent=11 // pred_check_branch
        %120 = sbr.rel (%p118) target = $region16
      $region15: #{forward.8} parent=11 // pred_region
        _
      $region16: #{forward.8} parent=11 // pred_fallthru
        _
      // Predicated region
      $region17: #{forward.8} parent=11 // pred_check
        %p121 = pneg %p77
      $region18: #{forward.8} parent=11 // pred_check_branch
        %123 = sbr.rel (%p121) target = $region20
      $region19: #{forward.8} parent=11 // pred_region
        _
      $region20: #{forward.8} parent=11 // pred_fallthru
        _
    $region12: #{forward.8} parent=5 // pred_fallthru
      _
    %p124 = scmp.lt.s32.totalorder %s9, 2
    // Predicated region
    $region21: #{forward.8} parent=5 // pred_check
      %p125 = pneg %p124
    $region22: #{forward.8} parent=5 // pred_check_branch
      %127 = sbr.rel (%p125) target = $region24
    $region23: #{forward.8} parent=5 // pred_region
      // Predicated region
      $region25: #{forward.8} parent=23 // pred_check
        %p128 = pneg %p29
      $region26: #{forward.8} parent=23 // pred_check_branch
        %130 = sbr.rel (%p128) target = $region28
      $region27: #{forward.8} parent=23 // pred_region
        %p131 = scmp.lt.s32.totalorder %s9, 1
        %s132 = scalar_select %p131, %s9, 1
        %s133 = smul.addr %s132, 3
        %s134 = smul.addr %s133, 4
        %s135 = scalar_lea.vmem %s0, %s134
      $region28: #{forward.8} parent=23 // pred_fallthru
        _
    $region24: #{forward.8} parent=5 // pred_fallthru
      _
    %p136 = scmp.le.s32.totalorder 1, %s9
    %p137 = scmp.lt.s32.totalorder %s9, 3
    %p138 = pnand %p136, %p137
    %p139 = pneg %p138
    // Predicated region
    $region29: #{forward.8} parent=5 // pred_check
      _
    $region30: #{forward.8} parent=5 // pred_check_branch
      %141 = sbr.rel (%p138) target = $region32
    $region31: #{forward.8} parent=5 // pred_region
      %s142 = ssub.s32 %s9, 1
      %p143 = scmp.lt.s32.totalorder %s14, 1
      %s144 = scalar_select %p143, %s14, 1
      %s145 = smul.addr %s144, 3
      %s146 = smul.addr %s145, 4
      %s147 = scalar_lea.vmem %s0, %s146
      %p148 = pneg %p35
      %p149 = pneg %p32
      %p150 = pneg %p56
      %p151 = pneg %p53
      %p152 = pneg %p77
      %p153 = pneg %p74
      %p154 = pneg %p103
      %p155 = pneg %p100
      %p156 = scmp.lt.s32.totalorder %s14, 1
      %s157 = scalar_select %p156, %s14, 1
      %s158 = smul.addr %s157, 3
      %s159 = smul.addr %s158, 8
      %s160 = scalar_lea.vmem %s3, %s159
      %p161 = scmp.lt.s32.totalorder %s14, 1
      %s162 = scalar_select %p161, %s14, 1
      %s163 = smul.addr %s162, 3
      %s164 = smul.addr %s163, 4
      %s165 = scalar_lea.vmem %s0, %s164
      %p166 = scmp.lt.s32.totalorder %s14, 1
      %s167 = scalar_select %p166, %s14, 1
      %s168 = smul.addr %s167, 3
      %s169 = smul.addr %s168, 8
      %s170 = scalar_lea.vmem %s3, %s169
      %v172 = vld [vmem:[%s165] sm:$0xff]
      %v173 = vld [vmem:[%s165 + $0x8] sm:$0xf]
      %v174 = vld [vmem:[%s1] sm:$0xf]
      %s175 = scalar_lea.vmem %s1, 4
      %v176 = vld [vmem:[%s175] sm:$0xf]
      %v179 = vunpack.c.l.b16 %v172
      %v180 = vunpack.c.h.b16 %v172
      %v181 = vunpack.c.l.b16 %v173
      %v182 = vpack.c.b16 %v179, %v179
      %v183 = vpack.c.b16 %v180, %v180
      %v184 = vpack.c.b16 %v181, %v181
      %185 = vrot.lane.b32.xlu0 %v182, 127
      %v186 = vpop.permute.xlu0 %185
      %187 = vrot.lane.b32.xlu0 %v183, 127
      %v188 = vpop.permute.xlu0 %187
      %189 = vrot.lane.b32.xlu0 %v184, 127
      %v190 = vpop.permute.xlu0 %189
      %vm191 = vcmask 1039360
      %v192 = vsel %vm191, %v186, %v188
      %v193 = vsel %vm191, %v188, %v190
      %vm194 = vcmask 64512
      %v196 = vsel %vm194, %v176, 0
      %vm198 = vcmask 1043456
      %v200 = vsel %vm198, %v192, 0
      %v203 = vsel %vm198, %v193, 0
      %v206 = vsel %vm198, %v190, 0
      %208 = vmatpush.bf16.msra.mxu0 0
      %209 = vmatpush.bf16.msra.mxu0 0
      %210 = vmatpush.bf16.msra.mxu0 0
      %211 = vmatpush.bf16.msra.mxu0 0
      %212 = vmatpush.bf16.msra.mxu0 0
      %213 = vmatpush.bf16.msra.mxu0 0
      %214 = vmatpush.bf16.msra.mxu0 0
      %215 = vmatpush.bf16.msra.mxu0 %v200
      %216 = vmatmul.bf16.gmra.mxu0 %v196
      %v217 = vpop.f32.mrf.mxu0
      %v218 = vadd.f32 0.0, %v217
      %v219 = vpop.f32.mrf.mxu0
      %220 = vdwg.mxu0
      %221 = vmatpush.bf16.msra.mxu0 0
      %222 = vmatpush.bf16.msra.mxu0 0
      %223 = vmatpush.bf16.msra.mxu0 0
      %224 = vmatpush.bf16.msra.mxu0 0
      %225 = vmatpush.bf16.msra.mxu0 0
      %226 = vmatpush.bf16.msra.mxu0 0
      %227 = vmatpush.bf16.msra.mxu0 0
      %228 = vmatpush.bf16.msra.mxu0 %v203
      %229 = vmatmul.bf16.gmra.mxu0 %v196
      %v230 = vpop.f32.mrf.mxu0
      %v231 = vadd.f32 0.0, %v230
      %v232 = vpop.f32.mrf.mxu0
      %233 = vdwg.mxu0
      %234 = vmatpush.bf16.msra.mxu0 0
      %235 = vmatpush.bf16.msra.mxu0 0
      %236 = vmatpush.bf16.msra.mxu0 0
      %237 = vmatpush.bf16.msra.mxu0 0
      %238 = vmatpush.bf16.msra.mxu0 0
      %239 = vmatpush.bf16.msra.mxu0 0
      %240 = vmatpush.bf16.msra.mxu0 0
      %241 = vmatpush.bf16.msra.mxu0 %v206
      %242 = vmatmul.bf16.gmra.mxu0 %v196
      %v243 = vpop.f32.mrf.mxu0
      %v244 = vadd.f32 0.0, %v243
      %v245 = vpop.f32.mrf.mxu0
      %246 = vdwg.mxu0
      %v248 = vsel %vm194, %v174, 0
      %v251 = vsel %vm198, %v182, 0
      %v254 = vsel %vm198, %v183, 0
      %v257 = vsel %vm198, %v184, 0
      %259 = vmatpush.bf16.msra.mxu0 0
      %260 = vmatpush.bf16.msra.mxu0 0
      %261 = vmatpush.bf16.msra.mxu0 0
      %262 = vmatpush.bf16.msra.mxu0 0
      %263 = vmatpush.bf16.msra.mxu0 0
      %264 = vmatpush.bf16.msra.mxu0 0
      %265 = vmatpush.bf16.msra.mxu0 0
      %266 = vmatpush.bf16.msra.mxu0 %v251
      %267 = vmatmul.bf16.gmra.mxu0 %v248
      %v268 = vpop.f32.mrf.mxu0
      %v269 = vadd.f32 %v218, %v268
      %v270 = vpop.f32.mrf.mxu0
      %271 = vdwg.mxu0
      %272 = vmatpush.bf16.msra.mxu0 0
      %273 = vmatpush.bf16.msra.mxu0 0
      %274 = vmatpush.bf16.msra.mxu0 0
      %275 = vmatpush.bf16.msra.mxu0 0
      %276 = vmatpush.bf16.msra.mxu0 0
      %277 = vmatpush.bf16.msra.mxu0 0
      %278 = vmatpush.bf16.msra.mxu0 0
      %279 = vmatpush.bf16.msra.mxu0 %v254
      %280 = vmatmul.bf16.gmra.mxu0 %v248
      %v281 = vpop.f32.mrf.mxu0
      %v282 = vadd.f32 %v231, %v281
      %v283 = vpop.f32.mrf.mxu0
      %284 = vdwg.mxu0
      %285 = vmatpush.bf16.msra.mxu0 0
      %286 = vmatpush.bf16.msra.mxu0 0
      %287 = vmatpush.bf16.msra.mxu0 0
      %288 = vmatpush.bf16.msra.mxu0 0
      %289 = vmatpush.bf16.msra.mxu0 0
      %290 = vmatpush.bf16.msra.mxu0 0
      %291 = vmatpush.bf16.msra.mxu0 0
      %292 = vmatpush.bf16.msra.mxu0 %v257
      %293 = vmatmul.bf16.gmra.mxu0 %v248
      %v294 = vpop.f32.mrf.mxu0
      %v295 = vadd.f32 %v244, %v294
      %v296 = vpop.f32.mrf.mxu0
      %297 = vdwg.mxu0
      %s298 = scalar_lea.vmem %s1, 8
      %v299 = vld [vmem:[%s298] sm:$0xf]
      %300 = vrot.lane.b32.xlu0 %v182, 126
      %v301 = vpop.permute.xlu0 %300
      %302 = vrot.lane.b32.xlu0 %v183, 126
      %v303 = vpop.permute.xlu0 %302
      %304 = vrot.lane.b32.xlu0 %v184, 126
      %v305 = vpop.permute.xlu0 %304
      %vm306 = vcmask 1031168
      %v307 = vsel %vm306, %v301, %v303
      %v308 = vsel %vm306, %v303, %v305
      %v310 = vsel %vm194, %v299, 0
      %v313 = vsel %vm198, %v307, 0
      %v316 = vsel %vm198, %v308, 0
      %v319 = vsel %vm198, %v305, 0
      %321 = vmatpush.bf16.msra.mxu0 0
      %322 = vmatpush.bf16.msra.mxu0 0
      %323 = vmatpush.bf16.msra.mxu0 0
      %324 = vmatpush.bf16.msra.mxu0 0
      %325 = vmatpush.bf16.msra.mxu0 0
      %326 = vmatpush.bf16.msra.mxu0 0
      %327 = vmatpush.bf16.msra.mxu0 0
      %328 = vmatpush.bf16.msra.mxu0 %v313
      %329 = vmatmul.bf16.gmra.mxu0 %v310
      %v330 = vpop.f32.mrf.mxu0
      %v331 = vadd.f32 0.0, %v330
      %v332 = vpop.f32.mrf.mxu0
      %333 = vdwg.mxu0
      %334 = vmatpush.bf16.msra.mxu0 0
      %335 = vmatpush.bf16.msra.mxu0 0
      %336 = vmatpush.bf16.msra.mxu0 0
      %337 = vmatpush.bf16.msra.mxu0 0
      %338 = vmatpush.bf16.msra.mxu0 0
      %339 = vmatpush.bf16.msra.mxu0 0
      %340 = vmatpush.bf16.msra.mxu0 0
      %341 = vmatpush.bf16.msra.mxu0 %v316
      %342 = vmatmul.bf16.gmra.mxu0 %v310
      %v343 = vpop.f32.mrf.mxu0
      %v344 = vadd.f32 0.0, %v343
      %v345 = vpop.f32.mrf.mxu0
      %346 = vdwg.mxu0
      %347 = vmatpush.bf16.msra.mxu0 0
      %348 = vmatpush.bf16.msra.mxu0 0
      %349 = vmatpush.bf16.msra.mxu0 0
      %350 = vmatpush.bf16.msra.mxu0 0
      %351 = vmatpush.bf16.msra.mxu0 0
      %352 = vmatpush.bf16.msra.mxu0 0
      %353 = vmatpush.bf16.msra.mxu0 0
      %354 = vmatpush.bf16.msra.mxu0 %v319
      %355 = vmatmul.bf16.gmra.mxu0 %v310
      %v356 = vpop.f32.mrf.mxu0
      %v357 = vadd.f32 0.0, %v356
      %v358 = vpop.f32.mrf.mxu0
      %359 = vdwg.mxu0
      %v360 = vadd.f32 %v269, %v331
      %v361 = vadd.f32 %v282, %v344
      %v362 = vadd.f32 %v295, %v357
      %s363 = scalar_lea.vmem %s1, 12
      %v364 = vld [vmem:[%s363] sm:$0xf]
      %365 = vrot.lane.b32.xlu0 %v182, 110
      %v366 = vpop.permute.xlu0 %365
      %367 = vrot.lane.b32.xlu0 %v183, 110
      %v368 = vpop.permute.xlu0 %367
      %369 = vrot.lane.b32.xlu0 %v184, 110
      %v370 = vpop.permute.xlu0 %369
      %vm371 = vcmask 900096
      %v372 = vsel %vm371, %v366, %v368
      %v373 = vsel %vm371, %v368, %v370
      %v375 = vsel %vm194, %v364, 0
      %v378 = vsel %vm198, %v372, 0
      %v381 = vsel %vm198, %v373, 0
      %v384 = vsel %vm198, %v370, 0
      %386 = vmatpush.bf16.msra.mxu0 0
      %387 = vmatpush.bf16.msra.mxu0 0
      %388 = vmatpush.bf16.msra.mxu0 0
      %389 = vmatpush.bf16.msra.mxu0 0
      %390 = vmatpush.bf16.msra.mxu0 0
      %391 = vmatpush.bf16.msra.mxu0 0
      %392 = vmatpush.bf16.msra.mxu0 0
      %393 = vmatpush.bf16.msra.mxu0 %v378
      %394 = vmatmul.bf16.gmra.mxu0 %v375
      %v395 = vpop.f32.mrf.mxu0
      %v396 = vadd.f32 0.0, %v395
      %v397 = vpop.f32.mrf.mxu0
      %398 = vdwg.mxu0
      %399 = vmatpush.bf16.msra.mxu0 0
      %400 = vmatpush.bf16.msra.mxu0 0
      %401 = vmatpush.bf16.msra.mxu0 0
      %402 = vmatpush.bf16.msra.mxu0 0
      %403 = vmatpush.bf16.msra.mxu0 0
      %404 = vmatpush.bf16.msra.mxu0 0
      %405 = vmatpush.bf16.msra.mxu0 0
      %406 = vmatpush.bf16.msra.mxu0 %v381
      %407 = vmatmul.bf16.gmra.mxu0 %v375
      %v408 = vpop.f32.mrf.mxu0
      %v409 = vadd.f32 0.0, %v408
      %v410 = vpop.f32.mrf.mxu0
      %411 = vdwg.mxu0
      %412 = vmatpush.bf16.msra.mxu0 0
      %413 = vmatpush.bf16.msra.mxu0 0
      %414 = vmatpush.bf16.msra.mxu0 0
      %415 = vmatpush.bf16.msra.mxu0 0
      %416 = vmatpush.bf16.msra.mxu0 0
      %417 = vmatpush.bf16.msra.mxu0 0
      %418 = vmatpush.bf16.msra.mxu0 0
      %419 = vmatpush.bf16.msra.mxu0 %v384
      %420 = vmatmul.bf16.gmra.mxu0 %v375
      %v421 = vpop.f32.mrf.mxu0
      %v422 = vadd.f32 0.0, %v421
      %v423 = vpop.f32.mrf.mxu0
      %424 = vdwg.mxu0
      %v425 = vadd.f32 %v360, %v396
      %v426 = vadd.f32 %v361, %v409
      %v427 = vadd.f32 %v362, %v422
      %s428 = scalar_lea.vmem %s1, 16
      %v429 = vld [vmem:[%s428] sm:$0xf]
      %430 = vrot.lane.b32.xlu0 %v182, 109
      %v431 = vpop.permute.xlu0 %430
      %432 = vrot.lane.b32.xlu0 %v183, 109
      %v433 = vpop.permute.xlu0 %432
      %434 = vrot.lane.b32.xlu0 %v184, 109
      %v435 = vpop.permute.xlu0 %434
      %vm436 = vcmask 891904
      %v437 = vsel %vm436, %v431, %v433
      %v438 = vsel %vm436, %v433, %v435
      %v440 = vsel %vm194, %v429, 0
      %v443 = vsel %vm198, %v437, 0
      %v446 = vsel %vm198, %v438, 0
      %v449 = vsel %vm198, %v435, 0
      %451 = vmatpush.bf16.msra.mxu0 0
      %452 = vmatpush.bf16.msra.mxu0 0
      %453 = vmatpush.bf16.msra.mxu0 0
      %454 = vmatpush.bf16.msra.mxu0 0
      %455 = vmatpush.bf16.msra.mxu0 0
      %456 = vmatpush.bf16.msra.mxu0 0
      %457 = vmatpush.bf16.msra.mxu0 0
      %458 = vmatpush.bf16.msra.mxu0 %v443
      %459 = vmatmul.bf16.gmra.mxu0 %v440
      %v460 = vpop.f32.mrf.mxu0
      %v461 = vadd.f32 0.0, %v460
      %v462 = vpop.f32.mrf.mxu0
      %463 = vdwg.mxu0
      %464 = vmatpush.bf16.msra.mxu0 0
      %465 = vmatpush.bf16.msra.mxu0 0
      %466 = vmatpush.bf16.msra.mxu0 0
      %467 = vmatpush.bf16.msra.mxu0 0
      %468 = vmatpush.bf16.msra.mxu0 0
      %469 = vmatpush.bf16.msra.mxu0 0
      %470 = vmatpush.bf16.msra.mxu0 0
      %471 = vmatpush.bf16.msra.mxu0 %v446
      %472 = vmatmul.bf16.gmra.mxu0 %v440
      %v473 = vpop.f32.mrf.mxu0
      %v474 = vadd.f32 0.0, %v473
      %v475 = vpop.f32.mrf.mxu0
      %476 = vdwg.mxu0
      %477 = vmatpush.bf16.msra.mxu0 0
      %478 = vmatpush.bf16.msra.mxu0 0
      %479 = vmatpush.bf16.msra.mxu0 0
      %480 = vmatpush.bf16.msra.mxu0 0
      %481 = vmatpush.bf16.msra.mxu0 0
      %482 = vmatpush.bf16.msra.mxu0 0
      %483 = vmatpush.bf16.msra.mxu0 0
      %484 = vmatpush.bf16.msra.mxu0 %v449
      %485 = vmatmul.bf16.gmra.mxu0 %v440
      %v486 = vpop.f32.mrf.mxu0
      %v487 = vadd.f32 0.0, %v486
      %v488 = vpop.f32.mrf.mxu0
      %489 = vdwg.mxu0
      %v490 = vadd.f32 %v425, %v461
      %v491 = vadd.f32 %v426, %v474
      %v492 = vadd.f32 %v427, %v487
      %s493 = scalar_lea.vmem %s1, 20
      %v494 = vld [vmem:[%s493] sm:$0xf]
      %495 = vrot.lane.b32.xlu0 %v182, 108
      %v496 = vpop.permute.xlu0 %495
      %497 = vrot.lane.b32.xlu0 %v183, 108
      %v498 = vpop.permute.xlu0 %497
      %499 = vrot.lane.b32.xlu0 %v184, 108
      %v500 = vpop.permute.xlu0 %499
      %vm501 = vcmask 883712
      %v502 = vsel %vm501, %v496, %v498
      %v503 = vsel %vm501, %v498, %v500
      %v505 = vsel %vm194, %v494, 0
      %v508 = vsel %vm198, %v502, 0
      %v511 = vsel %vm198, %v503, 0
      %v514 = vsel %vm198, %v500, 0
      %516 = vmatpush.bf16.msra.mxu0 0
      %517 = vmatpush.bf16.msra.mxu0 0
      %518 = vmatpush.bf16.msra.mxu0 0
      %519 = vmatpush.bf16.msra.mxu0 0
      %520 = vmatpush.bf16.msra.mxu0 0
      %521 = vmatpush.bf16.msra.mxu0 0
      %522 = vmatpush.bf16.msra.mxu0 0
      %523 = vmatpush.bf16.msra.mxu0 %v508
      %524 = vmatmul.bf16.gmra.mxu0 %v505
      %v525 = vpop.f32.mrf.mxu0
      %v526 = vadd.f32 0.0, %v525
      %v527 = vpop.f32.mrf.mxu0
      %528 = vdwg.mxu0
      %529 = vmatpush.bf16.msra.mxu0 0
      %530 = vmatpush.bf16.msra.mxu0 0
      %531 = vmatpush.bf16.msra.mxu0 0
      %532 = vmatpush.bf16.msra.mxu0 0
      %533 = vmatpush.bf16.msra.mxu0 0
      %534 = vmatpush.bf16.msra.mxu0 0
      %535 = vmatpush.bf16.msra.mxu0 0
      %536 = vmatpush.bf16.msra.mxu0 %v511
      %537 = vmatmul.bf16.gmra.mxu0 %v505
      %v538 = vpop.f32.mrf.mxu0
      %v539 = vadd.f32 0.0, %v538
      %v540 = vpop.f32.mrf.mxu0
      %541 = vdwg.mxu0
      %542 = vmatpush.bf16.msra.mxu0 0
      %543 = vmatpush.bf16.msra.mxu0 0
      %544 = vmatpush.bf16.msra.mxu0 0
      %545 = vmatpush.bf16.msra.mxu0 0
      %546 = vmatpush.bf16.msra.mxu0 0
      %547 = vmatpush.bf16.msra.mxu0 0
      %548 = vmatpush.bf16.msra.mxu0 0
      %549 = vmatpush.bf16.msra.mxu0 %v514
      %550 = vmatmul.bf16.gmra.mxu0 %v505
      %v551 = vpop.f32.mrf.mxu0
      %v552 = vadd.f32 0.0, %v551
      %v553 = vpop.f32.mrf.mxu0
      %554 = vdwg.mxu0
      %v555 = vadd.f32 %v490, %v526
      %v556 = vadd.f32 %v491, %v539
      %v557 = vadd.f32 %v492, %v552
      %s558 = scalar_lea.vmem %s1, 24
      %v559 = vld [vmem:[%s558] sm:$0xf]
      %560 = vrot.lane.b32.xlu0 %v182, 92
      %v561 = vpop.permute.xlu0 %560
      %562 = vrot.lane.b32.xlu0 %v183, 92
      %v563 = vpop.permute.xlu0 %562
      %564 = vrot.lane.b32.xlu0 %v184, 92
      %v565 = vpop.permute.xlu0 %564
      %vm566 = vcmask 752640
      %v567 = vsel %vm566, %v561, %v563
      %v568 = vsel %vm566, %v563, %v565
      %v570 = vsel %vm194, %v559, 0
      %v573 = vsel %vm198, %v567, 0
      %v576 = vsel %vm198, %v568, 0
      %v579 = vsel %vm198, %v565, 0
      %581 = vmatpush.bf16.msra.mxu0 0
      %582 = vmatpush.bf16.msra.mxu0 0
      %583 = vmatpush.bf16.msra.mxu0 0
      %584 = vmatpush.bf16.msra.mxu0 0
      %585 = vmatpush.bf16.msra.mxu0 0
      %586 = vmatpush.bf16.msra.mxu0 0
      %587 = vmatpush.bf16.msra.mxu0 0
      %588 = vmatpush.bf16.msra.mxu0 %v573
      %589 = vmatmul.bf16.gmra.mxu0 %v570
      %v590 = vpop.f32.mrf.mxu0
      %v591 = vadd.f32 0.0, %v590
      %v592 = vpop.f32.mrf.mxu0
      %593 = vdwg.mxu0
      %594 = vmatpush.bf16.msra.mxu0 0
      %595 = vmatpush.bf16.msra.mxu0 0
      %596 = vmatpush.bf16.msra.mxu0 0
      %597 = vmatpush.bf16.msra.mxu0 0
      %598 = vmatpush.bf16.msra.mxu0 0
      %599 = vmatpush.bf16.msra.mxu0 0
      %600 = vmatpush.bf16.msra.mxu0 0
      %601 = vmatpush.bf16.msra.mxu0 %v576
      %602 = vmatmul.bf16.gmra.mxu0 %v570
      %v603 = vpop.f32.mrf.mxu0
      %v604 = vadd.f32 0.0, %v603
      %v605 = vpop.f32.mrf.mxu0
      %606 = vdwg.mxu0
      %607 = vmatpush.bf16.msra.mxu0 0
      %608 = vmatpush.bf16.msra.mxu0 0
      %609 = vmatpush.bf16.msra.mxu0 0
      %610 = vmatpush.bf16.msra.mxu0 0
      %611 = vmatpush.bf16.msra.mxu0 0
      %612 = vmatpush.bf16.msra.mxu0 0
      %613 = vmatpush.bf16.msra.mxu0 0
      %614 = vmatpush.bf16.msra.mxu0 %v579
      %615 = vmatmul.bf16.gmra.mxu0 %v570
      %v616 = vpop.f32.mrf.mxu0
      %v617 = vadd.f32 0.0, %v616
      %v618 = vpop.f32.mrf.mxu0
      %619 = vdwg.mxu0
      %v620 = vadd.f32 %v555, %v591
      %v621 = vadd.f32 %v556, %v604
      %v622 = vadd.f32 %v557, %v617
      %s623 = scalar_lea.vmem %s1, 28
      %v624 = vld [vmem:[%s623] sm:$0xf]
      %625 = vrot.lane.b32.xlu0 %v182, 91
      %v626 = vpop.permute.xlu0 %625
      %627 = vrot.lane.b32.xlu0 %v183, 91
      %v628 = vpop.permute.xlu0 %627
      %629 = vrot.lane.b32.xlu0 %v184, 91
      %v630 = vpop.permute.xlu0 %629
      %vm631 = vcmask 744448
      %v632 = vsel %vm631, %v626, %v628
      %v633 = vsel %vm631, %v628, %v630
      %v635 = vsel %vm194, %v624, 0
      %v638 = vsel %vm198, %v632, 0
      %v641 = vsel %vm198, %v633, 0
      %v644 = vsel %vm198, %v630, 0
      %646 = vmatpush.bf16.msra.mxu0 0
      %647 = vmatpush.bf16.msra.mxu0 0
      %648 = vmatpush.bf16.msra.mxu0 0
      %649 = vmatpush.bf16.msra.mxu0 0
      %650 = vmatpush.bf16.msra.mxu0 0
      %651 = vmatpush.bf16.msra.mxu0 0
      %652 = vmatpush.bf16.msra.mxu0 0
      %653 = vmatpush.bf16.msra.mxu0 %v638
      %654 = vmatmul.bf16.gmra.mxu0 %v635
      %v655 = vpop.f32.mrf.mxu0
      %v656 = vadd.f32 0.0, %v655
      %v657 = vpop.f32.mrf.mxu0
      %658 = vdwg.mxu0
      %659 = vmatpush.bf16.msra.mxu0 0
      %660 = vmatpush.bf16.msra.mxu0 0
      %661 = vmatpush.bf16.msra.mxu0 0
      %662 = vmatpush.bf16.msra.mxu0 0
      %663 = vmatpush.bf16.msra.mxu0 0
      %664 = vmatpush.bf16.msra.mxu0 0
      %665 = vmatpush.bf16.msra.mxu0 0
      %666 = vmatpush.bf16.msra.mxu0 %v641
      %667 = vmatmul.bf16.gmra.mxu0 %v635
      %v668 = vpop.f32.mrf.mxu0
      %v669 = vadd.f32 0.0, %v668
      %v670 = vpop.f32.mrf.mxu0
      %671 = vdwg.mxu0
      %672 = vmatpush.bf16.msra.mxu0 0
      %673 = vmatpush.bf16.msra.mxu0 0
      %674 = vmatpush.bf16.msra.mxu0 0
      %675 = vmatpush.bf16.msra.mxu0 0
      %676 = vmatpush.bf16.msra.mxu0 0
      %677 = vmatpush.bf16.msra.mxu0 0
      %678 = vmatpush.bf16.msra.mxu0 0
      %679 = vmatpush.bf16.msra.mxu0 %v644
      %680 = vmatmul.bf16.gmra.mxu0 %v635
      %v681 = vpop.f32.mrf.mxu0
      %v682 = vadd.f32 0.0, %v681
      %v683 = vpop.f32.mrf.mxu0
      %684 = vdwg.mxu0
      %v685 = vadd.f32 %v620, %v656
      %v686 = vadd.f32 %v621, %v669
      %v687 = vadd.f32 %v622, %v682
      %s688 = scalar_lea.vmem %s1, 32
      %v689 = vld [vmem:[%s688] sm:$0xf]
      %690 = vrot.lane.b32.xlu0 %v182, 90
      %v691 = vpop.permute.xlu0 %690
      %692 = vrot.lane.b32.xlu0 %v183, 90
      %v693 = vpop.permute.xlu0 %692
      %694 = vrot.lane.b32.xlu0 %v184, 90
      %v695 = vpop.permute.xlu0 %694
      %vm696 = vcmask 736256
      %v697 = vsel %vm696, %v691, %v693
      %v698 = vsel %vm696, %v693, %v695
      %v700 = vsel %vm194, %v689, 0
      %v703 = vsel %vm198, %v697, 0
      %v706 = vsel %vm198, %v698, 0
      %v709 = vsel %vm198, %v695, 0
      %711 = vmatpush.bf16.msra.mxu0 0
      %712 = vmatpush.bf16.msra.mxu0 0
      %713 = vmatpush.bf16.msra.mxu0 0
      %714 = vmatpush.bf16.msra.mxu0 0
      %715 = vmatpush.bf16.msra.mxu0 0
      %716 = vmatpush.bf16.msra.mxu0 0
      %717 = vmatpush.bf16.msra.mxu0 0
      %718 = vmatpush.bf16.msra.mxu0 %v703
      %719 = vmatmul.bf16.gmra.mxu0 %v700
      %v720 = vpop.f32.mrf.mxu0
      %v721 = vadd.f32 0.0, %v720
      %v722 = vpop.f32.mrf.mxu0
      %723 = vdwg.mxu0
      %724 = vmatpush.bf16.msra.mxu0 0
      %725 = vmatpush.bf16.msra.mxu0 0
      %726 = vmatpush.bf16.msra.mxu0 0
      %727 = vmatpush.bf16.msra.mxu0 0
      %728 = vmatpush.bf16.msra.mxu0 0
      %729 = vmatpush.bf16.msra.mxu0 0
      %730 = vmatpush.bf16.msra.mxu0 0
      %731 = vmatpush.bf16.msra.mxu0 %v706
      %732 = vmatmul.bf16.gmra.mxu0 %v700
      %v733 = vpop.f32.mrf.mxu0
      %v734 = vadd.f32 0.0, %v733
      %v735 = vpop.f32.mrf.mxu0
      %736 = vdwg.mxu0
      %737 = vmatpush.bf16.msra.mxu0 0
      %738 = vmatpush.bf16.msra.mxu0 0
      %739 = vmatpush.bf16.msra.mxu0 0
      %740 = vmatpush.bf16.msra.mxu0 0
      %741 = vmatpush.bf16.msra.mxu0 0
      %742 = vmatpush.bf16.msra.mxu0 0
      %743 = vmatpush.bf16.msra.mxu0 0
      %744 = vmatpush.bf16.msra.mxu0 %v709
      %745 = vmatmul.bf16.gmra.mxu0 %v700
      %v746 = vpop.f32.mrf.mxu0
      %v747 = vadd.f32 0.0, %v746
      %v748 = vpop.f32.mrf.mxu0
      %749 = vdwg.mxu0
      %v750 = vadd.f32 %v685, %v721
      %v751 = vadd.f32 %v686, %v734
      %v752 = vadd.f32 %v687, %v747
      %v753 = vld [vmem:[%s2] sm:$0xff]
      %755 = vset.pattern.permute.xlu0 0
      %756 = vperm.xlu0 %755, %v753
      %v757 = vpop.permute.xlu0 %756
      %v759 = vadd.f32 %v750, %v757
      %v760 = vadd.f32 %v751, %v757
      %v761 = vadd.f32 %v752, %v757
      %v762 = vmax.f32 %v759, 0.0
      %v763 = vmax.f32 %v760, 0.0
      %v764 = vmax.f32 %v761, 0.0
      %765 = vst [vmem:[%s170] sm:$0xff] %v762
      %766 = vst [vmem:[%s170 + $0x8] sm:$0xff] %v763
      %vm767 = vcmask 261120
      %768 = vst.msk [vmem:[%s170 + $0x10] sm:$0xff] %vm767, %v764
      %p769 = scmp.lt.s32.totalorder %s14, 1
      %s770 = scalar_select %p769, %s14, 1
      %s771 = smul.addr %s770, 3
      %s772 = smul.addr %s771, 8
      %s773 = scalar_lea.vmem %s3, %s772
      // Predicated region
      $region33: #{forward.8} parent=31 // pred_check
        %p774 = pneg %p100
      $region34: #{forward.8} parent=31 // pred_check_branch
        %776 = sbr.rel (%p774) target = $region36
      $region35: #{forward.8} parent=31 // pred_region
        _
      $region36: #{forward.8} parent=31 // pred_fallthru
        _
    $region32: #{forward.8} parent=5 // pred_fallthru
      _
    %p777 = scmp.le.s32.totalorder 2, %s9
    // Predicated region
    $region37: #{forward.8} parent=5 // pred_check
      %p778 = pneg %p777
    $region38: #{forward.8} parent=5 // pred_check_branch
      %780 = sbr.rel (%p778) target = $region40
    $region39: #{forward.8} parent=5 // pred_region
      %s781 = ssub.s32 %s9, 2
      // Predicated region
      $region41: #{forward.8} parent=39 // pred_check
        %p782 = pneg %p106
      $region42: #{forward.8} parent=39 // pred_check_branch
        %784 = sbr.rel (%p782) target = $region44
      $region43: #{forward.8} parent=39 // pred_region
        %p785 = scmp.lt.s32.totalorder %s15, 1
        %s786 = scalar_select %p785, %s15, 1
        %s787 = smul.addr %s786, 3
        %s788 = smul.addr %s787, 8
        %s789 = scalar_lea.vmem %s3, %s788
      $region44: #{forward.8} parent=39 // pred_fallthru
        _
    $region40: #{forward.8} parent=5 // pred_fallthru
      _
  $region6: #{forward.8} parent=0 // loop_footer
    %s13 = sadd.s32 1, %s9
  $region7: #{forward.8} parent=0 // loop_footer_branch
    %8 = sbr.rel target = $region3
  $region8: #{forward.8} parent=0 // loop_exit
    _

// kernel: forward.9
$region0: #{forward.9}
  #allocation0 [shape = 'u32[]', space=smem, size = 0x4, offset = 0x4, fixed_abs, tag = 'smem constant byte address 0x4 - core index']
  #allocation1 [shape = 'u32[72,128]{1,0:T(1,128)}', space=vmem, size = 0x9000, scoped, tag = 'internal scratch']
  %s0 = inlined_call_operand.vmem [shape: bf16[2,8,384], index: 0, kind: input, shape index: {}]
  %s1 = inlined_call_operand.vmem [shape: bf16[9,8,8], index: 1, kind: input, shape index: {}]
  %s2 = inlined_call_operand.vmem [shape: f32[8,1], index: 2, kind: input, shape index: {}]
  %s3 = inlined_call_operand.vmem [shape: f32[2,8,288], index: 3, kind: input, shape index: {}]
  %s4 = inlined_call_operand.vmem [shape: f32[2,8,288], index: 4, kind: output, shape index: {}]
  %s5 = sld [smem:[#allocation0]]
  $region49: #{forward.9} parent=0
    _
  %s7 = ssub.s32 1, %s5
  %s8 = scalar_select 0, %s7, %s5
  loop: start=0, step=1, limit=4
  $region2: #{forward.9} parent=0 // loop_pre_header
    _
  $region3: #{forward.9} parent=0 // loop_header
    %s10 = sphi 0, %s14
    %p11 = scmp.ge.s32.totalorder %s10, 4
    %s20 = sphi 0, %s22
    %s23 = sphi 0, %s20
    %s24 = sphi 0, %s23
    %s40 = sphi 0, %s24
    %s44 = sphi 0, %s44
    %s46 = sphi 0, %s44
    %s47 = sphi 0, %s46
    %s61 = sphi 0, %s47
    %s65 = sphi 0, %s65
    %s67 = sphi 0, %s65
    %s68 = sphi 0, %s67
    %s82 = sphi 0, %s68
    %s88 = sphi 0, %s90
    %s91 = sphi 0, %s88
    %s92 = sphi 0, %s91
    %s108 = sphi 0, %s92
    %s114 = sphi 0, %s116
    %s117 = sphi 0, %s114
    %s118 = sphi 0, %s117
    %s134 = sphi 0, %s118
  $region4: #{forward.9} parent=0 // loop_header_branch
    %13 = sbr.rel (%p11) target = $region8
  $region5: #{forward.9} parent=0 // loop_body
    %s15 = ssub.s32 %s10, 1
    %s16 = ssub.s32 %s10, 2
    %s17 = sadd.s32 %s10, 1
    %s18 = ssub.s32 %s10, %s17
    %p19 = scmp.eq.s32.totalorder %s18, 0
    %s21 = sadd.s32 %s20, 1
    %s22 = scalar_select %p19, %s20, %s21
    %p25 = pneg %p19
    %p26 = scmp.eq.s32.totalorder %s10, 1
    %p27 = por %p25, %p26
    %p28 = scmp.ne.s32.totalorder %s20, %s23
    %p29 = scmp.eq.s32.totalorder %s10, 0
    %p30 = por %p28, %p29
    %p31 = scmp.ne.s32.totalorder %s20, %s23
    %p32 = scmp.eq.s32.totalorder %s15, 1
    %p33 = por %p31, %p32
    %p34 = scmp.ne.s32.totalorder %s23, %s24
    %p35 = scmp.eq.s32.totalorder %s15, 0
    %p36 = por %p34, %p35
    %p37 = scmp.ne.s32.totalorder %s23, %s24
    %p38 = scmp.eq.s32.totalorder %s16, 1
    %p39 = por %p37, %p38
    %p41 = scmp.ne.s32.totalorder %s24, %s40
    %p42 = scmp.eq.s32.totalorder %s16, 0
    %p43 = por %p41, %p42
    %s45 = sadd.s32 %s44, 1
    %p48 = scmp.eq.s32.totalorder %s10, 1
    %p49 = scmp.ne.s32.totalorder %s44, %s46
    %p50 = scmp.eq.s32.totalorder %s10, 0
    %p51 = por %p49, %p50
    %p52 = scmp.ne.s32.totalorder %s44, %s46
    %p53 = scmp.eq.s32.totalorder %s15, 1
    %p54 = por %p52, %p53
    %p55 = scmp.ne.s32.totalorder %s46, %s47
    %p56 = scmp.eq.s32.totalorder %s15, 0
    %p57 = por %p55, %p56
    %p58 = scmp.ne.s32.totalorder %s46, %s47
    %p59 = scmp.eq.s32.totalorder %s16, 1
    %p60 = por %p58, %p59
    %p62 = scmp.ne.s32.totalorder %s47, %s61
    %p63 = scmp.eq.s32.totalorder %s16, 0
    %p64 = por %p62, %p63
    %s66 = sadd.s32 %s65, 1
    %p69 = scmp.eq.s32.totalorder %s10, 1
    %p70 = scmp.ne.s32.totalorder %s65, %s67
    %p71 = scmp.eq.s32.totalorder %s10, 0
    %p72 = por %p70, %p71
    %p73 = scmp.ne.s32.totalorder %s65, %s67
    %p74 = scmp.eq.s32.totalorder %s15, 1
    %p75 = por %p73, %p74
    %p76 = scmp.ne.s32.totalorder %s67, %s68
    %p77 = scmp.eq.s32.totalorder %s15, 0
    %p78 = por %p76, %p77
    %p79 = scmp.ne.s32.totalorder %s67, %s68
    %p80 = scmp.eq.s32.totalorder %s16, 1
    %p81 = por %p79, %p80
    %p83 = scmp.ne.s32.totalorder %s68, %s82
    %p84 = scmp.eq.s32.totalorder %s16, 0
    %p85 = por %p83, %p84
    %s86 = ssub.s32 %s10, %s17
    %p87 = scmp.eq.s32.totalorder %s86, 0
    %s89 = sadd.s32 %s88, 1
    %s90 = scalar_select %p87, %s88, %s89
    %p93 = pneg %p87
    %p94 = scmp.eq.s32.totalorder %s10, 1
    %p95 = por %p93, %p94
    %p96 = scmp.ne.s32.totalorder %s88, %s91
    %p97 = scmp.eq.s32.totalorder %s10, 0
    %p98 = por %p96, %p97
    %p99 = scmp.ne.s32.totalorder %s88, %s91
    %p100 = scmp.eq.s32.totalorder %s15, 1
    %p101 = por %p99, %p100
    %p102 = scmp.ne.s32.totalorder %s91, %s92
    %p103 = scmp.eq.s32.totalorder %s15, 0
    %p104 = por %p102, %p103
    %p105 = scmp.ne.s32.totalorder %s91, %s92
    %p106 = scmp.eq.s32.totalorder %s16, 1
    %p107 = por %p105, %p106
    %p109 = scmp.ne.s32.totalorder %s92, %s108
    %p110 = scmp.eq.s32.totalorder %s16, 0
    %p111 = por %p109, %p110
    %s112 = ssub.s32 %s10, %s17
    %p113 = scmp.eq.s32.totalorder %s112, 0
    %s115 = sadd.s32 %s114, 1
    %s116 = scalar_select %p113, %s114, %s115
    %p119 = pneg %p113
    %p120 = scmp.eq.s32.totalorder %s10, 1
    %p121 = por %p119, %p120
    %p122 = scmp.ne.s32.totalorder %s114, %s117
    %p123 = scmp.eq.s32.totalorder %s10, 0
    %p124 = por %p122, %p123
    %p125 = scmp.ne.s32.totalorder %s114, %s117
    %p126 = scmp.eq.s32.totalorder %s15, 1
    %p127 = por %p125, %p126
    %p128 = scmp.ne.s32.totalorder %s117, %s118
    %p129 = scmp.eq.s32.totalorder %s15, 0
    %p130 = por %p128, %p129
    %p131 = scmp.ne.s32.totalorder %s117, %s118
    %p132 = scmp.eq.s32.totalorder %s16, 1
    %p133 = por %p131, %p132
    %p135 = scmp.ne.s32.totalorder %s118, %s134
    %p136 = scmp.eq.s32.totalorder %s16, 0
    %p137 = por %p135, %p136
    %p138 = scmp.le.s32.totalorder 1, %s10
    %p139 = scmp.lt.s32.totalorder %s10, 3
    %p140 = pnand %p138, %p139
    %p141 = pneg %p140
    // Predicated region
    $region9: #{forward.9} parent=5 // pred_check
      _
    $region10: #{forward.9} parent=5 // pred_check_branch
      %143 = sbr.rel (%p140) target = $region12
    $region11: #{forward.9} parent=5 // pred_region
      %s144 = ssub.s32 %s10, 1
      // Predicated region
      $region13: #{forward.9} parent=11 // pred_check
        %p145 = pneg %p57
      $region14: #{forward.9} parent=11 // pred_check_branch
        %147 = sbr.rel (%p145) target = $region16
      $region15: #{forward.9} parent=11 // pred_region
        _
      $region16: #{forward.9} parent=11 // pred_fallthru
        _
      // Predicated region
      $region17: #{forward.9} parent=11 // pred_check
        %p148 = pneg %p78
      $region18: #{forward.9} parent=11 // pred_check_branch
        %150 = sbr.rel (%p148) target = $region20
      $region19: #{forward.9} parent=11 // pred_region
        _
      $region20: #{forward.9} parent=11 // pred_fallthru
        _
    $region12: #{forward.9} parent=5 // pred_fallthru
      _
    %p151 = scmp.lt.s32.totalorder %s10, 2
    // Predicated region
    $region21: #{forward.9} parent=5 // pred_check
      %p152 = pneg %p151
    $region22: #{forward.9} parent=5 // pred_check_branch
      %154 = sbr.rel (%p152) target = $region24
    $region23: #{forward.9} parent=5 // pred_region
      // Predicated region
      $region25: #{forward.9} parent=23 // pred_check
        %p155 = pneg %p30
      $region26: #{forward.9} parent=23 // pred_check_branch
        %157 = sbr.rel (%p155) target = $region28
      $region27: #{forward.9} parent=23 // pred_region
        %p158 = scmp.lt.s32.totalorder %s10, 1
        %s159 = scalar_select %p158, %s10, 1
        %s160 = smul.addr %s159, 3
        %s161 = smul.addr %s160, 4
        %s162 = scalar_lea.vmem %s0, %s161
      $region28: #{forward.9} parent=23 // pred_fallthru
        _
      // Predicated region
      $region29: #{forward.9} parent=23 // pred_check
        %p163 = pneg %p98
      $region30: #{forward.9} parent=23 // pred_check_branch
        %165 = sbr.rel (%p163) target = $region32
      $region31: #{forward.9} parent=23 // pred_region
        %p166 = scmp.lt.s32.totalorder %s10, 1
        %s167 = scalar_select %p166, %s10, 1
        %s168 = smul.addr %s167, 3
        %s169 = smul.addr %s168, 8
        %s170 = scalar_lea.vmem %s3, %s169
      $region32: #{forward.9} parent=23 // pred_fallthru
        _
    $region24: #{forward.9} parent=5 // pred_fallthru
      _
    %p171 = scmp.le.s32.totalorder 1, %s10
    %p172 = scmp.lt.s32.totalorder %s10, 3
    %p173 = pnand %p171, %p172
    %p174 = pneg %p173
    // Predicated region
    $region33: #{forward.9} parent=5 // pred_check
      _
    $region34: #{forward.9} parent=5 // pred_check_branch
      %176 = sbr.rel (%p173) target = $region36
    $region35: #{forward.9} parent=5 // pred_region
      %s177 = ssub.s32 %s10, 1
      %p178 = scmp.lt.s32.totalorder %s15, 1
      %s179 = scalar_select %p178, %s15, 1
      %s180 = smul.addr %s179, 3
      %s181 = smul.addr %s180, 4
      %s182 = scalar_lea.vmem %s0, %s181
      %p183 = pneg %p36
      %p184 = pneg %p33
      %p185 = pneg %p57
      %p186 = pneg %p54
      %p187 = pneg %p78
      %p188 = pneg %p75
      %p189 = scmp.lt.s32.totalorder %s15, 1
      %s190 = scalar_select %p189, %s15, 1
      %s191 = smul.addr %s190, 3
      %s192 = smul.addr %s191, 8
      %s193 = scalar_lea.vmem %s3, %s192
      %p194 = pneg %p104
      %p195 = pneg %p101
      %p196 = pneg %p130
      %p197 = pneg %p127
      %p198 = scmp.lt.s32.totalorder %s15, 1
      %s199 = scalar_select %p198, %s15, 1
      %s200 = smul.addr %s199, 3
      %s201 = smul.addr %s200, 8
      %s202 = scalar_lea.vmem %s4, %s201
      %p203 = scmp.lt.s32.totalorder %s15, 1
      %s204 = scalar_select %p203, %s15, 1
      %s205 = smul.addr %s204, 3
      %s206 = smul.addr %s205, 4
      %s207 = scalar_lea.vmem %s0, %s206
      %p208 = scmp.lt.s32.totalorder %s15, 1
      %s209 = scalar_select %p208, %s15, 1
      %s210 = smul.addr %s209, 3
      %s211 = smul.addr %s210, 8
      %s212 = scalar_lea.vmem %s3, %s211
      %p213 = scmp.lt.s32.totalorder %s15, 1
      %s214 = scalar_select %p213, %s15, 1
      %s215 = smul.addr %s214, 3
      %s216 = smul.addr %s215, 8
      %s217 = scalar_lea.vmem %s4, %s216
      %v219 = vld [vmem:[%s207] sm:$0xff]
      %v220 = vld [vmem:[%s207 + $0x8] sm:$0xf]
      %v221 = vld [vmem:[%s1] sm:$0xf]
      %s222 = scalar_lea.vmem %s1, 4
      %v223 = vld [vmem:[%s222] sm:$0xf]
      %v226 = vunpack.c.l.b16 %v219
      %v227 = vunpack.c.h.b16 %v219
      %v228 = vunpack.c.l.b16 %v220
      %v229 = vpack.c.b16 %v226, %v226
      %v230 = vpack.c.b16 %v227, %v227
      %v231 = vpack.c.b16 %v228, %v228
      %232 = vrot.lane.b32.xlu0 %v229, 127
      %v233 = vpop.permute.xlu0 %232
      %234 = vrot.lane.b32.xlu0 %v230, 127
      %v235 = vpop.permute.xlu0 %234
      %236 = vrot.lane.b32.xlu0 %v231, 127
      %v237 = vpop.permute.xlu0 %236
      %vm238 = vcmask 1039360
      %v239 = vsel %vm238, %v233, %v235
      %v240 = vsel %vm238, %v235, %v237
      %vm241 = vcmask 64512
      %v243 = vsel %vm241, %v223, 0
      %vm245 = vcmask 1043456
      %v247 = vsel %vm245, %v239, 0
      %v250 = vsel %vm245, %v240, 0
      %v253 = vsel %vm245, %v237, 0
      %255 = vmatpush.bf16.msra.mxu0 0
      %256 = vmatpush.bf16.msra.mxu0 0
      %257 = vmatpush.bf16.msra.mxu0 0
      %258 = vmatpush.bf16.msra.mxu0 0
      %259 = vmatpush.bf16.msra.mxu0 0
      %260 = vmatpush.bf16.msra.mxu0 0
      %261 = vmatpush.bf16.msra.mxu0 0
      %262 = vmatpush.bf16.msra.mxu0 %v247
      %263 = vmatmul.bf16.gmra.mxu0 %v243
      %v264 = vpop.f32.mrf.mxu0
      %v265 = vadd.f32 0.0, %v264
      %v266 = vpop.f32.mrf.mxu0
      %267 = vdwg.mxu0
      %268 = vmatpush.bf16.msra.mxu0 0
      %269 = vmatpush.bf16.msra.mxu0 0
      %270 = vmatpush.bf16.msra.mxu0 0
      %271 = vmatpush.bf16.msra.mxu0 0
      %272 = vmatpush.bf16.msra.mxu0 0
      %273 = vmatpush.bf16.msra.mxu0 0
      %274 = vmatpush.bf16.msra.mxu0 0
      %275 = vmatpush.bf16.msra.mxu0 %v250
      %276 = vmatmul.bf16.gmra.mxu0 %v243
      %v277 = vpop.f32.mrf.mxu0
      %v278 = vadd.f32 0.0, %v277
      %v279 = vpop.f32.mrf.mxu0
      %280 = vdwg.mxu0
      %281 = vmatpush.bf16.msra.mxu0 0
      %282 = vmatpush.bf16.msra.mxu0 0
      %283 = vmatpush.bf16.msra.mxu0 0
      %284 = vmatpush.bf16.msra.mxu0 0
      %285 = vmatpush.bf16.msra.mxu0 0
      %286 = vmatpush.bf16.msra.mxu0 0
      %287 = vmatpush.bf16.msra.mxu0 0
      %288 = vmatpush.bf16.msra.mxu0 %v253
      %289 = vmatmul.bf16.gmra.mxu0 %v243
      %v290 = vpop.f32.mrf.mxu0
      %v291 = vadd.f32 0.0, %v290
      %v292 = vpop.f32.mrf.mxu0
      %293 = vdwg.mxu0
      %v295 = vsel %vm241, %v221, 0
      %v298 = vsel %vm245, %v229, 0
      %v301 = vsel %vm245, %v230, 0
      %v304 = vsel %vm245, %v231, 0
      %306 = vmatpush.bf16.msra.mxu0 0
      %307 = vmatpush.bf16.msra.mxu0 0
      %308 = vmatpush.bf16.msra.mxu0 0
      %309 = vmatpush.bf16.msra.mxu0 0
      %310 = vmatpush.bf16.msra.mxu0 0
      %311 = vmatpush.bf16.msra.mxu0 0
      %312 = vmatpush.bf16.msra.mxu0 0
      %313 = vmatpush.bf16.msra.mxu0 %v298
      %314 = vmatmul.bf16.gmra.mxu0 %v295
      %v315 = vpop.f32.mrf.mxu0
      %v316 = vadd.f32 %v265, %v315
      %v317 = vpop.f32.mrf.mxu0
      %318 = vdwg.mxu0
      %319 = vmatpush.bf16.msra.mxu0 0
      %320 = vmatpush.bf16.msra.mxu0 0
      %321 = vmatpush.bf16.msra.mxu0 0
      %322 = vmatpush.bf16.msra.mxu0 0
      %323 = vmatpush.bf16.msra.mxu0 0
      %324 = vmatpush.bf16.msra.mxu0 0
      %325 = vmatpush.bf16.msra.mxu0 0
      %326 = vmatpush.bf16.msra.mxu0 %v301
      %327 = vmatmul.bf16.gmra.mxu0 %v295
      %v328 = vpop.f32.mrf.mxu0
      %v329 = vadd.f32 %v278, %v328
      %v330 = vpop.f32.mrf.mxu0
      %331 = vdwg.mxu0
      %332 = vmatpush.bf16.msra.mxu0 0
      %333 = vmatpush.bf16.msra.mxu0 0
      %334 = vmatpush.bf16.msra.mxu0 0
      %335 = vmatpush.bf16.msra.mxu0 0
      %336 = vmatpush.bf16.msra.mxu0 0
      %337 = vmatpush.bf16.msra.mxu0 0
      %338 = vmatpush.bf16.msra.mxu0 0
      %339 = vmatpush.bf16.msra.mxu0 %v304
      %340 = vmatmul.bf16.gmra.mxu0 %v295
      %v341 = vpop.f32.mrf.mxu0
      %v342 = vadd.f32 %v291, %v341
      %v343 = vpop.f32.mrf.mxu0
      %344 = vdwg.mxu0
      %s345 = scalar_lea.vmem %s1, 8
      %v346 = vld [vmem:[%s345] sm:$0xf]
      %347 = vrot.lane.b32.xlu0 %v229, 126
      %v348 = vpop.permute.xlu0 %347
      %349 = vrot.lane.b32.xlu0 %v230, 126
      %v350 = vpop.permute.xlu0 %349
      %351 = vrot.lane.b32.xlu0 %v231, 126
      %v352 = vpop.permute.xlu0 %351
      %vm353 = vcmask 1031168
      %v354 = vsel %vm353, %v348, %v350
      %v355 = vsel %vm353, %v350, %v352
      %v357 = vsel %vm241, %v346, 0
      %v360 = vsel %vm245, %v354, 0
      %v363 = vsel %vm245, %v355, 0
      %v366 = vsel %vm245, %v352, 0
      %368 = vmatpush.bf16.msra.mxu0 0
      %369 = vmatpush.bf16.msra.mxu0 0
      %370 = vmatpush.bf16.msra.mxu0 0
      %371 = vmatpush.bf16.msra.mxu0 0
      %372 = vmatpush.bf16.msra.mxu0 0
      %373 = vmatpush.bf16.msra.mxu0 0
      %374 = vmatpush.bf16.msra.mxu0 0
      %375 = vmatpush.bf16.msra.mxu0 %v360
      %376 = vmatmul.bf16.gmra.mxu0 %v357
      %v377 = vpop.f32.mrf.mxu0
      %v378 = vadd.f32 0.0, %v377
      %v379 = vpop.f32.mrf.mxu0
      %380 = vdwg.mxu0
      %381 = vmatpush.bf16.msra.mxu0 0
      %382 = vmatpush.bf16.msra.mxu0 0
      %383 = vmatpush.bf16.msra.mxu0 0
      %384 = vmatpush.bf16.msra.mxu0 0
      %385 = vmatpush.bf16.msra.mxu0 0
      %386 = vmatpush.bf16.msra.mxu0 0
      %387 = vmatpush.bf16.msra.mxu0 0
      %388 = vmatpush.bf16.msra.mxu0 %v363
      %389 = vmatmul.bf16.gmra.mxu0 %v357
      %v390 = vpop.f32.mrf.mxu0
      %v391 = vadd.f32 0.0, %v390
      %v392 = vpop.f32.mrf.mxu0
      %393 = vdwg.mxu0
      %394 = vmatpush.bf16.msra.mxu0 0
      %395 = vmatpush.bf16.msra.mxu0 0
      %396 = vmatpush.bf16.msra.mxu0 0
      %397 = vmatpush.bf16.msra.mxu0 0
      %398 = vmatpush.bf16.msra.mxu0 0
      %399 = vmatpush.bf16.msra.mxu0 0
      %400 = vmatpush.bf16.msra.mxu0 0
      %401 = vmatpush.bf16.msra.mxu0 %v366
      %402 = vmatmul.bf16.gmra.mxu0 %v357
      %v403 = vpop.f32.mrf.mxu0
      %v404 = vadd.f32 0.0, %v403
      %v405 = vpop.f32.mrf.mxu0
      %406 = vdwg.mxu0
      %v407 = vadd.f32 %v316, %v378
      %v408 = vadd.f32 %v329, %v391
      %v409 = vadd.f32 %v342, %v404
      %s410 = scalar_lea.vmem %s1, 12
      %v411 = vld [vmem:[%s410] sm:$0xf]
      %412 = vrot.lane.b32.xlu0 %v229, 110
      %v413 = vpop.permute.xlu0 %412
      %414 = vrot.lane.b32.xlu0 %v230, 110
      %v415 = vpop.permute.xlu0 %414
      %416 = vrot.lane.b32.xlu0 %v231, 110
      %v417 = vpop.permute.xlu0 %416
      %vm418 = vcmask 900096
      %v419 = vsel %vm418, %v413, %v415
      %v420 = vsel %vm418, %v415, %v417
      %v422 = vsel %vm241, %v411, 0
      %v425 = vsel %vm245, %v419, 0
      %v428 = vsel %vm245, %v420, 0
      %v431 = vsel %vm245, %v417, 0
      %433 = vmatpush.bf16.msra.mxu0 0
      %434 = vmatpush.bf16.msra.mxu0 0
      %435 = vmatpush.bf16.msra.mxu0 0
      %436 = vmatpush.bf16.msra.mxu0 0
      %437 = vmatpush.bf16.msra.mxu0 0
      %438 = vmatpush.bf16.msra.mxu0 0
      %439 = vmatpush.bf16.msra.mxu0 0
      %440 = vmatpush.bf16.msra.mxu0 %v425
      %441 = vmatmul.bf16.gmra.mxu0 %v422
      %v442 = vpop.f32.mrf.mxu0
      %v443 = vadd.f32 0.0, %v442
      %v444 = vpop.f32.mrf.mxu0
      %445 = vdwg.mxu0
      %446 = vmatpush.bf16.msra.mxu0 0
      %447 = vmatpush.bf16.msra.mxu0 0
      %448 = vmatpush.bf16.msra.mxu0 0
      %449 = vmatpush.bf16.msra.mxu0 0
      %450 = vmatpush.bf16.msra.mxu0 0
      %451 = vmatpush.bf16.msra.mxu0 0
      %452 = vmatpush.bf16.msra.mxu0 0
      %453 = vmatpush.bf16.msra.mxu0 %v428
      %454 = vmatmul.bf16.gmra.mxu0 %v422
      %v455 = vpop.f32.mrf.mxu0
      %v456 = vadd.f32 0.0, %v455
      %v457 = vpop.f32.mrf.mxu0
      %458 = vdwg.mxu0
      %459 = vmatpush.bf16.msra.mxu0 0
      %460 = vmatpush.bf16.msra.mxu0 0
      %461 = vmatpush.bf16.msra.mxu0 0
      %462 = vmatpush.bf16.msra.mxu0 0
      %463 = vmatpush.bf16.msra.mxu0 0
      %464 = vmatpush.bf16.msra.mxu0 0
      %465 = vmatpush.bf16.msra.mxu0 0
      %466 = vmatpush.bf16.msra.mxu0 %v431
      %467 = vmatmul.bf16.gmra.mxu0 %v422
      %v468 = vpop.f32.mrf.mxu0
      %v469 = vadd.f32 0.0, %v468
      %v470 = vpop.f32.mrf.mxu0
      %471 = vdwg.mxu0
      %v472 = vadd.f32 %v407, %v443
      %v473 = vadd.f32 %v408, %v456
      %v474 = vadd.f32 %v409, %v469
      %s475 = scalar_lea.vmem %s1, 16
      %v476 = vld [vmem:[%s475] sm:$0xf]
      %477 = vrot.lane.b32.xlu0 %v229, 109
      %v478 = vpop.permute.xlu0 %477
      %479 = vrot.lane.b32.xlu0 %v230, 109
      %v480 = vpop.permute.xlu0 %479
      %481 = vrot.lane.b32.xlu0 %v231, 109
      %v482 = vpop.permute.xlu0 %481
      %vm483 = vcmask 891904
      %v484 = vsel %vm483, %v478, %v480
      %v485 = vsel %vm483, %v480, %v482
      %v487 = vsel %vm241, %v476, 0
      %v490 = vsel %vm245, %v484, 0
      %v493 = vsel %vm245, %v485, 0
      %v496 = vsel %vm245, %v482, 0
      %498 = vmatpush.bf16.msra.mxu0 0
      %499 = vmatpush.bf16.msra.mxu0 0
      %500 = vmatpush.bf16.msra.mxu0 0
      %501 = vmatpush.bf16.msra.mxu0 0
      %502 = vmatpush.bf16.msra.mxu0 0
      %503 = vmatpush.bf16.msra.mxu0 0
      %504 = vmatpush.bf16.msra.mxu0 0
      %505 = vmatpush.bf16.msra.mxu0 %v490
      %506 = vmatmul.bf16.gmra.mxu0 %v487
      %v507 = vpop.f32.mrf.mxu0
      %v508 = vadd.f32 0.0, %v507
      %v509 = vpop.f32.mrf.mxu0
      %510 = vdwg.mxu0
      %511 = vmatpush.bf16.msra.mxu0 0
      %512 = vmatpush.bf16.msra.mxu0 0
      %513 = vmatpush.bf16.msra.mxu0 0
      %514 = vmatpush.bf16.msra.mxu0 0
      %515 = vmatpush.bf16.msra.mxu0 0
      %516 = vmatpush.bf16.msra.mxu0 0
      %517 = vmatpush.bf16.msra.mxu0 0
      %518 = vmatpush.bf16.msra.mxu0 %v493
      %519 = vmatmul.bf16.gmra.mxu0 %v487
      %v520 = vpop.f32.mrf.mxu0
      %v521 = vadd.f32 0.0, %v520
      %v522 = vpop.f32.mrf.mxu0
      %523 = vdwg.mxu0
      %524 = vmatpush.bf16.msra.mxu0 0
      %525 = vmatpush.bf16.msra.mxu0 0
      %526 = vmatpush.bf16.msra.mxu0 0
      %527 = vmatpush.bf16.msra.mxu0 0
      %528 = vmatpush.bf16.msra.mxu0 0
      %529 = vmatpush.bf16.msra.mxu0 0
      %530 = vmatpush.bf16.msra.mxu0 0
      %531 = vmatpush.bf16.msra.mxu0 %v496
      %532 = vmatmul.bf16.gmra.mxu0 %v487
      %v533 = vpop.f32.mrf.mxu0
      %v534 = vadd.f32 0.0, %v533
      %v535 = vpop.f32.mrf.mxu0
      %536 = vdwg.mxu0
      %v537 = vadd.f32 %v472, %v508
      %v538 = vadd.f32 %v473, %v521
      %v539 = vadd.f32 %v474, %v534
      %s540 = scalar_lea.vmem %s1, 20
      %v541 = vld [vmem:[%s540] sm:$0xf]
      %542 = vrot.lane.b32.xlu0 %v229, 108
      %v543 = vpop.permute.xlu0 %542
      %544 = vrot.lane.b32.xlu0 %v230, 108
      %v545 = vpop.permute.xlu0 %544
      %546 = vrot.lane.b32.xlu0 %v231, 108
      %v547 = vpop.permute.xlu0 %546
      %vm548 = vcmask 883712
      %v549 = vsel %vm548, %v543, %v545
      %v550 = vsel %vm548, %v545, %v547
      %v552 = vsel %vm241, %v541, 0
      %v555 = vsel %vm245, %v549, 0
      %v558 = vsel %vm245, %v550, 0
      %v561 = vsel %vm245, %v547, 0
      %563 = vmatpush.bf16.msra.mxu0 0
      %564 = vmatpush.bf16.msra.mxu0 0
      %565 = vmatpush.bf16.msra.mxu0 0
      %566 = vmatpush.bf16.msra.mxu0 0
      %567 = vmatpush.bf16.msra.mxu0 0
      %568 = vmatpush.bf16.msra.mxu0 0
      %569 = vmatpush.bf16.msra.mxu0 0
      %570 = vmatpush.bf16.msra.mxu0 %v555
      %571 = vmatmul.bf16.gmra.mxu0 %v552
      %v572 = vpop.f32.mrf.mxu0
      %v573 = vadd.f32 0.0, %v572
      %v574 = vpop.f32.mrf.mxu0
      %575 = vdwg.mxu0
      %576 = vmatpush.bf16.msra.mxu0 0
      %577 = vmatpush.bf16.msra.mxu0 0
      %578 = vmatpush.bf16.msra.mxu0 0
      %579 = vmatpush.bf16.msra.mxu0 0
      %580 = vmatpush.bf16.msra.mxu0 0
      %581 = vmatpush.bf16.msra.mxu0 0
      %582 = vmatpush.bf16.msra.mxu0 0
      %583 = vmatpush.bf16.msra.mxu0 %v558
      %584 = vmatmul.bf16.gmra.mxu0 %v552
      %v585 = vpop.f32.mrf.mxu0
      %v586 = vadd.f32 0.0, %v585
      %v587 = vpop.f32.mrf.mxu0
      %588 = vdwg.mxu0
      %589 = vmatpush.bf16.msra.mxu0 0
      %590 = vmatpush.bf16.msra.mxu0 0
      %591 = vmatpush.bf16.msra.mxu0 0
      %592 = vmatpush.bf16.msra.mxu0 0
      %593 = vmatpush.bf16.msra.mxu0 0
      %594 = vmatpush.bf16.msra.mxu0 0
      %595 = vmatpush.bf16.msra.mxu0 0
      %596 = vmatpush.bf16.msra.mxu0 %v561
      %597 = vmatmul.bf16.gmra.mxu0 %v552
      %v598 = vpop.f32.mrf.mxu0
      %v599 = vadd.f32 0.0, %v598
      %v600 = vpop.f32.mrf.mxu0
      %601 = vdwg.mxu0
      %v602 = vadd.f32 %v537, %v573
      %v603 = vadd.f32 %v538, %v586
      %v604 = vadd.f32 %v539, %v599
      %s605 = scalar_lea.vmem %s1, 24
      %v606 = vld [vmem:[%s605] sm:$0xf]
      %607 = vrot.lane.b32.xlu0 %v229, 92
      %v608 = vpop.permute.xlu0 %607
      %609 = vrot.lane.b32.xlu0 %v230, 92
      %v610 = vpop.permute.xlu0 %609
      %611 = vrot.lane.b32.xlu0 %v231, 92
      %v612 = vpop.permute.xlu0 %611
      %vm613 = vcmask 752640
      %v614 = vsel %vm613, %v608, %v610
      %v615 = vsel %vm613, %v610, %v612
      %v617 = vsel %vm241, %v606, 0
      %v620 = vsel %vm245, %v614, 0
      %v623 = vsel %vm245, %v615, 0
      %v626 = vsel %vm245, %v612, 0
      %628 = vmatpush.bf16.msra.mxu0 0
      %629 = vmatpush.bf16.msra.mxu0 0
      %630 = vmatpush.bf16.msra.mxu0 0
      %631 = vmatpush.bf16.msra.mxu0 0
      %632 = vmatpush.bf16.msra.mxu0 0
      %633 = vmatpush.bf16.msra.mxu0 0
      %634 = vmatpush.bf16.msra.mxu0 0
      %635 = vmatpush.bf16.msra.mxu0 %v620
      %636 = vmatmul.bf16.gmra.mxu0 %v617
      %v637 = vpop.f32.mrf.mxu0
      %v638 = vadd.f32 0.0, %v637
      %v639 = vpop.f32.mrf.mxu0
      %640 = vdwg.mxu0
      %641 = vmatpush.bf16.msra.mxu0 0
      %642 = vmatpush.bf16.msra.mxu0 0
      %643 = vmatpush.bf16.msra.mxu0 0
      %644 = vmatpush.bf16.msra.mxu0 0
      %645 = vmatpush.bf16.msra.mxu0 0
      %646 = vmatpush.bf16.msra.mxu0 0
      %647 = vmatpush.bf16.msra.mxu0 0
      %648 = vmatpush.bf16.msra.mxu0 %v623
      %649 = vmatmul.bf16.gmra.mxu0 %v617
      %v650 = vpop.f32.mrf.mxu0
      %v651 = vadd.f32 0.0, %v650
      %v652 = vpop.f32.mrf.mxu0
      %653 = vdwg.mxu0
      %654 = vmatpush.bf16.msra.mxu0 0
      %655 = vmatpush.bf16.msra.mxu0 0
      %656 = vmatpush.bf16.msra.mxu0 0
      %657 = vmatpush.bf16.msra.mxu0 0
      %658 = vmatpush.bf16.msra.mxu0 0
      %659 = vmatpush.bf16.msra.mxu0 0
      %660 = vmatpush.bf16.msra.mxu0 0
      %661 = vmatpush.bf16.msra.mxu0 %v626
      %662 = vmatmul.bf16.gmra.mxu0 %v617
      %v663 = vpop.f32.mrf.mxu0
      %v664 = vadd.f32 0.0, %v663
      %v665 = vpop.f32.mrf.mxu0
      %666 = vdwg.mxu0
      %v667 = vadd.f32 %v602, %v638
      %v668 = vadd.f32 %v603, %v651
      %v669 = vadd.f32 %v604, %v664
      %s670 = scalar_lea.vmem %s1, 28
      %v671 = vld [vmem:[%s670] sm:$0xf]
      %672 = vrot.lane.b32.xlu0 %v229, 91
      %v673 = vpop.permute.xlu0 %672
      %674 = vrot.lane.b32.xlu0 %v230, 91
      %v675 = vpop.permute.xlu0 %674
      %676 = vrot.lane.b32.xlu0 %v231, 91
      %v677 = vpop.permute.xlu0 %676
      %vm678 = vcmask 744448
      %v679 = vsel %vm678, %v673, %v675
      %v680 = vsel %vm678, %v675, %v677
      %v682 = vsel %vm241, %v671, 0
      %v685 = vsel %vm245, %v679, 0
      %v688 = vsel %vm245, %v680, 0
      %v691 = vsel %vm245, %v677, 0
      %693 = vmatpush.bf16.msra.mxu0 0
      %694 = vmatpush.bf16.msra.mxu0 0
      %695 = vmatpush.bf16.msra.mxu0 0
      %696 = vmatpush.bf16.msra.mxu0 0
      %697 = vmatpush.bf16.msra.mxu0 0
      %698 = vmatpush.bf16.msra.mxu0 0
      %699 = vmatpush.bf16.msra.mxu0 0
      %700 = vmatpush.bf16.msra.mxu0 %v685
      %701 = vmatmul.bf16.gmra.mxu0 %v682
      %v702 = vpop.f32.mrf.mxu0
      %v703 = vadd.f32 0.0, %v702
      %v704 = vpop.f32.mrf.mxu0
      %705 = vdwg.mxu0
      %706 = vmatpush.bf16.msra.mxu0 0
      %707 = vmatpush.bf16.msra.mxu0 0
      %708 = vmatpush.bf16.msra.mxu0 0
      %709 = vmatpush.bf16.msra.mxu0 0
      %710 = vmatpush.bf16.msra.mxu0 0
      %711 = vmatpush.bf16.msra.mxu0 0
      %712 = vmatpush.bf16.msra.mxu0 0
      %713 = vmatpush.bf16.msra.mxu0 %v688
      %714 = vmatmul.bf16.gmra.mxu0 %v682
      %v715 = vpop.f32.mrf.mxu0
      %v716 = vadd.f32 0.0, %v715
      %v717 = vpop.f32.mrf.mxu0
      %718 = vdwg.mxu0
      %719 = vmatpush.bf16.msra.mxu0 0
      %720 = vmatpush.bf16.msra.mxu0 0
      %721 = vmatpush.bf16.msra.mxu0 0
      %722 = vmatpush.bf16.msra.mxu0 0
      %723 = vmatpush.bf16.msra.mxu0 0
      %724 = vmatpush.bf16.msra.mxu0 0
      %725 = vmatpush.bf16.msra.mxu0 0
      %726 = vmatpush.bf16.msra.mxu0 %v691
      %727 = vmatmul.bf16.gmra.mxu0 %v682
      %v728 = vpop.f32.mrf.mxu0
      %v729 = vadd.f32 0.0, %v728
      %v730 = vpop.f32.mrf.mxu0
      %731 = vdwg.mxu0
      %v732 = vadd.f32 %v667, %v703
      %v733 = vadd.f32 %v668, %v716
      %v734 = vadd.f32 %v669, %v729
      %s735 = scalar_lea.vmem %s1, 32
      %v736 = vld [vmem:[%s735] sm:$0xf]
      %737 = vrot.lane.b32.xlu0 %v229, 90
      %v738 = vpop.permute.xlu0 %737
      %739 = vrot.lane.b32.xlu0 %v230, 90
      %v740 = vpop.permute.xlu0 %739
      %741 = vrot.lane.b32.xlu0 %v231, 90
      %v742 = vpop.permute.xlu0 %741
      %vm743 = vcmask 736256
      %v744 = vsel %vm743, %v738, %v740
      %v745 = vsel %vm743, %v740, %v742
      %v747 = vsel %vm241, %v736, 0
      %v750 = vsel %vm245, %v744, 0
      %v753 = vsel %vm245, %v745, 0
      %v756 = vsel %vm245, %v742, 0
      %758 = vmatpush.bf16.msra.mxu0 0
      %759 = vmatpush.bf16.msra.mxu0 0
      %760 = vmatpush.bf16.msra.mxu0 0
      %761 = vmatpush.bf16.msra.mxu0 0
      %762 = vmatpush.bf16.msra.mxu0 0
      %763 = vmatpush.bf16.msra.mxu0 0
      %764 = vmatpush.bf16.msra.mxu0 0
      %765 = vmatpush.bf16.msra.mxu0 %v750
      %766 = vmatmul.bf16.gmra.mxu0 %v747
      %v767 = vpop.f32.mrf.mxu0
      %v768 = vadd.f32 0.0, %v767
      %v769 = vpop.f32.mrf.mxu0
      %770 = vdwg.mxu0
      %771 = vmatpush.bf16.msra.mxu0 0
      %772 = vmatpush.bf16.msra.mxu0 0
      %773 = vmatpush.bf16.msra.mxu0 0
      %774 = vmatpush.bf16.msra.mxu0 0
      %775 = vmatpush.bf16.msra.mxu0 0
      %776 = vmatpush.bf16.msra.mxu0 0
      %777 = vmatpush.bf16.msra.mxu0 0
      %778 = vmatpush.bf16.msra.mxu0 %v753
      %779 = vmatmul.bf16.gmra.mxu0 %v747
      %v780 = vpop.f32.mrf.mxu0
      %v781 = vadd.f32 0.0, %v780
      %v782 = vpop.f32.mrf.mxu0
      %783 = vdwg.mxu0
      %784 = vmatpush.bf16.msra.mxu0 0
      %785 = vmatpush.bf16.msra.mxu0 0
      %786 = vmatpush.bf16.msra.mxu0 0
      %787 = vmatpush.bf16.msra.mxu0 0
      %788 = vmatpush.bf16.msra.mxu0 0
      %789 = vmatpush.bf16.msra.mxu0 0
      %790 = vmatpush.bf16.msra.mxu0 0
      %791 = vmatpush.bf16.msra.mxu0 %v756
      %792 = vmatmul.bf16.gmra.mxu0 %v747
      %v793 = vpop.f32.mrf.mxu0
      %v794 = vadd.f32 0.0, %v793
      %v795 = vpop.f32.mrf.mxu0
      %796 = vdwg.mxu0
      %v797 = vadd.f32 %v732, %v768
      %v798 = vadd.f32 %v733, %v781
      %v799 = vadd.f32 %v734, %v794
      %v800 = vld [vmem:[%s2] sm:$0xff]
      %802 = vset.pattern.permute.xlu0 0
      %803 = vperm.xlu0 %802, %v800
      %v804 = vpop.permute.xlu0 %803
      %v806 = vadd.f32 %v797, %v804
      %v807 = vadd.f32 %v798, %v804
      %v808 = vadd.f32 %v799, %v804
      %v809 = vld [vmem:[%s212] sm:$0xff]
      %v810 = vld [vmem:[%s212 + $0x8] sm:$0xff]
      %v811 = vld [vmem:[%s212 + $0x10] sm:$0xff]
      %v812 = vadd.f32 %v806, %v809
      %v813 = vadd.f32 %v807, %v810
      %v814 = vadd.f32 %v808, %v811
      %815 = vst [vmem:[%s217] sm:$0xff] %v812
      %816 = vst [vmem:[%s217 + $0x8] sm:$0xff] %v813
      %vm817 = vcmask 261120
      %818 = vst.msk [vmem:[%s217 + $0x10] sm:$0xff] %vm817, %v814
      %p819 = scmp.lt.s32.totalorder %s15, 1
      %s820 = scalar_select %p819, %s15, 1
      %s821 = smul.addr %s820, 3
      %s822 = smul.addr %s821, 8
      %s823 = scalar_lea.vmem %s4, %s822
      // Predicated region
      $region37: #{forward.9} parent=35 // pred_check
        %p824 = pneg %p127
      $region38: #{forward.9} parent=35 // pred_check_branch
        %826 = sbr.rel (%p824) target = $region40
      $region39: #{forward.9} parent=35 // pred_region
        _
      $region40: #{forward.9} parent=35 // pred_fallthru
        _
    $region36: #{forward.9} parent=5 // pred_fallthru
      _
    %p827 = scmp.le.s32.totalorder 2, %s10
    // Predicated region
    $region41: #{forward.9} parent=5 // pred_check
      %p828 = pneg %p827
    $region42: #{forward.9} parent=5 // pred_check_branch
      %830 = sbr.rel (%p828) target = $region44
    $region43: #{forward.9} parent=5 // pred_region
      %s831 = ssub.s32 %s10, 2
      // Predicated region
      $region45: #{forward.9} parent=43 // pred_check
        %p832 = pneg %p133
      $region46: #{forward.9} parent=43 // pred_check_branch
        %834 = sbr.rel (%p832) target = $region48
      $region47: #{forward.9} parent=43 // pred_region
        %p835 = scmp.lt.s32.totalorder %s16, 1
        %s836 = scalar_select %p835, %s16, 1
        %s837 = smul.addr %s836, 3
        %s838 = smul.addr %s837, 8
        %s839 = scalar_lea.vmem %s4, %s838
      $region48: #{forward.9} parent=43 // pred_fallthru
        _
    $region44: #{forward.9} parent=5 // pred_fallthru
      _
  $region6: #{forward.9} parent=0 // loop_footer
    %s14 = sadd.s32 1, %s10
  $region7: #{forward.9} parent=0 // loop_footer_branch
    %9 = sbr.rel target = $region3
  $region8: #{forward.9} parent=0 // loop_exit
    _

// kernel: forward.10
$region0: #{forward.10}
  #allocation0 [shape = 'u32[]', space=smem, size = 0x4, offset = 0x4, fixed_abs, tag = 'smem constant byte address 0x4 - core index']
  #allocation1 [shape = 'u32[72,128]{1,0:T(1,128)}', space=vmem, size = 0x9000, scoped, tag = 'internal scratch']
  %s0 = inlined_call_operand.vmem [shape: bf16[2,8,512], index: 0, kind: input, shape index: {}]
  %s1 = inlined_call_operand.vmem [shape: bf16[9,8,8], index: 1, kind: input, shape index: {}]
  %s2 = inlined_call_operand.vmem [shape: f32[8,1], index: 2, kind: input, shape index: {}]
  %s3 = inlined_call_operand.vmem [shape: f32[2,8,320], index: 3, kind: output, shape index: {}]
  %s4 = sld [smem:[#allocation0]]
  $region45: #{forward.10} parent=0
    _
  %s6 = ssub.s32 1, %s4
  %s7 = scalar_select 0, %s6, %s4
  loop: start=0, step=1, limit=4
  $region2: #{forward.10} parent=0 // loop_pre_header
    _
  $region3: #{forward.10} parent=0 // loop_header
    %s9 = sphi 0, %s13
    %p10 = scmp.ge.s32.totalorder %s9, 4
    %s19 = sphi 0, %s21
    %s22 = sphi 0, %s19
    %s23 = sphi 0, %s22
    %s39 = sphi 0, %s23
    %s43 = sphi 0, %s43
    %s45 = sphi 0, %s43
    %s46 = sphi 0, %s45
    %s60 = sphi 0, %s46
    %s64 = sphi 0, %s64
    %s66 = sphi 0, %s64
    %s67 = sphi 0, %s66
    %s81 = sphi 0, %s67
    %s87 = sphi 0, %s89
    %s90 = sphi 0, %s87
    %s91 = sphi 0, %s90
    %s107 = sphi 0, %s91
  $region4: #{forward.10} parent=0 // loop_header_branch
    %12 = sbr.rel (%p10) target = $region8
  $region5: #{forward.10} parent=0 // loop_body
    %s14 = ssub.s32 %s9, 1
    %s15 = ssub.s32 %s9, 2
    %s16 = sadd.s32 %s9, 1
    %s17 = ssub.s32 %s9, %s16
    %p18 = scmp.eq.s32.totalorder %s17, 0
    %s20 = sadd.s32 %s19, 1
    %s21 = scalar_select %p18, %s19, %s20
    %p24 = pneg %p18
    %p25 = scmp.eq.s32.totalorder %s9, 1
    %p26 = por %p24, %p25
    %p27 = scmp.ne.s32.totalorder %s19, %s22
    %p28 = scmp.eq.s32.totalorder %s9, 0
    %p29 = por %p27, %p28
    %p30 = scmp.ne.s32.totalorder %s19, %s22
    %p31 = scmp.eq.s32.totalorder %s14, 1
    %p32 = por %p30, %p31
    %p33 = scmp.ne.s32.totalorder %s22, %s23
    %p34 = scmp.eq.s32.totalorder %s14, 0
    %p35 = por %p33, %p34
    %p36 = scmp.ne.s32.totalorder %s22, %s23
    %p37 = scmp.eq.s32.totalorder %s15, 1
    %p38 = por %p36, %p37
    %p40 = scmp.ne.s32.totalorder %s23, %s39
    %p41 = scmp.eq.s32.totalorder %s15, 0
    %p42 = por %p40, %p41
    %s44 = sadd.s32 %s43, 1
    %p47 = scmp.eq.s32.totalorder %s9, 1
    %p48 = scmp.ne.s32.totalorder %s43, %s45
    %p49 = scmp.eq.s32.totalorder %s9, 0
    %p50 = por %p48, %p49
    %p51 = scmp.ne.s32.totalorder %s43, %s45
    %p52 = scmp.eq.s32.totalorder %s14, 1
    %p53 = por %p51, %p52
    %p54 = scmp.ne.s32.totalorder %s45, %s46
    %p55 = scmp.eq.s32.totalorder %s14, 0
    %p56 = por %p54, %p55
    %p57 = scmp.ne.s32.totalorder %s45, %s46
    %p58 = scmp.eq.s32.totalorder %s15, 1
    %p59 = por %p57, %p58
    %p61 = scmp.ne.s32.totalorder %s46, %s60
    %p62 = scmp.eq.s32.totalorder %s15, 0
    %p63 = por %p61, %p62
    %s65 = sadd.s32 %s64, 1
    %p68 = scmp.eq.s32.totalorder %s9, 1
    %p69 = scmp.ne.s32.totalorder %s64, %s66
    %p70 = scmp.eq.s32.totalorder %s9, 0
    %p71 = por %p69, %p70
    %p72 = scmp.ne.s32.totalorder %s64, %s66
    %p73 = scmp.eq.s32.totalorder %s14, 1
    %p74 = por %p72, %p73
    %p75 = scmp.ne.s32.totalorder %s66, %s67
    %p76 = scmp.eq.s32.totalorder %s14, 0
    %p77 = por %p75, %p76
    %p78 = scmp.ne.s32.totalorder %s66, %s67
    %p79 = scmp.eq.s32.totalorder %s15, 1
    %p80 = por %p78, %p79
    %p82 = scmp.ne.s32.totalorder %s67, %s81
    %p83 = scmp.eq.s32.totalorder %s15, 0
    %p84 = por %p82, %p83
    %s85 = ssub.s32 %s9, %s16
    %p86 = scmp.eq.s32.totalorder %s85, 0
    %s88 = sadd.s32 %s87, 1
    %s89 = scalar_select %p86, %s87, %s88
    %p92 = pneg %p86
    %p93 = scmp.eq.s32.totalorder %s9, 1
    %p94 = por %p92, %p93
    %p95 = scmp.ne.s32.totalorder %s87, %s90
    %p96 = scmp.eq.s32.totalorder %s9, 0
    %p97 = por %p95, %p96
    %p98 = scmp.ne.s32.totalorder %s87, %s90
    %p99 = scmp.eq.s32.totalorder %s14, 1
    %p100 = por %p98, %p99
    %p101 = scmp.ne.s32.totalorder %s90, %s91
    %p102 = scmp.eq.s32.totalorder %s14, 0
    %p103 = por %p101, %p102
    %p104 = scmp.ne.s32.totalorder %s90, %s91
    %p105 = scmp.eq.s32.totalorder %s15, 1
    %p106 = por %p104, %p105
    %p108 = scmp.ne.s32.totalorder %s91, %s107
    %p109 = scmp.eq.s32.totalorder %s15, 0
    %p110 = por %p108, %p109
    %p111 = scmp.le.s32.totalorder 1, %s9
    %p112 = scmp.lt.s32.totalorder %s9, 3
    %p113 = pnand %p111, %p112
    %p114 = pneg %p113
    // Predicated region
    $region9: #{forward.10} parent=5 // pred_check
      _
    $region10: #{forward.10} parent=5 // pred_check_branch
      %116 = sbr.rel (%p113) target = $region12
    $region11: #{forward.10} parent=5 // pred_region
      %s117 = ssub.s32 %s9, 1
      // Predicated region
      $region13: #{forward.10} parent=11 // pred_check
        %p118 = pneg %p56
      $region14: #{forward.10} parent=11 // pred_check_branch
        %120 = sbr.rel (%p118) target = $region16
      $region15: #{forward.10} parent=11 // pred_region
        _
      $region16: #{forward.10} parent=11 // pred_fallthru
        _
      // Predicated region
      $region17: #{forward.10} parent=11 // pred_check
        %p121 = pneg %p77
      $region18: #{forward.10} parent=11 // pred_check_branch
        %123 = sbr.rel (%p121) target = $region20
      $region19: #{forward.10} parent=11 // pred_region
        _
      $region20: #{forward.10} parent=11 // pred_fallthru
        _
    $region12: #{forward.10} parent=5 // pred_fallthru
      _
    %p124 = scmp.lt.s32.totalorder %s9, 2
    // Predicated region
    $region21: #{forward.10} parent=5 // pred_check
      %p125 = pneg %p124
    $region22: #{forward.10} parent=5 // pred_check_branch
      %127 = sbr.rel (%p125) target = $region24
    $region23: #{forward.10} parent=5 // pred_region
      // Predicated region
      $region25: #{forward.10} parent=23 // pred_check
        %p128 = pneg %p29
      $region26: #{forward.10} parent=23 // pred_check_branch
        %130 = sbr.rel (%p128) target = $region28
      $region27: #{forward.10} parent=23 // pred_region
        %p131 = scmp.lt.s32.totalorder %s9, 1
        %s132 = scalar_select %p131, %s9, 1
        %s133 = smul.addr %s132, 4
        %s134 = smul.addr %s133, 4
        %s135 = scalar_lea.vmem %s0, %s134
      $region28: #{forward.10} parent=23 // pred_fallthru
        _
    $region24: #{forward.10} parent=5 // pred_fallthru
      _
    %p136 = scmp.le.s32.totalorder 1, %s9
    %p137 = scmp.lt.s32.totalorder %s9, 3
    %p138 = pnand %p136, %p137
    %p139 = pneg %p138
    // Predicated region
    $region29: #{forward.10} parent=5 // pred_check
      _
    $region30: #{forward.10} parent=5 // pred_check_branch
      %141 = sbr.rel (%p138) target = $region32
    $region31: #{forward.10} parent=5 // pred_region
      %s142 = ssub.s32 %s9, 1
      %p143 = scmp.lt.s32.totalorder %s14, 1
      %s144 = scalar_select %p143, %s14, 1
      %s145 = smul.addr %s144, 4
      %s146 = smul.addr %s145, 4
      %s147 = scalar_lea.vmem %s0, %s146
      %p148 = pneg %p35
      %p149 = pneg %p32
      %p150 = pneg %p56
      %p151 = pneg %p53
      %p152 = pneg %p77
      %p153 = pneg %p74
      %p154 = pneg %p103
      %p155 = pneg %p100
      %p156 = scmp.lt.s32.totalorder %s14, 1
      %s157 = scalar_select %p156, %s14, 1
      %s158 = smul.addr %s157, 3
      %s159 = smul.addr %s158, 8
      %s160 = scalar_lea.vmem %s3, %s159
      %p161 = scmp.lt.s32.totalorder %s14, 1
      %s162 = scalar_select %p161, %s14, 1
      %s163 = smul.addr %s162, 4
      %s164 = smul.addr %s163, 4
      %s165 = scalar_lea.vmem %s0, %s164
      %p166 = scmp.lt.s32.totalorder %s14, 1
      %s167 = scalar_select %p166, %s14, 1
      %s168 = smul.addr %s167, 3
      %s169 = smul.addr %s168, 8
      %s170 = scalar_lea.vmem %s3, %s169
      %v172 = vld [vmem:[%s165] sm:$0xff]
      %v173 = vld [vmem:[%s165 + $0x8] sm:$0xf]
      %v174 = vld [vmem:[%s1] sm:$0xf]
      %s175 = scalar_lea.vmem %s1, 4
      %v176 = vld [vmem:[%s175] sm:$0xf]
      %v179 = vunpack.c.l.b16 %v172
      %v180 = vunpack.c.h.b16 %v172
      %v181 = vunpack.c.l.b16 %v173
      %v182 = vpack.c.b16 %v179, %v179
      %v183 = vpack.c.b16 %v180, %v180
      %v184 = vpack.c.b16 %v181, %v181
      %185 = vrot.lane.b32.xlu0 %v182, 126
      %v186 = vpop.permute.xlu0 %185
      %187 = vrot.lane.b32.xlu0 %v183, 126
      %v188 = vpop.permute.xlu0 %187
      %189 = vrot.lane.b32.xlu0 %v184, 126
      %v190 = vpop.permute.xlu0 %189
      %vm191 = vcmask 1031168
      %v192 = vsel %vm191, %v186, %v188
      %v193 = vsel %vm191, %v188, %v190
      %vm194 = vcmask 64512
      %v196 = vsel %vm194, %v176, 0
      %vm198 = vcmask 1043456
      %v200 = vsel %vm198, %v192, 0
      %v203 = vsel %vm198, %v193, 0
      %v206 = vsel %vm198, %v190, 0
      %208 = vmatpush.bf16.msra.mxu0 0
      %209 = vmatpush.bf16.msra.mxu0 0
      %210 = vmatpush.bf16.msra.mxu0 0
      %211 = vmatpush.bf16.msra.mxu0 0
      %212 = vmatpush.bf16.msra.mxu0 0
      %213 = vmatpush.bf16.msra.mxu0 0
      %214 = vmatpush.bf16.msra.mxu0 0
      %215 = vmatpush.bf16.msra.mxu0 %v200
      %216 = vmatmul.bf16.gmra.mxu0 %v196
      %v217 = vpop.f32.mrf.mxu0
      %v218 = vadd.f32 0.0, %v217
      %v219 = vpop.f32.mrf.mxu0
      %220 = vdwg.mxu0
      %221 = vmatpush.bf16.msra.mxu0 0
      %222 = vmatpush.bf16.msra.mxu0 0
      %223 = vmatpush.bf16.msra.mxu0 0
      %224 = vmatpush.bf16.msra.mxu0 0
      %225 = vmatpush.bf16.msra.mxu0 0
      %226 = vmatpush.bf16.msra.mxu0 0
      %227 = vmatpush.bf16.msra.mxu0 0
      %228 = vmatpush.bf16.msra.mxu0 %v203
      %229 = vmatmul.bf16.gmra.mxu0 %v196
      %v230 = vpop.f32.mrf.mxu0
      %v231 = vadd.f32 0.0, %v230
      %v232 = vpop.f32.mrf.mxu0
      %233 = vdwg.mxu0
      %234 = vmatpush.bf16.msra.mxu0 0
      %235 = vmatpush.bf16.msra.mxu0 0
      %236 = vmatpush.bf16.msra.mxu0 0
      %237 = vmatpush.bf16.msra.mxu0 0
      %238 = vmatpush.bf16.msra.mxu0 0
      %239 = vmatpush.bf16.msra.mxu0 0
      %240 = vmatpush.bf16.msra.mxu0 0
      %241 = vmatpush.bf16.msra.mxu0 %v206
      %242 = vmatmul.bf16.gmra.mxu0 %v196
      %v243 = vpop.f32.mrf.mxu0
      %v244 = vadd.f32 0.0, %v243
      %v245 = vpop.f32.mrf.mxu0
      %246 = vdwg.mxu0
      %v248 = vsel %vm194, %v174, 0
      %v251 = vsel %vm198, %v182, 0
      %v254 = vsel %vm198, %v183, 0
      %v257 = vsel %vm198, %v184, 0
      %259 = vmatpush.bf16.msra.mxu0 0
      %260 = vmatpush.bf16.msra.mxu0 0
      %261 = vmatpush.bf16.msra.mxu0 0
      %262 = vmatpush.bf16.msra.mxu0 0
      %263 = vmatpush.bf16.msra.mxu0 0
      %264 = vmatpush.bf16.msra.mxu0 0
      %265 = vmatpush.bf16.msra.mxu0 0
      %266 = vmatpush.bf16.msra.mxu0 %v251
      %267 = vmatmul.bf16.gmra.mxu0 %v248
      %v268 = vpop.f32.mrf.mxu0
      %v269 = vadd.f32 %v218, %v268
      %v270 = vpop.f32.mrf.mxu0
      %271 = vdwg.mxu0
      %272 = vmatpush.bf16.msra.mxu0 0
      %273 = vmatpush.bf16.msra.mxu0 0
      %274 = vmatpush.bf16.msra.mxu0 0
      %275 = vmatpush.bf16.msra.mxu0 0
      %276 = vmatpush.bf16.msra.mxu0 0
      %277 = vmatpush.bf16.msra.mxu0 0
      %278 = vmatpush.bf16.msra.mxu0 0
      %279 = vmatpush.bf16.msra.mxu0 %v254
      %280 = vmatmul.bf16.gmra.mxu0 %v248
      %v281 = vpop.f32.mrf.mxu0
      %v282 = vadd.f32 %v231, %v281
      %v283 = vpop.f32.mrf.mxu0
      %284 = vdwg.mxu0
      %285 = vmatpush.bf16.msra.mxu0 0
      %286 = vmatpush.bf16.msra.mxu0 0
      %287 = vmatpush.bf16.msra.mxu0 0
      %288 = vmatpush.bf16.msra.mxu0 0
      %289 = vmatpush.bf16.msra.mxu0 0
      %290 = vmatpush.bf16.msra.mxu0 0
      %291 = vmatpush.bf16.msra.mxu0 0
      %292 = vmatpush.bf16.msra.mxu0 %v257
      %293 = vmatmul.bf16.gmra.mxu0 %v248
      %v294 = vpop.f32.mrf.mxu0
      %v295 = vadd.f32 %v244, %v294
      %v296 = vpop.f32.mrf.mxu0
      %297 = vdwg.mxu0
      %s298 = scalar_lea.vmem %s1, 8
      %v299 = vld [vmem:[%s298] sm:$0xf]
      %300 = vrot.lane.b32.xlu0 %v182, 124
      %v301 = vpop.permute.xlu0 %300
      %302 = vrot.lane.b32.xlu0 %v183, 124
      %v303 = vpop.permute.xlu0 %302
      %304 = vrot.lane.b32.xlu0 %v184, 124
      %v305 = vpop.permute.xlu0 %304
      %vm306 = vcmask 1014784
      %v307 = vsel %vm306, %v301, %v303
      %v308 = vsel %vm306, %v303, %v305
      %v310 = vsel %vm194, %v299, 0
      %v313 = vsel %vm198, %v307, 0
      %v316 = vsel %vm198, %v308, 0
      %v319 = vsel %vm198, %v305, 0
      %321 = vmatpush.bf16.msra.mxu0 0
      %322 = vmatpush.bf16.msra.mxu0 0
      %323 = vmatpush.bf16.msra.mxu0 0
      %324 = vmatpush.bf16.msra.mxu0 0
      %325 = vmatpush.bf16.msra.mxu0 0
      %326 = vmatpush.bf16.msra.mxu0 0
      %327 = vmatpush.bf16.msra.mxu0 0
      %328 = vmatpush.bf16.msra.mxu0 %v313
      %329 = vmatmul.bf16.gmra.mxu0 %v310
      %v330 = vpop.f32.mrf.mxu0
      %v331 = vadd.f32 0.0, %v330
      %v332 = vpop.f32.mrf.mxu0
      %333 = vdwg.mxu0
      %334 = vmatpush.bf16.msra.mxu0 0
      %335 = vmatpush.bf16.msra.mxu0 0
      %336 = vmatpush.bf16.msra.mxu0 0
      %337 = vmatpush.bf16.msra.mxu0 0
      %338 = vmatpush.bf16.msra.mxu0 0
      %339 = vmatpush.bf16.msra.mxu0 0
      %340 = vmatpush.bf16.msra.mxu0 0
      %341 = vmatpush.bf16.msra.mxu0 %v316
      %342 = vmatmul.bf16.gmra.mxu0 %v310
      %v343 = vpop.f32.mrf.mxu0
      %v344 = vadd.f32 0.0, %v343
      %v345 = vpop.f32.mrf.mxu0
      %346 = vdwg.mxu0
      %347 = vmatpush.bf16.msra.mxu0 0
      %348 = vmatpush.bf16.msra.mxu0 0
      %349 = vmatpush.bf16.msra.mxu0 0
      %350 = vmatpush.bf16.msra.mxu0 0
      %351 = vmatpush.bf16.msra.mxu0 0
      %352 = vmatpush.bf16.msra.mxu0 0
      %353 = vmatpush.bf16.msra.mxu0 0
      %354 = vmatpush.bf16.msra.mxu0 %v319
      %355 = vmatmul.bf16.gmra.mxu0 %v310
      %v356 = vpop.f32.mrf.mxu0
      %v357 = vadd.f32 0.0, %v356
      %v358 = vpop.f32.mrf.mxu0
      %359 = vdwg.mxu0
      %v360 = vadd.f32 %v269, %v331
      %v361 = vadd.f32 %v282, %v344
      %v362 = vadd.f32 %v295, %v357
      %s363 = scalar_lea.vmem %s1, 12
      %v364 = vld [vmem:[%s363] sm:$0xf]
      %365 = vrot.lane.b32.xlu0 %v182, 88
      %v366 = vpop.permute.xlu0 %365
      %367 = vrot.lane.b32.xlu0 %v183, 88
      %v368 = vpop.permute.xlu0 %367
      %369 = vrot.lane.b32.xlu0 %v184, 88
      %v370 = vpop.permute.xlu0 %369
      %vm371 = vcmask 719872
      %v372 = vsel %vm371, %v366, %v368
      %v373 = vsel %vm371, %v368, %v370
      %v375 = vsel %vm194, %v364, 0
      %v378 = vsel %vm198, %v372, 0
      %v381 = vsel %vm198, %v373, 0
      %v384 = vsel %vm198, %v370, 0
      %386 = vmatpush.bf16.msra.mxu0 0
      %387 = vmatpush.bf16.msra.mxu0 0
      %388 = vmatpush.bf16.msra.mxu0 0
      %389 = vmatpush.bf16.msra.mxu0 0
      %390 = vmatpush.bf16.msra.mxu0 0
      %391 = vmatpush.bf16.msra.mxu0 0
      %392 = vmatpush.bf16.msra.mxu0 0
      %393 = vmatpush.bf16.msra.mxu0 %v378
      %394 = vmatmul.bf16.gmra.mxu0 %v375
      %v395 = vpop.f32.mrf.mxu0
      %v396 = vadd.f32 0.0, %v395
      %v397 = vpop.f32.mrf.mxu0
      %398 = vdwg.mxu0
      %399 = vmatpush.bf16.msra.mxu0 0
      %400 = vmatpush.bf16.msra.mxu0 0
      %401 = vmatpush.bf16.msra.mxu0 0
      %402 = vmatpush.bf16.msra.mxu0 0
      %403 = vmatpush.bf16.msra.mxu0 0
      %404 = vmatpush.bf16.msra.mxu0 0
      %405 = vmatpush.bf16.msra.mxu0 0
      %406 = vmatpush.bf16.msra.mxu0 %v381
      %407 = vmatmul.bf16.gmra.mxu0 %v375
      %v408 = vpop.f32.mrf.mxu0
      %v409 = vadd.f32 0.0, %v408
      %v410 = vpop.f32.mrf.mxu0
      %411 = vdwg.mxu0
      %412 = vmatpush.bf16.msra.mxu0 0
      %413 = vmatpush.bf16.msra.mxu0 0
      %414 = vmatpush.bf16.msra.mxu0 0
      %415 = vmatpush.bf16.msra.mxu0 0
      %416 = vmatpush.bf16.msra.mxu0 0
      %417 = vmatpush.bf16.msra.mxu0 0
      %418 = vmatpush.bf16.msra.mxu0 0
      %419 = vmatpush.bf16.msra.mxu0 %v384
      %420 = vmatmul.bf16.gmra.mxu0 %v375
      %v421 = vpop.f32.mrf.mxu0
      %v422 = vadd.f32 0.0, %v421
      %v423 = vpop.f32.mrf.mxu0
      %424 = vdwg.mxu0
      %v425 = vadd.f32 %v360, %v396
      %v426 = vadd.f32 %v361, %v409
      %v427 = vadd.f32 %v362, %v422
      %s428 = scalar_lea.vmem %s1, 16
      %v429 = vld [vmem:[%s428] sm:$0xf]
      %430 = vrot.lane.b32.xlu0 %v182, 86
      %v431 = vpop.permute.xlu0 %430
      %432 = vrot.lane.b32.xlu0 %v183, 86
      %v433 = vpop.permute.xlu0 %432
      %434 = vrot.lane.b32.xlu0 %v184, 86
      %v435 = vpop.permute.xlu0 %434
      %vm436 = vcmask 703488
      %v437 = vsel %vm436, %v431, %v433
      %v438 = vsel %vm436, %v433, %v435
      %v440 = vsel %vm194, %v429, 0
      %v443 = vsel %vm198, %v437, 0
      %v446 = vsel %vm198, %v438, 0
      %v449 = vsel %vm198, %v435, 0
      %451 = vmatpush.bf16.msra.mxu0 0
      %452 = vmatpush.bf16.msra.mxu0 0
      %453 = vmatpush.bf16.msra.mxu0 0
      %454 = vmatpush.bf16.msra.mxu0 0
      %455 = vmatpush.bf16.msra.mxu0 0
      %456 = vmatpush.bf16.msra.mxu0 0
      %457 = vmatpush.bf16.msra.mxu0 0
      %458 = vmatpush.bf16.msra.mxu0 %v443
      %459 = vmatmul.bf16.gmra.mxu0 %v440
      %v460 = vpop.f32.mrf.mxu0
      %v461 = vadd.f32 0.0, %v460
      %v462 = vpop.f32.mrf.mxu0
      %463 = vdwg.mxu0
      %464 = vmatpush.bf16.msra.mxu0 0
      %465 = vmatpush.bf16.msra.mxu0 0
      %466 = vmatpush.bf16.msra.mxu0 0
      %467 = vmatpush.bf16.msra.mxu0 0
      %468 = vmatpush.bf16.msra.mxu0 0
      %469 = vmatpush.bf16.msra.mxu0 0
      %470 = vmatpush.bf16.msra.mxu0 0
      %471 = vmatpush.bf16.msra.mxu0 %v446
      %472 = vmatmul.bf16.gmra.mxu0 %v440
      %v473 = vpop.f32.mrf.mxu0
      %v474 = vadd.f32 0.0, %v473
      %v475 = vpop.f32.mrf.mxu0
      %476 = vdwg.mxu0
      %477 = vmatpush.bf16.msra.mxu0 0
      %478 = vmatpush.bf16.msra.mxu0 0
      %479 = vmatpush.bf16.msra.mxu0 0
      %480 = vmatpush.bf16.msra.mxu0 0
      %481 = vmatpush.bf16.msra.mxu0 0
      %482 = vmatpush.bf16.msra.mxu0 0
      %483 = vmatpush.bf16.msra.mxu0 0
      %484 = vmatpush.bf16.msra.mxu0 %v449
      %485 = vmatmul.bf16.gmra.mxu0 %v440
      %v486 = vpop.f32.mrf.mxu0
      %v487 = vadd.f32 0.0, %v486
      %v488 = vpop.f32.mrf.mxu0
      %489 = vdwg.mxu0
      %v490 = vadd.f32 %v425, %v461
      %v491 = vadd.f32 %v426, %v474
      %v492 = vadd.f32 %v427, %v487
      %s493 = scalar_lea.vmem %s1, 20
      %v494 = vld [vmem:[%s493] sm:$0xf]
      %495 = vrot.lane.b32.xlu0 %v182, 84
      %v496 = vpop.permute.xlu0 %495
      %497 = vrot.lane.b32.xlu0 %v183, 84
      %v498 = vpop.permute.xlu0 %497
      %499 = vrot.lane.b32.xlu0 %v184, 84
      %v500 = vpop.permute.xlu0 %499
      %vm501 = vcmask 687104
      %v502 = vsel %vm501, %v496, %v498
      %v503 = vsel %vm501, %v498, %v500
      %v505 = vsel %vm194, %v494, 0
      %v508 = vsel %vm198, %v502, 0
      %v511 = vsel %vm198, %v503, 0
      %v514 = vsel %vm198, %v500, 0
      %516 = vmatpush.bf16.msra.mxu0 0
      %517 = vmatpush.bf16.msra.mxu0 0
      %518 = vmatpush.bf16.msra.mxu0 0
      %519 = vmatpush.bf16.msra.mxu0 0
      %520 = vmatpush.bf16.msra.mxu0 0
      %521 = vmatpush.bf16.msra.mxu0 0
      %522 = vmatpush.bf16.msra.mxu0 0
      %523 = vmatpush.bf16.msra.mxu0 %v508
      %524 = vmatmul.bf16.gmra.mxu0 %v505
      %v525 = vpop.f32.mrf.mxu0
      %v526 = vadd.f32 0.0, %v525
      %v527 = vpop.f32.mrf.mxu0
      %528 = vdwg.mxu0
      %529 = vmatpush.bf16.msra.mxu0 0
      %530 = vmatpush.bf16.msra.mxu0 0
      %531 = vmatpush.bf16.msra.mxu0 0
      %532 = vmatpush.bf16.msra.mxu0 0
      %533 = vmatpush.bf16.msra.mxu0 0
      %534 = vmatpush.bf16.msra.mxu0 0
      %535 = vmatpush.bf16.msra.mxu0 0
      %536 = vmatpush.bf16.msra.mxu0 %v511
      %537 = vmatmul.bf16.gmra.mxu0 %v505
      %v538 = vpop.f32.mrf.mxu0
      %v539 = vadd.f32 0.0, %v538
      %v540 = vpop.f32.mrf.mxu0
      %541 = vdwg.mxu0
      %542 = vmatpush.bf16.msra.mxu0 0
      %543 = vmatpush.bf16.msra.mxu0 0
      %544 = vmatpush.bf16.msra.mxu0 0
      %545 = vmatpush.bf16.msra.mxu0 0
      %546 = vmatpush.bf16.msra.mxu0 0
      %547 = vmatpush.bf16.msra.mxu0 0
      %548 = vmatpush.bf16.msra.mxu0 0
      %549 = vmatpush.bf16.msra.mxu0 %v514
      %550 = vmatmul.bf16.gmra.mxu0 %v505
      %v551 = vpop.f32.mrf.mxu0
      %v552 = vadd.f32 0.0, %v551
      %v553 = vpop.f32.mrf.mxu0
      %554 = vdwg.mxu0
      %v555 = vadd.f32 %v490, %v526
      %v556 = vadd.f32 %v491, %v539
      %v557 = vadd.f32 %v492, %v552
      %v558 = vld [vmem:[%s165] sm:$0xff]
      %v559 = vld [vmem:[%s165 + $0x8] sm:$0xff]
      %s560 = scalar_lea.vmem %s1, 24
      %v561 = vld [vmem:[%s560] sm:$0xf]
      %v564 = vunpack.c.l.b16 %v558
      %v565 = vunpack.c.h.b16 %v558
      %v566 = vunpack.c.l.b16 %v559
      %v567 = vunpack.c.h.b16 %v559
      %v568 = vpack.c.b16 %v564, %v564
      %v569 = vpack.c.b16 %v565, %v565
      %v570 = vpack.c.b16 %v566, %v566
      %v571 = vpack.c.b16 %v567, %v567
      %572 = vrot.lane.b32.xlu0 %v568, 48
      %v573 = vpop.permute.xlu0 %572
      %574 = vrot.lane.b32.xlu0 %v569, 48
      %v575 = vpop.permute.xlu0 %574
      %576 = vrot.lane.b32.xlu0 %v570, 48
      %v577 = vpop.permute.xlu0 %576
      %578 = vrot.lane.b32.xlu0 %v571, 48
      %v579 = vpop.permute.xlu0 %578
      %vm580 = vcmask 392192
      %v581 = vsel %vm580, %v573, %v575
      %v582 = vsel %vm580, %v575, %v577
      %v583 = vsel %vm580, %v577, %v579
      %v585 = vsel %vm194, %v561, 0
      %v588 = vsel %vm198, %v581, 0
      %v591 = vsel %vm198, %v582, 0
      %v594 = vsel %vm198, %v583, 0
      %596 = vmatpush.bf16.msra.mxu0 0
      %597 = vmatpush.bf16.msra.mxu0 0
      %598 = vmatpush.bf16.msra.mxu0 0
      %599 = vmatpush.bf16.msra.mxu0 0
      %600 = vmatpush.bf16.msra.mxu0 0
      %601 = vmatpush.bf16.msra.mxu0 0
      %602 = vmatpush.bf16.msra.mxu0 0
      %603 = vmatpush.bf16.msra.mxu0 %v588
      %604 = vmatmul.bf16.gmra.mxu0 %v585
      %v605 = vpop.f32.mrf.mxu0
      %v606 = vadd.f32 0.0, %v605
      %v607 = vpop.f32.mrf.mxu0
      %608 = vdwg.mxu0
      %609 = vmatpush.bf16.msra.mxu0 0
      %610 = vmatpush.bf16.msra.mxu0 0
      %611 = vmatpush.bf16.msra.mxu0 0
      %612 = vmatpush.bf16.msra.mxu0 0
      %613 = vmatpush.bf16.msra.mxu0 0
      %614 = vmatpush.bf16.msra.mxu0 0
      %615 = vmatpush.bf16.msra.mxu0 0
      %616 = vmatpush.bf16.msra.mxu0 %v591
      %617 = vmatmul.bf16.gmra.mxu0 %v585
      %v618 = vpop.f32.mrf.mxu0
      %v619 = vadd.f32 0.0, %v618
      %v620 = vpop.f32.mrf.mxu0
      %621 = vdwg.mxu0
      %622 = vmatpush.bf16.msra.mxu0 0
      %623 = vmatpush.bf16.msra.mxu0 0
      %624 = vmatpush.bf16.msra.mxu0 0
      %625 = vmatpush.bf16.msra.mxu0 0
      %626 = vmatpush.bf16.msra.mxu0 0
      %627 = vmatpush.bf16.msra.mxu0 0
      %628 = vmatpush.bf16.msra.mxu0 0
      %629 = vmatpush.bf16.msra.mxu0 %v594
      %630 = vmatmul.bf16.gmra.mxu0 %v585
      %v631 = vpop.f32.mrf.mxu0
      %v632 = vadd.f32 0.0, %v631
      %v633 = vpop.f32.mrf.mxu0
      %634 = vdwg.mxu0
      %v635 = vadd.f32 %v555, %v606
      %v636 = vadd.f32 %v556, %v619
      %v637 = vadd.f32 %v557, %v632
      %s638 = scalar_lea.vmem %s1, 28
      %v639 = vld [vmem:[%s638] sm:$0xf]
      %640 = vrot.lane.b32.xlu0 %v568, 46
      %v641 = vpop.permute.xlu0 %640
      %642 = vrot.lane.b32.xlu0 %v569, 46
      %v643 = vpop.permute.xlu0 %642
      %644 = vrot.lane.b32.xlu0 %v570, 46
      %v645 = vpop.permute.xlu0 %644
      %646 = vrot.lane.b32.xlu0 %v571, 46
      %v647 = vpop.permute.xlu0 %646
      %vm648 = vcmask 375808
      %v649 = vsel %vm648, %v641, %v643
      %v650 = vsel %vm648, %v643, %v645
      %v651 = vsel %vm648, %v645, %v647
      %v653 = vsel %vm194, %v639, 0
      %v656 = vsel %vm198, %v649, 0
      %v659 = vsel %vm198, %v650, 0
      %v662 = vsel %vm198, %v651, 0
      %664 = vmatpush.bf16.msra.mxu0 0
      %665 = vmatpush.bf16.msra.mxu0 0
      %666 = vmatpush.bf16.msra.mxu0 0
      %667 = vmatpush.bf16.msra.mxu0 0
      %668 = vmatpush.bf16.msra.mxu0 0
      %669 = vmatpush.bf16.msra.mxu0 0
      %670 = vmatpush.bf16.msra.mxu0 0
      %671 = vmatpush.bf16.msra.mxu0 %v656
      %672 = vmatmul.bf16.gmra.mxu0 %v653
      %v673 = vpop.f32.mrf.mxu0
      %v674 = vadd.f32 0.0, %v673
      %v675 = vpop.f32.mrf.mxu0
      %676 = vdwg.mxu0
      %677 = vmatpush.bf16.msra.mxu0 0
      %678 = vmatpush.bf16.msra.mxu0 0
      %679 = vmatpush.bf16.msra.mxu0 0
      %680 = vmatpush.bf16.msra.mxu0 0
      %681 = vmatpush.bf16.msra.mxu0 0
      %682 = vmatpush.bf16.msra.mxu0 0
      %683 = vmatpush.bf16.msra.mxu0 0
      %684 = vmatpush.bf16.msra.mxu0 %v659
      %685 = vmatmul.bf16.gmra.mxu0 %v653
      %v686 = vpop.f32.mrf.mxu0
      %v687 = vadd.f32 0.0, %v686
      %v688 = vpop.f32.mrf.mxu0
      %689 = vdwg.mxu0
      %690 = vmatpush.bf16.msra.mxu0 0
      %691 = vmatpush.bf16.msra.mxu0 0
      %692 = vmatpush.bf16.msra.mxu0 0
      %693 = vmatpush.bf16.msra.mxu0 0
      %694 = vmatpush.bf16.msra.mxu0 0
      %695 = vmatpush.bf16.msra.mxu0 0
      %696 = vmatpush.bf16.msra.mxu0 0
      %697 = vmatpush.bf16.msra.mxu0 %v662
      %698 = vmatmul.bf16.gmra.mxu0 %v653
      %v699 = vpop.f32.mrf.mxu0
      %v700 = vadd.f32 0.0, %v699
      %v701 = vpop.f32.mrf.mxu0
      %702 = vdwg.mxu0
      %v703 = vadd.f32 %v635, %v674
      %v704 = vadd.f32 %v636, %v687
      %v705 = vadd.f32 %v637, %v700
      %s706 = scalar_lea.vmem %s1, 32
      %v707 = vld [vmem:[%s706] sm:$0xf]
      %708 = vrot.lane.b32.xlu0 %v568, 44
      %v709 = vpop.permute.xlu0 %708
      %710 = vrot.lane.b32.xlu0 %v569, 44
      %v711 = vpop.permute.xlu0 %710
      %712 = vrot.lane.b32.xlu0 %v570, 44
      %v713 = vpop.permute.xlu0 %712
      %714 = vrot.lane.b32.xlu0 %v571, 44
      %v715 = vpop.permute.xlu0 %714
      %vm716 = vcmask 359424
      %v717 = vsel %vm716, %v709, %v711
      %v718 = vsel %vm716, %v711, %v713
      %v719 = vsel %vm716, %v713, %v715
      %v721 = vsel %vm194, %v707, 0
      %v724 = vsel %vm198, %v717, 0
      %v727 = vsel %vm198, %v718, 0
      %v730 = vsel %vm198, %v719, 0
      %732 = vmatpush.bf16.msra.mxu0 0
      %733 = vmatpush.bf16.msra.mxu0 0
      %734 = vmatpush.bf16.msra.mxu0 0
      %735 = vmatpush.bf16.msra.mxu0 0
      %736 = vmatpush.bf16.msra.mxu0 0
      %737 = vmatpush.bf16.msra.mxu0 0
      %738 = vmatpush.bf16.msra.mxu0 0
      %739 = vmatpush.bf16.msra.mxu0 %v724
      %740 = vmatmul.bf16.gmra.mxu0 %v721
      %v741 = vpop.f32.mrf.mxu0
      %v742 = vadd.f32 0.0, %v741
      %v743 = vpop.f32.mrf.mxu0
      %744 = vdwg.mxu0
      %745 = vmatpush.bf16.msra.mxu0 0
      %746 = vmatpush.bf16.msra.mxu0 0
      %747 = vmatpush.bf16.msra.mxu0 0
      %748 = vmatpush.bf16.msra.mxu0 0
      %749 = vmatpush.bf16.msra.mxu0 0
      %750 = vmatpush.bf16.msra.mxu0 0
      %751 = vmatpush.bf16.msra.mxu0 0
      %752 = vmatpush.bf16.msra.mxu0 %v727
      %753 = vmatmul.bf16.gmra.mxu0 %v721
      %v754 = vpop.f32.mrf.mxu0
      %v755 = vadd.f32 0.0, %v754
      %v756 = vpop.f32.mrf.mxu0
      %757 = vdwg.mxu0
      %758 = vmatpush.bf16.msra.mxu0 0
      %759 = vmatpush.bf16.msra.mxu0 0
      %760 = vmatpush.bf16.msra.mxu0 0
      %761 = vmatpush.bf16.msra.mxu0 0
      %762 = vmatpush.bf16.msra.mxu0 0
      %763 = vmatpush.bf16.msra.mxu0 0
      %764 = vmatpush.bf16.msra.mxu0 0
      %765 = vmatpush.bf16.msra.mxu0 %v730
      %766 = vmatmul.bf16.gmra.mxu0 %v721
      %v767 = vpop.f32.mrf.mxu0
      %v768 = vadd.f32 0.0, %v767
      %v769 = vpop.f32.mrf.mxu0
      %770 = vdwg.mxu0
      %v771 = vadd.f32 %v703, %v742
      %v772 = vadd.f32 %v704, %v755
      %v773 = vadd.f32 %v705, %v768
      %v774 = vld [vmem:[%s2] sm:$0xff]
      %776 = vset.pattern.permute.xlu0 0
      %777 = vperm.xlu0 %776, %v774
      %v778 = vpop.permute.xlu0 %777
      %v780 = vadd.f32 %v771, %v778
      %v781 = vadd.f32 %v772, %v778
      %v782 = vadd.f32 %v773, %v778
      %v783 = vmax.f32 %v780, 0.0
      %v784 = vmax.f32 %v781, 0.0
      %v785 = vmax.f32 %v782, 0.0
      %786 = vst [vmem:[%s170] sm:$0xff] %v783
      %787 = vst [vmem:[%s170 + $0x8] sm:$0xff] %v784
      %vm788 = vcmask 523264
      %789 = vst.msk [vmem:[%s170 + $0x10] sm:$0xff] %vm788, %v785
      %p790 = scmp.lt.s32.totalorder %s14, 1
      %s791 = scalar_select %p790, %s14, 1
      %s792 = smul.addr %s791, 3
      %s793 = smul.addr %s792, 8
      %s794 = scalar_lea.vmem %s3, %s793
      // Predicated region
      $region33: #{forward.10} parent=31 // pred_check
        %p795 = pneg %p100
      $region34: #{forward.10} parent=31 // pred_check_branch
        %797 = sbr.rel (%p795) target = $region36
      $region35: #{forward.10} parent=31 // pred_region
        _
      $region36: #{forward.10} parent=31 // pred_fallthru
        _
    $region32: #{forward.10} parent=5 // pred_fallthru
      _
    %p798 = scmp.le.s32.totalorder 2, %s9
    // Predicated region
    $region37: #{forward.10} parent=5 // pred_check
      %p799 = pneg %p798
    $region38: #{forward.10} parent=5 // pred_check_branch
      %801 = sbr.rel (%p799) target = $region40
    $region39: #{forward.10} parent=5 // pred_region
      %s802 = ssub.s32 %s9, 2
      // Predicated region
      $region41: #{forward.10} parent=39 // pred_check
        %p803 = pneg %p106
      $region42: #{forward.10} parent=39 // pred_check_branch
        %805 = sbr.rel (%p803) target = $region44
      $region43: #{forward.10} parent=39 // pred_region
        %p806 = scmp.lt.s32.totalorder %s15, 1
        %s807 = scalar_select %p806, %s15, 1
        %s808 = smul.addr %s807, 3
        %s809 = smul.addr %s808, 8
        %s810 = scalar_lea.vmem %s3, %s809
      $region44: #{forward.10} parent=39 // pred_fallthru
        _
    $region40: #{forward.10} parent=5 // pred_fallthru
      _
  $region6: #{forward.10} parent=0 // loop_footer
    %s13 = sadd.s32 1, %s9
  $region7: #{forward.10} parent=0 // loop_footer_branch
    %8 = sbr.rel target = $region3
  $region8: #{forward.10} parent=0 // loop_exit
    _

// kernel: forward.11
$region0: #{forward.11}
  #allocation0 [shape = 'u32[]', space=smem, size = 0x4, offset = 0x4, fixed_abs, tag = 'smem constant byte address 0x4 - core index']
  #allocation1 [shape = 'u32[72,128]{1,0:T(1,128)}', space=vmem, size = 0x9000, scoped, tag = 'internal scratch']
  %s0 = inlined_call_operand.vmem [shape: bf16[2,8,512], index: 0, kind: input, shape index: {}]
  %s1 = inlined_call_operand.vmem [shape: bf16[9,8,8], index: 1, kind: input, shape index: {}]
  %s2 = inlined_call_operand.vmem [shape: f32[8,1], index: 2, kind: input, shape index: {}]
  %s3 = inlined_call_operand.vmem [shape: f32[2,8,320], index: 3, kind: input, shape index: {}]
  %s4 = inlined_call_operand.vmem [shape: f32[2,8,320], index: 4, kind: output, shape index: {}]
  %s5 = sld [smem:[#allocation0]]
  $region49: #{forward.11} parent=0
    _
  %s7 = ssub.s32 1, %s5
  %s8 = scalar_select 0, %s7, %s5
  loop: start=0, step=1, limit=4
  $region2: #{forward.11} parent=0 // loop_pre_header
    _
  $region3: #{forward.11} parent=0 // loop_header
    %s10 = sphi 0, %s14
    %p11 = scmp.ge.s32.totalorder %s10, 4
    %s20 = sphi 0, %s22
    %s23 = sphi 0, %s20
    %s24 = sphi 0, %s23
    %s40 = sphi 0, %s24
    %s44 = sphi 0, %s44
    %s46 = sphi 0, %s44
    %s47 = sphi 0, %s46
    %s61 = sphi 0, %s47
    %s65 = sphi 0, %s65
    %s67 = sphi 0, %s65
    %s68 = sphi 0, %s67
    %s82 = sphi 0, %s68
    %s88 = sphi 0, %s90
    %s91 = sphi 0, %s88
    %s92 = sphi 0, %s91
    %s108 = sphi 0, %s92
    %s114 = sphi 0, %s116
    %s117 = sphi 0, %s114
    %s118 = sphi 0, %s117
    %s134 = sphi 0, %s118
  $region4: #{forward.11} parent=0 // loop_header_branch
    %13 = sbr.rel (%p11) target = $region8
  $region5: #{forward.11} parent=0 // loop_body
    %s15 = ssub.s32 %s10, 1
    %s16 = ssub.s32 %s10, 2
    %s17 = sadd.s32 %s10, 1
    %s18 = ssub.s32 %s10, %s17
    %p19 = scmp.eq.s32.totalorder %s18, 0
    %s21 = sadd.s32 %s20, 1
    %s22 = scalar_select %p19, %s20, %s21
    %p25 = pneg %p19
    %p26 = scmp.eq.s32.totalorder %s10, 1
    %p27 = por %p25, %p26
    %p28 = scmp.ne.s32.totalorder %s20, %s23
    %p29 = scmp.eq.s32.totalorder %s10, 0
    %p30 = por %p28, %p29
    %p31 = scmp.ne.s32.totalorder %s20, %s23
    %p32 = scmp.eq.s32.totalorder %s15, 1
    %p33 = por %p31, %p32
    %p34 = scmp.ne.s32.totalorder %s23, %s24
    %p35 = scmp.eq.s32.totalorder %s15, 0
    %p36 = por %p34, %p35
    %p37 = scmp.ne.s32.totalorder %s23, %s24
    %p38 = scmp.eq.s32.totalorder %s16, 1
    %p39 = por %p37, %p38
    %p41 = scmp.ne.s32.totalorder %s24, %s40
    %p42 = scmp.eq.s32.totalorder %s16, 0
    %p43 = por %p41, %p42
    %s45 = sadd.s32 %s44, 1
    %p48 = scmp.eq.s32.totalorder %s10, 1
    %p49 = scmp.ne.s32.totalorder %s44, %s46
    %p50 = scmp.eq.s32.totalorder %s10, 0
    %p51 = por %p49, %p50
    %p52 = scmp.ne.s32.totalorder %s44, %s46
    %p53 = scmp.eq.s32.totalorder %s15, 1
    %p54 = por %p52, %p53
    %p55 = scmp.ne.s32.totalorder %s46, %s47
    %p56 = scmp.eq.s32.totalorder %s15, 0
    %p57 = por %p55, %p56
    %p58 = scmp.ne.s32.totalorder %s46, %s47
    %p59 = scmp.eq.s32.totalorder %s16, 1
    %p60 = por %p58, %p59
    %p62 = scmp.ne.s32.totalorder %s47, %s61
    %p63 = scmp.eq.s32.totalorder %s16, 0
    %p64 = por %p62, %p63
    %s66 = sadd.s32 %s65, 1
    %p69 = scmp.eq.s32.totalorder %s10, 1
    %p70 = scmp.ne.s32.totalorder %s65, %s67
    %p71 = scmp.eq.s32.totalorder %s10, 0
    %p72 = por %p70, %p71
    %p73 = scmp.ne.s32.totalorder %s65, %s67
    %p74 = scmp.eq.s32.totalorder %s15, 1
    %p75 = por %p73, %p74
    %p76 = scmp.ne.s32.totalorder %s67, %s68
    %p77 = scmp.eq.s32.totalorder %s15, 0
    %p78 = por %p76, %p77
    %p79 = scmp.ne.s32.totalorder %s67, %s68
    %p80 = scmp.eq.s32.totalorder %s16, 1
    %p81 = por %p79, %p80
    %p83 = scmp.ne.s32.totalorder %s68, %s82
    %p84 = scmp.eq.s32.totalorder %s16, 0
    %p85 = por %p83, %p84
    %s86 = ssub.s32 %s10, %s17
    %p87 = scmp.eq.s32.totalorder %s86, 0
    %s89 = sadd.s32 %s88, 1
    %s90 = scalar_select %p87, %s88, %s89
    %p93 = pneg %p87
    %p94 = scmp.eq.s32.totalorder %s10, 1
    %p95 = por %p93, %p94
    %p96 = scmp.ne.s32.totalorder %s88, %s91
    %p97 = scmp.eq.s32.totalorder %s10, 0
    %p98 = por %p96, %p97
    %p99 = scmp.ne.s32.totalorder %s88, %s91
    %p100 = scmp.eq.s32.totalorder %s15, 1
    %p101 = por %p99, %p100
    %p102 = scmp.ne.s32.totalorder %s91, %s92
    %p103 = scmp.eq.s32.totalorder %s15, 0
    %p104 = por %p102, %p103
    %p105 = scmp.ne.s32.totalorder %s91, %s92
    %p106 = scmp.eq.s32.totalorder %s16, 1
    %p107 = por %p105, %p106
    %p109 = scmp.ne.s32.totalorder %s92, %s108
    %p110 = scmp.eq.s32.totalorder %s16, 0
    %p111 = por %p109, %p110
    %s112 = ssub.s32 %s10, %s17
    %p113 = scmp.eq.s32.totalorder %s112, 0
    %s115 = sadd.s32 %s114, 1
    %s116 = scalar_select %p113, %s114, %s115
    %p119 = pneg %p113
    %p120 = scmp.eq.s32.totalorder %s10, 1
    %p121 = por %p119, %p120
    %p122 = scmp.ne.s32.totalorder %s114, %s117
    %p123 = scmp.eq.s32.totalorder %s10, 0
    %p124 = por %p122, %p123
    %p125 = scmp.ne.s32.totalorder %s114, %s117
    %p126 = scmp.eq.s32.totalorder %s15, 1
    %p127 = por %p125, %p126
    %p128 = scmp.ne.s32.totalorder %s117, %s118
    %p129 = scmp.eq.s32.totalorder %s15, 0
    %p130 = por %p128, %p129
    %p131 = scmp.ne.s32.totalorder %s117, %s118
    %p132 = scmp.eq.s32.totalorder %s16, 1
    %p133 = por %p131, %p132
    %p135 = scmp.ne.s32.totalorder %s118, %s134
    %p136 = scmp.eq.s32.totalorder %s16, 0
    %p137 = por %p135, %p136
    %p138 = scmp.le.s32.totalorder 1, %s10
    %p139 = scmp.lt.s32.totalorder %s10, 3
    %p140 = pnand %p138, %p139
    %p141 = pneg %p140
    // Predicated region
    $region9: #{forward.11} parent=5 // pred_check
      _
    $region10: #{forward.11} parent=5 // pred_check_branch
      %143 = sbr.rel (%p140) target = $region12
    $region11: #{forward.11} parent=5 // pred_region
      %s144 = ssub.s32 %s10, 1
      // Predicated region
      $region13: #{forward.11} parent=11 // pred_check
        %p145 = pneg %p57
      $region14: #{forward.11} parent=11 // pred_check_branch
        %147 = sbr.rel (%p145) target = $region16
      $region15: #{forward.11} parent=11 // pred_region
        _
      $region16: #{forward.11} parent=11 // pred_fallthru
        _
      // Predicated region
      $region17: #{forward.11} parent=11 // pred_check
        %p148 = pneg %p78
      $region18: #{forward.11} parent=11 // pred_check_branch
        %150 = sbr.rel (%p148) target = $region20
      $region19: #{forward.11} parent=11 // pred_region
        _
      $region20: #{forward.11} parent=11 // pred_fallthru
        _
    $region12: #{forward.11} parent=5 // pred_fallthru
      _
    %p151 = scmp.lt.s32.totalorder %s10, 2
    // Predicated region
    $region21: #{forward.11} parent=5 // pred_check
      %p152 = pneg %p151
    $region22: #{forward.11} parent=5 // pred_check_branch
      %154 = sbr.rel (%p152) target = $region24
    $region23: #{forward.11} parent=5 // pred_region
      // Predicated region
      $region25: #{forward.11} parent=23 // pred_check
        %p155 = pneg %p30
      $region26: #{forward.11} parent=23 // pred_check_branch
        %157 = sbr.rel (%p155) target = $region28
      $region27: #{forward.11} parent=23 // pred_region
        %p158 = scmp.lt.s32.totalorder %s10, 1
        %s159 = scalar_select %p158, %s10, 1
        %s160 = smul.addr %s159, 4
        %s161 = smul.addr %s160, 4
        %s162 = scalar_lea.vmem %s0, %s161
      $region28: #{forward.11} parent=23 // pred_fallthru
        _
      // Predicated region
      $region29: #{forward.11} parent=23 // pred_check
        %p163 = pneg %p98
      $region30: #{forward.11} parent=23 // pred_check_branch
        %165 = sbr.rel (%p163) target = $region32
      $region31: #{forward.11} parent=23 // pred_region
        %p166 = scmp.lt.s32.totalorder %s10, 1
        %s167 = scalar_select %p166, %s10, 1
        %s168 = smul.addr %s167, 3
        %s169 = smul.addr %s168, 8
        %s170 = scalar_lea.vmem %s3, %s169
      $region32: #{forward.11} parent=23 // pred_fallthru
        _
    $region24: #{forward.11} parent=5 // pred_fallthru
      _
    %p171 = scmp.le.s32.totalorder 1, %s10
    %p172 = scmp.lt.s32.totalorder %s10, 3
    %p173 = pnand %p171, %p172
    %p174 = pneg %p173
    // Predicated region
    $region33: #{forward.11} parent=5 // pred_check
      _
    $region34: #{forward.11} parent=5 // pred_check_branch
      %176 = sbr.rel (%p173) target = $region36
    $region35: #{forward.11} parent=5 // pred_region
      %s177 = ssub.s32 %s10, 1
      %p178 = scmp.lt.s32.totalorder %s15, 1
      %s179 = scalar_select %p178, %s15, 1
      %s180 = smul.addr %s179, 4
      %s181 = smul.addr %s180, 4
      %s182 = scalar_lea.vmem %s0, %s181
      %p183 = pneg %p36
      %p184 = pneg %p33
      %p185 = pneg %p57
      %p186 = pneg %p54
      %p187 = pneg %p78
      %p188 = pneg %p75
      %p189 = scmp.lt.s32.totalorder %s15, 1
      %s190 = scalar_select %p189, %s15, 1
      %s191 = smul.addr %s190, 3
      %s192 = smul.addr %s191, 8
      %s193 = scalar_lea.vmem %s3, %s192
      %p194 = pneg %p104
      %p195 = pneg %p101
      %p196 = pneg %p130
      %p197 = pneg %p127
      %p198 = scmp.lt.s32.totalorder %s15, 1
      %s199 = scalar_select %p198, %s15, 1
      %s200 = smul.addr %s199, 3
      %s201 = smul.addr %s200, 8
      %s202 = scalar_lea.vmem %s4, %s201
      %p203 = scmp.lt.s32.totalorder %s15, 1
      %s204 = scalar_select %p203, %s15, 1
      %s205 = smul.addr %s204, 4
      %s206 = smul.addr %s205, 4
      %s207 = scalar_lea.vmem %s0, %s206
      %p208 = scmp.lt.s32.totalorder %s15, 1
      %s209 = scalar_select %p208, %s15, 1
      %s210 = smul.addr %s209, 3
      %s211 = smul.addr %s210, 8
      %s212 = scalar_lea.vmem %s3, %s211
      %p213 = scmp.lt.s32.totalorder %s15, 1
      %s214 = scalar_select %p213, %s15, 1
      %s215 = smul.addr %s214, 3
      %s216 = smul.addr %s215, 8
      %s217 = scalar_lea.vmem %s4, %s216
      %v219 = vld [vmem:[%s207] sm:$0xff]
      %v220 = vld [vmem:[%s207 + $0x8] sm:$0xf]
      %v221 = vld [vmem:[%s1] sm:$0xf]
      %s222 = scalar_lea.vmem %s1, 4
      %v223 = vld [vmem:[%s222] sm:$0xf]
      %v226 = vunpack.c.l.b16 %v219
      %v227 = vunpack.c.h.b16 %v219
      %v228 = vunpack.c.l.b16 %v220
      %v229 = vpack.c.b16 %v226, %v226
      %v230 = vpack.c.b16 %v227, %v227
      %v231 = vpack.c.b16 %v228, %v228
      %232 = vrot.lane.b32.xlu0 %v229, 126
      %v233 = vpop.permute.xlu0 %232
      %234 = vrot.lane.b32.xlu0 %v230, 126
      %v235 = vpop.permute.xlu0 %234
      %236 = vrot.lane.b32.xlu0 %v231, 126
      %v237 = vpop.permute.xlu0 %236
      %vm238 = vcmask 1031168
      %v239 = vsel %vm238, %v233, %v235
      %v240 = vsel %vm238, %v235, %v237
      %vm241 = vcmask 64512
      %v243 = vsel %vm241, %v223, 0
      %vm245 = vcmask 1043456
      %v247 = vsel %vm245, %v239, 0
      %v250 = vsel %vm245, %v240, 0
      %v253 = vsel %vm245, %v237, 0
      %255 = vmatpush.bf16.msra.mxu0 0
      %256 = vmatpush.bf16.msra.mxu0 0
      %257 = vmatpush.bf16.msra.mxu0 0
      %258 = vmatpush.bf16.msra.mxu0 0
      %259 = vmatpush.bf16.msra.mxu0 0
      %260 = vmatpush.bf16.msra.mxu0 0
      %261 = vmatpush.bf16.msra.mxu0 0
      %262 = vmatpush.bf16.msra.mxu0 %v247
      %263 = vmatmul.bf16.gmra.mxu0 %v243
      %v264 = vpop.f32.mrf.mxu0
      %v265 = vadd.f32 0.0, %v264
      %v266 = vpop.f32.mrf.mxu0
      %267 = vdwg.mxu0
      %268 = vmatpush.bf16.msra.mxu0 0
      %269 = vmatpush.bf16.msra.mxu0 0
      %270 = vmatpush.bf16.msra.mxu0 0
      %271 = vmatpush.bf16.msra.mxu0 0
      %272 = vmatpush.bf16.msra.mxu0 0
      %273 = vmatpush.bf16.msra.mxu0 0
      %274 = vmatpush.bf16.msra.mxu0 0
      %275 = vmatpush.bf16.msra.mxu0 %v250
      %276 = vmatmul.bf16.gmra.mxu0 %v243
      %v277 = vpop.f32.mrf.mxu0
      %v278 = vadd.f32 0.0, %v277
      %v279 = vpop.f32.mrf.mxu0
      %280 = vdwg.mxu0
      %281 = vmatpush.bf16.msra.mxu0 0
      %282 = vmatpush.bf16.msra.mxu0 0
      %283 = vmatpush.bf16.msra.mxu0 0
      %284 = vmatpush.bf16.msra.mxu0 0
      %285 = vmatpush.bf16.msra.mxu0 0
      %286 = vmatpush.bf16.msra.mxu0 0
      %287 = vmatpush.bf16.msra.mxu0 0
      %288 = vmatpush.bf16.msra.mxu0 %v253
      %289 = vmatmul.bf16.gmra.mxu0 %v243
      %v290 = vpop.f32.mrf.mxu0
      %v291 = vadd.f32 0.0, %v290
      %v292 = vpop.f32.mrf.mxu0
      %293 = vdwg.mxu0
      %v295 = vsel %vm241, %v221, 0
      %v298 = vsel %vm245, %v229, 0
      %v301 = vsel %vm245, %v230, 0
      %v304 = vsel %vm245, %v231, 0
      %306 = vmatpush.bf16.msra.mxu0 0
      %307 = vmatpush.bf16.msra.mxu0 0
      %308 = vmatpush.bf16.msra.mxu0 0
      %309 = vmatpush.bf16.msra.mxu0 0
      %310 = vmatpush.bf16.msra.mxu0 0
      %311 = vmatpush.bf16.msra.mxu0 0
      %312 = vmatpush.bf16.msra.mxu0 0
      %313 = vmatpush.bf16.msra.mxu0 %v298
      %314 = vmatmul.bf16.gmra.mxu0 %v295
      %v315 = vpop.f32.mrf.mxu0
      %v316 = vadd.f32 %v265, %v315
      %v317 = vpop.f32.mrf.mxu0
      %318 = vdwg.mxu0
      %319 = vmatpush.bf16.msra.mxu0 0
      %320 = vmatpush.bf16.msra.mxu0 0
      %321 = vmatpush.bf16.msra.mxu0 0
      %322 = vmatpush.bf16.msra.mxu0 0
      %323 = vmatpush.bf16.msra.mxu0 0
      %324 = vmatpush.bf16.msra.mxu0 0
      %325 = vmatpush.bf16.msra.mxu0 0
      %326 = vmatpush.bf16.msra.mxu0 %v301
      %327 = vmatmul.bf16.gmra.mxu0 %v295
      %v328 = vpop.f32.mrf.mxu0
      %v329 = vadd.f32 %v278, %v328
      %v330 = vpop.f32.mrf.mxu0
      %331 = vdwg.mxu0
      %332 = vmatpush.bf16.msra.mxu0 0
      %333 = vmatpush.bf16.msra.mxu0 0
      %334 = vmatpush.bf16.msra.mxu0 0
      %335 = vmatpush.bf16.msra.mxu0 0
      %336 = vmatpush.bf16.msra.mxu0 0
      %337 = vmatpush.bf16.msra.mxu0 0
      %338 = vmatpush.bf16.msra.mxu0 0
      %339 = vmatpush.bf16.msra.mxu0 %v304
      %340 = vmatmul.bf16.gmra.mxu0 %v295
      %v341 = vpop.f32.mrf.mxu0
      %v342 = vadd.f32 %v291, %v341
      %v343 = vpop.f32.mrf.mxu0
      %344 = vdwg.mxu0
      %s345 = scalar_lea.vmem %s1, 8
      %v346 = vld [vmem:[%s345] sm:$0xf]
      %347 = vrot.lane.b32.xlu0 %v229, 124
      %v348 = vpop.permute.xlu0 %347
      %349 = vrot.lane.b32.xlu0 %v230, 124
      %v350 = vpop.permute.xlu0 %349
      %351 = vrot.lane.b32.xlu0 %v231, 124
      %v352 = vpop.permute.xlu0 %351
      %vm353 = vcmask 1014784
      %v354 = vsel %vm353, %v348, %v350
      %v355 = vsel %vm353, %v350, %v352
      %v357 = vsel %vm241, %v346, 0
      %v360 = vsel %vm245, %v354, 0
      %v363 = vsel %vm245, %v355, 0
      %v366 = vsel %vm245, %v352, 0
      %368 = vmatpush.bf16.msra.mxu0 0
      %369 = vmatpush.bf16.msra.mxu0 0
      %370 = vmatpush.bf16.msra.mxu0 0
      %371 = vmatpush.bf16.msra.mxu0 0
      %372 = vmatpush.bf16.msra.mxu0 0
      %373 = vmatpush.bf16.msra.mxu0 0
      %374 = vmatpush.bf16.msra.mxu0 0
      %375 = vmatpush.bf16.msra.mxu0 %v360
      %376 = vmatmul.bf16.gmra.mxu0 %v357
      %v377 = vpop.f32.mrf.mxu0
      %v378 = vadd.f32 0.0, %v377
      %v379 = vpop.f32.mrf.mxu0
      %380 = vdwg.mxu0
      %381 = vmatpush.bf16.msra.mxu0 0
      %382 = vmatpush.bf16.msra.mxu0 0
      %383 = vmatpush.bf16.msra.mxu0 0
      %384 = vmatpush.bf16.msra.mxu0 0
      %385 = vmatpush.bf16.msra.mxu0 0
      %386 = vmatpush.bf16.msra.mxu0 0
      %387 = vmatpush.bf16.msra.mxu0 0
      %388 = vmatpush.bf16.msra.mxu0 %v363
      %389 = vmatmul.bf16.gmra.mxu0 %v357
      %v390 = vpop.f32.mrf.mxu0
      %v391 = vadd.f32 0.0, %v390
      %v392 = vpop.f32.mrf.mxu0
      %393 = vdwg.mxu0
      %394 = vmatpush.bf16.msra.mxu0 0
      %395 = vmatpush.bf16.msra.mxu0 0
      %396 = vmatpush.bf16.msra.mxu0 0
      %397 = vmatpush.bf16.msra.mxu0 0
      %398 = vmatpush.bf16.msra.mxu0 0
      %399 = vmatpush.bf16.msra.mxu0 0
      %400 = vmatpush.bf16.msra.mxu0 0
      %401 = vmatpush.bf16.msra.mxu0 %v366
      %402 = vmatmul.bf16.gmra.mxu0 %v357
      %v403 = vpop.f32.mrf.mxu0
      %v404 = vadd.f32 0.0, %v403
      %v405 = vpop.f32.mrf.mxu0
      %406 = vdwg.mxu0
      %v407 = vadd.f32 %v316, %v378
      %v408 = vadd.f32 %v329, %v391
      %v409 = vadd.f32 %v342, %v404
      %s410 = scalar_lea.vmem %s1, 12
      %v411 = vld [vmem:[%s410] sm:$0xf]
      %412 = vrot.lane.b32.xlu0 %v229, 88
      %v413 = vpop.permute.xlu0 %412
      %414 = vrot.lane.b32.xlu0 %v230, 88
      %v415 = vpop.permute.xlu0 %414
      %416 = vrot.lane.b32.xlu0 %v231, 88
      %v417 = vpop.permute.xlu0 %416
      %vm418 = vcmask 719872
      %v419 = vsel %vm418, %v413, %v415
      %v420 = vsel %vm418, %v415, %v417
      %v422 = vsel %vm241, %v411, 0
      %v425 = vsel %vm245, %v419, 0
      %v428 = vsel %vm245, %v420, 0
      %v431 = vsel %vm245, %v417, 0
      %433 = vmatpush.bf16.msra.mxu0 0
      %434 = vmatpush.bf16.msra.mxu0 0
      %435 = vmatpush.bf16.msra.mxu0 0
      %436 = vmatpush.bf16.msra.mxu0 0
      %437 = vmatpush.bf16.msra.mxu0 0
      %438 = vmatpush.bf16.msra.mxu0 0
      %439 = vmatpush.bf16.msra.mxu0 0
      %440 = vmatpush.bf16.msra.mxu0 %v425
      %441 = vmatmul.bf16.gmra.mxu0 %v422
      %v442 = vpop.f32.mrf.mxu0
      %v443 = vadd.f32 0.0, %v442
      %v444 = vpop.f32.mrf.mxu0
      %445 = vdwg.mxu0
      %446 = vmatpush.bf16.msra.mxu0 0
      %447 = vmatpush.bf16.msra.mxu0 0
      %448 = vmatpush.bf16.msra.mxu0 0
      %449 = vmatpush.bf16.msra.mxu0 0
      %450 = vmatpush.bf16.msra.mxu0 0
      %451 = vmatpush.bf16.msra.mxu0 0
      %452 = vmatpush.bf16.msra.mxu0 0
      %453 = vmatpush.bf16.msra.mxu0 %v428
      %454 = vmatmul.bf16.gmra.mxu0 %v422
      %v455 = vpop.f32.mrf.mxu0
      %v456 = vadd.f32 0.0, %v455
      %v457 = vpop.f32.mrf.mxu0
      %458 = vdwg.mxu0
      %459 = vmatpush.bf16.msra.mxu0 0
      %460 = vmatpush.bf16.msra.mxu0 0
      %461 = vmatpush.bf16.msra.mxu0 0
      %462 = vmatpush.bf16.msra.mxu0 0
      %463 = vmatpush.bf16.msra.mxu0 0
      %464 = vmatpush.bf16.msra.mxu0 0
      %465 = vmatpush.bf16.msra.mxu0 0
      %466 = vmatpush.bf16.msra.mxu0 %v431
      %467 = vmatmul.bf16.gmra.mxu0 %v422
      %v468 = vpop.f32.mrf.mxu0
      %v469 = vadd.f32 0.0, %v468
      %v470 = vpop.f32.mrf.mxu0
      %471 = vdwg.mxu0
      %v472 = vadd.f32 %v407, %v443
      %v473 = vadd.f32 %v408, %v456
      %v474 = vadd.f32 %v409, %v469
      %s475 = scalar_lea.vmem %s1, 16
      %v476 = vld [vmem:[%s475] sm:$0xf]
      %477 = vrot.lane.b32.xlu0 %v229, 86
      %v478 = vpop.permute.xlu0 %477
      %479 = vrot.lane.b32.xlu0 %v230, 86
      %v480 = vpop.permute.xlu0 %479
      %481 = vrot.lane.b32.xlu0 %v231, 86
      %v482 = vpop.permute.xlu0 %481
      %vm483 = vcmask 703488
      %v484 = vsel %vm483, %v478, %v480
      %v485 = vsel %vm483, %v480, %v482
      %v487 = vsel %vm241, %v476, 0
      %v490 = vsel %vm245, %v484, 0
      %v493 = vsel %vm245, %v485, 0
      %v496 = vsel %vm245, %v482, 0
      %498 = vmatpush.bf16.msra.mxu0 0
      %499 = vmatpush.bf16.msra.mxu0 0
      %500 = vmatpush.bf16.msra.mxu0 0
      %501 = vmatpush.bf16.msra.mxu0 0
      %502 = vmatpush.bf16.msra.mxu0 0
      %503 = vmatpush.bf16.msra.mxu0 0
      %504 = vmatpush.bf16.msra.mxu0 0
      %505 = vmatpush.bf16.msra.mxu0 %v490
      %506 = vmatmul.bf16.gmra.mxu0 %v487
      %v507 = vpop.f32.mrf.mxu0
      %v508 = vadd.f32 0.0, %v507
      %v509 = vpop.f32.mrf.mxu0
      %510 = vdwg.mxu0
      %511 = vmatpush.bf16.msra.mxu0 0
      %512 = vmatpush.bf16.msra.mxu0 0
      %513 = vmatpush.bf16.msra.mxu0 0
      %514 = vmatpush.bf16.msra.mxu0 0
      %515 = vmatpush.bf16.msra.mxu0 0
      %516 = vmatpush.bf16.msra.mxu0 0
      %517 = vmatpush.bf16.msra.mxu0 0
      %518 = vmatpush.bf16.msra.mxu0 %v493
      %519 = vmatmul.bf16.gmra.mxu0 %v487
      %v520 = vpop.f32.mrf.mxu0
      %v521 = vadd.f32 0.0, %v520
      %v522 = vpop.f32.mrf.mxu0
      %523 = vdwg.mxu0
      %524 = vmatpush.bf16.msra.mxu0 0
      %525 = vmatpush.bf16.msra.mxu0 0
      %526 = vmatpush.bf16.msra.mxu0 0
      %527 = vmatpush.bf16.msra.mxu0 0
      %528 = vmatpush.bf16.msra.mxu0 0
      %529 = vmatpush.bf16.msra.mxu0 0
      %530 = vmatpush.bf16.msra.mxu0 0
      %531 = vmatpush.bf16.msra.mxu0 %v496
      %532 = vmatmul.bf16.gmra.mxu0 %v487
      %v533 = vpop.f32.mrf.mxu0
      %v534 = vadd.f32 0.0, %v533
      %v535 = vpop.f32.mrf.mxu0
      %536 = vdwg.mxu0
      %v537 = vadd.f32 %v472, %v508
      %v538 = vadd.f32 %v473, %v521
      %v539 = vadd.f32 %v474, %v534
      %s540 = scalar_lea.vmem %s1, 20
      %v541 = vld [vmem:[%s540] sm:$0xf]
      %542 = vrot.lane.b32.xlu0 %v229, 84
      %v543 = vpop.permute.xlu0 %542
      %544 = vrot.lane.b32.xlu0 %v230, 84
      %v545 = vpop.permute.xlu0 %544
      %546 = vrot.lane.b32.xlu0 %v231, 84
      %v547 = vpop.permute.xlu0 %546
      %vm548 = vcmask 687104
      %v549 = vsel %vm548, %v543, %v545
      %v550 = vsel %vm548, %v545, %v547
      %v552 = vsel %vm241, %v541, 0
      %v555 = vsel %vm245, %v549, 0
      %v558 = vsel %vm245, %v550, 0
      %v561 = vsel %vm245, %v547, 0
      %563 = vmatpush.bf16.msra.mxu0 0
      %564 = vmatpush.bf16.msra.mxu0 0
      %565 = vmatpush.bf16.msra.mxu0 0
      %566 = vmatpush.bf16.msra.mxu0 0
      %567 = vmatpush.bf16.msra.mxu0 0
      %568 = vmatpush.bf16.msra.mxu0 0
      %569 = vmatpush.bf16.msra.mxu0 0
      %570 = vmatpush.bf16.msra.mxu0 %v555
      %571 = vmatmul.bf16.gmra.mxu0 %v552
      %v572 = vpop.f32.mrf.mxu0
      %v573 = vadd.f32 0.0, %v572
      %v574 = vpop.f32.mrf.mxu0
      %575 = vdwg.mxu0
      %576 = vmatpush.bf16.msra.mxu0 0
      %577 = vmatpush.bf16.msra.mxu0 0
      %578 = vmatpush.bf16.msra.mxu0 0
      %579 = vmatpush.bf16.msra.mxu0 0
      %580 = vmatpush.bf16.msra.mxu0 0
      %581 = vmatpush.bf16.msra.mxu0 0
      %582 = vmatpush.bf16.msra.mxu0 0
      %583 = vmatpush.bf16.msra.mxu0 %v558
      %584 = vmatmul.bf16.gmra.mxu0 %v552
      %v585 = vpop.f32.mrf.mxu0
      %v586 = vadd.f32 0.0, %v585
      %v587 = vpop.f32.mrf.mxu0
      %588 = vdwg.mxu0
      %589 = vmatpush.bf16.msra.mxu0 0
      %590 = vmatpush.bf16.msra.mxu0 0
      %591 = vmatpush.bf16.msra.mxu0 0
      %592 = vmatpush.bf16.msra.mxu0 0
      %593 = vmatpush.bf16.msra.mxu0 0
      %594 = vmatpush.bf16.msra.mxu0 0
      %595 = vmatpush.bf16.msra.mxu0 0
      %596 = vmatpush.bf16.msra.mxu0 %v561
      %597 = vmatmul.bf16.gmra.mxu0 %v552
      %v598 = vpop.f32.mrf.mxu0
      %v599 = vadd.f32 0.0, %v598
      %v600 = vpop.f32.mrf.mxu0
      %601 = vdwg.mxu0
      %v602 = vadd.f32 %v537, %v573
      %v603 = vadd.f32 %v538, %v586
      %v604 = vadd.f32 %v539, %v599
      %v605 = vld [vmem:[%s207] sm:$0xff]
      %v606 = vld [vmem:[%s207 + $0x8] sm:$0xff]
      %s607 = scalar_lea.vmem %s1, 24
      %v608 = vld [vmem:[%s607] sm:$0xf]
      %v611 = vunpack.c.l.b16 %v605
      %v612 = vunpack.c.h.b16 %v605
      %v613 = vunpack.c.l.b16 %v606
      %v614 = vunpack.c.h.b16 %v606
      %v615 = vpack.c.b16 %v611, %v611
      %v616 = vpack.c.b16 %v612, %v612
      %v617 = vpack.c.b16 %v613, %v613
      %v618 = vpack.c.b16 %v614, %v614
      %619 = vrot.lane.b32.xlu0 %v615, 48
      %v620 = vpop.permute.xlu0 %619
      %621 = vrot.lane.b32.xlu0 %v616, 48
      %v622 = vpop.permute.xlu0 %621
      %623 = vrot.lane.b32.xlu0 %v617, 48
      %v624 = vpop.permute.xlu0 %623
      %625 = vrot.lane.b32.xlu0 %v618, 48
      %v626 = vpop.permute.xlu0 %625
      %vm627 = vcmask 392192
      %v628 = vsel %vm627, %v620, %v622
      %v629 = vsel %vm627, %v622, %v624
      %v630 = vsel %vm627, %v624, %v626
      %v632 = vsel %vm241, %v608, 0
      %v635 = vsel %vm245, %v628, 0
      %v638 = vsel %vm245, %v629, 0
      %v641 = vsel %vm245, %v630, 0
      %643 = vmatpush.bf16.msra.mxu0 0
      %644 = vmatpush.bf16.msra.mxu0 0
      %645 = vmatpush.bf16.msra.mxu0 0
      %646 = vmatpush.bf16.msra.mxu0 0
      %647 = vmatpush.bf16.msra.mxu0 0
      %648 = vmatpush.bf16.msra.mxu0 0
      %649 = vmatpush.bf16.msra.mxu0 0
      %650 = vmatpush.bf16.msra.mxu0 %v635
      %651 = vmatmul.bf16.gmra.mxu0 %v632
      %v652 = vpop.f32.mrf.mxu0
      %v653 = vadd.f32 0.0, %v652
      %v654 = vpop.f32.mrf.mxu0
      %655 = vdwg.mxu0
      %656 = vmatpush.bf16.msra.mxu0 0
      %657 = vmatpush.bf16.msra.mxu0 0
      %658 = vmatpush.bf16.msra.mxu0 0
      %659 = vmatpush.bf16.msra.mxu0 0
      %660 = vmatpush.bf16.msra.mxu0 0
      %661 = vmatpush.bf16.msra.mxu0 0
      %662 = vmatpush.bf16.msra.mxu0 0
      %663 = vmatpush.bf16.msra.mxu0 %v638
      %664 = vmatmul.bf16.gmra.mxu0 %v632
      %v665 = vpop.f32.mrf.mxu0
      %v666 = vadd.f32 0.0, %v665
      %v667 = vpop.f32.mrf.mxu0
      %668 = vdwg.mxu0
      %669 = vmatpush.bf16.msra.mxu0 0
      %670 = vmatpush.bf16.msra.mxu0 0
      %671 = vmatpush.bf16.msra.mxu0 0
      %672 = vmatpush.bf16.msra.mxu0 0
      %673 = vmatpush.bf16.msra.mxu0 0
      %674 = vmatpush.bf16.msra.mxu0 0
      %675 = vmatpush.bf16.msra.mxu0 0
      %676 = vmatpush.bf16.msra.mxu0 %v641
      %677 = vmatmul.bf16.gmra.mxu0 %v632
      %v678 = vpop.f32.mrf.mxu0
      %v679 = vadd.f32 0.0, %v678
      %v680 = vpop.f32.mrf.mxu0
      %681 = vdwg.mxu0
      %v682 = vadd.f32 %v602, %v653
      %v683 = vadd.f32 %v603, %v666
      %v684 = vadd.f32 %v604, %v679
      %s685 = scalar_lea.vmem %s1, 28
      %v686 = vld [vmem:[%s685] sm:$0xf]
      %687 = vrot.lane.b32.xlu0 %v615, 46
      %v688 = vpop.permute.xlu0 %687
      %689 = vrot.lane.b32.xlu0 %v616, 46
      %v690 = vpop.permute.xlu0 %689
      %691 = vrot.lane.b32.xlu0 %v617, 46
      %v692 = vpop.permute.xlu0 %691
      %693 = vrot.lane.b32.xlu0 %v618, 46
      %v694 = vpop.permute.xlu0 %693
      %vm695 = vcmask 375808
      %v696 = vsel %vm695, %v688, %v690
      %v697 = vsel %vm695, %v690, %v692
      %v698 = vsel %vm695, %v692, %v694
      %v700 = vsel %vm241, %v686, 0
      %v703 = vsel %vm245, %v696, 0
      %v706 = vsel %vm245, %v697, 0
      %v709 = vsel %vm245, %v698, 0
      %711 = vmatpush.bf16.msra.mxu0 0
      %712 = vmatpush.bf16.msra.mxu0 0
      %713 = vmatpush.bf16.msra.mxu0 0
      %714 = vmatpush.bf16.msra.mxu0 0
      %715 = vmatpush.bf16.msra.mxu0 0
      %716 = vmatpush.bf16.msra.mxu0 0
      %717 = vmatpush.bf16.msra.mxu0 0
      %718 = vmatpush.bf16.msra.mxu0 %v703
      %719 = vmatmul.bf16.gmra.mxu0 %v700
      %v720 = vpop.f32.mrf.mxu0
      %v721 = vadd.f32 0.0, %v720
      %v722 = vpop.f32.mrf.mxu0
      %723 = vdwg.mxu0
      %724 = vmatpush.bf16.msra.mxu0 0
      %725 = vmatpush.bf16.msra.mxu0 0
      %726 = vmatpush.bf16.msra.mxu0 0
      %727 = vmatpush.bf16.msra.mxu0 0
      %728 = vmatpush.bf16.msra.mxu0 0
      %729 = vmatpush.bf16.msra.mxu0 0
      %730 = vmatpush.bf16.msra.mxu0 0
      %731 = vmatpush.bf16.msra.mxu0 %v706
      %732 = vmatmul.bf16.gmra.mxu0 %v700
      %v733 = vpop.f32.mrf.mxu0
      %v734 = vadd.f32 0.0, %v733
      %v735 = vpop.f32.mrf.mxu0
      %736 = vdwg.mxu0
      %737 = vmatpush.bf16.msra.mxu0 0
      %738 = vmatpush.bf16.msra.mxu0 0
      %739 = vmatpush.bf16.msra.mxu0 0
      %740 = vmatpush.bf16.msra.mxu0 0
      %741 = vmatpush.bf16.msra.mxu0 0
      %742 = vmatpush.bf16.msra.mxu0 0
      %743 = vmatpush.bf16.msra.mxu0 0
      %744 = vmatpush.bf16.msra.mxu0 %v709
      %745 = vmatmul.bf16.gmra.mxu0 %v700
      %v746 = vpop.f32.mrf.mxu0
      %v747 = vadd.f32 0.0, %v746
      %v748 = vpop.f32.mrf.mxu0
      %749 = vdwg.mxu0
      %v750 = vadd.f32 %v682, %v721
      %v751 = vadd.f32 %v683, %v734
      %v752 = vadd.f32 %v684, %v747
      %s753 = scalar_lea.vmem %s1, 32
      %v754 = vld [vmem:[%s753] sm:$0xf]
      %755 = vrot.lane.b32.xlu0 %v615, 44
      %v756 = vpop.permute.xlu0 %755
      %757 = vrot.lane.b32.xlu0 %v616, 44
      %v758 = vpop.permute.xlu0 %757
      %759 = vrot.lane.b32.xlu0 %v617, 44
      %v760 = vpop.permute.xlu0 %759
      %761 = vrot.lane.b32.xlu0 %v618, 44
      %v762 = vpop.permute.xlu0 %761
      %vm763 = vcmask 359424
      %v764 = vsel %vm763, %v756, %v758
      %v765 = vsel %vm763, %v758, %v760
      %v766 = vsel %vm763, %v760, %v762
      %v768 = vsel %vm241, %v754, 0
      %v771 = vsel %vm245, %v764, 0
      %v774 = vsel %vm245, %v765, 0
      %v777 = vsel %vm245, %v766, 0
      %779 = vmatpush.bf16.msra.mxu0 0
      %780 = vmatpush.bf16.msra.mxu0 0
      %781 = vmatpush.bf16.msra.mxu0 0
      %782 = vmatpush.bf16.msra.mxu0 0
      %783 = vmatpush.bf16.msra.mxu0 0
      %784 = vmatpush.bf16.msra.mxu0 0
      %785 = vmatpush.bf16.msra.mxu0 0
      %786 = vmatpush.bf16.msra.mxu0 %v771
      %787 = vmatmul.bf16.gmra.mxu0 %v768
      %v788 = vpop.f32.mrf.mxu0
      %v789 = vadd.f32 0.0, %v788
      %v790 = vpop.f32.mrf.mxu0
      %791 = vdwg.mxu0
      %792 = vmatpush.bf16.msra.mxu0 0
      %793 = vmatpush.bf16.msra.mxu0 0
      %794 = vmatpush.bf16.msra.mxu0 0
      %795 = vmatpush.bf16.msra.mxu0 0
      %796 = vmatpush.bf16.msra.mxu0 0
      %797 = vmatpush.bf16.msra.mxu0 0
      %798 = vmatpush.bf16.msra.mxu0 0
      %799 = vmatpush.bf16.msra.mxu0 %v774
      %800 = vmatmul.bf16.gmra.mxu0 %v768
      %v801 = vpop.f32.mrf.mxu0
      %v802 = vadd.f32 0.0, %v801
      %v803 = vpop.f32.mrf.mxu0
      %804 = vdwg.mxu0
      %805 = vmatpush.bf16.msra.mxu0 0
      %806 = vmatpush.bf16.msra.mxu0 0
      %807 = vmatpush.bf16.msra.mxu0 0
      %808 = vmatpush.bf16.msra.mxu0 0
      %809 = vmatpush.bf16.msra.mxu0 0
      %810 = vmatpush.bf16.msra.mxu0 0
      %811 = vmatpush.bf16.msra.mxu0 0
      %812 = vmatpush.bf16.msra.mxu0 %v777
      %813 = vmatmul.bf16.gmra.mxu0 %v768
      %v814 = vpop.f32.mrf.mxu0
      %v815 = vadd.f32 0.0, %v814
      %v816 = vpop.f32.mrf.mxu0
      %817 = vdwg.mxu0
      %v818 = vadd.f32 %v750, %v789
      %v819 = vadd.f32 %v751, %v802
      %v820 = vadd.f32 %v752, %v815
      %v821 = vld [vmem:[%s2] sm:$0xff]
      %823 = vset.pattern.permute.xlu0 0
      %824 = vperm.xlu0 %823, %v821
      %v825 = vpop.permute.xlu0 %824
      %v827 = vadd.f32 %v818, %v825
      %v828 = vadd.f32 %v819, %v825
      %v829 = vadd.f32 %v820, %v825
      %v830 = vld [vmem:[%s212] sm:$0xff]
      %v831 = vld [vmem:[%s212 + $0x8] sm:$0xff]
      %v832 = vld [vmem:[%s212 + $0x10] sm:$0xff]
      %v833 = vadd.f32 %v827, %v830
      %v834 = vadd.f32 %v828, %v831
      %v835 = vadd.f32 %v829, %v832
      %836 = vst [vmem:[%s217] sm:$0xff] %v833
      %837 = vst [vmem:[%s217 + $0x8] sm:$0xff] %v834
      %vm838 = vcmask 523264
      %839 = vst.msk [vmem:[%s217 + $0x10] sm:$0xff] %vm838, %v835
      %p840 = scmp.lt.s32.totalorder %s15, 1
      %s841 = scalar_select %p840, %s15, 1
      %s842 = smul.addr %s841, 3
      %s843 = smul.addr %s842, 8
      %s844 = scalar_lea.vmem %s4, %s843
      // Predicated region
      $region37: #{forward.11} parent=35 // pred_check
        %p845 = pneg %p127
      $region38: #{forward.11} parent=35 // pred_check_branch
        %847 = sbr.rel (%p845) target = $region40
      $region39: #{forward.11} parent=35 // pred_region
        _
      $region40: #{forward.11} parent=35 // pred_fallthru
        _
    $region36: #{forward.11} parent=5 // pred_fallthru
      _
    %p848 = scmp.le.s32.totalorder 2, %s10
    // Predicated region
    $region41: #{forward.11} parent=5 // pred_check
      %p849 = pneg %p848
    $region42: #{forward.11} parent=5 // pred_check_branch
      %851 = sbr.rel (%p849) target = $region44
    $region43: #{forward.11} parent=5 // pred_region
      %s852 = ssub.s32 %s10, 2
      // Predicated region
      $region45: #{forward.11} parent=43 // pred_check
        %p853 = pneg %p133
      $region46: #{forward.11} parent=43 // pred_check_branch
        %855 = sbr.rel (%p853) target = $region48
      $region47: #{forward.11} parent=43 // pred_region
        %p856 = scmp.lt.s32.totalorder %s16, 1
        %s857 = scalar_select %p856, %s16, 1
        %s858 = smul.addr %s857, 3
        %s859 = smul.addr %s858, 8
        %s860 = scalar_lea.vmem %s4, %s859
      $region48: #{forward.11} parent=43 // pred_fallthru
        _
    $region44: #{forward.11} parent=5 // pred_fallthru
      _
  $region6: #{forward.11} parent=0 // loop_footer
    %s14 = sadd.s32 1, %s10
  $region7: #{forward.11} parent=0 // loop_footer_branch
    %9 = sbr.rel target = $region3
  $region8: #{forward.11} parent=0 // loop_exit
    _

// kernel: forward.12
$region0: #{forward.12}
  #allocation0 [shape = 'u32[]', space=smem, size = 0x4, offset = 0x4, fixed_abs, tag = 'smem constant byte address 0x4 - core index']
  #allocation1 [shape = 'u32[72,128]{1,0:T(1,128)}', space=vmem, size = 0x9000, scoped, tag = 'internal scratch']
  %s0 = inlined_call_operand.vmem [shape: bf16[2,8,640], index: 0, kind: input, shape index: {}]
  %s1 = inlined_call_operand.vmem [shape: bf16[9,8,8], index: 1, kind: input, shape index: {}]
  %s2 = inlined_call_operand.vmem [shape: f32[8,1], index: 2, kind: input, shape index: {}]
  %s3 = inlined_call_operand.vmem [shape: f32[2,8,384], index: 3, kind: output, shape index: {}]
  %s4 = sld [smem:[#allocation0]]
  $region45: #{forward.12} parent=0
    _
  %s6 = ssub.s32 1, %s4
  %s7 = scalar_select 0, %s6, %s4
  loop: start=0, step=1, limit=4
  $region2: #{forward.12} parent=0 // loop_pre_header
    _
  $region3: #{forward.12} parent=0 // loop_header
    %s9 = sphi 0, %s13
    %p10 = scmp.ge.s32.totalorder %s9, 4
    %s19 = sphi 0, %s21
    %s22 = sphi 0, %s19
    %s23 = sphi 0, %s22
    %s39 = sphi 0, %s23
    %s43 = sphi 0, %s43
    %s45 = sphi 0, %s43
    %s46 = sphi 0, %s45
    %s60 = sphi 0, %s46
    %s64 = sphi 0, %s64
    %s66 = sphi 0, %s64
    %s67 = sphi 0, %s66
    %s81 = sphi 0, %s67
    %s87 = sphi 0, %s89
    %s90 = sphi 0, %s87
    %s91 = sphi 0, %s90
    %s107 = sphi 0, %s91
  $region4: #{forward.12} parent=0 // loop_header_branch
    %12 = sbr.rel (%p10) target = $region8
  $region5: #{forward.12} parent=0 // loop_body
    %s14 = ssub.s32 %s9, 1
    %s15 = ssub.s32 %s9, 2
    %s16 = sadd.s32 %s9, 1
    %s17 = ssub.s32 %s9, %s16
    %p18 = scmp.eq.s32.totalorder %s17, 0
    %s20 = sadd.s32 %s19, 1
    %s21 = scalar_select %p18, %s19, %s20
    %p24 = pneg %p18
    %p25 = scmp.eq.s32.totalorder %s9, 1
    %p26 = por %p24, %p25
    %p27 = scmp.ne.s32.totalorder %s19, %s22
    %p28 = scmp.eq.s32.totalorder %s9, 0
    %p29 = por %p27, %p28
    %p30 = scmp.ne.s32.totalorder %s19, %s22
    %p31 = scmp.eq.s32.totalorder %s14, 1
    %p32 = por %p30, %p31
    %p33 = scmp.ne.s32.totalorder %s22, %s23
    %p34 = scmp.eq.s32.totalorder %s14, 0
    %p35 = por %p33, %p34
    %p36 = scmp.ne.s32.totalorder %s22, %s23
    %p37 = scmp.eq.s32.totalorder %s15, 1
    %p38 = por %p36, %p37
    %p40 = scmp.ne.s32.totalorder %s23, %s39
    %p41 = scmp.eq.s32.totalorder %s15, 0
    %p42 = por %p40, %p41
    %s44 = sadd.s32 %s43, 1
    %p47 = scmp.eq.s32.totalorder %s9, 1
    %p48 = scmp.ne.s32.totalorder %s43, %s45
    %p49 = scmp.eq.s32.totalorder %s9, 0
    %p50 = por %p48, %p49
    %p51 = scmp.ne.s32.totalorder %s43, %s45
    %p52 = scmp.eq.s32.totalorder %s14, 1
    %p53 = por %p51, %p52
    %p54 = scmp.ne.s32.totalorder %s45, %s46
    %p55 = scmp.eq.s32.totalorder %s14, 0
    %p56 = por %p54, %p55
    %p57 = scmp.ne.s32.totalorder %s45, %s46
    %p58 = scmp.eq.s32.totalorder %s15, 1
    %p59 = por %p57, %p58
    %p61 = scmp.ne.s32.totalorder %s46, %s60
    %p62 = scmp.eq.s32.totalorder %s15, 0
    %p63 = por %p61, %p62
    %s65 = sadd.s32 %s64, 1
    %p68 = scmp.eq.s32.totalorder %s9, 1
    %p69 = scmp.ne.s32.totalorder %s64, %s66
    %p70 = scmp.eq.s32.totalorder %s9, 0
    %p71 = por %p69, %p70
    %p72 = scmp.ne.s32.totalorder %s64, %s66
    %p73 = scmp.eq.s32.totalorder %s14, 1
    %p74 = por %p72, %p73
    %p75 = scmp.ne.s32.totalorder %s66, %s67
    %p76 = scmp.eq.s32.totalorder %s14, 0
    %p77 = por %p75, %p76
    %p78 = scmp.ne.s32.totalorder %s66, %s67
    %p79 = scmp.eq.s32.totalorder %s15, 1
    %p80 = por %p78, %p79
    %p82 = scmp.ne.s32.totalorder %s67, %s81
    %p83 = scmp.eq.s32.totalorder %s15, 0
    %p84 = por %p82, %p83
    %s85 = ssub.s32 %s9, %s16
    %p86 = scmp.eq.s32.totalorder %s85, 0
    %s88 = sadd.s32 %s87, 1
    %s89 = scalar_select %p86, %s87, %s88
    %p92 = pneg %p86
    %p93 = scmp.eq.s32.totalorder %s9, 1
    %p94 = por %p92, %p93
    %p95 = scmp.ne.s32.totalorder %s87, %s90
    %p96 = scmp.eq.s32.totalorder %s9, 0
    %p97 = por %p95, %p96
    %p98 = scmp.ne.s32.totalorder %s87, %s90
    %p99 = scmp.eq.s32.totalorder %s14, 1
    %p100 = por %p98, %p99
    %p101 = scmp.ne.s32.totalorder %s90, %s91
    %p102 = scmp.eq.s32.totalorder %s14, 0
    %p103 = por %p101, %p102
    %p104 = scmp.ne.s32.totalorder %s90, %s91
    %p105 = scmp.eq.s32.totalorder %s15, 1
    %p106 = por %p104, %p105
    %p108 = scmp.ne.s32.totalorder %s91, %s107
    %p109 = scmp.eq.s32.totalorder %s15, 0
    %p110 = por %p108, %p109
    %p111 = scmp.le.s32.totalorder 1, %s9
    %p112 = scmp.lt.s32.totalorder %s9, 3
    %p113 = pnand %p111, %p112
    %p114 = pneg %p113
    // Predicated region
    $region9: #{forward.12} parent=5 // pred_check
      _
    $region10: #{forward.12} parent=5 // pred_check_branch
      %116 = sbr.rel (%p113) target = $region12
    $region11: #{forward.12} parent=5 // pred_region
      %s117 = ssub.s32 %s9, 1
      // Predicated region
      $region13: #{forward.12} parent=11 // pred_check
        %p118 = pneg %p56
      $region14: #{forward.12} parent=11 // pred_check_branch
        %120 = sbr.rel (%p118) target = $region16
      $region15: #{forward.12} parent=11 // pred_region
        _
      $region16: #{forward.12} parent=11 // pred_fallthru
        _
      // Predicated region
      $region17: #{forward.12} parent=11 // pred_check
        %p121 = pneg %p77
      $region18: #{forward.12} parent=11 // pred_check_branch
        %123 = sbr.rel (%p121) target = $region20
      $region19: #{forward.12} parent=11 // pred_region
        _
      $region20: #{forward.12} parent=11 // pred_fallthru
        _
    $region12: #{forward.12} parent=5 // pred_fallthru
      _
    %p124 = scmp.lt.s32.totalorder %s9, 2
    // Predicated region
    $region21: #{forward.12} parent=5 // pred_check
      %p125 = pneg %p124
    $region22: #{forward.12} parent=5 // pred_check_branch
      %127 = sbr.rel (%p125) target = $region24
    $region23: #{forward.12} parent=5 // pred_region
      // Predicated region
      $region25: #{forward.12} parent=23 // pred_check
        %p128 = pneg %p29
      $region26: #{forward.12} parent=23 // pred_check_branch
        %130 = sbr.rel (%p128) target = $region28
      $region27: #{forward.12} parent=23 // pred_region
        %p131 = scmp.lt.s32.totalorder %s9, 1
        %s132 = scalar_select %p131, %s9, 1
        %s133 = smul.addr %s132, 5
        %s134 = smul.addr %s133, 4
        %s135 = scalar_lea.vmem %s0, %s134
      $region28: #{forward.12} parent=23 // pred_fallthru
        _
    $region24: #{forward.12} parent=5 // pred_fallthru
      _
    %p136 = scmp.le.s32.totalorder 1, %s9
    %p137 = scmp.lt.s32.totalorder %s9, 3
    %p138 = pnand %p136, %p137
    %p139 = pneg %p138
    // Predicated region
    $region29: #{forward.12} parent=5 // pred_check
      _
    $region30: #{forward.12} parent=5 // pred_check_branch
      %141 = sbr.rel (%p138) target = $region32
    $region31: #{forward.12} parent=5 // pred_region
      %s142 = ssub.s32 %s9, 1
      %p143 = scmp.lt.s32.totalorder %s14, 1
      %s144 = scalar_select %p143, %s14, 1
      %s145 = smul.addr %s144, 5
      %s146 = smul.addr %s145, 4
      %s147 = scalar_lea.vmem %s0, %s146
      %p148 = pneg %p35
      %p149 = pneg %p32
      %p150 = pneg %p56
      %p151 = pneg %p53
      %p152 = pneg %p77
      %p153 = pneg %p74
      %p154 = pneg %p103
      %p155 = pneg %p100
      %p156 = scmp.lt.s32.totalorder %s14, 1
      %s157 = scalar_select %p156, %s14, 1
      %s158 = smul.addr %s157, 3
      %s159 = smul.addr %s158, 8
      %s160 = scalar_lea.vmem %s3, %s159
      %p161 = scmp.lt.s32.totalorder %s14, 1
      %s162 = scalar_select %p161, %s14, 1
      %s163 = smul.addr %s162, 5
      %s164 = smul.addr %s163, 4
      %s165 = scalar_lea.vmem %s0, %s164
      %p166 = scmp.lt.s32.totalorder %s14, 1
      %s167 = scalar_select %p166, %s14, 1
      %s168 = smul.addr %s167, 3
      %s169 = smul.addr %s168, 8
      %s170 = scalar_lea.vmem %s3, %s169
      %v172 = vld [vmem:[%s165] sm:$0xff]
      %v173 = vld [vmem:[%s165 + $0x8] sm:$0xf]
      %v174 = vld [vmem:[%s1] sm:$0xf]
      %v175 = vld [vmem:[%s165 + $0x8] sm:$0xff]
      %s176 = scalar_lea.vmem %s1, 4
      %v177 = vld [vmem:[%s176] sm:$0xf]
      %v180 = vunpack.c.l.b16 %v172
      %v181 = vunpack.c.h.b16 %v172
      %v182 = vunpack.c.l.b16 %v175
      %v183 = vunpack.c.h.b16 %v175
      %v184 = vpack.c.b16 %v180, %v180
      %v185 = vpack.c.b16 %v181, %v181
      %v186 = vpack.c.b16 %v182, %v182
      %v187 = vpack.c.b16 %v183, %v183
      %188 = vrot.lane.b32.xlu0 %v184, 124
      %v189 = vpop.permute.xlu0 %188
      %190 = vrot.lane.b32.xlu0 %v185, 124
      %v191 = vpop.permute.xlu0 %190
      %192 = vrot.lane.b32.xlu0 %v186, 124
      %v193 = vpop.permute.xlu0 %192
      %194 = vrot.lane.b32.xlu0 %v187, 124
      %v195 = vpop.permute.xlu0 %194
      %vm196 = vcmask 1014784
      %v197 = vsel %vm196, %v189, %v191
      %v198 = vsel %vm196, %v191, %v193
      %v199 = vsel %vm196, %v193, %v195
      %vm200 = vcmask 64512
      %v202 = vsel %vm200, %v177, 0
      %vm204 = vcmask 1043456
      %v206 = vsel %vm204, %v197, 0
      %v209 = vsel %vm204, %v198, 0
      %v212 = vsel %vm204, %v199, 0
      %214 = vmatpush.bf16.msra.mxu0 0
      %215 = vmatpush.bf16.msra.mxu0 0
      %216 = vmatpush.bf16.msra.mxu0 0
      %217 = vmatpush.bf16.msra.mxu0 0
      %218 = vmatpush.bf16.msra.mxu0 0
      %219 = vmatpush.bf16.msra.mxu0 0
      %220 = vmatpush.bf16.msra.mxu0 0
      %221 = vmatpush.bf16.msra.mxu0 %v206
      %222 = vmatmul.bf16.gmra.mxu0 %v202
      %v223 = vpop.f32.mrf.mxu0
      %v224 = vadd.f32 0.0, %v223
      %v225 = vpop.f32.mrf.mxu0
      %226 = vdwg.mxu0
      %227 = vmatpush.bf16.msra.mxu0 0
      %228 = vmatpush.bf16.msra.mxu0 0
      %229 = vmatpush.bf16.msra.mxu0 0
      %230 = vmatpush.bf16.msra.mxu0 0
      %231 = vmatpush.bf16.msra.mxu0 0
      %232 = vmatpush.bf16.msra.mxu0 0
      %233 = vmatpush.bf16.msra.mxu0 0
      %234 = vmatpush.bf16.msra.mxu0 %v209
      %235 = vmatmul.bf16.gmra.mxu0 %v202
      %v236 = vpop.f32.mrf.mxu0
      %v237 = vadd.f32 0.0, %v236
      %v238 = vpop.f32.mrf.mxu0
      %239 = vdwg.mxu0
      %240 = vmatpush.bf16.msra.mxu0 0
      %241 = vmatpush.bf16.msra.mxu0 0
      %242 = vmatpush.bf16.msra.mxu0 0
      %243 = vmatpush.bf16.msra.mxu0 0
      %244 = vmatpush.bf16.msra.mxu0 0
      %245 = vmatpush.bf16.msra.mxu0 0
      %246 = vmatpush.bf16.msra.mxu0 0
      %247 = vmatpush.bf16.msra.mxu0 %v212
      %248 = vmatmul.bf16.gmra.mxu0 %v202
      %v249 = vpop.f32.mrf.mxu0
      %v250 = vadd.f32 0.0, %v249
      %v251 = vpop.f32.mrf.mxu0
      %252 = vdwg.mxu0
      %v254 = vunpack.c.l.b16 %v173
      %v255 = vpack.c.b16 %v254, %v254
      %v257 = vsel %vm200, %v174, 0
      %v260 = vsel %vm204, %v184, 0
      %v263 = vsel %vm204, %v185, 0
      %v266 = vsel %vm204, %v255, 0
      %268 = vmatpush.bf16.msra.mxu0 0
      %269 = vmatpush.bf16.msra.mxu0 0
      %270 = vmatpush.bf16.msra.mxu0 0
      %271 = vmatpush.bf16.msra.mxu0 0
      %272 = vmatpush.bf16.msra.mxu0 0
      %273 = vmatpush.bf16.msra.mxu0 0
      %274 = vmatpush.bf16.msra.mxu0 0
      %275 = vmatpush.bf16.msra.mxu0 %v260
      %276 = vmatmul.bf16.gmra.mxu0 %v257
      %v277 = vpop.f32.mrf.mxu0
      %v278 = vadd.f32 %v224, %v277
      %v279 = vpop.f32.mrf.mxu0
      %280 = vdwg.mxu0
      %281 = vmatpush.bf16.msra.mxu0 0
      %282 = vmatpush.bf16.msra.mxu0 0
      %283 = vmatpush.bf16.msra.mxu0 0
      %284 = vmatpush.bf16.msra.mxu0 0
      %285 = vmatpush.bf16.msra.mxu0 0
      %286 = vmatpush.bf16.msra.mxu0 0
      %287 = vmatpush.bf16.msra.mxu0 0
      %288 = vmatpush.bf16.msra.mxu0 %v263
      %289 = vmatmul.bf16.gmra.mxu0 %v257
      %v290 = vpop.f32.mrf.mxu0
      %v291 = vadd.f32 %v237, %v290
      %v292 = vpop.f32.mrf.mxu0
      %293 = vdwg.mxu0
      %294 = vmatpush.bf16.msra.mxu0 0
      %295 = vmatpush.bf16.msra.mxu0 0
      %296 = vmatpush.bf16.msra.mxu0 0
      %297 = vmatpush.bf16.msra.mxu0 0
      %298 = vmatpush.bf16.msra.mxu0 0
      %299 = vmatpush.bf16.msra.mxu0 0
      %300 = vmatpush.bf16.msra.mxu0 0
      %301 = vmatpush.bf16.msra.mxu0 %v266
      %302 = vmatmul.bf16.gmra.mxu0 %v257
      %v303 = vpop.f32.mrf.mxu0
      %v304 = vadd.f32 %v250, %v303
      %v305 = vpop.f32.mrf.mxu0
      %306 = vdwg.mxu0
      %s307 = scalar_lea.vmem %s1, 8
      %v308 = vld [vmem:[%s307] sm:$0xf]
      %309 = vrot.lane.b32.xlu0 %v184, 120
      %v310 = vpop.permute.xlu0 %309
      %311 = vrot.lane.b32.xlu0 %v185, 120
      %v312 = vpop.permute.xlu0 %311
      %313 = vrot.lane.b32.xlu0 %v186, 120
      %v314 = vpop.permute.xlu0 %313
      %315 = vrot.lane.b32.xlu0 %v187, 120
      %v316 = vpop.permute.xlu0 %315
      %vm317 = vcmask 982016
      %v318 = vsel %vm317, %v310, %v312
      %v319 = vsel %vm317, %v312, %v314
      %v320 = vsel %vm317, %v314, %v316
      %v322 = vsel %vm200, %v308, 0
      %v325 = vsel %vm204, %v318, 0
      %v328 = vsel %vm204, %v319, 0
      %v331 = vsel %vm204, %v320, 0
      %333 = vmatpush.bf16.msra.mxu0 0
      %334 = vmatpush.bf16.msra.mxu0 0
      %335 = vmatpush.bf16.msra.mxu0 0
      %336 = vmatpush.bf16.msra.mxu0 0
      %337 = vmatpush.bf16.msra.mxu0 0
      %338 = vmatpush.bf16.msra.mxu0 0
      %339 = vmatpush.bf16.msra.mxu0 0
      %340 = vmatpush.bf16.msra.mxu0 %v325
      %341 = vmatmul.bf16.gmra.mxu0 %v322
      %v342 = vpop.f32.mrf.mxu0
      %v343 = vadd.f32 0.0, %v342
      %v344 = vpop.f32.mrf.mxu0
      %345 = vdwg.mxu0
      %346 = vmatpush.bf16.msra.mxu0 0
      %347 = vmatpush.bf16.msra.mxu0 0
      %348 = vmatpush.bf16.msra.mxu0 0
      %349 = vmatpush.bf16.msra.mxu0 0
      %350 = vmatpush.bf16.msra.mxu0 0
      %351 = vmatpush.bf16.msra.mxu0 0
      %352 = vmatpush.bf16.msra.mxu0 0
      %353 = vmatpush.bf16.msra.mxu0 %v328
      %354 = vmatmul.bf16.gmra.mxu0 %v322
      %v355 = vpop.f32.mrf.mxu0
      %v356 = vadd.f32 0.0, %v355
      %v357 = vpop.f32.mrf.mxu0
      %358 = vdwg.mxu0
      %359 = vmatpush.bf16.msra.mxu0 0
      %360 = vmatpush.bf16.msra.mxu0 0
      %361 = vmatpush.bf16.msra.mxu0 0
      %362 = vmatpush.bf16.msra.mxu0 0
      %363 = vmatpush.bf16.msra.mxu0 0
      %364 = vmatpush.bf16.msra.mxu0 0
      %365 = vmatpush.bf16.msra.mxu0 0
      %366 = vmatpush.bf16.msra.mxu0 %v331
      %367 = vmatmul.bf16.gmra.mxu0 %v322
      %v368 = vpop.f32.mrf.mxu0
      %v369 = vadd.f32 0.0, %v368
      %v370 = vpop.f32.mrf.mxu0
      %371 = vdwg.mxu0
      %v372 = vadd.f32 %v278, %v343
      %v373 = vadd.f32 %v291, %v356
      %v374 = vadd.f32 %v304, %v369
      %s375 = scalar_lea.vmem %s1, 12
      %v376 = vld [vmem:[%s375] sm:$0xf]
      %377 = vrot.lane.b32.xlu0 %v184, 32
      %v378 = vpop.permute.xlu0 %377
      %379 = vrot.lane.b32.xlu0 %v185, 32
      %v380 = vpop.permute.xlu0 %379
      %381 = vrot.lane.b32.xlu0 %v186, 32
      %v382 = vpop.permute.xlu0 %381
      %383 = vrot.lane.b32.xlu0 %v187, 32
      %v384 = vpop.permute.xlu0 %383
      %vm385 = vcmask 261120
      %v386 = vsel %vm385, %v378, %v380
      %v387 = vsel %vm385, %v380, %v382
      %v388 = vsel %vm385, %v382, %v384
      %v390 = vsel %vm200, %v376, 0
      %v393 = vsel %vm204, %v386, 0
      %v396 = vsel %vm204, %v387, 0
      %v399 = vsel %vm204, %v388, 0
      %401 = vmatpush.bf16.msra.mxu0 0
      %402 = vmatpush.bf16.msra.mxu0 0
      %403 = vmatpush.bf16.msra.mxu0 0
      %404 = vmatpush.bf16.msra.mxu0 0
      %405 = vmatpush.bf16.msra.mxu0 0
      %406 = vmatpush.bf16.msra.mxu0 0
      %407 = vmatpush.bf16.msra.mxu0 0
      %408 = vmatpush.bf16.msra.mxu0 %v393
      %409 = vmatmul.bf16.gmra.mxu0 %v390
      %v410 = vpop.f32.mrf.mxu0
      %v411 = vadd.f32 0.0, %v410
      %v412 = vpop.f32.mrf.mxu0
      %413 = vdwg.mxu0
      %414 = vmatpush.bf16.msra.mxu0 0
      %415 = vmatpush.bf16.msra.mxu0 0
      %416 = vmatpush.bf16.msra.mxu0 0
      %417 = vmatpush.bf16.msra.mxu0 0
      %418 = vmatpush.bf16.msra.mxu0 0
      %419 = vmatpush.bf16.msra.mxu0 0
      %420 = vmatpush.bf16.msra.mxu0 0
      %421 = vmatpush.bf16.msra.mxu0 %v396
      %422 = vmatmul.bf16.gmra.mxu0 %v390
      %v423 = vpop.f32.mrf.mxu0
      %v424 = vadd.f32 0.0, %v423
      %v425 = vpop.f32.mrf.mxu0
      %426 = vdwg.mxu0
      %427 = vmatpush.bf16.msra.mxu0 0
      %428 = vmatpush.bf16.msra.mxu0 0
      %429 = vmatpush.bf16.msra.mxu0 0
      %430 = vmatpush.bf16.msra.mxu0 0
      %431 = vmatpush.bf16.msra.mxu0 0
      %432 = vmatpush.bf16.msra.mxu0 0
      %433 = vmatpush.bf16.msra.mxu0 0
      %434 = vmatpush.bf16.msra.mxu0 %v399
      %435 = vmatmul.bf16.gmra.mxu0 %v390
      %v436 = vpop.f32.mrf.mxu0
      %v437 = vadd.f32 0.0, %v436
      %v438 = vpop.f32.mrf.mxu0
      %439 = vdwg.mxu0
      %v440 = vadd.f32 %v372, %v411
      %v441 = vadd.f32 %v373, %v424
      %v442 = vadd.f32 %v374, %v437
      %s443 = scalar_lea.vmem %s1, 16
      %v444 = vld [vmem:[%s443] sm:$0xf]
      %445 = vrot.lane.b32.xlu0 %v184, 28
      %v446 = vpop.permute.xlu0 %445
      %447 = vrot.lane.b32.xlu0 %v185, 28
      %v448 = vpop.permute.xlu0 %447
      %449 = vrot.lane.b32.xlu0 %v186, 28
      %v450 = vpop.permute.xlu0 %449
      %451 = vrot.lane.b32.xlu0 %v187, 28
      %v452 = vpop.permute.xlu0 %451
      %vm453 = vcmask 228352
      %v454 = vsel %vm453, %v446, %v448
      %v455 = vsel %vm453, %v448, %v450
      %v456 = vsel %vm453, %v450, %v452
      %v458 = vsel %vm200, %v444, 0
      %v461 = vsel %vm204, %v454, 0
      %v464 = vsel %vm204, %v455, 0
      %v467 = vsel %vm204, %v456, 0
      %469 = vmatpush.bf16.msra.mxu0 0
      %470 = vmatpush.bf16.msra.mxu0 0
      %471 = vmatpush.bf16.msra.mxu0 0
      %472 = vmatpush.bf16.msra.mxu0 0
      %473 = vmatpush.bf16.msra.mxu0 0
      %474 = vmatpush.bf16.msra.mxu0 0
      %475 = vmatpush.bf16.msra.mxu0 0
      %476 = vmatpush.bf16.msra.mxu0 %v461
      %477 = vmatmul.bf16.gmra.mxu0 %v458
      %v478 = vpop.f32.mrf.mxu0
      %v479 = vadd.f32 0.0, %v478
      %v480 = vpop.f32.mrf.mxu0
      %481 = vdwg.mxu0
      %482 = vmatpush.bf16.msra.mxu0 0
      %483 = vmatpush.bf16.msra.mxu0 0
      %484 = vmatpush.bf16.msra.mxu0 0
      %485 = vmatpush.bf16.msra.mxu0 0
      %486 = vmatpush.bf16.msra.mxu0 0
      %487 = vmatpush.bf16.msra.mxu0 0
      %488 = vmatpush.bf16.msra.mxu0 0
      %489 = vmatpush.bf16.msra.mxu0 %v464
      %490 = vmatmul.bf16.gmra.mxu0 %v458
      %v491 = vpop.f32.mrf.mxu0
      %v492 = vadd.f32 0.0, %v491
      %v493 = vpop.f32.mrf.mxu0
      %494 = vdwg.mxu0
      %495 = vmatpush.bf16.msra.mxu0 0
      %496 = vmatpush.bf16.msra.mxu0 0
      %497 = vmatpush.bf16.msra.mxu0 0
      %498 = vmatpush.bf16.msra.mxu0 0
      %499 = vmatpush.bf16.msra.mxu0 0
      %500 = vmatpush.bf16.msra.mxu0 0
      %501 = vmatpush.bf16.msra.mxu0 0
      %502 = vmatpush.bf16.msra.mxu0 %v467
      %503 = vmatmul.bf16.gmra.mxu0 %v458
      %v504 = vpop.f32.mrf.mxu0
      %v505 = vadd.f32 0.0, %v504
      %v506 = vpop.f32.mrf.mxu0
      %507 = vdwg.mxu0
      %v508 = vadd.f32 %v440, %v479
      %v509 = vadd.f32 %v441, %v492
      %v510 = vadd.f32 %v442, %v505
      %s511 = scalar_lea.vmem %s1, 20
      %v512 = vld [vmem:[%s511] sm:$0xf]
      %513 = vrot.lane.b32.xlu0 %v184, 24
      %v514 = vpop.permute.xlu0 %513
      %515 = vrot.lane.b32.xlu0 %v185, 24
      %v516 = vpop.permute.xlu0 %515
      %517 = vrot.lane.b32.xlu0 %v186, 24
      %v518 = vpop.permute.xlu0 %517
      %519 = vrot.lane.b32.xlu0 %v187, 24
      %v520 = vpop.permute.xlu0 %519
      %vm521 = vcmask 195584
      %v522 = vsel %vm521, %v514, %v516
      %v523 = vsel %vm521, %v516, %v518
      %v524 = vsel %vm521, %v518, %v520
      %v526 = vsel %vm200, %v512, 0
      %v529 = vsel %vm204, %v522, 0
      %v532 = vsel %vm204, %v523, 0
      %v535 = vsel %vm204, %v524, 0
      %537 = vmatpush.bf16.msra.mxu0 0
      %538 = vmatpush.bf16.msra.mxu0 0
      %539 = vmatpush.bf16.msra.mxu0 0
      %540 = vmatpush.bf16.msra.mxu0 0
      %541 = vmatpush.bf16.msra.mxu0 0
      %542 = vmatpush.bf16.msra.mxu0 0
      %543 = vmatpush.bf16.msra.mxu0 0
      %544 = vmatpush.bf16.msra.mxu0 %v529
      %545 = vmatmul.bf16.gmra.mxu0 %v526
      %v546 = vpop.f32.mrf.mxu0
      %v547 = vadd.f32 0.0, %v546
      %v548 = vpop.f32.mrf.mxu0
      %549 = vdwg.mxu0
      %550 = vmatpush.bf16.msra.mxu0 0
      %551 = vmatpush.bf16.msra.mxu0 0
      %552 = vmatpush.bf16.msra.mxu0 0
      %553 = vmatpush.bf16.msra.mxu0 0
      %554 = vmatpush.bf16.msra.mxu0 0
      %555 = vmatpush.bf16.msra.mxu0 0
      %556 = vmatpush.bf16.msra.mxu0 0
      %557 = vmatpush.bf16.msra.mxu0 %v532
      %558 = vmatmul.bf16.gmra.mxu0 %v526
      %v559 = vpop.f32.mrf.mxu0
      %v560 = vadd.f32 0.0, %v559
      %v561 = vpop.f32.mrf.mxu0
      %562 = vdwg.mxu0
      %563 = vmatpush.bf16.msra.mxu0 0
      %564 = vmatpush.bf16.msra.mxu0 0
      %565 = vmatpush.bf16.msra.mxu0 0
      %566 = vmatpush.bf16.msra.mxu0 0
      %567 = vmatpush.bf16.msra.mxu0 0
      %568 = vmatpush.bf16.msra.mxu0 0
      %569 = vmatpush.bf16.msra.mxu0 0
      %570 = vmatpush.bf16.msra.mxu0 %v535
      %571 = vmatmul.bf16.gmra.mxu0 %v526
      %v572 = vpop.f32.mrf.mxu0
      %v573 = vadd.f32 0.0, %v572
      %v574 = vpop.f32.mrf.mxu0
      %575 = vdwg.mxu0
      %v576 = vadd.f32 %v508, %v547
      %v577 = vadd.f32 %v509, %v560
      %v578 = vadd.f32 %v510, %v573
      %v579 = vld [vmem:[%s165 + $0x4] sm:$0xff]
      %v580 = vld [vmem:[%s165 + $0xc] sm:$0xff]
      %s581 = scalar_lea.vmem %s1, 24
      %v582 = vld [vmem:[%s581] sm:$0xf]
      %v585 = vunpack.c.l.b16 %v579
      %v586 = vunpack.c.h.b16 %v579
      %v587 = vunpack.c.l.b16 %v580
      %v588 = vunpack.c.h.b16 %v580
      %v589 = vpack.c.b16 %v585, %v585
      %v590 = vpack.c.b16 %v586, %v586
      %v591 = vpack.c.b16 %v587, %v587
      %v592 = vpack.c.b16 %v588, %v588
      %593 = vrot.lane.b32.xlu0 %v589, 64
      %v594 = vpop.permute.xlu0 %593
      %595 = vrot.lane.b32.xlu0 %v590, 64
      %v596 = vpop.permute.xlu0 %595
      %597 = vrot.lane.b32.xlu0 %v591, 64
      %v598 = vpop.permute.xlu0 %597
      %599 = vrot.lane.b32.xlu0 %v592, 64
      %v600 = vpop.permute.xlu0 %599
      %vm601 = vcmask 523264
      %v602 = vsel %vm601, %v594, %v596
      %v603 = vsel %vm601, %v596, %v598
      %v604 = vsel %vm601, %v598, %v600
      %v606 = vsel %vm200, %v582, 0
      %v609 = vsel %vm204, %v602, 0
      %v612 = vsel %vm204, %v603, 0
      %v615 = vsel %vm204, %v604, 0
      %617 = vmatpush.bf16.msra.mxu0 0
      %618 = vmatpush.bf16.msra.mxu0 0
      %619 = vmatpush.bf16.msra.mxu0 0
      %620 = vmatpush.bf16.msra.mxu0 0
      %621 = vmatpush.bf16.msra.mxu0 0
      %622 = vmatpush.bf16.msra.mxu0 0
      %623 = vmatpush.bf16.msra.mxu0 0
      %624 = vmatpush.bf16.msra.mxu0 %v609
      %625 = vmatmul.bf16.gmra.mxu0 %v606
      %v626 = vpop.f32.mrf.mxu0
      %v627 = vadd.f32 0.0, %v626
      %v628 = vpop.f32.mrf.mxu0
      %629 = vdwg.mxu0
      %630 = vmatpush.bf16.msra.mxu0 0
      %631 = vmatpush.bf16.msra.mxu0 0
      %632 = vmatpush.bf16.msra.mxu0 0
      %633 = vmatpush.bf16.msra.mxu0 0
      %634 = vmatpush.bf16.msra.mxu0 0
      %635 = vmatpush.bf16.msra.mxu0 0
      %636 = vmatpush.bf16.msra.mxu0 0
      %637 = vmatpush.bf16.msra.mxu0 %v612
      %638 = vmatmul.bf16.gmra.mxu0 %v606
      %v639 = vpop.f32.mrf.mxu0
      %v640 = vadd.f32 0.0, %v639
      %v641 = vpop.f32.mrf.mxu0
      %642 = vdwg.mxu0
      %643 = vmatpush.bf16.msra.mxu0 0
      %644 = vmatpush.bf16.msra.mxu0 0
      %645 = vmatpush.bf16.msra.mxu0 0
      %646 = vmatpush.bf16.msra.mxu0 0
      %647 = vmatpush.bf16.msra.mxu0 0
      %648 = vmatpush.bf16.msra.mxu0 0
      %649 = vmatpush.bf16.msra.mxu0 0
      %650 = vmatpush.bf16.msra.mxu0 %v615
      %651 = vmatmul.bf16.gmra.mxu0 %v606
      %v652 = vpop.f32.mrf.mxu0
      %v653 = vadd.f32 0.0, %v652
      %v654 = vpop.f32.mrf.mxu0
      %655 = vdwg.mxu0
      %v656 = vadd.f32 %v576, %v627
      %v657 = vadd.f32 %v577, %v640
      %v658 = vadd.f32 %v578, %v653
      %s659 = scalar_lea.vmem %s1, 28
      %v660 = vld [vmem:[%s659] sm:$0xf]
      %661 = vrot.lane.b32.xlu0 %v589, 60
      %v662 = vpop.permute.xlu0 %661
      %663 = vrot.lane.b32.xlu0 %v590, 60
      %v664 = vpop.permute.xlu0 %663
      %665 = vrot.lane.b32.xlu0 %v591, 60
      %v666 = vpop.permute.xlu0 %665
      %667 = vrot.lane.b32.xlu0 %v592, 60
      %v668 = vpop.permute.xlu0 %667
      %vm669 = vcmask 490496
      %v670 = vsel %vm669, %v662, %v664
      %v671 = vsel %vm669, %v664, %v666
      %v672 = vsel %vm669, %v666, %v668
      %v674 = vsel %vm200, %v660, 0
      %v677 = vsel %vm204, %v670, 0
      %v680 = vsel %vm204, %v671, 0
      %v683 = vsel %vm204, %v672, 0
      %685 = vmatpush.bf16.msra.mxu0 0
      %686 = vmatpush.bf16.msra.mxu0 0
      %687 = vmatpush.bf16.msra.mxu0 0
      %688 = vmatpush.bf16.msra.mxu0 0
      %689 = vmatpush.bf16.msra.mxu0 0
      %690 = vmatpush.bf16.msra.mxu0 0
      %691 = vmatpush.bf16.msra.mxu0 0
      %692 = vmatpush.bf16.msra.mxu0 %v677
      %693 = vmatmul.bf16.gmra.mxu0 %v674
      %v694 = vpop.f32.mrf.mxu0
      %v695 = vadd.f32 0.0, %v694
      %v696 = vpop.f32.mrf.mxu0
      %697 = vdwg.mxu0
      %698 = vmatpush.bf16.msra.mxu0 0
      %699 = vmatpush.bf16.msra.mxu0 0
      %700 = vmatpush.bf16.msra.mxu0 0
      %701 = vmatpush.bf16.msra.mxu0 0
      %702 = vmatpush.bf16.msra.mxu0 0
      %703 = vmatpush.bf16.msra.mxu0 0
      %704 = vmatpush.bf16.msra.mxu0 0
      %705 = vmatpush.bf16.msra.mxu0 %v680
      %706 = vmatmul.bf16.gmra.mxu0 %v674
      %v707 = vpop.f32.mrf.mxu0
      %v708 = vadd.f32 0.0, %v707
      %v709 = vpop.f32.mrf.mxu0
      %710 = vdwg.mxu0
      %711 = vmatpush.bf16.msra.mxu0 0
      %712 = vmatpush.bf16.msra.mxu0 0
      %713 = vmatpush.bf16.msra.mxu0 0
      %714 = vmatpush.bf16.msra.mxu0 0
      %715 = vmatpush.bf16.msra.mxu0 0
      %716 = vmatpush.bf16.msra.mxu0 0
      %717 = vmatpush.bf16.msra.mxu0 0
      %718 = vmatpush.bf16.msra.mxu0 %v683
      %719 = vmatmul.bf16.gmra.mxu0 %v674
      %v720 = vpop.f32.mrf.mxu0
      %v721 = vadd.f32 0.0, %v720
      %v722 = vpop.f32.mrf.mxu0
      %723 = vdwg.mxu0
      %v724 = vadd.f32 %v656, %v695
      %v725 = vadd.f32 %v657, %v708
      %v726 = vadd.f32 %v658, %v721
      %s727 = scalar_lea.vmem %s1, 32
      %v728 = vld [vmem:[%s727] sm:$0xf]
      %729 = vrot.lane.b32.xlu0 %v589, 56
      %v730 = vpop.permute.xlu0 %729
      %731 = vrot.lane.b32.xlu0 %v590, 56
      %v732 = vpop.permute.xlu0 %731
      %733 = vrot.lane.b32.xlu0 %v591, 56
      %v734 = vpop.permute.xlu0 %733
      %735 = vrot.lane.b32.xlu0 %v592, 56
      %v736 = vpop.permute.xlu0 %735
      %vm737 = vcmask 457728
      %v738 = vsel %vm737, %v730, %v732
      %v739 = vsel %vm737, %v732, %v734
      %v740 = vsel %vm737, %v734, %v736
      %v742 = vsel %vm200, %v728, 0
      %v745 = vsel %vm204, %v738, 0
      %v748 = vsel %vm204, %v739, 0
      %v751 = vsel %vm204, %v740, 0
      %753 = vmatpush.bf16.msra.mxu0 0
      %754 = vmatpush.bf16.msra.mxu0 0
      %755 = vmatpush.bf16.msra.mxu0 0
      %756 = vmatpush.bf16.msra.mxu0 0
      %757 = vmatpush.bf16.msra.mxu0 0
      %758 = vmatpush.bf16.msra.mxu0 0
      %759 = vmatpush.bf16.msra.mxu0 0
      %760 = vmatpush.bf16.msra.mxu0 %v745
      %761 = vmatmul.bf16.gmra.mxu0 %v742
      %v762 = vpop.f32.mrf.mxu0
      %v763 = vadd.f32 0.0, %v762
      %v764 = vpop.f32.mrf.mxu0
      %765 = vdwg.mxu0
      %766 = vmatpush.bf16.msra.mxu0 0
      %767 = vmatpush.bf16.msra.mxu0 0
      %768 = vmatpush.bf16.msra.mxu0 0
      %769 = vmatpush.bf16.msra.mxu0 0
      %770 = vmatpush.bf16.msra.mxu0 0
      %771 = vmatpush.bf16.msra.mxu0 0
      %772 = vmatpush.bf16.msra.mxu0 0
      %773 = vmatpush.bf16.msra.mxu0 %v748
      %774 = vmatmul.bf16.gmra.mxu0 %v742
      %v775 = vpop.f32.mrf.mxu0
      %v776 = vadd.f32 0.0, %v775
      %v777 = vpop.f32.mrf.mxu0
      %778 = vdwg.mxu0
      %779 = vmatpush.bf16.msra.mxu0 0
      %780 = vmatpush.bf16.msra.mxu0 0
      %781 = vmatpush.bf16.msra.mxu0 0
      %782 = vmatpush.bf16.msra.mxu0 0
      %783 = vmatpush.bf16.msra.mxu0 0
      %784 = vmatpush.bf16.msra.mxu0 0
      %785 = vmatpush.bf16.msra.mxu0 0
      %786 = vmatpush.bf16.msra.mxu0 %v751
      %787 = vmatmul.bf16.gmra.mxu0 %v742
      %v788 = vpop.f32.mrf.mxu0
      %v789 = vadd.f32 0.0, %v788
      %v790 = vpop.f32.mrf.mxu0
      %791 = vdwg.mxu0
      %v792 = vadd.f32 %v724, %v763
      %v793 = vadd.f32 %v725, %v776
      %v794 = vadd.f32 %v726, %v789
      %v795 = vld [vmem:[%s2] sm:$0xff]
      %797 = vset.pattern.permute.xlu0 0
      %798 = vperm.xlu0 %797, %v795
      %v799 = vpop.permute.xlu0 %798
      %v801 = vadd.f32 %v792, %v799
      %v802 = vadd.f32 %v793, %v799
      %v803 = vadd.f32 %v794, %v799
      %v804 = vmax.f32 %v801, 0.0
      %v805 = vmax.f32 %v802, 0.0
      %v806 = vmax.f32 %v803, 0.0
      %807 = vst [vmem:[%s170] sm:$0xff] %v804
      %808 = vst [vmem:[%s170 + $0x8] sm:$0xff] %v805
      %809 = vst [vmem:[%s170 + $0x10] sm:$0xff] %v806
      %p810 = scmp.lt.s32.totalorder %s14, 1
      %s811 = scalar_select %p810, %s14, 1
      %s812 = smul.addr %s811, 3
      %s813 = smul.addr %s812, 8
      %s814 = scalar_lea.vmem %s3, %s813
      // Predicated region
      $region33: #{forward.12} parent=31 // pred_check
        %p815 = pneg %p100
      $region34: #{forward.12} parent=31 // pred_check_branch
        %817 = sbr.rel (%p815) target = $region36
      $region35: #{forward.12} parent=31 // pred_region
        _
      $region36: #{forward.12} parent=31 // pred_fallthru
        _
    $region32: #{forward.12} parent=5 // pred_fallthru
      _
    %p818 = scmp.le.s32.totalorder 2, %s9
    // Predicated region
    $region37: #{forward.12} parent=5 // pred_check
      %p819 = pneg %p818
    $region38: #{forward.12} parent=5 // pred_check_branch
      %821 = sbr.rel (%p819) target = $region40
    $region39: #{forward.12} parent=5 // pred_region
      %s822 = ssub.s32 %s9, 2
      // Predicated region
      $region41: #{forward.12} parent=39 // pred_check
        %p823 = pneg %p106
      $region42: #{forward.12} parent=39 // pred_check_branch
        %825 = sbr.rel (%p823) target = $region44
      $region43: #{forward.12} parent=39 // pred_region
        %p826 = scmp.lt.s32.totalorder %s15, 1
        %s827 = scalar_select %p826, %s15, 1
        %s828 = smul.addr %s827, 3
        %s829 = smul.addr %s828, 8
        %s830 = scalar_lea.vmem %s3, %s829
      $region44: #{forward.12} parent=39 // pred_fallthru
        _
    $region40: #{forward.12} parent=5 // pred_fallthru
      _
  $region6: #{forward.12} parent=0 // loop_footer
    %s13 = sadd.s32 1, %s9
  $region7: #{forward.12} parent=0 // loop_footer_branch
    %8 = sbr.rel target = $region3
  $region8: #{forward.12} parent=0 // loop_exit
    _

// kernel: forward.13
$region0: #{forward.13}
  #allocation0 [shape = 'u32[]', space=smem, size = 0x4, offset = 0x4, fixed_abs, tag = 'smem constant byte address 0x4 - core index']
  #allocation1 [shape = 'u32[72,128]{1,0:T(1,128)}', space=vmem, size = 0x9000, scoped, tag = 'internal scratch']
  %s0 = inlined_call_operand.vmem [shape: bf16[2,8,640], index: 0, kind: input, shape index: {}]
  %s1 = inlined_call_operand.vmem [shape: bf16[9,8,8], index: 1, kind: input, shape index: {}]
  %s2 = inlined_call_operand.vmem [shape: f32[8,1], index: 2, kind: input, shape index: {}]
  %s3 = inlined_call_operand.vmem [shape: f32[2,8,384], index: 3, kind: input, shape index: {}]
  %s4 = inlined_call_operand.vmem [shape: f32[2,8,384], index: 4, kind: output, shape index: {}]
  %s5 = sld [smem:[#allocation0]]
  $region49: #{forward.13} parent=0
    _
  %s7 = ssub.s32 1, %s5
  %s8 = scalar_select 0, %s7, %s5
  loop: start=0, step=1, limit=4
  $region2: #{forward.13} parent=0 // loop_pre_header
    _
  $region3: #{forward.13} parent=0 // loop_header
    %s10 = sphi 0, %s14
    %p11 = scmp.ge.s32.totalorder %s10, 4
    %s20 = sphi 0, %s22
    %s23 = sphi 0, %s20
    %s24 = sphi 0, %s23
    %s40 = sphi 0, %s24
    %s44 = sphi 0, %s44
    %s46 = sphi 0, %s44
    %s47 = sphi 0, %s46
    %s61 = sphi 0, %s47
    %s65 = sphi 0, %s65
    %s67 = sphi 0, %s65
    %s68 = sphi 0, %s67
    %s82 = sphi 0, %s68
    %s88 = sphi 0, %s90
    %s91 = sphi 0, %s88
    %s92 = sphi 0, %s91
    %s108 = sphi 0, %s92
    %s114 = sphi 0, %s116
    %s117 = sphi 0, %s114
    %s118 = sphi 0, %s117
    %s134 = sphi 0, %s118
  $region4: #{forward.13} parent=0 // loop_header_branch
    %13 = sbr.rel (%p11) target = $region8
  $region5: #{forward.13} parent=0 // loop_body
    %s15 = ssub.s32 %s10, 1
    %s16 = ssub.s32 %s10, 2
    %s17 = sadd.s32 %s10, 1
    %s18 = ssub.s32 %s10, %s17
    %p19 = scmp.eq.s32.totalorder %s18, 0
    %s21 = sadd.s32 %s20, 1
    %s22 = scalar_select %p19, %s20, %s21
    %p25 = pneg %p19
    %p26 = scmp.eq.s32.totalorder %s10, 1
    %p27 = por %p25, %p26
    %p28 = scmp.ne.s32.totalorder %s20, %s23
    %p29 = scmp.eq.s32.totalorder %s10, 0
    %p30 = por %p28, %p29
    %p31 = scmp.ne.s32.totalorder %s20, %s23
    %p32 = scmp.eq.s32.totalorder %s15, 1
    %p33 = por %p31, %p32
    %p34 = scmp.ne.s32.totalorder %s23, %s24
    %p35 = scmp.eq.s32.totalorder %s15, 0
    %p36 = por %p34, %p35
    %p37 = scmp.ne.s32.totalorder %s23, %s24
    %p38 = scmp.eq.s32.totalorder %s16, 1
    %p39 = por %p37, %p38
    %p41 = scmp.ne.s32.totalorder %s24, %s40
    %p42 = scmp.eq.s32.totalorder %s16, 0
    %p43 = por %p41, %p42
    %s45 = sadd.s32 %s44, 1
    %p48 = scmp.eq.s32.totalorder %s10, 1
    %p49 = scmp.ne.s32.totalorder %s44, %s46
    %p50 = scmp.eq.s32.totalorder %s10, 0
    %p51 = por %p49, %p50
    %p52 = scmp.ne.s32.totalorder %s44, %s46
    %p53 = scmp.eq.s32.totalorder %s15, 1
    %p54 = por %p52, %p53
    %p55 = scmp.ne.s32.totalorder %s46, %s47
    %p56 = scmp.eq.s32.totalorder %s15, 0
    %p57 = por %p55, %p56
    %p58 = scmp.ne.s32.totalorder %s46, %s47
    %p59 = scmp.eq.s32.totalorder %s16, 1
    %p60 = por %p58, %p59
    %p62 = scmp.ne.s32.totalorder %s47, %s61
    %p63 = scmp.eq.s32.totalorder %s16, 0
    %p64 = por %p62, %p63
    %s66 = sadd.s32 %s65, 1
    %p69 = scmp.eq.s32.totalorder %s10, 1
    %p70 = scmp.ne.s32.totalorder %s65, %s67
    %p71 = scmp.eq.s32.totalorder %s10, 0
    %p72 = por %p70, %p71
    %p73 = scmp.ne.s32.totalorder %s65, %s67
    %p74 = scmp.eq.s32.totalorder %s15, 1
    %p75 = por %p73, %p74
    %p76 = scmp.ne.s32.totalorder %s67, %s68
    %p77 = scmp.eq.s32.totalorder %s15, 0
    %p78 = por %p76, %p77
    %p79 = scmp.ne.s32.totalorder %s67, %s68
    %p80 = scmp.eq.s32.totalorder %s16, 1
    %p81 = por %p79, %p80
    %p83 = scmp.ne.s32.totalorder %s68, %s82
    %p84 = scmp.eq.s32.totalorder %s16, 0
    %p85 = por %p83, %p84
    %s86 = ssub.s32 %s10, %s17
    %p87 = scmp.eq.s32.totalorder %s86, 0
    %s89 = sadd.s32 %s88, 1
    %s90 = scalar_select %p87, %s88, %s89
    %p93 = pneg %p87
    %p94 = scmp.eq.s32.totalorder %s10, 1
    %p95 = por %p93, %p94
    %p96 = scmp.ne.s32.totalorder %s88, %s91
    %p97 = scmp.eq.s32.totalorder %s10, 0
    %p98 = por %p96, %p97
    %p99 = scmp.ne.s32.totalorder %s88, %s91
    %p100 = scmp.eq.s32.totalorder %s15, 1
    %p101 = por %p99, %p100
    %p102 = scmp.ne.s32.totalorder %s91, %s92
    %p103 = scmp.eq.s32.totalorder %s15, 0
    %p104 = por %p102, %p103
    %p105 = scmp.ne.s32.totalorder %s91, %s92
    %p106 = scmp.eq.s32.totalorder %s16, 1
    %p107 = por %p105, %p106
    %p109 = scmp.ne.s32.totalorder %s92, %s108
    %p110 = scmp.eq.s32.totalorder %s16, 0
    %p111 = por %p109, %p110
    %s112 = ssub.s32 %s10, %s17
    %p113 = scmp.eq.s32.totalorder %s112, 0
    %s115 = sadd.s32 %s114, 1
    %s116 = scalar_select %p113, %s114, %s115
    %p119 = pneg %p113
    %p120 = scmp.eq.s32.totalorder %s10, 1
    %p121 = por %p119, %p120
    %p122 = scmp.ne.s32.totalorder %s114, %s117
    %p123 = scmp.eq.s32.totalorder %s10, 0
    %p124 = por %p122, %p123
    %p125 = scmp.ne.s32.totalorder %s114, %s117
    %p126 = scmp.eq.s32.totalorder %s15, 1
    %p127 = por %p125, %p126
    %p128 = scmp.ne.s32.totalorder %s117, %s118
    %p129 = scmp.eq.s32.totalorder %s15, 0
    %p130 = por %p128, %p129
    %p131 = scmp.ne.s32.totalorder %s117, %s118
    %p132 = scmp.eq.s32.totalorder %s16, 1
    %p133 = por %p131, %p132
    %p135 = scmp.ne.s32.totalorder %s118, %s134
    %p136 = scmp.eq.s32.totalorder %s16, 0
    %p137 = por %p135, %p136
    %p138 = scmp.le.s32.totalorder 1, %s10
    %p139 = scmp.lt.s32.totalorder %s10, 3
    %p140 = pnand %p138, %p139
    %p141 = pneg %p140
    // Predicated region
    $region9: #{forward.13} parent=5 // pred_check
      _
    $region10: #{forward.13} parent=5 // pred_check_branch
      %143 = sbr.rel (%p140) target = $region12
    $region11: #{forward.13} parent=5 // pred_region
      %s144 = ssub.s32 %s10, 1
      // Predicated region
      $region13: #{forward.13} parent=11 // pred_check
        %p145 = pneg %p57
      $region14: #{forward.13} parent=11 // pred_check_branch
        %147 = sbr.rel (%p145) target = $region16
      $region15: #{forward.13} parent=11 // pred_region
        _
      $region16: #{forward.13} parent=11 // pred_fallthru
        _
      // Predicated region
      $region17: #{forward.13} parent=11 // pred_check
        %p148 = pneg %p78
      $region18: #{forward.13} parent=11 // pred_check_branch
        %150 = sbr.rel (%p148) target = $region20
      $region19: #{forward.13} parent=11 // pred_region
        _
      $region20: #{forward.13} parent=11 // pred_fallthru
        _
    $region12: #{forward.13} parent=5 // pred_fallthru
      _
    %p151 = scmp.lt.s32.totalorder %s10, 2
    // Predicated region
    $region21: #{forward.13} parent=5 // pred_check
      %p152 = pneg %p151
    $region22: #{forward.13} parent=5 // pred_check_branch
      %154 = sbr.rel (%p152) target = $region24
    $region23: #{forward.13} parent=5 // pred_region
      // Predicated region
      $region25: #{forward.13} parent=23 // pred_check
        %p155 = pneg %p30
      $region26: #{forward.13} parent=23 // pred_check_branch
        %157 = sbr.rel (%p155) target = $region28
      $region27: #{forward.13} parent=23 // pred_region
        %p158 = scmp.lt.s32.totalorder %s10, 1
        %s159 = scalar_select %p158, %s10, 1
        %s160 = smul.addr %s159, 5
        %s161 = smul.addr %s160, 4
        %s162 = scalar_lea.vmem %s0, %s161
      $region28: #{forward.13} parent=23 // pred_fallthru
        _
      // Predicated region
      $region29: #{forward.13} parent=23 // pred_check
        %p163 = pneg %p98
      $region30: #{forward.13} parent=23 // pred_check_branch
        %165 = sbr.rel (%p163) target = $region32
      $region31: #{forward.13} parent=23 // pred_region
        %p166 = scmp.lt.s32.totalorder %s10, 1
        %s167 = scalar_select %p166, %s10, 1
        %s168 = smul.addr %s167, 3
        %s169 = smul.addr %s168, 8
        %s170 = scalar_lea.vmem %s3, %s169
      $region32: #{forward.13} parent=23 // pred_fallthru
        _
    $region24: #{forward.13} parent=5 // pred_fallthru
      _
    %p171 = scmp.le.s32.totalorder 1, %s10
    %p172 = scmp.lt.s32.totalorder %s10, 3
    %p173 = pnand %p171, %p172
    %p174 = pneg %p173
    // Predicated region
    $region33: #{forward.13} parent=5 // pred_check
      _
    $region34: #{forward.13} parent=5 // pred_check_branch
      %176 = sbr.rel (%p173) target = $region36
    $region35: #{forward.13} parent=5 // pred_region
      %s177 = ssub.s32 %s10, 1
      %p178 = scmp.lt.s32.totalorder %s15, 1
      %s179 = scalar_select %p178, %s15, 1
      %s180 = smul.addr %s179, 5
      %s181 = smul.addr %s180, 4
      %s182 = scalar_lea.vmem %s0, %s181
      %p183 = pneg %p36
      %p184 = pneg %p33
      %p185 = pneg %p57
      %p186 = pneg %p54
      %p187 = pneg %p78
      %p188 = pneg %p75
      %p189 = scmp.lt.s32.totalorder %s15, 1
      %s190 = scalar_select %p189, %s15, 1
      %s191 = smul.addr %s190, 3
      %s192 = smul.addr %s191, 8
      %s193 = scalar_lea.vmem %s3, %s192
      %p194 = pneg %p104
      %p195 = pneg %p101
      %p196 = pneg %p130
      %p197 = pneg %p127
      %p198 = scmp.lt.s32.totalorder %s15, 1
      %s199 = scalar_select %p198, %s15, 1
      %s200 = smul.addr %s199, 3
      %s201 = smul.addr %s200, 8
      %s202 = scalar_lea.vmem %s4, %s201
      %p203 = scmp.lt.s32.totalorder %s15, 1
      %s204 = scalar_select %p203, %s15, 1
      %s205 = smul.addr %s204, 5
      %s206 = smul.addr %s205, 4
      %s207 = scalar_lea.vmem %s0, %s206
      %p208 = scmp.lt.s32.totalorder %s15, 1
      %s209 = scalar_select %p208, %s15, 1
      %s210 = smul.addr %s209, 3
      %s211 = smul.addr %s210, 8
      %s212 = scalar_lea.vmem %s3, %s211
      %p213 = scmp.lt.s32.totalorder %s15, 1
      %s214 = scalar_select %p213, %s15, 1
      %s215 = smul.addr %s214, 3
      %s216 = smul.addr %s215, 8
      %s217 = scalar_lea.vmem %s4, %s216
      %v219 = vld [vmem:[%s207] sm:$0xff]
      %v220 = vld [vmem:[%s207 + $0x8] sm:$0xf]
      %v221 = vld [vmem:[%s1] sm:$0xf]
      %v222 = vld [vmem:[%s207 + $0x8] sm:$0xff]
      %s223 = scalar_lea.vmem %s1, 4
      %v224 = vld [vmem:[%s223] sm:$0xf]
      %v227 = vunpack.c.l.b16 %v219
      %v228 = vunpack.c.h.b16 %v219
      %v229 = vunpack.c.l.b16 %v222
      %v230 = vunpack.c.h.b16 %v222
      %v231 = vpack.c.b16 %v227, %v227
      %v232 = vpack.c.b16 %v228, %v228
      %v233 = vpack.c.b16 %v229, %v229
      %v234 = vpack.c.b16 %v230, %v230
      %235 = vrot.lane.b32.xlu0 %v231, 124
      %v236 = vpop.permute.xlu0 %235
      %237 = vrot.lane.b32.xlu0 %v232, 124
      %v238 = vpop.permute.xlu0 %237
      %239 = vrot.lane.b32.xlu0 %v233, 124
      %v240 = vpop.permute.xlu0 %239
      %241 = vrot.lane.b32.xlu0 %v234, 124
      %v242 = vpop.permute.xlu0 %241
      %vm243 = vcmask 1014784
      %v244 = vsel %vm243, %v236, %v238
      %v245 = vsel %vm243, %v238, %v240
      %v246 = vsel %vm243, %v240, %v242
      %vm247 = vcmask 64512
      %v249 = vsel %vm247, %v224, 0
      %vm251 = vcmask 1043456
      %v253 = vsel %vm251, %v244, 0
      %v256 = vsel %vm251, %v245, 0
      %v259 = vsel %vm251, %v246, 0
      %261 = vmatpush.bf16.msra.mxu0 0
      %262 = vmatpush.bf16.msra.mxu0 0
      %263 = vmatpush.bf16.msra.mxu0 0
      %264 = vmatpush.bf16.msra.mxu0 0
      %265 = vmatpush.bf16.msra.mxu0 0
      %266 = vmatpush.bf16.msra.mxu0 0
      %267 = vmatpush.bf16.msra.mxu0 0
      %268 = vmatpush.bf16.msra.mxu0 %v253
      %269 = vmatmul.bf16.gmra.mxu0 %v249
      %v270 = vpop.f32.mrf.mxu0
      %v271 = vadd.f32 0.0, %v270
      %v272 = vpop.f32.mrf.mxu0
      %273 = vdwg.mxu0
      %274 = vmatpush.bf16.msra.mxu0 0
      %275 = vmatpush.bf16.msra.mxu0 0
      %276 = vmatpush.bf16.msra.mxu0 0
      %277 = vmatpush.bf16.msra.mxu0 0
      %278 = vmatpush.bf16.msra.mxu0 0
      %279 = vmatpush.bf16.msra.mxu0 0
      %280 = vmatpush.bf16.msra.mxu0 0
      %281 = vmatpush.bf16.msra.mxu0 %v256
      %282 = vmatmul.bf16.gmra.mxu0 %v249
      %v283 = vpop.f32.mrf.mxu0
      %v284 = vadd.f32 0.0, %v283
      %v285 = vpop.f32.mrf.mxu0
      %286 = vdwg.mxu0
      %287 = vmatpush.bf16.msra.mxu0 0
      %288 = vmatpush.bf16.msra.mxu0 0
      %289 = vmatpush.bf16.msra.mxu0 0
      %290 = vmatpush.bf16.msra.mxu0 0
      %291 = vmatpush.bf16.msra.mxu0 0
      %292 = vmatpush.bf16.msra.mxu0 0
      %293 = vmatpush.bf16.msra.mxu0 0
      %294 = vmatpush.bf16.msra.mxu0 %v259
      %295 = vmatmul.bf16.gmra.mxu0 %v249
      %v296 = vpop.f32.mrf.mxu0
      %v297 = vadd.f32 0.0, %v296
      %v298 = vpop.f32.mrf.mxu0
      %299 = vdwg.mxu0
      %v301 = vunpack.c.l.b16 %v220
      %v302 = vpack.c.b16 %v301, %v301
      %v304 = vsel %vm247, %v221, 0
      %v307 = vsel %vm251, %v231, 0
      %v310 = vsel %vm251, %v232, 0
      %v313 = vsel %vm251, %v302, 0
      %315 = vmatpush.bf16.msra.mxu0 0
      %316 = vmatpush.bf16.msra.mxu0 0
      %317 = vmatpush.bf16.msra.mxu0 0
      %318 = vmatpush.bf16.msra.mxu0 0
      %319 = vmatpush.bf16.msra.mxu0 0
      %320 = vmatpush.bf16.msra.mxu0 0
      %321 = vmatpush.bf16.msra.mxu0 0
      %322 = vmatpush.bf16.msra.mxu0 %v307
      %323 = vmatmul.bf16.gmra.mxu0 %v304
      %v324 = vpop.f32.mrf.mxu0
      %v325 = vadd.f32 %v271, %v324
      %v326 = vpop.f32.mrf.mxu0
      %327 = vdwg.mxu0
      %328 = vmatpush.bf16.msra.mxu0 0
      %329 = vmatpush.bf16.msra.mxu0 0
      %330 = vmatpush.bf16.msra.mxu0 0
      %331 = vmatpush.bf16.msra.mxu0 0
      %332 = vmatpush.bf16.msra.mxu0 0
      %333 = vmatpush.bf16.msra.mxu0 0
      %334 = vmatpush.bf16.msra.mxu0 0
      %335 = vmatpush.bf16.msra.mxu0 %v310
      %336 = vmatmul.bf16.gmra.mxu0 %v304
      %v337 = vpop.f32.mrf.mxu0
      %v338 = vadd.f32 %v284, %v337
      %v339 = vpop.f32.mrf.mxu0
      %340 = vdwg.mxu0
      %341 = vmatpush.bf16.msra.mxu0 0
      %342 = vmatpush.bf16.msra.mxu0 0
      %343 = vmatpush.bf16.msra.mxu0 0
      %344 = vmatpush.bf16.msra.mxu0 0
      %345 = vmatpush.bf16.msra.mxu0 0
      %346 = vmatpush.bf16.msra.mxu0 0
      %347 = vmatpush.bf16.msra.mxu0 0
      %348 = vmatpush.bf16.msra.mxu0 %v313
      %349 = vmatmul.bf16.gmra.mxu0 %v304
      %v350 = vpop.f32.mrf.mxu0
      %v351 = vadd.f32 %v297, %v350
      %v352 = vpop.f32.mrf.mxu0
      %353 = vdwg.mxu0
      %s354 = scalar_lea.vmem %s1, 8
      %v355 = vld [vmem:[%s354] sm:$0xf]
      %356 = vrot.lane.b32.xlu0 %v231, 120
      %v357 = vpop.permute.xlu0 %356
      %358 = vrot.lane.b32.xlu0 %v232, 120
      %v359 = vpop.permute.xlu0 %358
      %360 = vrot.lane.b32.xlu0 %v233, 120
      %v361 = vpop.permute.xlu0 %360
      %362 = vrot.lane.b32.xlu0 %v234, 120
      %v363 = vpop.permute.xlu0 %362
      %vm364 = vcmask 982016
      %v365 = vsel %vm364, %v357, %v359
      %v366 = vsel %vm364, %v359, %v361
      %v367 = vsel %vm364, %v361, %v363
      %v369 = vsel %vm247, %v355, 0
      %v372 = vsel %vm251, %v365, 0
      %v375 = vsel %vm251, %v366, 0
      %v378 = vsel %vm251, %v367, 0
      %380 = vmatpush.bf16.msra.mxu0 0
      %381 = vmatpush.bf16.msra.mxu0 0
      %382 = vmatpush.bf16.msra.mxu0 0
      %383 = vmatpush.bf16.msra.mxu0 0
      %384 = vmatpush.bf16.msra.mxu0 0
      %385 = vmatpush.bf16.msra.mxu0 0
      %386 = vmatpush.bf16.msra.mxu0 0
      %387 = vmatpush.bf16.msra.mxu0 %v372
      %388 = vmatmul.bf16.gmra.mxu0 %v369
      %v389 = vpop.f32.mrf.mxu0
      %v390 = vadd.f32 0.0, %v389
      %v391 = vpop.f32.mrf.mxu0
      %392 = vdwg.mxu0
      %393 = vmatpush.bf16.msra.mxu0 0
      %394 = vmatpush.bf16.msra.mxu0 0
      %395 = vmatpush.bf16.msra.mxu0 0
      %396 = vmatpush.bf16.msra.mxu0 0
      %397 = vmatpush.bf16.msra.mxu0 0
      %398 = vmatpush.bf16.msra.mxu0 0
      %399 = vmatpush.bf16.msra.mxu0 0
      %400 = vmatpush.bf16.msra.mxu0 %v375
      %401 = vmatmul.bf16.gmra.mxu0 %v369
      %v402 = vpop.f32.mrf.mxu0
      %v403 = vadd.f32 0.0, %v402
      %v404 = vpop.f32.mrf.mxu0
      %405 = vdwg.mxu0
      %406 = vmatpush.bf16.msra.mxu0 0
      %407 = vmatpush.bf16.msra.mxu0 0
      %408 = vmatpush.bf16.msra.mxu0 0
      %409 = vmatpush.bf16.msra.mxu0 0
      %410 = vmatpush.bf16.msra.mxu0 0
      %411 = vmatpush.bf16.msra.mxu0 0
      %412 = vmatpush.bf16.msra.mxu0 0
      %413 = vmatpush.bf16.msra.mxu0 %v378
      %414 = vmatmul.bf16.gmra.mxu0 %v369
      %v415 = vpop.f32.mrf.mxu0
      %v416 = vadd.f32 0.0, %v415
      %v417 = vpop.f32.mrf.mxu0
      %418 = vdwg.mxu0
      %v419 = vadd.f32 %v325, %v390
      %v420 = vadd.f32 %v338, %v403
      %v421 = vadd.f32 %v351, %v416
      %s422 = scalar_lea.vmem %s1, 12
      %v423 = vld [vmem:[%s422] sm:$0xf]
      %424 = vrot.lane.b32.xlu0 %v231, 32
      %v425 = vpop.permute.xlu0 %424
      %426 = vrot.lane.b32.xlu0 %v232, 32
      %v427 = vpop.permute.xlu0 %426
      %428 = vrot.lane.b32.xlu0 %v233, 32
      %v429 = vpop.permute.xlu0 %428
      %430 = vrot.lane.b32.xlu0 %v234, 32
      %v431 = vpop.permute.xlu0 %430
      %vm432 = vcmask 261120
      %v433 = vsel %vm432, %v425, %v427
      %v434 = vsel %vm432, %v427, %v429
      %v435 = vsel %vm432, %v429, %v431
      %v437 = vsel %vm247, %v423, 0
      %v440 = vsel %vm251, %v433, 0
      %v443 = vsel %vm251, %v434, 0
      %v446 = vsel %vm251, %v435, 0
      %448 = vmatpush.bf16.msra.mxu0 0
      %449 = vmatpush.bf16.msra.mxu0 0
      %450 = vmatpush.bf16.msra.mxu0 0
      %451 = vmatpush.bf16.msra.mxu0 0
      %452 = vmatpush.bf16.msra.mxu0 0
      %453 = vmatpush.bf16.msra.mxu0 0
      %454 = vmatpush.bf16.msra.mxu0 0
      %455 = vmatpush.bf16.msra.mxu0 %v440
      %456 = vmatmul.bf16.gmra.mxu0 %v437
      %v457 = vpop.f32.mrf.mxu0
      %v458 = vadd.f32 0.0, %v457
      %v459 = vpop.f32.mrf.mxu0
      %460 = vdwg.mxu0
      %461 = vmatpush.bf16.msra.mxu0 0
      %462 = vmatpush.bf16.msra.mxu0 0
      %463 = vmatpush.bf16.msra.mxu0 0
      %464 = vmatpush.bf16.msra.mxu0 0
      %465 = vmatpush.bf16.msra.mxu0 0
      %466 = vmatpush.bf16.msra.mxu0 0
      %467 = vmatpush.bf16.msra.mxu0 0
      %468 = vmatpush.bf16.msra.mxu0 %v443
      %469 = vmatmul.bf16.gmra.mxu0 %v437
      %v470 = vpop.f32.mrf.mxu0
      %v471 = vadd.f32 0.0, %v470
      %v472 = vpop.f32.mrf.mxu0
      %473 = vdwg.mxu0
      %474 = vmatpush.bf16.msra.mxu0 0
      %475 = vmatpush.bf16.msra.mxu0 0
      %476 = vmatpush.bf16.msra.mxu0 0
      %477 = vmatpush.bf16.msra.mxu0 0
      %478 = vmatpush.bf16.msra.mxu0 0
      %479 = vmatpush.bf16.msra.mxu0 0
      %480 = vmatpush.bf16.msra.mxu0 0
      %481 = vmatpush.bf16.msra.mxu0 %v446
      %482 = vmatmul.bf16.gmra.mxu0 %v437
      %v483 = vpop.f32.mrf.mxu0
      %v484 = vadd.f32 0.0, %v483
      %v485 = vpop.f32.mrf.mxu0
      %486 = vdwg.mxu0
      %v487 = vadd.f32 %v419, %v458
      %v488 = vadd.f32 %v420, %v471
      %v489 = vadd.f32 %v421, %v484
      %s490 = scalar_lea.vmem %s1, 16
      %v491 = vld [vmem:[%s490] sm:$0xf]
      %492 = vrot.lane.b32.xlu0 %v231, 28
      %v493 = vpop.permute.xlu0 %492
      %494 = vrot.lane.b32.xlu0 %v232, 28
      %v495 = vpop.permute.xlu0 %494
      %496 = vrot.lane.b32.xlu0 %v233, 28
      %v497 = vpop.permute.xlu0 %496
      %498 = vrot.lane.b32.xlu0 %v234, 28
      %v499 = vpop.permute.xlu0 %498
      %vm500 = vcmask 228352
      %v501 = vsel %vm500, %v493, %v495
      %v502 = vsel %vm500, %v495, %v497
      %v503 = vsel %vm500, %v497, %v499
      %v505 = vsel %vm247, %v491, 0
      %v508 = vsel %vm251, %v501, 0
      %v511 = vsel %vm251, %v502, 0
      %v514 = vsel %vm251, %v503, 0
      %516 = vmatpush.bf16.msra.mxu0 0
      %517 = vmatpush.bf16.msra.mxu0 0
      %518 = vmatpush.bf16.msra.mxu0 0
      %519 = vmatpush.bf16.msra.mxu0 0
      %520 = vmatpush.bf16.msra.mxu0 0
      %521 = vmatpush.bf16.msra.mxu0 0
      %522 = vmatpush.bf16.msra.mxu0 0
      %523 = vmatpush.bf16.msra.mxu0 %v508
      %524 = vmatmul.bf16.gmra.mxu0 %v505
      %v525 = vpop.f32.mrf.mxu0
      %v526 = vadd.f32 0.0, %v525
      %v527 = vpop.f32.mrf.mxu0
      %528 = vdwg.mxu0
      %529 = vmatpush.bf16.msra.mxu0 0
      %530 = vmatpush.bf16.msra.mxu0 0
      %531 = vmatpush.bf16.msra.mxu0 0
      %532 = vmatpush.bf16.msra.mxu0 0
      %533 = vmatpush.bf16.msra.mxu0 0
      %534 = vmatpush.bf16.msra.mxu0 0
      %535 = vmatpush.bf16.msra.mxu0 0
      %536 = vmatpush.bf16.msra.mxu0 %v511
      %537 = vmatmul.bf16.gmra.mxu0 %v505
      %v538 = vpop.f32.mrf.mxu0
      %v539 = vadd.f32 0.0, %v538
      %v540 = vpop.f32.mrf.mxu0
      %541 = vdwg.mxu0
      %542 = vmatpush.bf16.msra.mxu0 0
      %543 = vmatpush.bf16.msra.mxu0 0
      %544 = vmatpush.bf16.msra.mxu0 0
      %545 = vmatpush.bf16.msra.mxu0 0
      %546 = vmatpush.bf16.msra.mxu0 0
      %547 = vmatpush.bf16.msra.mxu0 0
      %548 = vmatpush.bf16.msra.mxu0 0
      %549 = vmatpush.bf16.msra.mxu0 %v514
      %550 = vmatmul.bf16.gmra.mxu0 %v505
      %v551 = vpop.f32.mrf.mxu0
      %v552 = vadd.f32 0.0, %v551
      %v553 = vpop.f32.mrf.mxu0
      %554 = vdwg.mxu0
      %v555 = vadd.f32 %v487, %v526
      %v556 = vadd.f32 %v488, %v539
      %v557 = vadd.f32 %v489, %v552
      %s558 = scalar_lea.vmem %s1, 20
      %v559 = vld [vmem:[%s558] sm:$0xf]
      %560 = vrot.lane.b32.xlu0 %v231, 24
      %v561 = vpop.permute.xlu0 %560
      %562 = vrot.lane.b32.xlu0 %v232, 24
      %v563 = vpop.permute.xlu0 %562
      %564 = vrot.lane.b32.xlu0 %v233, 24
      %v565 = vpop.permute.xlu0 %564
      %566 = vrot.lane.b32.xlu0 %v234, 24
      %v567 = vpop.permute.xlu0 %566
      %vm568 = vcmask 195584
      %v569 = vsel %vm568, %v561, %v563
      %v570 = vsel %vm568, %v563, %v565
      %v571 = vsel %vm568, %v565, %v567
      %v573 = vsel %vm247, %v559, 0
      %v576 = vsel %vm251, %v569, 0
      %v579 = vsel %vm251, %v570, 0
      %v582 = vsel %vm251, %v571, 0
      %584 = vmatpush.bf16.msra.mxu0 0
      %585 = vmatpush.bf16.msra.mxu0 0
      %586 = vmatpush.bf16.msra.mxu0 0
      %587 = vmatpush.bf16.msra.mxu0 0
      %588 = vmatpush.bf16.msra.mxu0 0
      %589 = vmatpush.bf16.msra.mxu0 0
      %590 = vmatpush.bf16.msra.mxu0 0
      %591 = vmatpush.bf16.msra.mxu0 %v576
      %592 = vmatmul.bf16.gmra.mxu0 %v573
      %v593 = vpop.f32.mrf.mxu0
      %v594 = vadd.f32 0.0, %v593
      %v595 = vpop.f32.mrf.mxu0
      %596 = vdwg.mxu0
      %597 = vmatpush.bf16.msra.mxu0 0
      %598 = vmatpush.bf16.msra.mxu0 0
      %599 = vmatpush.bf16.msra.mxu0 0
      %600 = vmatpush.bf16.msra.mxu0 0
      %601 = vmatpush.bf16.msra.mxu0 0
      %602 = vmatpush.bf16.msra.mxu0 0
      %603 = vmatpush.bf16.msra.mxu0 0
      %604 = vmatpush.bf16.msra.mxu0 %v579
      %605 = vmatmul.bf16.gmra.mxu0 %v573
      %v606 = vpop.f32.mrf.mxu0
      %v607 = vadd.f32 0.0, %v606
      %v608 = vpop.f32.mrf.mxu0
      %609 = vdwg.mxu0
      %610 = vmatpush.bf16.msra.mxu0 0
      %611 = vmatpush.bf16.msra.mxu0 0
      %612 = vmatpush.bf16.msra.mxu0 0
      %613 = vmatpush.bf16.msra.mxu0 0
      %614 = vmatpush.bf16.msra.mxu0 0
      %615 = vmatpush.bf16.msra.mxu0 0
      %616 = vmatpush.bf16.msra.mxu0 0
      %617 = vmatpush.bf16.msra.mxu0 %v582
      %618 = vmatmul.bf16.gmra.mxu0 %v573
      %v619 = vpop.f32.mrf.mxu0
      %v620 = vadd.f32 0.0, %v619
      %v621 = vpop.f32.mrf.mxu0
      %622 = vdwg.mxu0
      %v623 = vadd.f32 %v555, %v594
      %v624 = vadd.f32 %v556, %v607
      %v625 = vadd.f32 %v557, %v620
      %v626 = vld [vmem:[%s207 + $0x4] sm:$0xff]
      %v627 = vld [vmem:[%s207 + $0xc] sm:$0xff]
      %s628 = scalar_lea.vmem %s1, 24
      %v629 = vld [vmem:[%s628] sm:$0xf]
      %v632 = vunpack.c.l.b16 %v626
      %v633 = vunpack.c.h.b16 %v626
      %v634 = vunpack.c.l.b16 %v627
      %v635 = vunpack.c.h.b16 %v627
      %v636 = vpack.c.b16 %v632, %v632
      %v637 = vpack.c.b16 %v633, %v633
      %v638 = vpack.c.b16 %v634, %v634
      %v639 = vpack.c.b16 %v635, %v635
      %640 = vrot.lane.b32.xlu0 %v636, 64
      %v641 = vpop.permute.xlu0 %640
      %642 = vrot.lane.b32.xlu0 %v637, 64
      %v643 = vpop.permute.xlu0 %642
      %644 = vrot.lane.b32.xlu0 %v638, 64
      %v645 = vpop.permute.xlu0 %644
      %646 = vrot.lane.b32.xlu0 %v639, 64
      %v647 = vpop.permute.xlu0 %646
      %vm648 = vcmask 523264
      %v649 = vsel %vm648, %v641, %v643
      %v650 = vsel %vm648, %v643, %v645
      %v651 = vsel %vm648, %v645, %v647
      %v653 = vsel %vm247, %v629, 0
      %v656 = vsel %vm251, %v649, 0
      %v659 = vsel %vm251, %v650, 0
      %v662 = vsel %vm251, %v651, 0
      %664 = vmatpush.bf16.msra.mxu0 0
      %665 = vmatpush.bf16.msra.mxu0 0
      %666 = vmatpush.bf16.msra.mxu0 0
      %667 = vmatpush.bf16.msra.mxu0 0
      %668 = vmatpush.bf16.msra.mxu0 0
      %669 = vmatpush.bf16.msra.mxu0 0
      %670 = vmatpush.bf16.msra.mxu0 0
      %671 = vmatpush.bf16.msra.mxu0 %v656
      %672 = vmatmul.bf16.gmra.mxu0 %v653
      %v673 = vpop.f32.mrf.mxu0
      %v674 = vadd.f32 0.0, %v673
      %v675 = vpop.f32.mrf.mxu0
      %676 = vdwg.mxu0
      %677 = vmatpush.bf16.msra.mxu0 0
      %678 = vmatpush.bf16.msra.mxu0 0
      %679 = vmatpush.bf16.msra.mxu0 0
      %680 = vmatpush.bf16.msra.mxu0 0
      %681 = vmatpush.bf16.msra.mxu0 0
      %682 = vmatpush.bf16.msra.mxu0 0
      %683 = vmatpush.bf16.msra.mxu0 0
      %684 = vmatpush.bf16.msra.mxu0 %v659
      %685 = vmatmul.bf16.gmra.mxu0 %v653
      %v686 = vpop.f32.mrf.mxu0
      %v687 = vadd.f32 0.0, %v686
      %v688 = vpop.f32.mrf.mxu0
      %689 = vdwg.mxu0
      %690 = vmatpush.bf16.msra.mxu0 0
      %691 = vmatpush.bf16.msra.mxu0 0
      %692 = vmatpush.bf16.msra.mxu0 0
      %693 = vmatpush.bf16.msra.mxu0 0
      %694 = vmatpush.bf16.msra.mxu0 0
      %695 = vmatpush.bf16.msra.mxu0 0
      %696 = vmatpush.bf16.msra.mxu0 0
      %697 = vmatpush.bf16.msra.mxu0 %v662
      %698 = vmatmul.bf16.gmra.mxu0 %v653
      %v699 = vpop.f32.mrf.mxu0
      %v700 = vadd.f32 0.0, %v699
      %v701 = vpop.f32.mrf.mxu0
      %702 = vdwg.mxu0
      %v703 = vadd.f32 %v623, %v674
      %v704 = vadd.f32 %v624, %v687
      %v705 = vadd.f32 %v625, %v700
      %s706 = scalar_lea.vmem %s1, 28
      %v707 = vld [vmem:[%s706] sm:$0xf]
      %708 = vrot.lane.b32.xlu0 %v636, 60
      %v709 = vpop.permute.xlu0 %708
      %710 = vrot.lane.b32.xlu0 %v637, 60
      %v711 = vpop.permute.xlu0 %710
      %712 = vrot.lane.b32.xlu0 %v638, 60
      %v713 = vpop.permute.xlu0 %712
      %714 = vrot.lane.b32.xlu0 %v639, 60
      %v715 = vpop.permute.xlu0 %714
      %vm716 = vcmask 490496
      %v717 = vsel %vm716, %v709, %v711
      %v718 = vsel %vm716, %v711, %v713
      %v719 = vsel %vm716, %v713, %v715
      %v721 = vsel %vm247, %v707, 0
      %v724 = vsel %vm251, %v717, 0
      %v727 = vsel %vm251, %v718, 0
      %v730 = vsel %vm251, %v719, 0
      %732 = vmatpush.bf16.msra.mxu0 0
      %733 = vmatpush.bf16.msra.mxu0 0
      %734 = vmatpush.bf16.msra.mxu0 0
      %735 = vmatpush.bf16.msra.mxu0 0
      %736 = vmatpush.bf16.msra.mxu0 0
      %737 = vmatpush.bf16.msra.mxu0 0
      %738 = vmatpush.bf16.msra.mxu0 0
      %739 = vmatpush.bf16.msra.mxu0 %v724
      %740 = vmatmul.bf16.gmra.mxu0 %v721
      %v741 = vpop.f32.mrf.mxu0
      %v742 = vadd.f32 0.0, %v741
      %v743 = vpop.f32.mrf.mxu0
      %744 = vdwg.mxu0
      %745 = vmatpush.bf16.msra.mxu0 0
      %746 = vmatpush.bf16.msra.mxu0 0
      %747 = vmatpush.bf16.msra.mxu0 0
      %748 = vmatpush.bf16.msra.mxu0 0
      %749 = vmatpush.bf16.msra.mxu0 0
      %750 = vmatpush.bf16.msra.mxu0 0
      %751 = vmatpush.bf16.msra.mxu0 0
      %752 = vmatpush.bf16.msra.mxu0 %v727
      %753 = vmatmul.bf16.gmra.mxu0 %v721
      %v754 = vpop.f32.mrf.mxu0
      %v755 = vadd.f32 0.0, %v754
      %v756 = vpop.f32.mrf.mxu0
      %757 = vdwg.mxu0
      %758 = vmatpush.bf16.msra.mxu0 0
      %759 = vmatpush.bf16.msra.mxu0 0
      %760 = vmatpush.bf16.msra.mxu0 0
      %761 = vmatpush.bf16.msra.mxu0 0
      %762 = vmatpush.bf16.msra.mxu0 0
      %763 = vmatpush.bf16.msra.mxu0 0
      %764 = vmatpush.bf16.msra.mxu0 0
      %765 = vmatpush.bf16.msra.mxu0 %v730
      %766 = vmatmul.bf16.gmra.mxu0 %v721
      %v767 = vpop.f32.mrf.mxu0
      %v768 = vadd.f32 0.0, %v767
      %v769 = vpop.f32.mrf.mxu0
      %770 = vdwg.mxu0
      %v771 = vadd.f32 %v703, %v742
      %v772 = vadd.f32 %v704, %v755
      %v773 = vadd.f32 %v705, %v768
      %s774 = scalar_lea.vmem %s1, 32
      %v775 = vld [vmem:[%s774] sm:$0xf]
      %776 = vrot.lane.b32.xlu0 %v636, 56
      %v777 = vpop.permute.xlu0 %776
      %778 = vrot.lane.b32.xlu0 %v637, 56
      %v779 = vpop.permute.xlu0 %778
      %780 = vrot.lane.b32.xlu0 %v638, 56
      %v781 = vpop.permute.xlu0 %780
      %782 = vrot.lane.b32.xlu0 %v639, 56
      %v783 = vpop.permute.xlu0 %782
      %vm784 = vcmask 457728
      %v785 = vsel %vm784, %v777, %v779
      %v786 = vsel %vm784, %v779, %v781
      %v787 = vsel %vm784, %v781, %v783
      %v789 = vsel %vm247, %v775, 0
      %v792 = vsel %vm251, %v785, 0
      %v795 = vsel %vm251, %v786, 0
      %v798 = vsel %vm251, %v787, 0
      %800 = vmatpush.bf16.msra.mxu0 0
      %801 = vmatpush.bf16.msra.mxu0 0
      %802 = vmatpush.bf16.msra.mxu0 0
      %803 = vmatpush.bf16.msra.mxu0 0
      %804 = vmatpush.bf16.msra.mxu0 0
      %805 = vmatpush.bf16.msra.mxu0 0
      %806 = vmatpush.bf16.msra.mxu0 0
      %807 = vmatpush.bf16.msra.mxu0 %v792
      %808 = vmatmul.bf16.gmra.mxu0 %v789
      %v809 = vpop.f32.mrf.mxu0
      %v810 = vadd.f32 0.0, %v809
      %v811 = vpop.f32.mrf.mxu0
      %812 = vdwg.mxu0
      %813 = vmatpush.bf16.msra.mxu0 0
      %814 = vmatpush.bf16.msra.mxu0 0
      %815 = vmatpush.bf16.msra.mxu0 0
      %816 = vmatpush.bf16.msra.mxu0 0
      %817 = vmatpush.bf16.msra.mxu0 0
      %818 = vmatpush.bf16.msra.mxu0 0
      %819 = vmatpush.bf16.msra.mxu0 0
      %820 = vmatpush.bf16.msra.mxu0 %v795
      %821 = vmatmul.bf16.gmra.mxu0 %v789
      %v822 = vpop.f32.mrf.mxu0
      %v823 = vadd.f32 0.0, %v822
      %v824 = vpop.f32.mrf.mxu0
      %825 = vdwg.mxu0
      %826 = vmatpush.bf16.msra.mxu0 0
      %827 = vmatpush.bf16.msra.mxu0 0
      %828 = vmatpush.bf16.msra.mxu0 0
      %829 = vmatpush.bf16.msra.mxu0 0
      %830 = vmatpush.bf16.msra.mxu0 0
      %831 = vmatpush.bf16.msra.mxu0 0
      %832 = vmatpush.bf16.msra.mxu0 0
      %833 = vmatpush.bf16.msra.mxu0 %v798
      %834 = vmatmul.bf16.gmra.mxu0 %v789
      %v835 = vpop.f32.mrf.mxu0
      %v836 = vadd.f32 0.0, %v835
      %v837 = vpop.f32.mrf.mxu0
      %838 = vdwg.mxu0
      %v839 = vadd.f32 %v771, %v810
      %v840 = vadd.f32 %v772, %v823
      %v841 = vadd.f32 %v773, %v836
      %v842 = vld [vmem:[%s2] sm:$0xff]
      %844 = vset.pattern.permute.xlu0 0
      %845 = vperm.xlu0 %844, %v842
      %v846 = vpop.permute.xlu0 %845
      %v848 = vadd.f32 %v839, %v846
      %v849 = vadd.f32 %v840, %v846
      %v850 = vadd.f32 %v841, %v846
      %v851 = vld [vmem:[%s212] sm:$0xff]
      %v852 = vld [vmem:[%s212 + $0x8] sm:$0xff]
      %v853 = vld [vmem:[%s212 + $0x10] sm:$0xff]
      %v854 = vadd.f32 %v848, %v851
      %v855 = vadd.f32 %v849, %v852
      %v856 = vadd.f32 %v850, %v853
      %857 = vst [vmem:[%s217] sm:$0xff] %v854
      %858 = vst [vmem:[%s217 + $0x8] sm:$0xff] %v855
      %859 = vst [vmem:[%s217 + $0x10] sm:$0xff] %v856
      %p860 = scmp.lt.s32.totalorder %s15, 1
      %s861 = scalar_select %p860, %s15, 1
      %s862 = smul.addr %s861, 3
      %s863 = smul.addr %s862, 8
      %s864 = scalar_lea.vmem %s4, %s863
      // Predicated region
      $region37: #{forward.13} parent=35 // pred_check
        %p865 = pneg %p127
      $region38: #{forward.13} parent=35 // pred_check_branch
        %867 = sbr.rel (%p865) target = $region40
      $region39: #{forward.13} parent=35 // pred_region
        _
      $region40: #{forward.13} parent=35 // pred_fallthru
        _
    $region36: #{forward.13} parent=5 // pred_fallthru
      _
    %p868 = scmp.le.s32.totalorder 2, %s10
    // Predicated region
    $region41: #{forward.13} parent=5 // pred_check
      %p869 = pneg %p868
    $region42: #{forward.13} parent=5 // pred_check_branch
      %871 = sbr.rel (%p869) target = $region44
    $region43: #{forward.13} parent=5 // pred_region
      %s872 = ssub.s32 %s10, 2
      // Predicated region
      $region45: #{forward.13} parent=43 // pred_check
        %p873 = pneg %p133
      $region46: #{forward.13} parent=43 // pred_check_branch
        %875 = sbr.rel (%p873) target = $region48
      $region47: #{forward.13} parent=43 // pred_region
        %p876 = scmp.lt.s32.totalorder %s16, 1
        %s877 = scalar_select %p876, %s16, 1
        %s878 = smul.addr %s877, 3
        %s879 = smul.addr %s878, 8
        %s880 = scalar_lea.vmem %s4, %s879
      $region48: #{forward.13} parent=43 // pred_fallthru
        _
    $region44: #{forward.13} parent=5 // pred_fallthru
      _
  $region6: #{forward.13} parent=0 // loop_footer
    %s14 = sadd.s32 1, %s10
  $region7: #{forward.13} parent=0 // loop_footer_branch
    %9 = sbr.rel target = $region3
  $region8: #{forward.13} parent=0 // loop_exit
    _

// kernel: forward.14
$region0: #{forward.14}
  #allocation0 [shape = 'u32[]', space=smem, size = 0x4, offset = 0x4, fixed_abs, tag = 'smem constant byte address 0x4 - core index']
  #allocation1 [shape = 'u32[72,128]{1,0:T(1,128)}', space=vmem, size = 0x9000, scoped, tag = 'internal scratch']
  %s0 = inlined_call_operand.vmem [shape: bf16[2,8,512], index: 0, kind: input, shape index: {}]
  %s1 = inlined_call_operand.vmem [shape: bf16[9,4,8], index: 1, kind: input, shape index: {}]
  %s2 = inlined_call_operand.vmem [shape: f32[4,1], index: 2, kind: input, shape index: {}]
  %s3 = inlined_call_operand.vmem [shape: f32[2,4,320], index: 3, kind: output, shape index: {}]
  %s4 = sld [smem:[#allocation0]]
  $region45: #{forward.14} parent=0
    _
  %s6 = ssub.s32 1, %s4
  %s7 = scalar_select 0, %s6, %s4
  loop: start=0, step=1, limit=4
  $region2: #{forward.14} parent=0 // loop_pre_header
    _
  $region3: #{forward.14} parent=0 // loop_header
    %s9 = sphi 0, %s13
    %p10 = scmp.ge.s32.totalorder %s9, 4
    %s19 = sphi 0, %s21
    %s22 = sphi 0, %s19
    %s23 = sphi 0, %s22
    %s39 = sphi 0, %s23
    %s43 = sphi 0, %s43
    %s45 = sphi 0, %s43
    %s46 = sphi 0, %s45
    %s60 = sphi 0, %s46
    %s64 = sphi 0, %s64
    %s66 = sphi 0, %s64
    %s67 = sphi 0, %s66
    %s81 = sphi 0, %s67
    %s87 = sphi 0, %s89
    %s90 = sphi 0, %s87
    %s91 = sphi 0, %s90
    %s107 = sphi 0, %s91
  $region4: #{forward.14} parent=0 // loop_header_branch
    %12 = sbr.rel (%p10) target = $region8
  $region5: #{forward.14} parent=0 // loop_body
    %s14 = ssub.s32 %s9, 1
    %s15 = ssub.s32 %s9, 2
    %s16 = sadd.s32 %s9, 1
    %s17 = ssub.s32 %s9, %s16
    %p18 = scmp.eq.s32.totalorder %s17, 0
    %s20 = sadd.s32 %s19, 1
    %s21 = scalar_select %p18, %s19, %s20
    %p24 = pneg %p18
    %p25 = scmp.eq.s32.totalorder %s9, 1
    %p26 = por %p24, %p25
    %p27 = scmp.ne.s32.totalorder %s19, %s22
    %p28 = scmp.eq.s32.totalorder %s9, 0
    %p29 = por %p27, %p28
    %p30 = scmp.ne.s32.totalorder %s19, %s22
    %p31 = scmp.eq.s32.totalorder %s14, 1
    %p32 = por %p30, %p31
    %p33 = scmp.ne.s32.totalorder %s22, %s23
    %p34 = scmp.eq.s32.totalorder %s14, 0
    %p35 = por %p33, %p34
    %p36 = scmp.ne.s32.totalorder %s22, %s23
    %p37 = scmp.eq.s32.totalorder %s15, 1
    %p38 = por %p36, %p37
    %p40 = scmp.ne.s32.totalorder %s23, %s39
    %p41 = scmp.eq.s32.totalorder %s15, 0
    %p42 = por %p40, %p41
    %s44 = sadd.s32 %s43, 1
    %p47 = scmp.eq.s32.totalorder %s9, 1
    %p48 = scmp.ne.s32.totalorder %s43, %s45
    %p49 = scmp.eq.s32.totalorder %s9, 0
    %p50 = por %p48, %p49
    %p51 = scmp.ne.s32.totalorder %s43, %s45
    %p52 = scmp.eq.s32.totalorder %s14, 1
    %p53 = por %p51, %p52
    %p54 = scmp.ne.s32.totalorder %s45, %s46
    %p55 = scmp.eq.s32.totalorder %s14, 0
    %p56 = por %p54, %p55
    %p57 = scmp.ne.s32.totalorder %s45, %s46
    %p58 = scmp.eq.s32.totalorder %s15, 1
    %p59 = por %p57, %p58
    %p61 = scmp.ne.s32.totalorder %s46, %s60
    %p62 = scmp.eq.s32.totalorder %s15, 0
    %p63 = por %p61, %p62
    %s65 = sadd.s32 %s64, 1
    %p68 = scmp.eq.s32.totalorder %s9, 1
    %p69 = scmp.ne.s32.totalorder %s64, %s66
    %p70 = scmp.eq.s32.totalorder %s9, 0
    %p71 = por %p69, %p70
    %p72 = scmp.ne.s32.totalorder %s64, %s66
    %p73 = scmp.eq.s32.totalorder %s14, 1
    %p74 = por %p72, %p73
    %p75 = scmp.ne.s32.totalorder %s66, %s67
    %p76 = scmp.eq.s32.totalorder %s14, 0
    %p77 = por %p75, %p76
    %p78 = scmp.ne.s32.totalorder %s66, %s67
    %p79 = scmp.eq.s32.totalorder %s15, 1
    %p80 = por %p78, %p79
    %p82 = scmp.ne.s32.totalorder %s67, %s81
    %p83 = scmp.eq.s32.totalorder %s15, 0
    %p84 = por %p82, %p83
    %s85 = ssub.s32 %s9, %s16
    %p86 = scmp.eq.s32.totalorder %s85, 0
    %s88 = sadd.s32 %s87, 1
    %s89 = scalar_select %p86, %s87, %s88
    %p92 = pneg %p86
    %p93 = scmp.eq.s32.totalorder %s9, 1
    %p94 = por %p92, %p93
    %p95 = scmp.ne.s32.totalorder %s87, %s90
    %p96 = scmp.eq.s32.totalorder %s9, 0
    %p97 = por %p95, %p96
    %p98 = scmp.ne.s32.totalorder %s87, %s90
    %p99 = scmp.eq.s32.totalorder %s14, 1
    %p100 = por %p98, %p99
    %p101 = scmp.ne.s32.totalorder %s90, %s91
    %p102 = scmp.eq.s32.totalorder %s14, 0
    %p103 = por %p101, %p102
    %p104 = scmp.ne.s32.totalorder %s90, %s91
    %p105 = scmp.eq.s32.totalorder %s15, 1
    %p106 = por %p104, %p105
    %p108 = scmp.ne.s32.totalorder %s91, %s107
    %p109 = scmp.eq.s32.totalorder %s15, 0
    %p110 = por %p108, %p109
    %p111 = scmp.le.s32.totalorder 1, %s9
    %p112 = scmp.lt.s32.totalorder %s9, 3
    %p113 = pnand %p111, %p112
    %p114 = pneg %p113
    // Predicated region
    $region9: #{forward.14} parent=5 // pred_check
      _
    $region10: #{forward.14} parent=5 // pred_check_branch
      %116 = sbr.rel (%p113) target = $region12
    $region11: #{forward.14} parent=5 // pred_region
      %s117 = ssub.s32 %s9, 1
      // Predicated region
      $region13: #{forward.14} parent=11 // pred_check
        %p118 = pneg %p56
      $region14: #{forward.14} parent=11 // pred_check_branch
        %120 = sbr.rel (%p118) target = $region16
      $region15: #{forward.14} parent=11 // pred_region
        _
      $region16: #{forward.14} parent=11 // pred_fallthru
        _
      // Predicated region
      $region17: #{forward.14} parent=11 // pred_check
        %p121 = pneg %p77
      $region18: #{forward.14} parent=11 // pred_check_branch
        %123 = sbr.rel (%p121) target = $region20
      $region19: #{forward.14} parent=11 // pred_region
        _
      $region20: #{forward.14} parent=11 // pred_fallthru
        _
    $region12: #{forward.14} parent=5 // pred_fallthru
      _
    %p124 = scmp.lt.s32.totalorder %s9, 2
    // Predicated region
    $region21: #{forward.14} parent=5 // pred_check
      %p125 = pneg %p124
    $region22: #{forward.14} parent=5 // pred_check_branch
      %127 = sbr.rel (%p125) target = $region24
    $region23: #{forward.14} parent=5 // pred_region
      // Predicated region
      $region25: #{forward.14} parent=23 // pred_check
        %p128 = pneg %p29
      $region26: #{forward.14} parent=23 // pred_check_branch
        %130 = sbr.rel (%p128) target = $region28
      $region27: #{forward.14} parent=23 // pred_region
        %p131 = scmp.lt.s32.totalorder %s9, 1
        %s132 = scalar_select %p131, %s9, 1
        %s133 = smul.addr %s132, 4
        %s134 = smul.addr %s133, 4
        %s135 = scalar_lea.vmem %s0, %s134
      $region28: #{forward.14} parent=23 // pred_fallthru
        _
    $region24: #{forward.14} parent=5 // pred_fallthru
      _
    %p136 = scmp.le.s32.totalorder 1, %s9
    %p137 = scmp.lt.s32.totalorder %s9, 3
    %p138 = pnand %p136, %p137
    %p139 = pneg %p138
    // Predicated region
    $region29: #{forward.14} parent=5 // pred_check
      _
    $region30: #{forward.14} parent=5 // pred_check_branch
      %141 = sbr.rel (%p138) target = $region32
    $region31: #{forward.14} parent=5 // pred_region
      %s142 = ssub.s32 %s9, 1
      %p143 = scmp.lt.s32.totalorder %s14, 1
      %s144 = scalar_select %p143, %s14, 1
      %s145 = smul.addr %s144, 4
      %s146 = smul.addr %s145, 4
      %s147 = scalar_lea.vmem %s0, %s146
      %p148 = pneg %p35
      %p149 = pneg %p32
      %p150 = pneg %p56
      %p151 = pneg %p53
      %p152 = pneg %p77
      %p153 = pneg %p74
      %p154 = pneg %p103
      %p155 = pneg %p100
      %p156 = scmp.lt.s32.totalorder %s14, 1
      %s157 = scalar_select %p156, %s14, 1
      %s158 = smul.addr %s157, 3
      %s159 = smul.addr %s158, 4
      %s160 = scalar_lea.vmem %s3, %s159
      %p161 = scmp.lt.s32.totalorder %s14, 1
      %s162 = scalar_select %p161, %s14, 1
      %s163 = smul.addr %s162, 4
      %s164 = smul.addr %s163, 4
      %s165 = scalar_lea.vmem %s0, %s164
      %p166 = scmp.lt.s32.totalorder %s14, 1
      %s167 = scalar_select %p166, %s14, 1
      %s168 = smul.addr %s167, 3
      %s169 = smul.addr %s168, 4
      %s170 = scalar_lea.vmem %s3, %s169
      %v172 = vld [vmem:[%s165] sm:$0xff]
      %v173 = vld [vmem:[%s165 + $0x8] sm:$0xf]
      %v174 = vld [vmem:[%s1] sm:$0x3]
      %s175 = scalar_lea.vmem %s1, 2
      %v176 = vld [vmem:[%s175] sm:$0x3]
      %v179 = vunpack.c.l.b16 %v172
      %v180 = vunpack.c.h.b16 %v172
      %v181 = vunpack.c.l.b16 %v173
      %v182 = vpack.c.b16 %v179, %v179
      %v183 = vpack.c.b16 %v180, %v180
      %v184 = vpack.c.b16 %v181, %v181
      %185 = vrot.lane.b32.xlu0 %v182, 126
      %v186 = vpop.permute.xlu0 %185
      %187 = vrot.lane.b32.xlu0 %v183, 126
      %v188 = vpop.permute.xlu0 %187
      %189 = vrot.lane.b32.xlu0 %v184, 126
      %v190 = vpop.permute.xlu0 %189
      %vm191 = vcmask 1031168
      %v192 = vsel %vm191, %v186, %v188
      %v193 = vsel %vm191, %v188, %v190
      %vm194 = vcmask 64512
      %v196 = vsel %vm194, %v176, 0
      %vm198 = vcmask 1043456
      %v200 = vsel %vm198, %v192, 0
      %v203 = vsel %vm198, %v193, 0
      %v206 = vsel %vm198, %v190, 0
      %208 = vmatpush.bf16.msra.mxu0 0
      %209 = vmatpush.bf16.msra.mxu0 0
      %210 = vmatpush.bf16.msra.mxu0 0
      %211 = vmatpush.bf16.msra.mxu0 0
      %212 = vmatpush.bf16.msra.mxu0 0
      %213 = vmatpush.bf16.msra.mxu0 0
      %214 = vmatpush.bf16.msra.mxu0 0
      %215 = vmatpush.bf16.msra.mxu0 %v200
      %216 = vmatmul.bf16.gmra.mxu0 %v196
      %v217 = vpop.f32.mrf.mxu0
      %v218 = vadd.f32 0.0, %v217
      %v219 = vpop.f32.mrf.mxu0
      %220 = vdwg.mxu0
      %221 = vmatpush.bf16.msra.mxu0 0
      %222 = vmatpush.bf16.msra.mxu0 0
      %223 = vmatpush.bf16.msra.mxu0 0
      %224 = vmatpush.bf16.msra.mxu0 0
      %225 = vmatpush.bf16.msra.mxu0 0
      %226 = vmatpush.bf16.msra.mxu0 0
      %227 = vmatpush.bf16.msra.mxu0 0
      %228 = vmatpush.bf16.msra.mxu0 %v203
      %229 = vmatmul.bf16.gmra.mxu0 %v196
      %v230 = vpop.f32.mrf.mxu0
      %v231 = vadd.f32 0.0, %v230
      %v232 = vpop.f32.mrf.mxu0
      %233 = vdwg.mxu0
      %234 = vmatpush.bf16.msra.mxu0 0
      %235 = vmatpush.bf16.msra.mxu0 0
      %236 = vmatpush.bf16.msra.mxu0 0
      %237 = vmatpush.bf16.msra.mxu0 0
      %238 = vmatpush.bf16.msra.mxu0 0
      %239 = vmatpush.bf16.msra.mxu0 0
      %240 = vmatpush.bf16.msra.mxu0 0
      %241 = vmatpush.bf16.msra.mxu0 %v206
      %242 = vmatmul.bf16.gmra.mxu0 %v196
      %v243 = vpop.f32.mrf.mxu0
      %v244 = vadd.f32 0.0, %v243
      %v245 = vpop.f32.mrf.mxu0
      %246 = vdwg.mxu0
      %v248 = vsel %vm194, %v174, 0
      %v251 = vsel %vm198, %v182, 0
      %v254 = vsel %vm198, %v183, 0
      %v257 = vsel %vm198, %v184, 0
      %259 = vmatpush.bf16.msra.mxu0 0
      %260 = vmatpush.bf16.msra.mxu0 0
      %261 = vmatpush.bf16.msra.mxu0 0
      %262 = vmatpush.bf16.msra.mxu0 0
      %263 = vmatpush.bf16.msra.mxu0 0
      %264 = vmatpush.bf16.msra.mxu0 0
      %265 = vmatpush.bf16.msra.mxu0 0
      %266 = vmatpush.bf16.msra.mxu0 %v251
      %267 = vmatmul.bf16.gmra.mxu0 %v248
      %v268 = vpop.f32.mrf.mxu0
      %v269 = vadd.f32 %v218, %v268
      %v270 = vpop.f32.mrf.mxu0
      %271 = vdwg.mxu0
      %272 = vmatpush.bf16.msra.mxu0 0
      %273 = vmatpush.bf16.msra.mxu0 0
      %274 = vmatpush.bf16.msra.mxu0 0
      %275 = vmatpush.bf16.msra.mxu0 0
      %276 = vmatpush.bf16.msra.mxu0 0
      %277 = vmatpush.bf16.msra.mxu0 0
      %278 = vmatpush.bf16.msra.mxu0 0
      %279 = vmatpush.bf16.msra.mxu0 %v254
      %280 = vmatmul.bf16.gmra.mxu0 %v248
      %v281 = vpop.f32.mrf.mxu0
      %v282 = vadd.f32 %v231, %v281
      %v283 = vpop.f32.mrf.mxu0
      %284 = vdwg.mxu0
      %285 = vmatpush.bf16.msra.mxu0 0
      %286 = vmatpush.bf16.msra.mxu0 0
      %287 = vmatpush.bf16.msra.mxu0 0
      %288 = vmatpush.bf16.msra.mxu0 0
      %289 = vmatpush.bf16.msra.mxu0 0
      %290 = vmatpush.bf16.msra.mxu0 0
      %291 = vmatpush.bf16.msra.mxu0 0
      %292 = vmatpush.bf16.msra.mxu0 %v257
      %293 = vmatmul.bf16.gmra.mxu0 %v248
      %v294 = vpop.f32.mrf.mxu0
      %v295 = vadd.f32 %v244, %v294
      %v296 = vpop.f32.mrf.mxu0
      %297 = vdwg.mxu0
      %s298 = scalar_lea.vmem %s1, 4
      %v299 = vld [vmem:[%s298] sm:$0x3]
      %300 = vrot.lane.b32.xlu0 %v182, 124
      %v301 = vpop.permute.xlu0 %300
      %302 = vrot.lane.b32.xlu0 %v183, 124
      %v303 = vpop.permute.xlu0 %302
      %304 = vrot.lane.b32.xlu0 %v184, 124
      %v305 = vpop.permute.xlu0 %304
      %vm306 = vcmask 1014784
      %v307 = vsel %vm306, %v301, %v303
      %v308 = vsel %vm306, %v303, %v305
      %v310 = vsel %vm194, %v299, 0
      %v313 = vsel %vm198, %v307, 0
      %v316 = vsel %vm198, %v308, 0
      %v319 = vsel %vm198, %v305, 0
      %321 = vmatpush.bf16.msra.mxu0 0
      %322 = vmatpush.bf16.msra.mxu0 0
      %323 = vmatpush.bf16.msra.mxu0 0
      %324 = vmatpush.bf16.msra.mxu0 0
      %325 = vmatpush.bf16.msra.mxu0 0
      %326 = vmatpush.bf16.msra.mxu0 0
      %327 = vmatpush.bf16.msra.mxu0 0
      %328 = vmatpush.bf16.msra.mxu0 %v313
      %329 = vmatmul.bf16.gmra.mxu0 %v310
      %v330 = vpop.f32.mrf.mxu0
      %v331 = vadd.f32 0.0, %v330
      %v332 = vpop.f32.mrf.mxu0
      %333 = vdwg.mxu0
      %334 = vmatpush.bf16.msra.mxu0 0
      %335 = vmatpush.bf16.msra.mxu0 0
      %336 = vmatpush.bf16.msra.mxu0 0
      %337 = vmatpush.bf16.msra.mxu0 0
      %338 = vmatpush.bf16.msra.mxu0 0
      %339 = vmatpush.bf16.msra.mxu0 0
      %340 = vmatpush.bf16.msra.mxu0 0
      %341 = vmatpush.bf16.msra.mxu0 %v316
      %342 = vmatmul.bf16.gmra.mxu0 %v310
      %v343 = vpop.f32.mrf.mxu0
      %v344 = vadd.f32 0.0, %v343
      %v345 = vpop.f32.mrf.mxu0
      %346 = vdwg.mxu0
      %347 = vmatpush.bf16.msra.mxu0 0
      %348 = vmatpush.bf16.msra.mxu0 0
      %349 = vmatpush.bf16.msra.mxu0 0
      %350 = vmatpush.bf16.msra.mxu0 0
      %351 = vmatpush.bf16.msra.mxu0 0
      %352 = vmatpush.bf16.msra.mxu0 0
      %353 = vmatpush.bf16.msra.mxu0 0
      %354 = vmatpush.bf16.msra.mxu0 %v319
      %355 = vmatmul.bf16.gmra.mxu0 %v310
      %v356 = vpop.f32.mrf.mxu0
      %v357 = vadd.f32 0.0, %v356
      %v358 = vpop.f32.mrf.mxu0
      %359 = vdwg.mxu0
      %v360 = vadd.f32 %v269, %v331
      %v361 = vadd.f32 %v282, %v344
      %v362 = vadd.f32 %v295, %v357
      %s363 = scalar_lea.vmem %s1, 6
      %v364 = vld [vmem:[%s363] sm:$0x3]
      %365 = vrot.lane.b32.xlu0 %v182, 88
      %v366 = vpop.permute.xlu0 %365
      %367 = vrot.lane.b32.xlu0 %v183, 88
      %v368 = vpop.permute.xlu0 %367
      %369 = vrot.lane.b32.xlu0 %v184, 88
      %v370 = vpop.permute.xlu0 %369
      %vm371 = vcmask 719872
      %v372 = vsel %vm371, %v366, %v368
      %v373 = vsel %vm371, %v368, %v370
      %v375 = vsel %vm194, %v364, 0
      %v378 = vsel %vm198, %v372, 0
      %v381 = vsel %vm198, %v373, 0
      %v384 = vsel %vm198, %v370, 0
      %386 = vmatpush.bf16.msra.mxu0 0
      %387 = vmatpush.bf16.msra.mxu0 0
      %388 = vmatpush.bf16.msra.mxu0 0
      %389 = vmatpush.bf16.msra.mxu0 0
      %390 = vmatpush.bf16.msra.mxu0 0
      %391 = vmatpush.bf16.msra.mxu0 0
      %392 = vmatpush.bf16.msra.mxu0 0
      %393 = vmatpush.bf16.msra.mxu0 %v378
      %394 = vmatmul.bf16.gmra.mxu0 %v375
      %v395 = vpop.f32.mrf.mxu0
      %v396 = vadd.f32 0.0, %v395
      %v397 = vpop.f32.mrf.mxu0
      %398 = vdwg.mxu0
      %399 = vmatpush.bf16.msra.mxu0 0
      %400 = vmatpush.bf16.msra.mxu0 0
      %401 = vmatpush.bf16.msra.mxu0 0
      %402 = vmatpush.bf16.msra.mxu0 0
      %403 = vmatpush.bf16.msra.mxu0 0
      %404 = vmatpush.bf16.msra.mxu0 0
      %405 = vmatpush.bf16.msra.mxu0 0
      %406 = vmatpush.bf16.msra.mxu0 %v381
      %407 = vmatmul.bf16.gmra.mxu0 %v375
      %v408 = vpop.f32.mrf.mxu0
      %v409 = vadd.f32 0.0, %v408
      %v410 = vpop.f32.mrf.mxu0
      %411 = vdwg.mxu0
      %412 = vmatpush.bf16.msra.mxu0 0
      %413 = vmatpush.bf16.msra.mxu0 0
      %414 = vmatpush.bf16.msra.mxu0 0
      %415 = vmatpush.bf16.msra.mxu0 0
      %416 = vmatpush.bf16.msra.mxu0 0
      %417 = vmatpush.bf16.msra.mxu0 0
      %418 = vmatpush.bf16.msra.mxu0 0
      %419 = vmatpush.bf16.msra.mxu0 %v384
      %420 = vmatmul.bf16.gmra.mxu0 %v375
      %v421 = vpop.f32.mrf.mxu0
      %v422 = vadd.f32 0.0, %v421
      %v423 = vpop.f32.mrf.mxu0
      %424 = vdwg.mxu0
      %v425 = vadd.f32 %v360, %v396
      %v426 = vadd.f32 %v361, %v409
      %v427 = vadd.f32 %v362, %v422
      %s428 = scalar_lea.vmem %s1, 8
      %v429 = vld [vmem:[%s428] sm:$0x3]
      %430 = vrot.lane.b32.xlu0 %v182, 86
      %v431 = vpop.permute.xlu0 %430
      %432 = vrot.lane.b32.xlu0 %v183, 86
      %v433 = vpop.permute.xlu0 %432
      %434 = vrot.lane.b32.xlu0 %v184, 86
      %v435 = vpop.permute.xlu0 %434
      %vm436 = vcmask 703488
      %v437 = vsel %vm436, %v431, %v433
      %v438 = vsel %vm436, %v433, %v435
      %v440 = vsel %vm194, %v429, 0
      %v443 = vsel %vm198, %v437, 0
      %v446 = vsel %vm198, %v438, 0
      %v449 = vsel %vm198, %v435, 0
      %451 = vmatpush.bf16.msra.mxu0 0
      %452 = vmatpush.bf16.msra.mxu0 0
      %453 = vmatpush.bf16.msra.mxu0 0
      %454 = vmatpush.bf16.msra.mxu0 0
      %455 = vmatpush.bf16.msra.mxu0 0
      %456 = vmatpush.bf16.msra.mxu0 0
      %457 = vmatpush.bf16.msra.mxu0 0
      %458 = vmatpush.bf16.msra.mxu0 %v443
      %459 = vmatmul.bf16.gmra.mxu0 %v440
      %v460 = vpop.f32.mrf.mxu0
      %v461 = vadd.f32 0.0, %v460
      %v462 = vpop.f32.mrf.mxu0
      %463 = vdwg.mxu0
      %464 = vmatpush.bf16.msra.mxu0 0
      %465 = vmatpush.bf16.msra.mxu0 0
      %466 = vmatpush.bf16.msra.mxu0 0
      %467 = vmatpush.bf16.msra.mxu0 0
      %468 = vmatpush.bf16.msra.mxu0 0
      %469 = vmatpush.bf16.msra.mxu0 0
      %470 = vmatpush.bf16.msra.mxu0 0
      %471 = vmatpush.bf16.msra.mxu0 %v446
      %472 = vmatmul.bf16.gmra.mxu0 %v440
      %v473 = vpop.f32.mrf.mxu0
      %v474 = vadd.f32 0.0, %v473
      %v475 = vpop.f32.mrf.mxu0
      %476 = vdwg.mxu0
      %477 = vmatpush.bf16.msra.mxu0 0
      %478 = vmatpush.bf16.msra.mxu0 0
      %479 = vmatpush.bf16.msra.mxu0 0
      %480 = vmatpush.bf16.msra.mxu0 0
      %481 = vmatpush.bf16.msra.mxu0 0
      %482 = vmatpush.bf16.msra.mxu0 0
      %483 = vmatpush.bf16.msra.mxu0 0
      %484 = vmatpush.bf16.msra.mxu0 %v449
      %485 = vmatmul.bf16.gmra.mxu0 %v440
      %v486 = vpop.f32.mrf.mxu0
      %v487 = vadd.f32 0.0, %v486
      %v488 = vpop.f32.mrf.mxu0
      %489 = vdwg.mxu0
      %v490 = vadd.f32 %v425, %v461
      %v491 = vadd.f32 %v426, %v474
      %v492 = vadd.f32 %v427, %v487
      %s493 = scalar_lea.vmem %s1, 10
      %v494 = vld [vmem:[%s493] sm:$0x3]
      %495 = vrot.lane.b32.xlu0 %v182, 84
      %v496 = vpop.permute.xlu0 %495
      %497 = vrot.lane.b32.xlu0 %v183, 84
      %v498 = vpop.permute.xlu0 %497
      %499 = vrot.lane.b32.xlu0 %v184, 84
      %v500 = vpop.permute.xlu0 %499
      %vm501 = vcmask 687104
      %v502 = vsel %vm501, %v496, %v498
      %v503 = vsel %vm501, %v498, %v500
      %v505 = vsel %vm194, %v494, 0
      %v508 = vsel %vm198, %v502, 0
      %v511 = vsel %vm198, %v503, 0
      %v514 = vsel %vm198, %v500, 0
      %516 = vmatpush.bf16.msra.mxu0 0
      %517 = vmatpush.bf16.msra.mxu0 0
      %518 = vmatpush.bf16.msra.mxu0 0
      %519 = vmatpush.bf16.msra.mxu0 0
      %520 = vmatpush.bf16.msra.mxu0 0
      %521 = vmatpush.bf16.msra.mxu0 0
      %522 = vmatpush.bf16.msra.mxu0 0
      %523 = vmatpush.bf16.msra.mxu0 %v508
      %524 = vmatmul.bf16.gmra.mxu0 %v505
      %v525 = vpop.f32.mrf.mxu0
      %v526 = vadd.f32 0.0, %v525
      %v527 = vpop.f32.mrf.mxu0
      %528 = vdwg.mxu0
      %529 = vmatpush.bf16.msra.mxu0 0
      %530 = vmatpush.bf16.msra.mxu0 0
      %531 = vmatpush.bf16.msra.mxu0 0
      %532 = vmatpush.bf16.msra.mxu0 0
      %533 = vmatpush.bf16.msra.mxu0 0
      %534 = vmatpush.bf16.msra.mxu0 0
      %535 = vmatpush.bf16.msra.mxu0 0
      %536 = vmatpush.bf16.msra.mxu0 %v511
      %537 = vmatmul.bf16.gmra.mxu0 %v505
      %v538 = vpop.f32.mrf.mxu0
      %v539 = vadd.f32 0.0, %v538
      %v540 = vpop.f32.mrf.mxu0
      %541 = vdwg.mxu0
      %542 = vmatpush.bf16.msra.mxu0 0
      %543 = vmatpush.bf16.msra.mxu0 0
      %544 = vmatpush.bf16.msra.mxu0 0
      %545 = vmatpush.bf16.msra.mxu0 0
      %546 = vmatpush.bf16.msra.mxu0 0
      %547 = vmatpush.bf16.msra.mxu0 0
      %548 = vmatpush.bf16.msra.mxu0 0
      %549 = vmatpush.bf16.msra.mxu0 %v514
      %550 = vmatmul.bf16.gmra.mxu0 %v505
      %v551 = vpop.f32.mrf.mxu0
      %v552 = vadd.f32 0.0, %v551
      %v553 = vpop.f32.mrf.mxu0
      %554 = vdwg.mxu0
      %v555 = vadd.f32 %v490, %v526
      %v556 = vadd.f32 %v491, %v539
      %v557 = vadd.f32 %v492, %v552
      %v558 = vld [vmem:[%s165] sm:$0xff]
      %v559 = vld [vmem:[%s165 + $0x8] sm:$0xff]
      %s560 = scalar_lea.vmem %s1, 12
      %v561 = vld [vmem:[%s560] sm:$0x3]
      %v564 = vunpack.c.l.b16 %v558
      %v565 = vunpack.c.h.b16 %v558
      %v566 = vunpack.c.l.b16 %v559
      %v567 = vunpack.c.h.b16 %v559
      %v568 = vpack.c.b16 %v564, %v564
      %v569 = vpack.c.b16 %v565, %v565
      %v570 = vpack.c.b16 %v566, %v566
      %v571 = vpack.c.b16 %v567, %v567
      %572 = vrot.lane.b32.xlu0 %v568, 48
      %v573 = vpop.permute.xlu0 %572
      %574 = vrot.lane.b32.xlu0 %v569, 48
      %v575 = vpop.permute.xlu0 %574
      %576 = vrot.lane.b32.xlu0 %v570, 48
      %v577 = vpop.permute.xlu0 %576
      %578 = vrot.lane.b32.xlu0 %v571, 48
      %v579 = vpop.permute.xlu0 %578
      %vm580 = vcmask 392192
      %v581 = vsel %vm580, %v573, %v575
      %v582 = vsel %vm580, %v575, %v577
      %v583 = vsel %vm580, %v577, %v579
      %v585 = vsel %vm194, %v561, 0
      %v588 = vsel %vm198, %v581, 0
      %v591 = vsel %vm198, %v582, 0
      %v594 = vsel %vm198, %v583, 0
      %596 = vmatpush.bf16.msra.mxu0 0
      %597 = vmatpush.bf16.msra.mxu0 0
      %598 = vmatpush.bf16.msra.mxu0 0
      %599 = vmatpush.bf16.msra.mxu0 0
      %600 = vmatpush.bf16.msra.mxu0 0
      %601 = vmatpush.bf16.msra.mxu0 0
      %602 = vmatpush.bf16.msra.mxu0 0
      %603 = vmatpush.bf16.msra.mxu0 %v588
      %604 = vmatmul.bf16.gmra.mxu0 %v585
      %v605 = vpop.f32.mrf.mxu0
      %v606 = vadd.f32 0.0, %v605
      %v607 = vpop.f32.mrf.mxu0
      %608 = vdwg.mxu0
      %609 = vmatpush.bf16.msra.mxu0 0
      %610 = vmatpush.bf16.msra.mxu0 0
      %611 = vmatpush.bf16.msra.mxu0 0
      %612 = vmatpush.bf16.msra.mxu0 0
      %613 = vmatpush.bf16.msra.mxu0 0
      %614 = vmatpush.bf16.msra.mxu0 0
      %615 = vmatpush.bf16.msra.mxu0 0
      %616 = vmatpush.bf16.msra.mxu0 %v591
      %617 = vmatmul.bf16.gmra.mxu0 %v585
      %v618 = vpop.f32.mrf.mxu0
      %v619 = vadd.f32 0.0, %v618
      %v620 = vpop.f32.mrf.mxu0
      %621 = vdwg.mxu0
      %622 = vmatpush.bf16.msra.mxu0 0
      %623 = vmatpush.bf16.msra.mxu0 0
      %624 = vmatpush.bf16.msra.mxu0 0
      %625 = vmatpush.bf16.msra.mxu0 0
      %626 = vmatpush.bf16.msra.mxu0 0
      %627 = vmatpush.bf16.msra.mxu0 0
      %628 = vmatpush.bf16.msra.mxu0 0
      %629 = vmatpush.bf16.msra.mxu0 %v594
      %630 = vmatmul.bf16.gmra.mxu0 %v585
      %v631 = vpop.f32.mrf.mxu0
      %v632 = vadd.f32 0.0, %v631
      %v633 = vpop.f32.mrf.mxu0
      %634 = vdwg.mxu0
      %v635 = vadd.f32 %v555, %v606
      %v636 = vadd.f32 %v556, %v619
      %v637 = vadd.f32 %v557, %v632
      %s638 = scalar_lea.vmem %s1, 14
      %v639 = vld [vmem:[%s638] sm:$0x3]
      %640 = vrot.lane.b32.xlu0 %v568, 46
      %v641 = vpop.permute.xlu0 %640
      %642 = vrot.lane.b32.xlu0 %v569, 46
      %v643 = vpop.permute.xlu0 %642
      %644 = vrot.lane.b32.xlu0 %v570, 46
      %v645 = vpop.permute.xlu0 %644
      %646 = vrot.lane.b32.xlu0 %v571, 46
      %v647 = vpop.permute.xlu0 %646
      %vm648 = vcmask 375808
      %v649 = vsel %vm648, %v641, %v643
      %v650 = vsel %vm648, %v643, %v645
      %v651 = vsel %vm648, %v645, %v647
      %v653 = vsel %vm194, %v639, 0
      %v656 = vsel %vm198, %v649, 0
      %v659 = vsel %vm198, %v650, 0
      %v662 = vsel %vm198, %v651, 0
      %664 = vmatpush.bf16.msra.mxu0 0
      %665 = vmatpush.bf16.msra.mxu0 0
      %666 = vmatpush.bf16.msra.mxu0 0
      %667 = vmatpush.bf16.msra.mxu0 0
      %668 = vmatpush.bf16.msra.mxu0 0
      %669 = vmatpush.bf16.msra.mxu0 0
      %670 = vmatpush.bf16.msra.mxu0 0
      %671 = vmatpush.bf16.msra.mxu0 %v656
      %672 = vmatmul.bf16.gmra.mxu0 %v653
      %v673 = vpop.f32.mrf.mxu0
      %v674 = vadd.f32 0.0, %v673
      %v675 = vpop.f32.mrf.mxu0
      %676 = vdwg.mxu0
      %677 = vmatpush.bf16.msra.mxu0 0
      %678 = vmatpush.bf16.msra.mxu0 0
      %679 = vmatpush.bf16.msra.mxu0 0
      %680 = vmatpush.bf16.msra.mxu0 0
      %681 = vmatpush.bf16.msra.mxu0 0
      %682 = vmatpush.bf16.msra.mxu0 0
      %683 = vmatpush.bf16.msra.mxu0 0
      %684 = vmatpush.bf16.msra.mxu0 %v659
      %685 = vmatmul.bf16.gmra.mxu0 %v653
      %v686 = vpop.f32.mrf.mxu0
      %v687 = vadd.f32 0.0, %v686
      %v688 = vpop.f32.mrf.mxu0
      %689 = vdwg.mxu0
      %690 = vmatpush.bf16.msra.mxu0 0
      %691 = vmatpush.bf16.msra.mxu0 0
      %692 = vmatpush.bf16.msra.mxu0 0
      %693 = vmatpush.bf16.msra.mxu0 0
      %694 = vmatpush.bf16.msra.mxu0 0
      %695 = vmatpush.bf16.msra.mxu0 0
      %696 = vmatpush.bf16.msra.mxu0 0
      %697 = vmatpush.bf16.msra.mxu0 %v662
      %698 = vmatmul.bf16.gmra.mxu0 %v653
      %v699 = vpop.f32.mrf.mxu0
      %v700 = vadd.f32 0.0, %v699
      %v701 = vpop.f32.mrf.mxu0
      %702 = vdwg.mxu0
      %v703 = vadd.f32 %v635, %v674
      %v704 = vadd.f32 %v636, %v687
      %v705 = vadd.f32 %v637, %v700
      %s706 = scalar_lea.vmem %s1, 16
      %v707 = vld [vmem:[%s706] sm:$0x3]
      %708 = vrot.lane.b32.xlu0 %v568, 44
      %v709 = vpop.permute.xlu0 %708
      %710 = vrot.lane.b32.xlu0 %v569, 44
      %v711 = vpop.permute.xlu0 %710
      %712 = vrot.lane.b32.xlu0 %v570, 44
      %v713 = vpop.permute.xlu0 %712
      %714 = vrot.lane.b32.xlu0 %v571, 44
      %v715 = vpop.permute.xlu0 %714
      %vm716 = vcmask 359424
      %v717 = vsel %vm716, %v709, %v711
      %v718 = vsel %vm716, %v711, %v713
      %v719 = vsel %vm716, %v713, %v715
      %v721 = vsel %vm194, %v707, 0
      %v724 = vsel %vm198, %v717, 0
      %v727 = vsel %vm198, %v718, 0
      %v730 = vsel %vm198, %v719, 0
      %732 = vmatpush.bf16.msra.mxu0 0
      %733 = vmatpush.bf16.msra.mxu0 0
      %734 = vmatpush.bf16.msra.mxu0 0
      %735 = vmatpush.bf16.msra.mxu0 0
      %736 = vmatpush.bf16.msra.mxu0 0
      %737 = vmatpush.bf16.msra.mxu0 0
      %738 = vmatpush.bf16.msra.mxu0 0
      %739 = vmatpush.bf16.msra.mxu0 %v724
      %740 = vmatmul.bf16.gmra.mxu0 %v721
      %v741 = vpop.f32.mrf.mxu0
      %v742 = vadd.f32 0.0, %v741
      %v743 = vpop.f32.mrf.mxu0
      %744 = vdwg.mxu0
      %745 = vmatpush.bf16.msra.mxu0 0
      %746 = vmatpush.bf16.msra.mxu0 0
      %747 = vmatpush.bf16.msra.mxu0 0
      %748 = vmatpush.bf16.msra.mxu0 0
      %749 = vmatpush.bf16.msra.mxu0 0
      %750 = vmatpush.bf16.msra.mxu0 0
      %751 = vmatpush.bf16.msra.mxu0 0
      %752 = vmatpush.bf16.msra.mxu0 %v727
      %753 = vmatmul.bf16.gmra.mxu0 %v721
      %v754 = vpop.f32.mrf.mxu0
      %v755 = vadd.f32 0.0, %v754
      %v756 = vpop.f32.mrf.mxu0
      %757 = vdwg.mxu0
      %758 = vmatpush.bf16.msra.mxu0 0
      %759 = vmatpush.bf16.msra.mxu0 0
      %760 = vmatpush.bf16.msra.mxu0 0
      %761 = vmatpush.bf16.msra.mxu0 0
      %762 = vmatpush.bf16.msra.mxu0 0
      %763 = vmatpush.bf16.msra.mxu0 0
      %764 = vmatpush.bf16.msra.mxu0 0
      %765 = vmatpush.bf16.msra.mxu0 %v730
      %766 = vmatmul.bf16.gmra.mxu0 %v721
      %v767 = vpop.f32.mrf.mxu0
      %v768 = vadd.f32 0.0, %v767
      %v769 = vpop.f32.mrf.mxu0
      %770 = vdwg.mxu0
      %v771 = vadd.f32 %v703, %v742
      %v772 = vadd.f32 %v704, %v755
      %v773 = vadd.f32 %v705, %v768
      %v774 = vld [vmem:[%s2] sm:$0xf]
      %776 = vset.pattern.permute.xlu0 0
      %777 = vperm.xlu0 %776, %v774
      %v778 = vpop.permute.xlu0 %777
      %v780 = vadd.f32 %v771, %v778
      %v781 = vadd.f32 %v772, %v778
      %v782 = vadd.f32 %v773, %v778
      %v783 = vmax.f32 %v780, 0.0
      %v784 = vmax.f32 %v781, 0.0
      %v785 = vmax.f32 %v782, 0.0
      %v788 = vrot.slane %v784, 4
      %v789 = vsel %vm198, %v783, %v788
      %791 = vst [vmem:[%s170] sm:$0xff] %v789
      %vm792 = vcmask 519168
      %793 = vst.msk [vmem:[%s170 + $0x8] sm:$0xf] %vm792, %v785
      %p794 = scmp.lt.s32.totalorder %s14, 1
      %s795 = scalar_select %p794, %s14, 1
      %s796 = smul.addr %s795, 3
      %s797 = smul.addr %s796, 4
      %s798 = scalar_lea.vmem %s3, %s797
      // Predicated region
      $region33: #{forward.14} parent=31 // pred_check
        %p799 = pneg %p100
      $region34: #{forward.14} parent=31 // pred_check_branch
        %801 = sbr.rel (%p799) target = $region36
      $region35: #{forward.14} parent=31 // pred_region
        _
      $region36: #{forward.14} parent=31 // pred_fallthru
        _
    $region32: #{forward.14} parent=5 // pred_fallthru
      _
    %p802 = scmp.le.s32.totalorder 2, %s9
    // Predicated region
    $region37: #{forward.14} parent=5 // pred_check
      %p803 = pneg %p802
    $region38: #{forward.14} parent=5 // pred_check_branch
      %805 = sbr.rel (%p803) target = $region40
    $region39: #{forward.14} parent=5 // pred_region
      %s806 = ssub.s32 %s9, 2
      // Predicated region
      $region41: #{forward.14} parent=39 // pred_check
        %p807 = pneg %p106
      $region42: #{forward.14} parent=39 // pred_check_branch
        %809 = sbr.rel (%p807) target = $region44
      $region43: #{forward.14} parent=39 // pred_region
        %p810 = scmp.lt.s32.totalorder %s15, 1
        %s811 = scalar_select %p810, %s15, 1
        %s812 = smul.addr %s811, 3
        %s813 = smul.addr %s812, 4
        %s814 = scalar_lea.vmem %s3, %s813
      $region44: #{forward.14} parent=39 // pred_fallthru
        _
    $region40: #{forward.14} parent=5 // pred_fallthru
      _
  $region6: #{forward.14} parent=0 // loop_footer
    %s13 = sadd.s32 1, %s9
  $region7: #{forward.14} parent=0 // loop_footer_branch
    %8 = sbr.rel target = $region3
  $region8: #{forward.14} parent=0 // loop_exit
    _

// kernel: forward.15
$region0: #{forward.15}
  #allocation0 [shape = 'u32[]', space=smem, size = 0x4, offset = 0x4, fixed_abs, tag = 'smem constant byte address 0x4 - core index']
  #allocation1 [shape = 'u32[72,128]{1,0:T(1,128)}', space=vmem, size = 0x9000, scoped, tag = 'internal scratch']
  %s0 = inlined_call_operand.vmem [shape: bf16[2,4,384], index: 0, kind: input, shape index: {}]
  %s1 = inlined_call_operand.vmem [shape: bf16[9,3,4], index: 1, kind: input, shape index: {}]
  %s2 = inlined_call_operand.vmem [shape: f32[3,1], index: 2, kind: input, shape index: {}]
  %s3 = inlined_call_operand.vmem [shape: f32[2,3,288], index: 3, kind: output, shape index: {}]
  %s4 = sld [smem:[#allocation0]]
  $region45: #{forward.15} parent=0
    _
  %s6 = ssub.s32 1, %s4
  %s7 = scalar_select 0, %s6, %s4
  loop: start=0, step=1, limit=4
  $region2: #{forward.15} parent=0 // loop_pre_header
    _
  $region3: #{forward.15} parent=0 // loop_header
    %s9 = sphi 0, %s13
    %p10 = scmp.ge.s32.totalorder %s9, 4
    %s19 = sphi 0, %s21
    %s22 = sphi 0, %s19
    %s23 = sphi 0, %s22
    %s39 = sphi 0, %s23
    %s43 = sphi 0, %s43
    %s45 = sphi 0, %s43
    %s46 = sphi 0, %s45
    %s60 = sphi 0, %s46
    %s64 = sphi 0, %s64
    %s66 = sphi 0, %s64
    %s67 = sphi 0, %s66
    %s81 = sphi 0, %s67
    %s87 = sphi 0, %s89
    %s90 = sphi 0, %s87
    %s91 = sphi 0, %s90
    %s107 = sphi 0, %s91
  $region4: #{forward.15} parent=0 // loop_header_branch
    %12 = sbr.rel (%p10) target = $region8
  $region5: #{forward.15} parent=0 // loop_body
    %s14 = ssub.s32 %s9, 1
    %s15 = ssub.s32 %s9, 2
    %s16 = sadd.s32 %s9, 1
    %s17 = ssub.s32 %s9, %s16
    %p18 = scmp.eq.s32.totalorder %s17, 0
    %s20 = sadd.s32 %s19, 1
    %s21 = scalar_select %p18, %s19, %s20
    %p24 = pneg %p18
    %p25 = scmp.eq.s32.totalorder %s9, 1
    %p26 = por %p24, %p25
    %p27 = scmp.ne.s32.totalorder %s19, %s22
    %p28 = scmp.eq.s32.totalorder %s9, 0
    %p29 = por %p27, %p28
    %p30 = scmp.ne.s32.totalorder %s19, %s22
    %p31 = scmp.eq.s32.totalorder %s14, 1
    %p32 = por %p30, %p31
    %p33 = scmp.ne.s32.totalorder %s22, %s23
    %p34 = scmp.eq.s32.totalorder %s14, 0
    %p35 = por %p33, %p34
    %p36 = scmp.ne.s32.totalorder %s22, %s23
    %p37 = scmp.eq.s32.totalorder %s15, 1
    %p38 = por %p36, %p37
    %p40 = scmp.ne.s32.totalorder %s23, %s39
    %p41 = scmp.eq.s32.totalorder %s15, 0
    %p42 = por %p40, %p41
    %s44 = sadd.s32 %s43, 1
    %p47 = scmp.eq.s32.totalorder %s9, 1
    %p48 = scmp.ne.s32.totalorder %s43, %s45
    %p49 = scmp.eq.s32.totalorder %s9, 0
    %p50 = por %p48, %p49
    %p51 = scmp.ne.s32.totalorder %s43, %s45
    %p52 = scmp.eq.s32.totalorder %s14, 1
    %p53 = por %p51, %p52
    %p54 = scmp.ne.s32.totalorder %s45, %s46
    %p55 = scmp.eq.s32.totalorder %s14, 0
    %p56 = por %p54, %p55
    %p57 = scmp.ne.s32.totalorder %s45, %s46
    %p58 = scmp.eq.s32.totalorder %s15, 1
    %p59 = por %p57, %p58
    %p61 = scmp.ne.s32.totalorder %s46, %s60
    %p62 = scmp.eq.s32.totalorder %s15, 0
    %p63 = por %p61, %p62
    %s65 = sadd.s32 %s64, 1
    %p68 = scmp.eq.s32.totalorder %s9, 1
    %p69 = scmp.ne.s32.totalorder %s64, %s66
    %p70 = scmp.eq.s32.totalorder %s9, 0
    %p71 = por %p69, %p70
    %p72 = scmp.ne.s32.totalorder %s64, %s66
    %p73 = scmp.eq.s32.totalorder %s14, 1
    %p74 = por %p72, %p73
    %p75 = scmp.ne.s32.totalorder %s66, %s67
    %p76 = scmp.eq.s32.totalorder %s14, 0
    %p77 = por %p75, %p76
    %p78 = scmp.ne.s32.totalorder %s66, %s67
    %p79 = scmp.eq.s32.totalorder %s15, 1
    %p80 = por %p78, %p79
    %p82 = scmp.ne.s32.totalorder %s67, %s81
    %p83 = scmp.eq.s32.totalorder %s15, 0
    %p84 = por %p82, %p83
    %s85 = ssub.s32 %s9, %s16
    %p86 = scmp.eq.s32.totalorder %s85, 0
    %s88 = sadd.s32 %s87, 1
    %s89 = scalar_select %p86, %s87, %s88
    %p92 = pneg %p86
    %p93 = scmp.eq.s32.totalorder %s9, 1
    %p94 = por %p92, %p93
    %p95 = scmp.ne.s32.totalorder %s87, %s90
    %p96 = scmp.eq.s32.totalorder %s9, 0
    %p97 = por %p95, %p96
    %p98 = scmp.ne.s32.totalorder %s87, %s90
    %p99 = scmp.eq.s32.totalorder %s14, 1
    %p100 = por %p98, %p99
    %p101 = scmp.ne.s32.totalorder %s90, %s91
    %p102 = scmp.eq.s32.totalorder %s14, 0
    %p103 = por %p101, %p102
    %p104 = scmp.ne.s32.totalorder %s90, %s91
    %p105 = scmp.eq.s32.totalorder %s15, 1
    %p106 = por %p104, %p105
    %p108 = scmp.ne.s32.totalorder %s91, %s107
    %p109 = scmp.eq.s32.totalorder %s15, 0
    %p110 = por %p108, %p109
    %p111 = scmp.le.s32.totalorder 1, %s9
    %p112 = scmp.lt.s32.totalorder %s9, 3
    %p113 = pnand %p111, %p112
    %p114 = pneg %p113
    // Predicated region
    $region9: #{forward.15} parent=5 // pred_check
      _
    $region10: #{forward.15} parent=5 // pred_check_branch
      %116 = sbr.rel (%p113) target = $region12
    $region11: #{forward.15} parent=5 // pred_region
      %s117 = ssub.s32 %s9, 1
      // Predicated region
      $region13: #{forward.15} parent=11 // pred_check
        %p118 = pneg %p56
      $region14: #{forward.15} parent=11 // pred_check_branch
        %120 = sbr.rel (%p118) target = $region16
      $region15: #{forward.15} parent=11 // pred_region
        _
      $region16: #{forward.15} parent=11 // pred_fallthru
        _
      // Predicated region
      $region17: #{forward.15} parent=11 // pred_check
        %p121 = pneg %p77
      $region18: #{forward.15} parent=11 // pred_check_branch
        %123 = sbr.rel (%p121) target = $region20
      $region19: #{forward.15} parent=11 // pred_region
        _
      $region20: #{forward.15} parent=11 // pred_fallthru
        _
    $region12: #{forward.15} parent=5 // pred_fallthru
      _
    %p124 = scmp.lt.s32.totalorder %s9, 2
    // Predicated region
    $region21: #{forward.15} parent=5 // pred_check
      %p125 = pneg %p124
    $region22: #{forward.15} parent=5 // pred_check_branch
      %127 = sbr.rel (%p125) target = $region24
    $region23: #{forward.15} parent=5 // pred_region
      // Predicated region
      $region25: #{forward.15} parent=23 // pred_check
        %p128 = pneg %p29
      $region26: #{forward.15} parent=23 // pred_check_branch
        %130 = sbr.rel (%p128) target = $region28
      $region27: #{forward.15} parent=23 // pred_region
        %p131 = scmp.lt.s32.totalorder %s9, 1
        %s132 = scalar_select %p131, %s9, 1
        %s133 = smul.addr %s132, 3
        %s134 = smul.addr %s133, 2
        %s135 = scalar_lea.vmem %s0, %s134
      $region28: #{forward.15} parent=23 // pred_fallthru
        _
    $region24: #{forward.15} parent=5 // pred_fallthru
      _
    %p136 = scmp.le.s32.totalorder 1, %s9
    %p137 = scmp.lt.s32.totalorder %s9, 3
    %p138 = pnand %p136, %p137
    %p139 = pneg %p138
    // Predicated region
    $region29: #{forward.15} parent=5 // pred_check
      _
    $region30: #{forward.15} parent=5 // pred_check_branch
      %141 = sbr.rel (%p138) target = $region32
    $region31: #{forward.15} parent=5 // pred_region
      %s142 = ssub.s32 %s9, 1
      %p143 = scmp.lt.s32.totalorder %s14, 1
      %s144 = scalar_select %p143, %s14, 1
      %s145 = smul.addr %s144, 3
      %s146 = smul.addr %s145, 2
      %s147 = scalar_lea.vmem %s0, %s146
      %p148 = pneg %p35
      %p149 = pneg %p32
      %p150 = pneg %p56
      %p151 = pneg %p53
      %p152 = pneg %p77
      %p153 = pneg %p74
      %p154 = pneg %p103
      %p155 = pneg %p100
      %p156 = scmp.lt.s32.totalorder %s14, 1
      %s157 = scalar_select %p156, %s14, 1
      %s158 = smul.addr %s157, 3
      %s159 = smul.addr %s158, 4
      %s160 = scalar_lea.vmem %s3, %s159
      %p161 = scmp.lt.s32.totalorder %s14, 1
      %s162 = scalar_select %p161, %s14, 1
      %s163 = smul.addr %s162, 3
      %s164 = smul.addr %s163, 2
      %s165 = scalar_lea.vmem %s0, %s164
      %p166 = scmp.lt.s32.totalorder %s14, 1
      %s167 = scalar_select %p166, %s14, 1
      %s168 = smul.addr %s167, 3
      %s169 = smul.addr %s168, 4
      %s170 = scalar_lea.vmem %s3, %s169
      %v172 = vld [vmem:[%s165] sm:$0x3f]
      %v173 = vld [vmem:[%s1] sm:$0x3]
      %s174 = scalar_lea.vmem %s1, 2
      %v175 = vld [vmem:[%s174] sm:$0x3]
      %177 = vst [vmem:[#allocation1] ss:$4 sm:$0xff] %v172
      %v178 = vld.sshfl [vmem:[#allocation1] sm:$0xff pattern:$0x73625140]
      %v180 = vld.sshfl [vmem:[#allocation1 + $0x8] sm:$0xff pattern:$0x73625140]
      %v182 = vld.sshfl [vmem:[#allocation1 + $0x10] sm:$0xff pattern:$0x73625140]
      %184 = vrot.lane.b32.xlu0 %v178, 127
      %v185 = vpop.permute.xlu0 %184
      %186 = vrot.lane.b32.xlu0 %v180, 127
      %v187 = vpop.permute.xlu0 %186
      %188 = vrot.lane.b32.xlu0 %v182, 127
      %v189 = vpop.permute.xlu0 %188
      %vm190 = vcmask 1039360
      %v191 = vsel %vm190, %v185, %v187
      %v192 = vsel %vm190, %v187, %v189
      %vm193 = vcmask 31744
      %v195 = vsel %vm193, %v175, 0
      %vm197 = vcmask 1041408
      %v199 = vsel %vm197, %v191, 0
      %v202 = vsel %vm197, %v192, 0
      %v205 = vsel %vm197, %v189, 0
      %207 = vmatpush.bf16.msra.mxu0 0
      %208 = vmatpush.bf16.msra.mxu0 0
      %209 = vmatpush.bf16.msra.mxu0 0
      %210 = vmatpush.bf16.msra.mxu0 0
      %211 = vmatpush.bf16.msra.mxu0 0
      %212 = vmatpush.bf16.msra.mxu0 0
      %213 = vmatpush.bf16.msra.mxu0 0
      %214 = vmatpush.bf16.msra.mxu0 %v199
      %215 = vmatmul.bf16.gmra.mxu0 %v195
      %v216 = vpop.f32.mrf.mxu0
      %v217 = vadd.f32 0.0, %v216
      %v218 = vpop.f32.mrf.mxu0
      %219 = vdwg.mxu0
      %220 = vmatpush.bf16.msra.mxu0 0
      %221 = vmatpush.bf16.msra.mxu0 0
      %222 = vmatpush.bf16.msra.mxu0 0
      %223 = vmatpush.bf16.msra.mxu0 0
      %224 = vmatpush.bf16.msra.mxu0 0
      %225 = vmatpush.bf16.msra.mxu0 0
      %226 = vmatpush.bf16.msra.mxu0 0
      %227 = vmatpush.bf16.msra.mxu0 %v202
      %228 = vmatmul.bf16.gmra.mxu0 %v195
      %v229 = vpop.f32.mrf.mxu0
      %v230 = vadd.f32 0.0, %v229
      %v231 = vpop.f32.mrf.mxu0
      %232 = vdwg.mxu0
      %233 = vmatpush.bf16.msra.mxu0 0
      %234 = vmatpush.bf16.msra.mxu0 0
      %235 = vmatpush.bf16.msra.mxu0 0
      %236 = vmatpush.bf16.msra.mxu0 0
      %237 = vmatpush.bf16.msra.mxu0 0
      %238 = vmatpush.bf16.msra.mxu0 0
      %239 = vmatpush.bf16.msra.mxu0 0
      %240 = vmatpush.bf16.msra.mxu0 %v205
      %241 = vmatmul.bf16.gmra.mxu0 %v195
      %v242 = vpop.f32.mrf.mxu0
      %v243 = vadd.f32 0.0, %v242
      %v244 = vpop.f32.mrf.mxu0
      %245 = vdwg.mxu0
      %246 = vst [vmem:[#allocation1] ss:$4 sm:$0xff] %v172
      %v247 = vld.sshfl [vmem:[#allocation1] sm:$0xff pattern:$0x73625140]
      %v248 = vld.sshfl [vmem:[#allocation1 + $0x8] sm:$0xff pattern:$0x73625140]
      %v249 = vld.sshfl [vmem:[#allocation1 + $0x10] sm:$0xff pattern:$0x73625140]
      %v251 = vsel %vm193, %v173, 0
      %v253 = vsel %vm197, %v247, 0
      %v255 = vsel %vm197, %v248, 0
      %v257 = vsel %vm197, %v249, 0
      %259 = vmatpush.bf16.msra.mxu0 0
      %260 = vmatpush.bf16.msra.mxu0 0
      %261 = vmatpush.bf16.msra.mxu0 0
      %262 = vmatpush.bf16.msra.mxu0 0
      %263 = vmatpush.bf16.msra.mxu0 0
      %264 = vmatpush.bf16.msra.mxu0 0
      %265 = vmatpush.bf16.msra.mxu0 0
      %266 = vmatpush.bf16.msra.mxu0 %v253
      %267 = vmatmul.bf16.gmra.mxu0 %v251
      %v268 = vpop.f32.mrf.mxu0
      %v269 = vadd.f32 %v217, %v268
      %v270 = vpop.f32.mrf.mxu0
      %271 = vdwg.mxu0
      %272 = vmatpush.bf16.msra.mxu0 0
      %273 = vmatpush.bf16.msra.mxu0 0
      %274 = vmatpush.bf16.msra.mxu0 0
      %275 = vmatpush.bf16.msra.mxu0 0
      %276 = vmatpush.bf16.msra.mxu0 0
      %277 = vmatpush.bf16.msra.mxu0 0
      %278 = vmatpush.bf16.msra.mxu0 0
      %279 = vmatpush.bf16.msra.mxu0 %v255
      %280 = vmatmul.bf16.gmra.mxu0 %v251
      %v281 = vpop.f32.mrf.mxu0
      %v282 = vadd.f32 %v230, %v281
      %v283 = vpop.f32.mrf.mxu0
      %284 = vdwg.mxu0
      %285 = vmatpush.bf16.msra.mxu0 0
      %286 = vmatpush.bf16.msra.mxu0 0
      %287 = vmatpush.bf16.msra.mxu0 0
      %288 = vmatpush.bf16.msra.mxu0 0
      %289 = vmatpush.bf16.msra.mxu0 0
      %290 = vmatpush.bf16.msra.mxu0 0
      %291 = vmatpush.bf16.msra.mxu0 0
      %292 = vmatpush.bf16.msra.mxu0 %v257
      %293 = vmatmul.bf16.gmra.mxu0 %v251
      %v294 = vpop.f32.mrf.mxu0
      %v295 = vadd.f32 %v243, %v294
      %v296 = vpop.f32.mrf.mxu0
      %297 = vdwg.mxu0
      %v298 = vld [vmem:[%s165] sm:$0x3f]
      %s299 = scalar_lea.vmem %s1, 4
      %v300 = vld [vmem:[%s299] sm:$0x3]
      %302 = vst [vmem:[#allocation1] ss:$4 sm:$0xff] %v298
      %v303 = vld.sshfl [vmem:[#allocation1] sm:$0xff pattern:$0x73625140]
      %v305 = vld.sshfl [vmem:[#allocation1 + $0x8] sm:$0xff pattern:$0x73625140]
      %v307 = vld.sshfl [vmem:[#allocation1 + $0x10] sm:$0xff pattern:$0x73625140]
      %309 = vrot.lane.b32.xlu0 %v303, 126
      %v310 = vpop.permute.xlu0 %309
      %311 = vrot.lane.b32.xlu0 %v305, 126
      %v312 = vpop.permute.xlu0 %311
      %313 = vrot.lane.b32.xlu0 %v307, 126
      %v314 = vpop.permute.xlu0 %313
      %vm315 = vcmask 1031168
      %v316 = vsel %vm315, %v310, %v312
      %v317 = vsel %vm315, %v312, %v314
      %v319 = vsel %vm193, %v300, 0
      %v322 = vsel %vm197, %v316, 0
      %v325 = vsel %vm197, %v317, 0
      %v328 = vsel %vm197, %v314, 0
      %330 = vmatpush.bf16.msra.mxu0 0
      %331 = vmatpush.bf16.msra.mxu0 0
      %332 = vmatpush.bf16.msra.mxu0 0
      %333 = vmatpush.bf16.msra.mxu0 0
      %334 = vmatpush.bf16.msra.mxu0 0
      %335 = vmatpush.bf16.msra.mxu0 0
      %336 = vmatpush.bf16.msra.mxu0 0
      %337 = vmatpush.bf16.msra.mxu0 %v322
      %338 = vmatmul.bf16.gmra.mxu0 %v319
      %v339 = vpop.f32.mrf.mxu0
      %v340 = vadd.f32 0.0, %v339
      %v341 = vpop.f32.mrf.mxu0
      %342 = vdwg.mxu0
      %343 = vmatpush.bf16.msra.mxu0 0
      %344 = vmatpush.bf16.msra.mxu0 0
      %345 = vmatpush.bf16.msra.mxu0 0
      %346 = vmatpush.bf16.msra.mxu0 0
      %347 = vmatpush.bf16.msra.mxu0 0
      %348 = vmatpush.bf16.msra.mxu0 0
      %349 = vmatpush.bf16.msra.mxu0 0
      %350 = vmatpush.bf16.msra.mxu0 %v325
      %351 = vmatmul.bf16.gmra.mxu0 %v319
      %v352 = vpop.f32.mrf.mxu0
      %v353 = vadd.f32 0.0, %v352
      %v354 = vpop.f32.mrf.mxu0
      %355 = vdwg.mxu0
      %356 = vmatpush.bf16.msra.mxu0 0
      %357 = vmatpush.bf16.msra.mxu0 0
      %358 = vmatpush.bf16.msra.mxu0 0
      %359 = vmatpush.bf16.msra.mxu0 0
      %360 = vmatpush.bf16.msra.mxu0 0
      %361 = vmatpush.bf16.msra.mxu0 0
      %362 = vmatpush.bf16.msra.mxu0 0
      %363 = vmatpush.bf16.msra.mxu0 %v328
      %364 = vmatmul.bf16.gmra.mxu0 %v319
      %v365 = vpop.f32.mrf.mxu0
      %v366 = vadd.f32 0.0, %v365
      %v367 = vpop.f32.mrf.mxu0
      %368 = vdwg.mxu0
      %v369 = vadd.f32 %v269, %v340
      %v370 = vadd.f32 %v282, %v353
      %v371 = vadd.f32 %v295, %v366
      %v372 = vld [vmem:[%s165] sm:$0x3f]
      %s373 = scalar_lea.vmem %s1, 6
      %v374 = vld [vmem:[%s373] sm:$0x3]
      %376 = vst [vmem:[#allocation1] ss:$4 sm:$0xff] %v372
      %v377 = vld.sshfl [vmem:[#allocation1] sm:$0xff pattern:$0x73625140]
      %v379 = vld.sshfl [vmem:[#allocation1 + $0x8] sm:$0xff pattern:$0x73625140]
      %v381 = vld.sshfl [vmem:[#allocation1 + $0x10] sm:$0xff pattern:$0x73625140]
      %383 = vrot.lane.b32.xlu0 %v377, 110
      %v384 = vpop.permute.xlu0 %383
      %385 = vrot.lane.b32.xlu0 %v379, 110
      %v386 = vpop.permute.xlu0 %385
      %387 = vrot.lane.b32.xlu0 %v381, 110
      %v388 = vpop.permute.xlu0 %387
      %vm389 = vcmask 900096
      %v390 = vsel %vm389, %v384, %v386
      %v391 = vsel %vm389, %v386, %v388
      %v393 = vsel %vm193, %v374, 0
      %v396 = vsel %vm197, %v390, 0
      %v399 = vsel %vm197, %v391, 0
      %v402 = vsel %vm197, %v388, 0
      %404 = vmatpush.bf16.msra.mxu0 0
      %405 = vmatpush.bf16.msra.mxu0 0
      %406 = vmatpush.bf16.msra.mxu0 0
      %407 = vmatpush.bf16.msra.mxu0 0
      %408 = vmatpush.bf16.msra.mxu0 0
      %409 = vmatpush.bf16.msra.mxu0 0
      %410 = vmatpush.bf16.msra.mxu0 0
      %411 = vmatpush.bf16.msra.mxu0 %v396
      %412 = vmatmul.bf16.gmra.mxu0 %v393
      %v413 = vpop.f32.mrf.mxu0
      %v414 = vadd.f32 0.0, %v413
      %v415 = vpop.f32.mrf.mxu0
      %416 = vdwg.mxu0
      %417 = vmatpush.bf16.msra.mxu0 0
      %418 = vmatpush.bf16.msra.mxu0 0
      %419 = vmatpush.bf16.msra.mxu0 0
      %420 = vmatpush.bf16.msra.mxu0 0
      %421 = vmatpush.bf16.msra.mxu0 0
      %422 = vmatpush.bf16.msra.mxu0 0
      %423 = vmatpush.bf16.msra.mxu0 0
      %424 = vmatpush.bf16.msra.mxu0 %v399
      %425 = vmatmul.bf16.gmra.mxu0 %v393
      %v426 = vpop.f32.mrf.mxu0
      %v427 = vadd.f32 0.0, %v426
      %v428 = vpop.f32.mrf.mxu0
      %429 = vdwg.mxu0
      %430 = vmatpush.bf16.msra.mxu0 0
      %431 = vmatpush.bf16.msra.mxu0 0
      %432 = vmatpush.bf16.msra.mxu0 0
      %433 = vmatpush.bf16.msra.mxu0 0
      %434 = vmatpush.bf16.msra.mxu0 0
      %435 = vmatpush.bf16.msra.mxu0 0
      %436 = vmatpush.bf16.msra.mxu0 0
      %437 = vmatpush.bf16.msra.mxu0 %v402
      %438 = vmatmul.bf16.gmra.mxu0 %v393
      %v439 = vpop.f32.mrf.mxu0
      %v440 = vadd.f32 0.0, %v439
      %v441 = vpop.f32.mrf.mxu0
      %442 = vdwg.mxu0
      %v443 = vadd.f32 %v369, %v414
      %v444 = vadd.f32 %v370, %v427
      %v445 = vadd.f32 %v371, %v440
      %v446 = vld [vmem:[%s165] sm:$0x3f]
      %s447 = scalar_lea.vmem %s1, 8
      %v448 = vld [vmem:[%s447] sm:$0x3]
      %450 = vst [vmem:[#allocation1] ss:$4 sm:$0xff] %v446
      %v451 = vld.sshfl [vmem:[#allocation1] sm:$0xff pattern:$0x73625140]
      %v453 = vld.sshfl [vmem:[#allocation1 + $0x8] sm:$0xff pattern:$0x73625140]
      %v455 = vld.sshfl [vmem:[#allocation1 + $0x10] sm:$0xff pattern:$0x73625140]
      %457 = vrot.lane.b32.xlu0 %v451, 109
      %v458 = vpop.permute.xlu0 %457
      %459 = vrot.lane.b32.xlu0 %v453, 109
      %v460 = vpop.permute.xlu0 %459
      %461 = vrot.lane.b32.xlu0 %v455, 109
      %v462 = vpop.permute.xlu0 %461
      %vm463 = vcmask 891904
      %v464 = vsel %vm463, %v458, %v460
      %v465 = vsel %vm463, %v460, %v462
      %v467 = vsel %vm193, %v448, 0
      %v470 = vsel %vm197, %v464, 0
      %v473 = vsel %vm197, %v465, 0
      %v476 = vsel %vm197, %v462, 0
      %478 = vmatpush.bf16.msra.mxu0 0
      %479 = vmatpush.bf16.msra.mxu0 0
      %480 = vmatpush.bf16.msra.mxu0 0
      %481 = vmatpush.bf16.msra.mxu0 0
      %482 = vmatpush.bf16.msra.mxu0 0
      %483 = vmatpush.bf16.msra.mxu0 0
      %484 = vmatpush.bf16.msra.mxu0 0
      %485 = vmatpush.bf16.msra.mxu0 %v470
      %486 = vmatmul.bf16.gmra.mxu0 %v467
      %v487 = vpop.f32.mrf.mxu0
      %v488 = vadd.f32 0.0, %v487
      %v489 = vpop.f32.mrf.mxu0
      %490 = vdwg.mxu0
      %491 = vmatpush.bf16.msra.mxu0 0
      %492 = vmatpush.bf16.msra.mxu0 0
      %493 = vmatpush.bf16.msra.mxu0 0
      %494 = vmatpush.bf16.msra.mxu0 0
      %495 = vmatpush.bf16.msra.mxu0 0
      %496 = vmatpush.bf16.msra.mxu0 0
      %497 = vmatpush.bf16.msra.mxu0 0
      %498 = vmatpush.bf16.msra.mxu0 %v473
      %499 = vmatmul.bf16.gmra.mxu0 %v467
      %v500 = vpop.f32.mrf.mxu0
      %v501 = vadd.f32 0.0, %v500
      %v502 = vpop.f32.mrf.mxu0
      %503 = vdwg.mxu0
      %504 = vmatpush.bf16.msra.mxu0 0
      %505 = vmatpush.bf16.msra.mxu0 0
      %506 = vmatpush.bf16.msra.mxu0 0
      %507 = vmatpush.bf16.msra.mxu0 0
      %508 = vmatpush.bf16.msra.mxu0 0
      %509 = vmatpush.bf16.msra.mxu0 0
      %510 = vmatpush.bf16.msra.mxu0 0
      %511 = vmatpush.bf16.msra.mxu0 %v476
      %512 = vmatmul.bf16.gmra.mxu0 %v467
      %v513 = vpop.f32.mrf.mxu0
      %v514 = vadd.f32 0.0, %v513
      %v515 = vpop.f32.mrf.mxu0
      %516 = vdwg.mxu0
      %v517 = vadd.f32 %v443, %v488
      %v518 = vadd.f32 %v444, %v501
      %v519 = vadd.f32 %v445, %v514
      %v520 = vld [vmem:[%s165] sm:$0x3f]
      %s521 = scalar_lea.vmem %s1, 10
      %v522 = vld [vmem:[%s521] sm:$0x3]
      %524 = vst [vmem:[#allocation1] ss:$4 sm:$0xff] %v520
      %v525 = vld.sshfl [vmem:[#allocation1] sm:$0xff pattern:$0x73625140]
      %v527 = vld.sshfl [vmem:[#allocation1 + $0x8] sm:$0xff pattern:$0x73625140]
      %v529 = vld.sshfl [vmem:[#allocation1 + $0x10] sm:$0xff pattern:$0x73625140]
      %531 = vrot.lane.b32.xlu0 %v525, 108
      %v532 = vpop.permute.xlu0 %531
      %533 = vrot.lane.b32.xlu0 %v527, 108
      %v534 = vpop.permute.xlu0 %533
      %535 = vrot.lane.b32.xlu0 %v529, 108
      %v536 = vpop.permute.xlu0 %535
      %vm537 = vcmask 883712
      %v538 = vsel %vm537, %v532, %v534
      %v539 = vsel %vm537, %v534, %v536
      %v541 = vsel %vm193, %v522, 0
      %v544 = vsel %vm197, %v538, 0
      %v547 = vsel %vm197, %v539, 0
      %v550 = vsel %vm197, %v536, 0
      %552 = vmatpush.bf16.msra.mxu0 0
      %553 = vmatpush.bf16.msra.mxu0 0
      %554 = vmatpush.bf16.msra.mxu0 0
      %555 = vmatpush.bf16.msra.mxu0 0
      %556 = vmatpush.bf16.msra.mxu0 0
      %557 = vmatpush.bf16.msra.mxu0 0
      %558 = vmatpush.bf16.msra.mxu0 0
      %559 = vmatpush.bf16.msra.mxu0 %v544
      %560 = vmatmul.bf16.gmra.mxu0 %v541
      %v561 = vpop.f32.mrf.mxu0
      %v562 = vadd.f32 0.0, %v561
      %v563 = vpop.f32.mrf.mxu0
      %564 = vdwg.mxu0
      %565 = vmatpush.bf16.msra.mxu0 0
      %566 = vmatpush.bf16.msra.mxu0 0
      %567 = vmatpush.bf16.msra.mxu0 0
      %568 = vmatpush.bf16.msra.mxu0 0
      %569 = vmatpush.bf16.msra.mxu0 0
      %570 = vmatpush.bf16.msra.mxu0 0
      %571 = vmatpush.bf16.msra.mxu0 0
      %572 = vmatpush.bf16.msra.mxu0 %v547
      %573 = vmatmul.bf16.gmra.mxu0 %v541
      %v574 = vpop.f32.mrf.mxu0
      %v575 = vadd.f32 0.0, %v574
      %v576 = vpop.f32.mrf.mxu0
      %577 = vdwg.mxu0
      %578 = vmatpush.bf16.msra.mxu0 0
      %579 = vmatpush.bf16.msra.mxu0 0
      %580 = vmatpush.bf16.msra.mxu0 0
      %581 = vmatpush.bf16.msra.mxu0 0
      %582 = vmatpush.bf16.msra.mxu0 0
      %583 = vmatpush.bf16.msra.mxu0 0
      %584 = vmatpush.bf16.msra.mxu0 0
      %585 = vmatpush.bf16.msra.mxu0 %v550
      %586 = vmatmul.bf16.gmra.mxu0 %v541
      %v587 = vpop.f32.mrf.mxu0
      %v588 = vadd.f32 0.0, %v587
      %v589 = vpop.f32.mrf.mxu0
      %590 = vdwg.mxu0
      %v591 = vadd.f32 %v517, %v562
      %v592 = vadd.f32 %v518, %v575
      %v593 = vadd.f32 %v519, %v588
      %v594 = vld [vmem:[%s165] sm:$0x3f]
      %s595 = scalar_lea.vmem %s1, 12
      %v596 = vld [vmem:[%s595] sm:$0x3]
      %598 = vst [vmem:[#allocation1] ss:$4 sm:$0xff] %v594
      %v599 = vld.sshfl [vmem:[#allocation1] sm:$0xff pattern:$0x73625140]
      %v601 = vld.sshfl [vmem:[#allocation1 + $0x8] sm:$0xff pattern:$0x73625140]
      %v603 = vld.sshfl [vmem:[#allocation1 + $0x10] sm:$0xff pattern:$0x73625140]
      %605 = vrot.lane.b32.xlu0 %v599, 92
      %v606 = vpop.permute.xlu0 %605
      %607 = vrot.lane.b32.xlu0 %v601, 92
      %v608 = vpop.permute.xlu0 %607
      %609 = vrot.lane.b32.xlu0 %v603, 92
      %v610 = vpop.permute.xlu0 %609
      %vm611 = vcmask 752640
      %v612 = vsel %vm611, %v606, %v608
      %v613 = vsel %vm611, %v608, %v610
      %v615 = vsel %vm193, %v596, 0
      %v618 = vsel %vm197, %v612, 0
      %v621 = vsel %vm197, %v613, 0
      %v624 = vsel %vm197, %v610, 0
      %626 = vmatpush.bf16.msra.mxu0 0
      %627 = vmatpush.bf16.msra.mxu0 0
      %628 = vmatpush.bf16.msra.mxu0 0
      %629 = vmatpush.bf16.msra.mxu0 0
      %630 = vmatpush.bf16.msra.mxu0 0
      %631 = vmatpush.bf16.msra.mxu0 0
      %632 = vmatpush.bf16.msra.mxu0 0
      %633 = vmatpush.bf16.msra.mxu0 %v618
      %634 = vmatmul.bf16.gmra.mxu0 %v615
      %v635 = vpop.f32.mrf.mxu0
      %v636 = vadd.f32 0.0, %v635
      %v637 = vpop.f32.mrf.mxu0
      %638 = vdwg.mxu0
      %639 = vmatpush.bf16.msra.mxu0 0
      %640 = vmatpush.bf16.msra.mxu0 0
      %641 = vmatpush.bf16.msra.mxu0 0
      %642 = vmatpush.bf16.msra.mxu0 0
      %643 = vmatpush.bf16.msra.mxu0 0
      %644 = vmatpush.bf16.msra.mxu0 0
      %645 = vmatpush.bf16.msra.mxu0 0
      %646 = vmatpush.bf16.msra.mxu0 %v621
      %647 = vmatmul.bf16.gmra.mxu0 %v615
      %v648 = vpop.f32.mrf.mxu0
      %v649 = vadd.f32 0.0, %v648
      %v650 = vpop.f32.mrf.mxu0
      %651 = vdwg.mxu0
      %652 = vmatpush.bf16.msra.mxu0 0
      %653 = vmatpush.bf16.msra.mxu0 0
      %654 = vmatpush.bf16.msra.mxu0 0
      %655 = vmatpush.bf16.msra.mxu0 0
      %656 = vmatpush.bf16.msra.mxu0 0
      %657 = vmatpush.bf16.msra.mxu0 0
      %658 = vmatpush.bf16.msra.mxu0 0
      %659 = vmatpush.bf16.msra.mxu0 %v624
      %660 = vmatmul.bf16.gmra.mxu0 %v615
      %v661 = vpop.f32.mrf.mxu0
      %v662 = vadd.f32 0.0, %v661
      %v663 = vpop.f32.mrf.mxu0
      %664 = vdwg.mxu0
      %v665 = vadd.f32 %v591, %v636
      %v666 = vadd.f32 %v592, %v649
      %v667 = vadd.f32 %v593, %v662
      %v668 = vld [vmem:[%s165] sm:$0x3f]
      %s669 = scalar_lea.vmem %s1, 14
      %v670 = vld [vmem:[%s669] sm:$0x3]
      %672 = vst [vmem:[#allocation1] ss:$4 sm:$0xff] %v668
      %v673 = vld.sshfl [vmem:[#allocation1] sm:$0xff pattern:$0x73625140]
      %v675 = vld.sshfl [vmem:[#allocation1 + $0x8] sm:$0xff pattern:$0x73625140]
      %v677 = vld.sshfl [vmem:[#allocation1 + $0x10] sm:$0xff pattern:$0x73625140]
      %679 = vrot.lane.b32.xlu0 %v673, 91
      %v680 = vpop.permute.xlu0 %679
      %681 = vrot.lane.b32.xlu0 %v675, 91
      %v682 = vpop.permute.xlu0 %681
      %683 = vrot.lane.b32.xlu0 %v677, 91
      %v684 = vpop.permute.xlu0 %683
      %vm685 = vcmask 744448
      %v686 = vsel %vm685, %v680, %v682
      %v687 = vsel %vm685, %v682, %v684
      %v689 = vsel %vm193, %v670, 0
      %v692 = vsel %vm197, %v686, 0
      %v695 = vsel %vm197, %v687, 0
      %v698 = vsel %vm197, %v684, 0
      %700 = vmatpush.bf16.msra.mxu0 0
      %701 = vmatpush.bf16.msra.mxu0 0
      %702 = vmatpush.bf16.msra.mxu0 0
      %703 = vmatpush.bf16.msra.mxu0 0
      %704 = vmatpush.bf16.msra.mxu0 0
      %705 = vmatpush.bf16.msra.mxu0 0
      %706 = vmatpush.bf16.msra.mxu0 0
      %707 = vmatpush.bf16.msra.mxu0 %v692
      %708 = vmatmul.bf16.gmra.mxu0 %v689
      %v709 = vpop.f32.mrf.mxu0
      %v710 = vadd.f32 0.0, %v709
      %v711 = vpop.f32.mrf.mxu0
      %712 = vdwg.mxu0
      %713 = vmatpush.bf16.msra.mxu0 0
      %714 = vmatpush.bf16.msra.mxu0 0
      %715 = vmatpush.bf16.msra.mxu0 0
      %716 = vmatpush.bf16.msra.mxu0 0
      %717 = vmatpush.bf16.msra.mxu0 0
      %718 = vmatpush.bf16.msra.mxu0 0
      %719 = vmatpush.bf16.msra.mxu0 0
      %720 = vmatpush.bf16.msra.mxu0 %v695
      %721 = vmatmul.bf16.gmra.mxu0 %v689
      %v722 = vpop.f32.mrf.mxu0
      %v723 = vadd.f32 0.0, %v722
      %v724 = vpop.f32.mrf.mxu0
      %725 = vdwg.mxu0
      %726 = vmatpush.bf16.msra.mxu0 0
      %727 = vmatpush.bf16.msra.mxu0 0
      %728 = vmatpush.bf16.msra.mxu0 0
      %729 = vmatpush.bf16.msra.mxu0 0
      %730 = vmatpush.bf16.msra.mxu0 0
      %731 = vmatpush.bf16.msra.mxu0 0
      %732 = vmatpush.bf16.msra.mxu0 0
      %733 = vmatpush.bf16.msra.mxu0 %v698
      %734 = vmatmul.bf16.gmra.mxu0 %v689
      %v735 = vpop.f32.mrf.mxu0
      %v736 = vadd.f32 0.0, %v735
      %v737 = vpop.f32.mrf.mxu0
      %738 = vdwg.mxu0
      %v739 = vadd.f32 %v665, %v710
      %v740 = vadd.f32 %v666, %v723
      %v741 = vadd.f32 %v667, %v736
      %v742 = vld [vmem:[%s165] sm:$0x3f]
      %s743 = scalar_lea.vmem %s1, 16
      %v744 = vld [vmem:[%s743] sm:$0x3]
      %746 = vst [vmem:[#allocation1] ss:$4 sm:$0xff] %v742
      %v747 = vld.sshfl [vmem:[#allocation1] sm:$0xff pattern:$0x73625140]
      %v749 = vld.sshfl [vmem:[#allocation1 + $0x8] sm:$0xff pattern:$0x73625140]
      %v751 = vld.sshfl [vmem:[#allocation1 + $0x10] sm:$0xff pattern:$0x73625140]
      %753 = vrot.lane.b32.xlu0 %v747, 90
      %v754 = vpop.permute.xlu0 %753
      %755 = vrot.lane.b32.xlu0 %v749, 90
      %v756 = vpop.permute.xlu0 %755
      %757 = vrot.lane.b32.xlu0 %v751, 90
      %v758 = vpop.permute.xlu0 %757
      %vm759 = vcmask 736256
      %v760 = vsel %vm759, %v754, %v756
      %v761 = vsel %vm759, %v756, %v758
      %v763 = vsel %vm193, %v744, 0
      %v766 = vsel %vm197, %v760, 0
      %v769 = vsel %vm197, %v761, 0
      %v772 = vsel %vm197, %v758, 0
      %774 = vmatpush.bf16.msra.mxu0 0
      %775 = vmatpush.bf16.msra.mxu0 0
      %776 = vmatpush.bf16.msra.mxu0 0
      %777 = vmatpush.bf16.msra.mxu0 0
      %778 = vmatpush.bf16.msra.mxu0 0
      %779 = vmatpush.bf16.msra.mxu0 0
      %780 = vmatpush.bf16.msra.mxu0 0
      %781 = vmatpush.bf16.msra.mxu0 %v766
      %782 = vmatmul.bf16.gmra.mxu0 %v763
      %v783 = vpop.f32.mrf.mxu0
      %v784 = vadd.f32 0.0, %v783
      %v785 = vpop.f32.mrf.mxu0
      %786 = vdwg.mxu0
      %787 = vmatpush.bf16.msra.mxu0 0
      %788 = vmatpush.bf16.msra.mxu0 0
      %789 = vmatpush.bf16.msra.mxu0 0
      %790 = vmatpush.bf16.msra.mxu0 0
      %791 = vmatpush.bf16.msra.mxu0 0
      %792 = vmatpush.bf16.msra.mxu0 0
      %793 = vmatpush.bf16.msra.mxu0 0
      %794 = vmatpush.bf16.msra.mxu0 %v769
      %795 = vmatmul.bf16.gmra.mxu0 %v763
      %v796 = vpop.f32.mrf.mxu0
      %v797 = vadd.f32 0.0, %v796
      %v798 = vpop.f32.mrf.mxu0
      %799 = vdwg.mxu0
      %800 = vmatpush.bf16.msra.mxu0 0
      %801 = vmatpush.bf16.msra.mxu0 0
      %802 = vmatpush.bf16.msra.mxu0 0
      %803 = vmatpush.bf16.msra.mxu0 0
      %804 = vmatpush.bf16.msra.mxu0 0
      %805 = vmatpush.bf16.msra.mxu0 0
      %806 = vmatpush.bf16.msra.mxu0 0
      %807 = vmatpush.bf16.msra.mxu0 %v772
      %808 = vmatmul.bf16.gmra.mxu0 %v763
      %v809 = vpop.f32.mrf.mxu0
      %v810 = vadd.f32 0.0, %v809
      %v811 = vpop.f32.mrf.mxu0
      %812 = vdwg.mxu0
      %v813 = vadd.f32 %v739, %v784
      %v814 = vadd.f32 %v740, %v797
      %v815 = vadd.f32 %v741, %v810
      %v816 = vld [vmem:[%s2] sm:$0x7]
      %818 = vset.pattern.permute.xlu0 0
      %819 = vperm.xlu0 %818, %v816
      %v820 = vpop.permute.xlu0 %819
      %v822 = vadd.f32 %v813, %v820
      %v823 = vadd.f32 %v814, %v820
      %v824 = vadd.f32 %v815, %v820
      %v825 = vtanh.pop %v822
      %v826 = vtanh.pop %v823
      %v827 = vtanh.pop %v824
      %v830 = vrot.slane %v826, 4
      %vm831 = vcmask 1043456
      %v832 = vsel %vm831, %v825, %v830
      %834 = vst [vmem:[%s170] sm:$0x77] %v832
      %vm835 = vcmask 256000
      %836 = vst.msk [vmem:[%s170 + $0x8] sm:$0x7] %vm835, %v827
      %p837 = scmp.lt.s32.totalorder %s14, 1
      %s838 = scalar_select %p837, %s14, 1
      %s839 = smul.addr %s838, 3
      %s840 = smul.addr %s839, 4
      %s841 = scalar_lea.vmem %s3, %s840
      // Predicated region
      $region33: #{forward.15} parent=31 // pred_check
        %p842 = pneg %p100
      $region34: #{forward.15} parent=31 // pred_check_branch
        %844 = sbr.rel (%p842) target = $region36
      $region35: #{forward.15} parent=31 // pred_region
        _
      $region36: #{forward.15} parent=31 // pred_fallthru
        _
    $region32: #{forward.15} parent=5 // pred_fallthru
      _
    %p845 = scmp.le.s32.totalorder 2, %s9
    // Predicated region
    $region37: #{forward.15} parent=5 // pred_check
      %p846 = pneg %p845
    $region38: #{forward.15} parent=5 // pred_check_branch
      %848 = sbr.rel (%p846) target = $region40
    $region39: #{forward.15} parent=5 // pred_region
      %s849 = ssub.s32 %s9, 2
      // Predicated region
      $region41: #{forward.15} parent=39 // pred_check
        %p850 = pneg %p106
      $region42: #{forward.15} parent=39 // pred_check_branch
        %852 = sbr.rel (%p850) target = $region44
      $region43: #{forward.15} parent=39 // pred_region
        %p853 = scmp.lt.s32.totalorder %s15, 1
        %s854 = scalar_select %p853, %s15, 1
        %s855 = smul.addr %s854, 3
        %s856 = smul.addr %s855, 4
        %s857 = scalar_lea.vmem %s3, %s856
      $region44: #{forward.15} parent=39 // pred_fallthru
        _
    $region40: #{forward.15} parent=5 // pred_fallthru
      _
  $region6: #{forward.15} parent=0 // loop_footer
    %s13 = sadd.s32 1, %s9
  $region7: #{forward.15} parent=0 // loop_footer_branch
    %8 = sbr.rel target = $region3
  $region8: #{forward.15} parent=0 // loop_exit
    _

</llo_original>
